<compile_context>
chip_gen: v5e
topology: v5e:2x2
jax: 0.10.0
libtpu: 0.0.40
codegen_flags: <defaults>
</compile_context>

<pallas_src>
import jax
import jax.numpy as jnp
from jax.experimental import pallas as pl
from jax.experimental.pallas import tpu as pltpu

# ---------------------------------------------------------------------------
# Static configuration (small, demo-sized NGP).
# ---------------------------------------------------------------------------
R_TILE = 512                 # rays per kernel tile (lane axis)
NUM_SAMPLES = 8              # samples per ray (uniform in the AABB)
L_FREQ = 4                   # multi-resolution levels of the positional encoding
ENC_DIM = 3 * L_FREQ * 2     # 24 encoded xyz features
HID = 64                     # hidden width (NGP uses 64-wide fully-fused MLPs)
FEAT = 16                    # density-net output features (feat[0] -> sigma)
SH_DIM = 16                  # spherical-harmonics degree-4 direction encoding
RGB_PAD = 8                  # rgb output rows padded 3 -> 8 for clean layout
SCALE = 0.5                  # hparams.scale -> AABB is [-SCALE, SCALE]^3
NEAR = 0.05                  # minimum ray distance


def _sh_deg4(ux, uy, uz):
    """Real spherical harmonics, degree 4 (16 comps), of a unit direction.

    Inputs / outputs are (1, R) lane-major vectors."""
    xx, yy, zz = ux * ux, uy * uy, uz * uz
    xy, yz, xz = ux * uy, uy * uz, ux * uz
    one = jnp.full_like(ux, 1.0)
    return [
        0.28209479177387814 * one,
        -0.48860251190291987 * uy,
        0.48860251190291987 * uz,
        -0.48860251190291987 * ux,
        1.0925484305920792 * xy,
        -1.0925484305920792 * yz,
        0.94617469575755997 * zz - 0.31539156525251999,
        -1.0925484305920792 * xz,
        0.54627421529603959 * (xx - yy),
        -0.59004358992664352 * uy * (3.0 * xx - yy),
        2.8906114426405538 * xy * uz,
        0.45704579946446572 * uy * (1.0 - 5.0 * zz),
        0.37317633259011546 * uz * (5.0 * zz - 3.0),
        0.45704579946446572 * ux * (1.0 - 5.0 * zz),
        1.4453057213202769 * uz * (xx - yy),
        0.59004358992664352 * ux * (xx - 3.0 * yy),
    ]


def _make_kernel(num_samples):
    inv_s = 1.0 / float(num_samples)

    def kernel(dirs_ref, poses_ref, w1_ref, w2_ref, wr1_ref, wr2_ref, wr3_ref,
               rgb_ref, depth_ref, opa_ref):
        d = dirs_ref[...]                         # (3, R)  camera-space dirs
        P = poses_ref[...]                        # (12, R) flattened c2w
        rows = d.shape[1]

        # -------- get_rays: rays_d = R @ d, rays_o = t (all (1, R) lane-dense) --
        dx, dy, dz = d[0:1, :], d[1:2, :], d[2:3, :]
        rdx = P[0:1] * dx + P[1:2] * dy + P[2:3] * dz
        rdy = P[4:5] * dx + P[5:6] * dy + P[6:7] * dz
        rdz = P[8:9] * dx + P[9:10] * dy + P[10:11] * dz
        ox, oy, oz = P[3:4], P[7:8], P[11:12]

        inv_n = jax.lax.rsqrt(rdx * rdx + rdy * rdy + rdz * rdz + 1e-12)
        ux, uy, uz = rdx * inv_n, rdy * inv_n, rdz * inv_n

        # -------- ray / AABB([-SCALE, SCALE]^3) intersection (hoisted) ----------
        def slab(o, u):
            safe_u = jnp.where(jnp.abs(u) < 1e-8,
                               jnp.where(u >= 0.0, 1e-8, -1e-8), u)
            inv = pl.reciprocal(safe_u, approx=True)      # EUP, off the VPU
            t1 = (-SCALE - o) * inv
            t2 = (SCALE - o) * inv
            return jnp.minimum(t1, t2), jnp.maximum(t1, t2)

        ax1, ax2 = slab(ox, ux)
        ay1, ay2 = slab(oy, uy)
        az1, az2 = slab(oz, uz)
        t_near = jnp.maximum(jnp.maximum(jnp.maximum(ax1, ay1), az1), NEAR)
        t_far = jnp.minimum(jnp.minimum(ax2, ay2), az2)
        # rays that miss the box get delta == 0 -> alpha == 0 -> zero weights
        delta = jnp.maximum(t_far - t_near, 0.0) * inv_s          # (1, R)

        u_vec = jnp.concatenate([ux, uy, uz], axis=0)             # (3, R)
        o_vec = jnp.concatenate([ox, oy, oz], axis=0)             # (3, R)

        # -------- hoisted bases for the multi-res triangle-wave encoding --------
        # TODO(synk): NGP's multi-resolution *hash-grid* encoding (tcnn HashGrid
        # gather) has no clean dense Pallas equivalent; a deterministic
        # multi-resolution triangle-wave encoding of the same width stands in.
        # Per sample:  v = ((o + t*u) + SCALE)*(0.5/SCALE)*f + phase
        #                = o_t + t * u_t   with per-row constants folded below.
        u_rows, o_rows = [], []
        for lvl in range(L_FREQ):
            f = float(2 ** lvl)
            a = 0.5 * f / SCALE
            for ph in (0.0, 0.5):
                b = 0.5 * f + ph
                u_rows.append(u_vec * a)
                o_rows.append(o_vec * a + b)
        u_t = jnp.concatenate(u_rows, axis=0)                     # (ENC_DIM, R)
        o_t = jnp.concatenate(o_rows, axis=0)                     # (ENC_DIM, R)

        # -------- hoisted SH(deg4) direction encoding ---------------------------
        sh_bf = jnp.concatenate(_sh_deg4(ux, uy, uz),
                                axis=0).astype(jnp.bfloat16)      # (SH_DIM, R)

        w1 = w1_ref[...]       # (HID, ENC_DIM)        bf16
        w2 = w2_ref[...]       # (FEAT, HID)           bf16
        wr1 = wr1_ref[...]     # (HID, FEAT+SH_DIM)    bf16 (fused feat|SH layer)
        wr2 = wr2_ref[...]     # (HID, HID)            bf16
        wr3 = wr3_ref[...]     # (RGB_PAD, HID)        bf16 (rows 3..7 are zero)

        # -------- sample loop: MLP + volume rendering (carries, unrolled) -------
        def body(_, carry):
            T, rgb_acc, dep_acc, opa_acc, t_cur = carry

            # positional encoding of the sample position -> (ENC_DIM, R)
            v = o_t + t_cur * u_t
            enc = jnp.abs(2.0 * (v - jnp.floor(v)) - 1.0).astype(jnp.bfloat16)

            # density net (MXU, bf16 operands, f32 accumulation)
            h1 = jnp.maximum(
                jnp.dot(w1, enc, preferred_element_type=jnp.float32), 0.0)
            feat = jnp.dot(w2, h1.astype(jnp.bfloat16),
                           preferred_element_type=jnp.float32)    # (FEAT, R)
            # TruncExp forward, clamped to avoid fp32 overflow -> NaN downstream
            sigma = jnp.exp(jnp.minimum(feat[0:1, :], 15.0))      # (1, R)

            # rgb net: single fused dot over [feat | SH] (K = 32)
            rgb_in = jnp.concatenate([feat.astype(jnp.bfloat16), sh_bf], axis=0)
            h = jnp.maximum(
                jnp.dot(wr1, rgb_in, preferred_element_type=jnp.float32), 0.0)
            h = jnp.maximum(
                jnp.dot(wr2, h.astype(jnp.bfloat16),
                        preferred_element_type=jnp.float32), 0.0)
            logit = jnp.dot(wr3, h.astype(jnp.bfloat16),
                            preferred_element_type=jnp.float32)[0:3, :]  # (3, R)
            rgb_s = pl.reciprocal(1.0 + jnp.exp(-logit), approx=True)    # Sigmoid

            # alpha compositing (all f32)
            alpha = 1.0 - jnp.exp(-sigma * delta)                 # (1, R)
            wgt = T * alpha
            rgb_acc = rgb_acc + wgt * rgb_s
            dep_acc = dep_acc + wgt * t_cur
            opa_acc = opa_acc + wgt
            return (T * (1.0 - alpha), rgb_acc, dep_acc, opa_acc, t_cur + delta)

        init = (jnp.ones((1, rows), jnp.float32),                 # transmittance
                jnp.zeros((3, rows), jnp.float32),                # rgb
                jnp.zeros((1, rows), jnp.float32),                # depth
                jnp.zeros((1, rows), jnp.float32),                # opacity
                t_near + 0.5 * delta)                             # first sample t
        _, rgb_acc, dep_acc, opa_acc, _ = jax.lax.fori_loop(
            0, num_samples, body, init, unroll=True)

        # random_bg=False -> black background composite (no-op on rgb)
        rgb_ref[...] = rgb_acc
        depth_ref[...] = dep_acc
        opa_ref[...] = opa_acc

    return kernel


def _prep_kernel_params(params):
    """Model-layout f32 weights -> fused / transposed / bf16 kernel weights."""
    w1, w2, wr1a, wr1b, wr2, wr3 = params
    k1 = w1.T.astype(jnp.bfloat16)                                 # (HID, ENC_DIM)
    k2 = w2.T.astype(jnp.bfloat16)                                 # (FEAT, HID)
    kr1 = jnp.concatenate([wr1a, wr1b], axis=0).T.astype(jnp.bfloat16)  # (HID, 32)
    kr2 = wr2.T.astype(jnp.bfloat16)                               # (HID, HID)
    wr3p = jnp.concatenate(
        [wr3, jnp.zeros((HID, RGB_PAD - 3), wr3.dtype)], axis=1)   # (HID, RGB_PAD)
    kr3 = wr3p.T.astype(jnp.bfloat16)                              # (RGB_PAD, HID)
    return k1, k2, kr1, kr2, kr3


def render_rays(directions, poses, params, num_samples=NUM_SAMPLES):
    """Pallas equivalent of get_rays(...) + render(model, rays_o, rays_d, ...)."""
    n = directions.shape[0]
    n_pad = ((n + R_TILE - 1) // R_TILE) * R_TILE

    # lane-major ray layout: rays on the lane axis
    dirs_t = directions.astype(jnp.float32).T                      # (3, n)
    poses_t = poses.reshape(n, 12).astype(jnp.float32).T           # (12, n)
    if n_pad != n:                                                  # pad tail tile
        pad = n_pad - n
        dirs_t = jnp.pad(dirs_t, ((0, 0), (0, pad)), mode="edge")
        poses_t = jnp.pad(poses_t, ((0, 0), (0, pad)), mode="edge")

    k1, k2, kr1, kr2, kr3 = _prep_kernel_params(params)

    ray_map = lambda i: (0, i)
    rep_map = lambda i: (0, 0)

    in_specs = [
        pl.BlockSpec((3, R_TILE), ray_map),            # directions
        pl.BlockSpec((12, R_TILE), ray_map),           # poses (flattened c2w)
        pl.BlockSpec((HID, ENC_DIM), rep_map),         # density net layer 1
        pl.BlockSpec((FEAT, HID), rep_map),            # density net layer 2
        pl.BlockSpec((HID, FEAT + SH_DIM), rep_map),   # rgb layer 1 (fused feat|SH)
        pl.BlockSpec((HID, HID), rep_map),             # rgb layer 2
        pl.BlockSpec((RGB_PAD, HID), rep_map),         # rgb output layer (padded)
    ]
    out_specs = [
        pl.BlockSpec((3, R_TILE), ray_map),            # rgb    (lane-dense)
        pl.BlockSpec((1, R_TILE), ray_map),            # depth  (lane-dense)
        pl.BlockSpec((1, R_TILE), ray_map),            # opacity(lane-dense)
    ]
    out_shape = (
        jax.ShapeDtypeStruct((3, n_pad), jnp.float32),
        jax.ShapeDtypeStruct((1, n_pad), jnp.float32),
        jax.ShapeDtypeStruct((1, n_pad), jnp.float32),
    )

    fn = pl.pallas_call(
        _make_kernel(num_samples),
        out_shape=out_shape,
        grid_spec=pltpu.PrefetchScalarGridSpec(
            num_scalar_prefetch=0,
            grid=(n_pad // R_TILE,),
            in_specs=in_specs,
            out_specs=out_specs),
        compiler_params=pltpu.CompilerParams(
            dimension_semantics=("parallel",)),
    )
    rgb_t, dep_t, opa_t = fn(dirs_t, poses_t, k1, k2, kr1, kr2, kr3)
    # back to the module's (N, C) convention (cheap wrapper-side transpose)
    return rgb_t.T[:n], dep_t.T[:n], opa_t.T[:n]


def init_params(key):
    ks = jax.random.split(key, 6)

    def w(k, shape):
        return (jax.random.normal(k, shape, jnp.float32)
                / jnp.sqrt(float(shape[0]))).astype(jnp.float32)

    return (
        w(ks[0], (ENC_DIM, HID)),   # density net: enc -> hidden
        w(ks[1], (HID, FEAT)),      # density net: hidden -> 16 feats (feat[0]=sigma)
        w(ks[2], (FEAT, HID)),      # rgb net layer 1 (features part)
        w(ks[3], (SH_DIM, HID)),    # rgb net layer 1 (SH direction part)
        w(ks[4], (HID, HID)),       # rgb net layer 2
        w(ks[5], (HID, 3)),         # rgb net output
    )


if __name__ == "__main__":
    key = jax.random.PRNGKey(0)
    k_pose, k_img, k_pix, k_params = jax.random.split(key, 4)

    # Scene / dataset-style tables (what NeRFSystem holds as buffers).
    N_IMGS, H, W = 4, 16, 16
    N_RAYS = 1024                                    # 2 ray tiles of 512 (feeds both v7x TCs)

    # Per-pixel camera-space directions (like get_ray_directions, z = 1).
    ii, jj = jnp.meshgrid(jnp.arange(W), jnp.arange(H), indexing="xy")
    focal = float(W)
    dirs_table = jnp.stack(
        [(ii.reshape(-1).astype(jnp.float32) + 0.5 - W / 2) / focal,
         (jj.reshape(-1).astype(jnp.float32) + 0.5 - H / 2) / focal,
         jnp.ones((H * W,), jnp.float32)], axis=-1)             # (H*W, 3)

    # Camera-to-world poses: identity rotation, camera at z=-1.5 looking at the box.
    eye = jnp.broadcast_to(jnp.eye(3, dtype=jnp.float32), (N_IMGS, 3, 3))
    trans = jnp.concatenate(
        [0.1 * jax.random.normal(k_pose, (N_IMGS, 2), jnp.float32),
         jnp.full((N_IMGS, 1), -1.5, jnp.float32)], axis=-1)     # (N_IMGS, 3)
    poses_table = jnp.concatenate([eye, trans[:, :, None]], axis=-1)  # (N_IMGS,3,4)

    # batch = {'img_idxs': ..., 'pix_idxs': ...} -> gather (plain-JAX glue,
    # mirrors `self.poses[batch['img_idxs']]`, `self.directions[batch['pix_idxs']]`).
    img_idxs = jax.random.randint(k_img, (N_RAYS,), 0, N_IMGS)
    pix_idxs = jax.random.randint(k_pix, (N_RAYS,), 0, H * W)
    poses = poses_table[img_idxs]                    # (N_RAYS, 3, 4)
    directions = dirs_table[pix_idxs]                # (N_RAYS, 3)

    params = init_params(k_params)

    rgb, depth, opacity = render_rays(directions, poses, params)
    jax.block_until_ready((rgb, depth, opacity))

    assert rgb.shape == (N_RAYS, 3) and depth.shape == (N_RAYS, 1)
    assert opacity.shape == (N_RAYS, 1)
    assert bool(jnp.all(jnp.isfinite(rgb)))
    assert bool(jnp.all(jnp.isfinite(depth)))
    assert bool(jnp.all((opacity >= 0.0) & (opacity <= 1.0 + 1e-5)))
    print("KERNEL_OK")
</pallas_src>

<mosaic_0001>
module attributes {stable_mosaic.version = 11 : i64} {
  func.func @kernel(%arg0: i32, %arg1: memref<3x512xf32, #tpu.memory_space<vmem>>, %arg2: memref<12x512xf32, #tpu.memory_space<vmem>>, %arg3: memref<64x24xbf16, #tpu.memory_space<vmem>>, %arg4: memref<16x64xbf16, #tpu.memory_space<vmem>>, %arg5: memref<64x32xbf16, #tpu.memory_space<vmem>>, %arg6: memref<64x64xbf16, #tpu.memory_space<vmem>>, %arg7: memref<8x64xbf16, #tpu.memory_space<vmem>>, %arg8: memref<3x512xf32, #tpu.memory_space<vmem>>, %arg9: memref<1x512xf32, #tpu.memory_space<vmem>>, %arg10: memref<1x512xf32, #tpu.memory_space<vmem>>) attributes {dimension_semantics = [#tpu.dimension_semantics<parallel>], iteration_bounds = array<i64: 2>, scalar_prefetch = 0 : i64, scratch_operands = 0 : i64, tpu.core_type = #tpu.core_type<tc>, window_params = [{transform_indices = @transform_0, window_bounds = array<i64: 3, 512>}, {transform_indices = @transform_1, window_bounds = array<i64: 12, 512>}, {pipeline_mode = #tpu.pipeline_mode<synchronous>, transform_indices = @transform_2, window_bounds = array<i64: 64, 24>}, {pipeline_mode = #tpu.pipeline_mode<synchronous>, transform_indices = @transform_3, window_bounds = array<i64: 16, 64>}, {pipeline_mode = #tpu.pipeline_mode<synchronous>, transform_indices = @transform_4, window_bounds = array<i64: 64, 32>}, {pipeline_mode = #tpu.pipeline_mode<synchronous>, transform_indices = @transform_5, window_bounds = array<i64: 64, 64>}, {pipeline_mode = #tpu.pipeline_mode<synchronous>, transform_indices = @transform_6, window_bounds = array<i64: 8, 64>}, {transform_indices = @transform_7, window_bounds = array<i64: 3, 512>}, {transform_indices = @transform_8, window_bounds = array<i64: 1, 512>}, {transform_indices = @transform_9, window_bounds = array<i64: 1, 512>}]} {
    %c0 = arith.constant 0 : index
    %c0_0 = arith.constant 0 : index
    %0 = vector.load %arg1[%c0, %c0_0] : memref<3x512xf32, #tpu.memory_space<vmem>>, vector<3x512xf32>
    %c0_1 = arith.constant 0 : index
    %c0_2 = arith.constant 0 : index
    %1 = vector.load %arg2[%c0_1, %c0_2] : memref<12x512xf32, #tpu.memory_space<vmem>>, vector<12x512xf32>
    %2 = vector.extract_strided_slice %0 {offsets = [0, 0], sizes = [1, 512], strides = [1, 1]} : vector<3x512xf32> to vector<1x512xf32>
    %3 = vector.extract_strided_slice %0 {offsets = [1, 0], sizes = [1, 512], strides = [1, 1]} : vector<3x512xf32> to vector<1x512xf32>
    %4 = vector.extract_strided_slice %0 {offsets = [2, 0], sizes = [1, 512], strides = [1, 1]} : vector<3x512xf32> to vector<1x512xf32>
    %5 = vector.extract_strided_slice %1 {offsets = [0, 0], sizes = [1, 512], strides = [1, 1]} : vector<12x512xf32> to vector<1x512xf32>
    %6 = arith.mulf %5, %2 : vector<1x512xf32>
    %7 = vector.extract_strided_slice %1 {offsets = [1, 0], sizes = [1, 512], strides = [1, 1]} : vector<12x512xf32> to vector<1x512xf32>
    %8 = arith.mulf %7, %3 : vector<1x512xf32>
    %9 = arith.addf %6, %8 : vector<1x512xf32>
    %10 = vector.extract_strided_slice %1 {offsets = [2, 0], sizes = [1, 512], strides = [1, 1]} : vector<12x512xf32> to vector<1x512xf32>
    %11 = arith.mulf %10, %4 : vector<1x512xf32>
    %12 = arith.addf %9, %11 : vector<1x512xf32>
    %13 = vector.extract_strided_slice %1 {offsets = [4, 0], sizes = [1, 512], strides = [1, 1]} : vector<12x512xf32> to vector<1x512xf32>
    %14 = arith.mulf %13, %2 : vector<1x512xf32>
    %15 = vector.extract_strided_slice %1 {offsets = [5, 0], sizes = [1, 512], strides = [1, 1]} : vector<12x512xf32> to vector<1x512xf32>
    %16 = arith.mulf %15, %3 : vector<1x512xf32>
    %17 = arith.addf %14, %16 : vector<1x512xf32>
    %18 = vector.extract_strided_slice %1 {offsets = [6, 0], sizes = [1, 512], strides = [1, 1]} : vector<12x512xf32> to vector<1x512xf32>
    %19 = arith.mulf %18, %4 : vector<1x512xf32>
    %20 = arith.addf %17, %19 : vector<1x512xf32>
    %21 = vector.extract_strided_slice %1 {offsets = [8, 0], sizes = [1, 512], strides = [1, 1]} : vector<12x512xf32> to vector<1x512xf32>
    %22 = arith.mulf %21, %2 : vector<1x512xf32>
    %23 = vector.extract_strided_slice %1 {offsets = [9, 0], sizes = [1, 512], strides = [1, 1]} : vector<12x512xf32> to vector<1x512xf32>
    %24 = arith.mulf %23, %3 : vector<1x512xf32>
    %25 = arith.addf %22, %24 : vector<1x512xf32>
    %26 = vector.extract_strided_slice %1 {offsets = [10, 0], sizes = [1, 512], strides = [1, 1]} : vector<12x512xf32> to vector<1x512xf32>
    %27 = arith.mulf %26, %4 : vector<1x512xf32>
    %28 = arith.addf %25, %27 : vector<1x512xf32>
    %29 = vector.extract_strided_slice %1 {offsets = [3, 0], sizes = [1, 512], strides = [1, 1]} : vector<12x512xf32> to vector<1x512xf32>
    %30 = vector.extract_strided_slice %1 {offsets = [7, 0], sizes = [1, 512], strides = [1, 1]} : vector<12x512xf32> to vector<1x512xf32>
    %31 = vector.extract_strided_slice %1 {offsets = [11, 0], sizes = [1, 512], strides = [1, 1]} : vector<12x512xf32> to vector<1x512xf32>
    %32 = arith.mulf %12, %12 : vector<1x512xf32>
    %33 = arith.mulf %20, %20 : vector<1x512xf32>
    %34 = arith.addf %32, %33 : vector<1x512xf32>
    %35 = arith.mulf %28, %28 : vector<1x512xf32>
    %36 = arith.addf %34, %35 : vector<1x512xf32>
    %cst = arith.constant 9.99999996E-13 : f32
    %37 = vector.broadcast %cst : f32 to vector<1x512xf32>
    %38 = arith.addf %36, %37 : vector<1x512xf32>
    %39 = math.rsqrt %38 : vector<1x512xf32>
    %40 = arith.mulf %12, %39 : vector<1x512xf32>
    %41 = arith.mulf %20, %39 : vector<1x512xf32>
    %42 = arith.mulf %28, %39 : vector<1x512xf32>
    %43 = math.absf %40 : vector<1x512xf32>
    %cst_3 = arith.constant 9.99999993E-9 : f32
    %44 = vector.broadcast %cst_3 : f32 to vector<1x512xf32>
    %45 = arith.cmpf olt, %43, %44 : vector<1x512xf32>
    %cst_4 = arith.constant 0.000000e+00 : f32
    %46 = vector.broadcast %cst_4 : f32 to vector<1x512xf32>
    %47 = arith.cmpf oge, %40, %46 : vector<1x512xf32>
    %cst_5 = arith.constant 9.99999993E-9 : f32
    %cst_6 = arith.constant -9.99999993E-9 : f32
    %48 = vector.broadcast %cst_5 : f32 to vector<1x512xf32>
    %49 = vector.broadcast %cst_6 : f32 to vector<1x512xf32>
    %50 = arith.select %47, %48, %49 : vector<1x512xi1>, vector<1x512xf32>
    %51 = arith.select %45, %50, %40 : vector<1x512xi1>, vector<1x512xf32>
    %52 = tpu.reciprocal %51 {approx = true} : vector<1x512xf32> -> vector<1x512xf32>
    %cst_7 = arith.constant -5.000000e-01 : f32
    %53 = vector.broadcast %cst_7 : f32 to vector<1x512xf32>
    %54 = arith.subf %53, %29 : vector<1x512xf32>
    %55 = arith.mulf %54, %52 : vector<1x512xf32>
    %cst_8 = arith.constant 5.000000e-01 : f32
    %56 = vector.broadcast %cst_8 : f32 to vector<1x512xf32>
    %57 = arith.subf %56, %29 : vector<1x512xf32>
    %58 = arith.mulf %57, %52 : vector<1x512xf32>
    %59 = arith.minimumf %55, %58 : vector<1x512xf32>
    %60 = arith.maximumf %55, %58 : vector<1x512xf32>
    %61 = math.absf %41 : vector<1x512xf32>
    %cst_9 = arith.constant 9.99999993E-9 : f32
    %62 = vector.broadcast %cst_9 : f32 to vector<1x512xf32>
    %63 = arith.cmpf olt, %61, %62 : vector<1x512xf32>
    %cst_10 = arith.constant 0.000000e+00 : f32
    %64 = vector.broadcast %cst_10 : f32 to vector<1x512xf32>
    %65 = arith.cmpf oge, %41, %64 : vector<1x512xf32>
    %cst_11 = arith.constant 9.99999993E-9 : f32
    %cst_12 = arith.constant -9.99999993E-9 : f32
    %66 = vector.broadcast %cst_11 : f32 to vector<1x512xf32>
    %67 = vector.broadcast %cst_12 : f32 to vector<1x512xf32>
    %68 = arith.select %65, %66, %67 : vector<1x512xi1>, vector<1x512xf32>
    %69 = arith.select %63, %68, %41 : vector<1x512xi1>, vector<1x512xf32>
    %70 = tpu.reciprocal %69 {approx = true} : vector<1x512xf32> -> vector<1x512xf32>
    %cst_13 = arith.constant -5.000000e-01 : f32
    %71 = vector.broadcast %cst_13 : f32 to vector<1x512xf32>
    %72 = arith.subf %71, %30 : vector<1x512xf32>
    %73 = arith.mulf %72, %70 : vector<1x512xf32>
    %cst_14 = arith.constant 5.000000e-01 : f32
    %74 = vector.broadcast %cst_14 : f32 to vector<1x512xf32>
    %75 = arith.subf %74, %30 : vector<1x512xf32>
    %76 = arith.mulf %75, %70 : vector<1x512xf32>
    %77 = arith.minimumf %73, %76 : vector<1x512xf32>
    %78 = arith.maximumf %73, %76 : vector<1x512xf32>
    %79 = math.absf %42 : vector<1x512xf32>
    %cst_15 = arith.constant 9.99999993E-9 : f32
    %80 = vector.broadcast %cst_15 : f32 to vector<1x512xf32>
    %81 = arith.cmpf olt, %79, %80 : vector<1x512xf32>
    %cst_16 = arith.constant 0.000000e+00 : f32
    %82 = vector.broadcast %cst_16 : f32 to vector<1x512xf32>
    %83 = arith.cmpf oge, %42, %82 : vector<1x512xf32>
    %cst_17 = arith.constant 9.99999993E-9 : f32
    %cst_18 = arith.constant -9.99999993E-9 : f32
    %84 = vector.broadcast %cst_17 : f32 to vector<1x512xf32>
    %85 = vector.broadcast %cst_18 : f32 to vector<1x512xf32>
    %86 = arith.select %83, %84, %85 : vector<1x512xi1>, vector<1x512xf32>
    %87 = arith.select %81, %86, %42 : vector<1x512xi1>, vector<1x512xf32>
    %88 = tpu.reciprocal %87 {approx = true} : vector<1x512xf32> -> vector<1x512xf32>
    %cst_19 = arith.constant -5.000000e-01 : f32
    %89 = vector.broadcast %cst_19 : f32 to vector<1x512xf32>
    %90 = arith.subf %89, %31 : vector<1x512xf32>
    %91 = arith.mulf %90, %88 : vector<1x512xf32>
    %cst_20 = arith.constant 5.000000e-01 : f32
    %92 = vector.broadcast %cst_20 : f32 to vector<1x512xf32>
    %93 = arith.subf %92, %31 : vector<1x512xf32>
    %94 = arith.mulf %93, %88 : vector<1x512xf32>
    %95 = arith.minimumf %91, %94 : vector<1x512xf32>
    %96 = arith.maximumf %91, %94 : vector<1x512xf32>
    %97 = arith.maximumf %59, %77 : vector<1x512xf32>
    %98 = arith.maximumf %97, %95 : vector<1x512xf32>
    %cst_21 = arith.constant 5.000000e-02 : f32
    %99 = vector.broadcast %cst_21 : f32 to vector<1x512xf32>
    %100 = arith.maximumf %98, %99 : vector<1x512xf32>
    %101 = arith.minimumf %60, %78 : vector<1x512xf32>
    %102 = arith.minimumf %101, %96 : vector<1x512xf32>
    %103 = arith.subf %102, %100 : vector<1x512xf32>
    %cst_22 = arith.constant 0.000000e+00 : f32
    %104 = vector.broadcast %cst_22 : f32 to vector<1x512xf32>
    %105 = arith.maximumf %103, %104 : vector<1x512xf32>
    %cst_23 = arith.constant 1.250000e-01 : f32
    %106 = vector.broadcast %cst_23 : f32 to vector<1x512xf32>
    %107 = arith.mulf %105, %106 : vector<1x512xf32>
    %108 = tpu.concatenate %40, %41, %42 in 0 : vector<1x512xf32>, vector<1x512xf32>, vector<1x512xf32> -> vector<3x512xf32>
    %109 = tpu.concatenate %29, %30, %31 in 0 : vector<1x512xf32>, vector<1x512xf32>, vector<1x512xf32> -> vector<3x512xf32>
    %cst_24 = arith.constant 1.000000e+00 : f32
    %110 = vector.broadcast %cst_24 : f32 to vector<3x512xf32>
    %111 = arith.mulf %108, %110 : vector<3x512xf32>
    %cst_25 = arith.constant 1.000000e+00 : f32
    %112 = vector.broadcast %cst_25 : f32 to vector<3x512xf32>
    %113 = arith.mulf %109, %112 : vector<3x512xf32>
    %cst_26 = arith.constant 5.000000e-01 : f32
    %114 = vector.broadcast %cst_26 : f32 to vector<3x512xf32>
    %115 = arith.addf %113, %114 : vector<3x512xf32>
    %cst_27 = arith.constant 1.000000e+00 : f32
    %116 = vector.broadcast %cst_27 : f32 to vector<3x512xf32>
    %117 = arith.mulf %108, %116 : vector<3x512xf32>
    %cst_28 = arith.constant 1.000000e+00 : f32
    %118 = vector.broadcast %cst_28 : f32 to vector<3x512xf32>
    %119 = arith.mulf %109, %118 : vector<3x512xf32>
    %cst_29 = arith.constant 1.000000e+00 : f32
    %120 = vector.broadcast %cst_29 : f32 to vector<3x512xf32>
    %121 = arith.addf %119, %120 : vector<3x512xf32>
    %cst_30 = arith.constant 2.000000e+00 : f32
    %122 = vector.broadcast %cst_30 : f32 to vector<3x512xf32>
    %123 = arith.mulf %108, %122 : vector<3x512xf32>
    %cst_31 = arith.constant 2.000000e+00 : f32
    %124 = vector.broadcast %cst_31 : f32 to vector<3x512xf32>
    %125 = arith.mulf %109, %124 : vector<3x512xf32>
    %cst_32 = arith.constant 1.000000e+00 : f32
    %126 = vector.broadcast %cst_32 : f32 to vector<3x512xf32>
    %127 = arith.addf %125, %126 : vector<3x512xf32>
    %cst_33 = arith.constant 2.000000e+00 : f32
    %128 = vector.broadcast %cst_33 : f32 to vector<3x512xf32>
    %129 = arith.mulf %108, %128 : vector<3x512xf32>
    %cst_34 = arith.constant 2.000000e+00 : f32
    %130 = vector.broadcast %cst_34 : f32 to vector<3x512xf32>
    %131 = arith.mulf %109, %130 : vector<3x512xf32>
    %cst_35 = arith.constant 1.500000e+00 : f32
    %132 = vector.broadcast %cst_35 : f32 to vector<3x512xf32>
    %133 = arith.addf %131, %132 : vector<3x512xf32>
    %cst_36 = arith.constant 4.000000e+00 : f32
    %134 = vector.broadcast %cst_36 : f32 to vector<3x512xf32>
    %135 = arith.mulf %108, %134 : vector<3x512xf32>
    %cst_37 = arith.constant 4.000000e+00 : f32
    %136 = vector.broadcast %cst_37 : f32 to vector<3x512xf32>
    %137 = arith.mulf %109, %136 : vector<3x512xf32>
    %cst_38 = arith.constant 2.000000e+00 : f32
    %138 = vector.broadcast %cst_38 : f32 to vector<3x512xf32>
    %139 = arith.addf %137, %138 : vector<3x512xf32>
    %cst_39 = arith.constant 4.000000e+00 : f32
    %140 = vector.broadcast %cst_39 : f32 to vector<3x512xf32>
    %141 = arith.mulf %108, %140 : vector<3x512xf32>
    %cst_40 = arith.constant 4.000000e+00 : f32
    %142 = vector.broadcast %cst_40 : f32 to vector<3x512xf32>
    %143 = arith.mulf %109, %142 : vector<3x512xf32>
    %cst_41 = arith.constant 2.500000e+00 : f32
    %144 = vector.broadcast %cst_41 : f32 to vector<3x512xf32>
    %145 = arith.addf %143, %144 : vector<3x512xf32>
    %cst_42 = arith.constant 8.000000e+00 : f32
    %146 = vector.broadcast %cst_42 : f32 to vector<3x512xf32>
    %147 = arith.mulf %108, %146 : vector<3x512xf32>
    %cst_43 = arith.constant 8.000000e+00 : f32
    %148 = vector.broadcast %cst_43 : f32 to vector<3x512xf32>
    %149 = arith.mulf %109, %148 : vector<3x512xf32>
    %cst_44 = arith.constant 4.000000e+00 : f32
    %150 = vector.broadcast %cst_44 : f32 to vector<3x512xf32>
    %151 = arith.addf %149, %150 : vector<3x512xf32>
    %cst_45 = arith.constant 8.000000e+00 : f32
    %152 = vector.broadcast %cst_45 : f32 to vector<3x512xf32>
    %153 = arith.mulf %108, %152 : vector<3x512xf32>
    %cst_46 = arith.constant 8.000000e+00 : f32
    %154 = vector.broadcast %cst_46 : f32 to vector<3x512xf32>
    %155 = arith.mulf %109, %154 : vector<3x512xf32>
    %cst_47 = arith.constant 4.500000e+00 : f32
    %156 = vector.broadcast %cst_47 : f32 to vector<3x512xf32>
    %157 = arith.addf %155, %156 : vector<3x512xf32>
    %158 = tpu.concatenate %111, %117, %123, %129, %135, %141, %147, %153 in 0 : vector<3x512xf32>, vector<3x512xf32>, vector<3x512xf32>, vector<3x512xf32>, vector<3x512xf32>, vector<3x512xf32>, vector<3x512xf32>, vector<3x512xf32> -> vector<24x512xf32>
    %159 = tpu.concatenate %115, %121, %127, %133, %139, %145, %151, %157 in 0 : vector<3x512xf32>, vector<3x512xf32>, vector<3x512xf32>, vector<3x512xf32>, vector<3x512xf32>, vector<3x512xf32>, vector<3x512xf32>, vector<3x512xf32> -> vector<24x512xf32>
    %160 = arith.mulf %40, %40 : vector<1x512xf32>
    %161 = arith.mulf %41, %41 : vector<1x512xf32>
    %162 = arith.mulf %42, %42 : vector<1x512xf32>
    %163 = arith.mulf %40, %41 : vector<1x512xf32>
    %164 = arith.mulf %41, %42 : vector<1x512xf32>
    %165 = arith.mulf %40, %42 : vector<1x512xf32>
    %cst_48 = arith.constant 1.000000e+00 : f32
    %166 = vector.broadcast %cst_48 : f32 to vector<1x512xf32>
    %cst_49 = arith.constant 0.282094806 : f32
    %167 = vector.broadcast %cst_49 : f32 to vector<1x512xf32>
    %168 = arith.mulf %167, %166 : vector<1x512xf32>
    %cst_50 = arith.constant -0.488602519 : f32
    %169 = vector.broadcast %cst_50 : f32 to vector<1x512xf32>
    %170 = arith.mulf %169, %41 : vector<1x512xf32>
    %cst_51 = arith.constant 0.488602519 : f32
    %171 = vector.broadcast %cst_51 : f32 to vector<1x512xf32>
    %172 = arith.mulf %171, %42 : vector<1x512xf32>
    %cst_52 = arith.constant -0.488602519 : f32
    %173 = vector.broadcast %cst_52 : f32 to vector<1x512xf32>
    %174 = arith.mulf %173, %40 : vector<1x512xf32>
    %cst_53 = arith.constant 1.09254849 : f32
    %175 = vector.broadcast %cst_53 : f32 to vector<1x512xf32>
    %176 = arith.mulf %175, %163 : vector<1x512xf32>
    %cst_54 = arith.constant -1.09254849 : f32
    %177 = vector.broadcast %cst_54 : f32 to vector<1x512xf32>
    %178 = arith.mulf %177, %164 : vector<1x512xf32>
    %cst_55 = arith.constant 0.946174681 : f32
    %179 = vector.broadcast %cst_55 : f32 to vector<1x512xf32>
    %180 = arith.mulf %179, %162 : vector<1x512xf32>
    %cst_56 = arith.constant 0.31539157 : f32
    %181 = vector.broadcast %cst_56 : f32 to vector<1x512xf32>
    %182 = arith.subf %180, %181 : vector<1x512xf32>
    %cst_57 = arith.constant -1.09254849 : f32
    %183 = vector.broadcast %cst_57 : f32 to vector<1x512xf32>
    %184 = arith.mulf %183, %165 : vector<1x512xf32>
    %185 = arith.subf %160, %161 : vector<1x512xf32>
    %cst_58 = arith.constant 0.546274245 : f32
    %186 = vector.broadcast %cst_58 : f32 to vector<1x512xf32>
    %187 = arith.mulf %186, %185 : vector<1x512xf32>
    %cst_59 = arith.constant -0.590043604 : f32
    %188 = vector.broadcast %cst_59 : f32 to vector<1x512xf32>
    %189 = arith.mulf %188, %41 : vector<1x512xf32>
    %cst_60 = arith.constant 3.000000e+00 : f32
    %190 = vector.broadcast %cst_60 : f32 to vector<1x512xf32>
    %191 = arith.mulf %190, %160 : vector<1x512xf32>
    %192 = arith.subf %191, %161 : vector<1x512xf32>
    %193 = arith.mulf %189, %192 : vector<1x512xf32>
    %cst_61 = arith.constant 2.89061141 : f32
    %194 = vector.broadcast %cst_61 : f32 to vector<1x512xf32>
    %195 = arith.mulf %194, %163 : vector<1x512xf32>
    %196 = arith.mulf %195, %42 : vector<1x512xf32>
    %cst_62 = arith.constant 0.457045794 : f32
    %197 = vector.broadcast %cst_62 : f32 to vector<1x512xf32>
    %198 = arith.mulf %197, %41 : vector<1x512xf32>
    %cst_63 = arith.constant 5.000000e+00 : f32
    %199 = vector.broadcast %cst_63 : f32 to vector<1x512xf32>
    %200 = arith.mulf %199, %162 : vector<1x512xf32>
    %cst_64 = arith.constant 1.000000e+00 : f32
    %201 = vector.broadcast %cst_64 : f32 to vector<1x512xf32>
    %202 = arith.subf %201, %200 : vector<1x512xf32>
    %203 = arith.mulf %198, %202 : vector<1x512xf32>
    %cst_65 = arith.constant 0.373176336 : f32
    %204 = vector.broadcast %cst_65 : f32 to vector<1x512xf32>
    %205 = arith.mulf %204, %42 : vector<1x512xf32>
    %cst_66 = arith.constant 5.000000e+00 : f32
    %206 = vector.broadcast %cst_66 : f32 to vector<1x512xf32>
    %207 = arith.mulf %206, %162 : vector<1x512xf32>
    %cst_67 = arith.constant 3.000000e+00 : f32
    %208 = vector.broadcast %cst_67 : f32 to vector<1x512xf32>
    %209 = arith.subf %207, %208 : vector<1x512xf32>
    %210 = arith.mulf %205, %209 : vector<1x512xf32>
    %cst_68 = arith.constant 0.457045794 : f32
    %211 = vector.broadcast %cst_68 : f32 to vector<1x512xf32>
    %212 = arith.mulf %211, %40 : vector<1x512xf32>
    %cst_69 = arith.constant 5.000000e+00 : f32
    %213 = vector.broadcast %cst_69 : f32 to vector<1x512xf32>
    %214 = arith.mulf %213, %162 : vector<1x512xf32>
    %cst_70 = arith.constant 1.000000e+00 : f32
    %215 = vector.broadcast %cst_70 : f32 to vector<1x512xf32>
    %216 = arith.subf %215, %214 : vector<1x512xf32>
    %217 = arith.mulf %212, %216 : vector<1x512xf32>
    %cst_71 = arith.constant 1.44530571 : f32
    %218 = vector.broadcast %cst_71 : f32 to vector<1x512xf32>
    %219 = arith.mulf %218, %42 : vector<1x512xf32>
    %220 = arith.subf %160, %161 : vector<1x512xf32>
    %221 = arith.mulf %219, %220 : vector<1x512xf32>
    %cst_72 = arith.constant 0.590043604 : f32
    %222 = vector.broadcast %cst_72 : f32 to vector<1x512xf32>
    %223 = arith.mulf %222, %40 : vector<1x512xf32>
    %cst_73 = arith.constant 3.000000e+00 : f32
    %224 = vector.broadcast %cst_73 : f32 to vector<1x512xf32>
    %225 = arith.mulf %224, %161 : vector<1x512xf32>
    %226 = arith.subf %160, %225 : vector<1x512xf32>
    %227 = arith.mulf %223, %226 : vector<1x512xf32>
    %228 = tpu.concatenate %168, %170, %172, %174, %176, %178, %182, %184, %187, %193, %196, %203, %210, %217, %221, %227 in 0 : vector<1x512xf32>, vector<1x512xf32>, vector<1x512xf32>, vector<1x512xf32>, vector<1x512xf32>, vector<1x512xf32>, vector<1x512xf32>, vector<1x512xf32>, vector<1x512xf32>, vector<1x512xf32>, vector<1x512xf32>, vector<1x512xf32>, vector<1x512xf32>, vector<1x512xf32>, vector<1x512xf32>, vector<1x512xf32> -> vector<16x512xf32>
    %229 = arith.truncf %228 : vector<16x512xf32> to vector<16x512xbf16>
    %c0_74 = arith.constant 0 : index
    %c0_75 = arith.constant 0 : index
    %230 = vector.load %arg3[%c0_74, %c0_75] : memref<64x24xbf16, #tpu.memory_space<vmem>>, vector<64x24xbf16>
    %c0_76 = arith.constant 0 : index
    %c0_77 = arith.constant 0 : index
    %231 = vector.load %arg4[%c0_76, %c0_77] : memref<16x64xbf16, #tpu.memory_space<vmem>>, vector<16x64xbf16>
    %c0_78 = arith.constant 0 : index
    %c0_79 = arith.constant 0 : index
    %232 = vector.load %arg5[%c0_78, %c0_79] : memref<64x32xbf16, #tpu.memory_space<vmem>>, vector<64x32xbf16>
    %c0_80 = arith.constant 0 : index
    %c0_81 = arith.constant 0 : index
    %233 = vector.load %arg6[%c0_80, %c0_81] : memref<64x64xbf16, #tpu.memory_space<vmem>>, vector<64x64xbf16>
    %c0_82 = arith.constant 0 : index
    %c0_83 = arith.constant 0 : index
    %234 = vector.load %arg7[%c0_82, %c0_83] : memref<8x64xbf16, #tpu.memory_space<vmem>>, vector<8x64xbf16>
    %cst_84 = arith.constant 1.000000e+00 : f32
    %235 = vector.broadcast %cst_84 : f32 to vector<1x512xf32>
    %cst_85 = arith.constant 0.000000e+00 : f32
    %236 = vector.broadcast %cst_85 : f32 to vector<3x512xf32>
    %cst_86 = arith.constant 0.000000e+00 : f32
    %237 = vector.broadcast %cst_86 : f32 to vector<1x512xf32>
    %cst_87 = arith.constant 0.000000e+00 : f32
    %238 = vector.broadcast %cst_87 : f32 to vector<1x512xf32>
    %cst_88 = arith.constant 5.000000e-01 : f32
    %239 = vector.broadcast %cst_88 : f32 to vector<1x512xf32>
    %240 = arith.mulf %239, %107 : vector<1x512xf32>
    %241 = arith.addf %100, %240 : vector<1x512xf32>
    %c0_i32 = arith.constant 0 : i32
    %242 = vector.broadcast %241 : vector<1x512xf32> to vector<24x512xf32>
    %243 = arith.mulf %242, %158 : vector<24x512xf32>
    %244 = arith.addf %159, %243 : vector<24x512xf32>
    %245 = math.floor %244 : vector<24x512xf32>
    %246 = arith.subf %244, %245 : vector<24x512xf32>
    %cst_89 = arith.constant 2.000000e+00 : f32
    %247 = vector.broadcast %cst_89 : f32 to vector<24x512xf32>
    %248 = arith.mulf %247, %246 : vector<24x512xf32>
    %cst_90 = arith.constant 1.000000e+00 : f32
    %249 = vector.broadcast %cst_90 : f32 to vector<24x512xf32>
    %250 = arith.subf %248, %249 : vector<24x512xf32>
    %251 = math.absf %250 : vector<24x512xf32>
    %252 = arith.truncf %251 : vector<24x512xf32> to vector<24x512xbf16>
    %cst_91 = arith.constant dense<0.000000e+00> : vector<64x512xf32>
    %253 = tpu.matmul %230, %252, %cst_91 {dimension_numbers = #tpu.dot_dimension_numbers<[1], [0], [0], [1], [0, 0, 1, 1], [], []>} : vector<64x24xbf16>, vector<24x512xbf16>, vector<64x512xf32> -> vector<64x512xf32>
    %cst_92 = arith.constant 0.000000e+00 : f32
    %254 = vector.broadcast %cst_92 : f32 to vector<64x512xf32>
    %255 = arith.maximumf %253, %254 : vector<64x512xf32>
    %256 = arith.truncf %255 : vector<64x512xf32> to vector<64x512xbf16>
    %cst_93 = arith.constant dense<0.000000e+00> : vector<16x512xf32>
    %257 = tpu.matmul %231, %256, %cst_93 {dimension_numbers = #tpu.dot_dimension_numbers<[1], [0], [0], [1], [0, 0, 1, 1], [], []>} : vector<16x64xbf16>, vector<64x512xbf16>, vector<16x512xf32> -> vector<16x512xf32>
    %258 = vector.extract_strided_slice %257 {offsets = [0, 0], sizes = [1, 512], strides = [1, 1]} : vector<16x512xf32> to vector<1x512xf32>
    %cst_94 = arith.constant 1.500000e+01 : f32
    %259 = vector.broadcast %cst_94 : f32 to vector<1x512xf32>
    %260 = arith.minimumf %258, %259 : vector<1x512xf32>
    %261 = math.exp %260 : vector<1x512xf32>
    %262 = arith.truncf %257 : vector<16x512xf32> to vector<16x512xbf16>
    %263 = tpu.concatenate %262, %229 in 0 : vector<16x512xbf16>, vector<16x512xbf16> -> vector<32x512xbf16>
    %cst_95 = arith.constant dense<0.000000e+00> : vector<64x512xf32>
    %264 = tpu.matmul %232, %263, %cst_95 {dimension_numbers = #tpu.dot_dimension_numbers<[1], [0], [0], [1], [0, 0, 1, 1], [], []>} : vector<64x32xbf16>, vector<32x512xbf16>, vector<64x512xf32> -> vector<64x512xf32>
    %cst_96 = arith.constant 0.000000e+00 : f32
    %265 = vector.broadcast %cst_96 : f32 to vector<64x512xf32>
    %266 = arith.maximumf %264, %265 : vector<64x512xf32>
    %267 = arith.truncf %266 : vector<64x512xf32> to vector<64x512xbf16>
    %cst_97 = arith.constant dense<0.000000e+00> : vector<64x512xf32>
    %268 = tpu.matmul %233, %267, %cst_97 {dimension_numbers = #tpu.dot_dimension_numbers<[1], [0], [0], [1], [0, 0, 1, 1], [], []>} : vector<64x64xbf16>, vector<64x512xbf16>, vector<64x512xf32> -> vector<64x512xf32>
    %cst_98 = arith.constant 0.000000e+00 : f32
    %269 = vector.broadcast %cst_98 : f32 to vector<64x512xf32>
    %270 = arith.maximumf %268, %269 : vector<64x512xf32>
    %271 = arith.truncf %270 : vector<64x512xf32> to vector<64x512xbf16>
    %cst_99 = arith.constant dense<0.000000e+00> : vector<8x512xf32>
    %272 = tpu.matmul %234, %271, %cst_99 {dimension_numbers = #tpu.dot_dimension_numbers<[1], [0], [0], [1], [0, 0, 1, 1], [], []>} : vector<8x64xbf16>, vector<64x512xbf16>, vector<8x512xf32> -> vector<8x512xf32>
    %273 = vector.extract_strided_slice %272 {offsets = [0, 0], sizes = [3, 512], strides = [1, 1]} : vector<8x512xf32> to vector<3x512xf32>
    %cst_100 = arith.constant 0.000000e+00 : f32
    %274 = vector.broadcast %cst_100 : f32 to vector<3x512xf32>
    %275 = arith.subf %274, %273 : vector<3x512xf32>
    %276 = math.exp %275 : vector<3x512xf32>
    %cst_101 = arith.constant 1.000000e+00 : f32
    %277 = vector.broadcast %cst_101 : f32 to vector<3x512xf32>
    %278 = arith.addf %277, %276 : vector<3x512xf32>
    %279 = tpu.reciprocal %278 {approx = true} : vector<3x512xf32> -> vector<3x512xf32>
    %cst_102 = arith.constant 0.000000e+00 : f32
    %280 = vector.broadcast %cst_102 : f32 to vector<1x512xf32>
    %281 = arith.subf %280, %261 : vector<1x512xf32>
    %282 = arith.mulf %281, %107 : vector<1x512xf32>
    %283 = math.exp %282 : vector<1x512xf32>
    %cst_103 = arith.constant 1.000000e+00 : f32
    %284 = vector.broadcast %cst_103 : f32 to vector<1x512xf32>
    %285 = arith.subf %284, %283 : vector<1x512xf32>
    %286 = arith.mulf %235, %285 : vector<1x512xf32>
    %287 = vector.broadcast %286 : vector<1x512xf32> to vector<3x512xf32>
    %288 = arith.mulf %287, %279 : vector<3x512xf32>
    %289 = arith.addf %236, %288 : vector<3x512xf32>
    %290 = arith.mulf %286, %241 : vector<1x512xf32>
    %291 = arith.addf %237, %290 : vector<1x512xf32>
    %292 = arith.addf %238, %286 : vector<1x512xf32>
    %cst_104 = arith.constant 1.000000e+00 : f32
    %293 = vector.broadcast %cst_104 : f32 to vector<1x512xf32>
    %294 = arith.subf %293, %285 : vector<1x512xf32>
    %295 = arith.mulf %235, %294 : vector<1x512xf32>
    %296 = arith.addf %241, %107 : vector<1x512xf32>
    %c1_i32 = arith.constant 1 : i32
    %297 = vector.broadcast %296 : vector<1x512xf32> to vector<24x512xf32>
    %298 = arith.mulf %297, %158 : vector<24x512xf32>
    %299 = arith.addf %159, %298 : vector<24x512xf32>
    %300 = math.floor %299 : vector<24x512xf32>
    %301 = arith.subf %299, %300 : vector<24x512xf32>
    %cst_105 = arith.constant 2.000000e+00 : f32
    %302 = vector.broadcast %cst_105 : f32 to vector<24x512xf32>
    %303 = arith.mulf %302, %301 : vector<24x512xf32>
    %cst_106 = arith.constant 1.000000e+00 : f32
    %304 = vector.broadcast %cst_106 : f32 to vector<24x512xf32>
    %305 = arith.subf %303, %304 : vector<24x512xf32>
    %306 = math.absf %305 : vector<24x512xf32>
    %307 = arith.truncf %306 : vector<24x512xf32> to vector<24x512xbf16>
    %cst_107 = arith.constant dense<0.000000e+00> : vector<64x512xf32>
    %308 = tpu.matmul %230, %307, %cst_107 {dimension_numbers = #tpu.dot_dimension_numbers<[1], [0], [0], [1], [0, 0, 1, 1], [], []>} : vector<64x24xbf16>, vector<24x512xbf16>, vector<64x512xf32> -> vector<64x512xf32>
    %cst_108 = arith.constant 0.000000e+00 : f32
    %309 = vector.broadcast %cst_108 : f32 to vector<64x512xf32>
    %310 = arith.maximumf %308, %309 : vector<64x512xf32>
    %311 = arith.truncf %310 : vector<64x512xf32> to vector<64x512xbf16>
    %cst_109 = arith.constant dense<0.000000e+00> : vector<16x512xf32>
    %312 = tpu.matmul %231, %311, %cst_109 {dimension_numbers = #tpu.dot_dimension_numbers<[1], [0], [0], [1], [0, 0, 1, 1], [], []>} : vector<16x64xbf16>, vector<64x512xbf16>, vector<16x512xf32> -> vector<16x512xf32>
    %313 = vector.extract_strided_slice %312 {offsets = [0, 0], sizes = [1, 512], strides = [1, 1]} : vector<16x512xf32> to vector<1x512xf32>
    %cst_110 = arith.constant 1.500000e+01 : f32
    %314 = vector.broadcast %cst_110 : f32 to vector<1x512xf32>
    %315 = arith.minimumf %313, %314 : vector<1x512xf32>
    %316 = math.exp %315 : vector<1x512xf32>
    %317 = arith.truncf %312 : vector<16x512xf32> to vector<16x512xbf16>
    %318 = tpu.concatenate %317, %229 in 0 : vector<16x512xbf16>, vector<16x512xbf16> -> vector<32x512xbf16>
    %cst_111 = arith.constant dense<0.000000e+00> : vector<64x512xf32>
    %319 = tpu.matmul %232, %318, %cst_111 {dimension_numbers = #tpu.dot_dimension_numbers<[1], [0], [0], [1], [0, 0, 1, 1], [], []>} : vector<64x32xbf16>, vector<32x512xbf16>, vector<64x512xf32> -> vector<64x512xf32>
    %cst_112 = arith.constant 0.000000e+00 : f32
    %320 = vector.broadcast %cst_112 : f32 to vector<64x512xf32>
    %321 = arith.maximumf %319, %320 : vector<64x512xf32>
    %322 = arith.truncf %321 : vector<64x512xf32> to vector<64x512xbf16>
    %cst_113 = arith.constant dense<0.000000e+00> : vector<64x512xf32>
    %323 = tpu.matmul %233, %322, %cst_113 {dimension_numbers = #tpu.dot_dimension_numbers<[1], [0], [0], [1], [0, 0, 1, 1], [], []>} : vector<64x64xbf16>, vector<64x512xbf16>, vector<64x512xf32> -> vector<64x512xf32>
    %cst_114 = arith.constant 0.000000e+00 : f32
    %324 = vector.broadcast %cst_114 : f32 to vector<64x512xf32>
    %325 = arith.maximumf %323, %324 : vector<64x512xf32>
    %326 = arith.truncf %325 : vector<64x512xf32> to vector<64x512xbf16>
    %cst_115 = arith.constant dense<0.000000e+00> : vector<8x512xf32>
    %327 = tpu.matmul %234, %326, %cst_115 {dimension_numbers = #tpu.dot_dimension_numbers<[1], [0], [0], [1], [0, 0, 1, 1], [], []>} : vector<8x64xbf16>, vector<64x512xbf16>, vector<8x512xf32> -> vector<8x512xf32>
    %328 = vector.extract_strided_slice %327 {offsets = [0, 0], sizes = [3, 512], strides = [1, 1]} : vector<8x512xf32> to vector<3x512xf32>
    %cst_116 = arith.constant 0.000000e+00 : f32
    %329 = vector.broadcast %cst_116 : f32 to vector<3x512xf32>
    %330 = arith.subf %329, %328 : vector<3x512xf32>
    %331 = math.exp %330 : vector<3x512xf32>
    %cst_117 = arith.constant 1.000000e+00 : f32
    %332 = vector.broadcast %cst_117 : f32 to vector<3x512xf32>
    %333 = arith.addf %332, %331 : vector<3x512xf32>
    %334 = tpu.reciprocal %333 {approx = true} : vector<3x512xf32> -> vector<3x512xf32>
    %cst_118 = arith.constant 0.000000e+00 : f32
    %335 = vector.broadcast %cst_118 : f32 to vector<1x512xf32>
    %336 = arith.subf %335, %316 : vector<1x512xf32>
    %337 = arith.mulf %336, %107 : vector<1x512xf32>
    %338 = math.exp %337 : vector<1x512xf32>
    %cst_119 = arith.constant 1.000000e+00 : f32
    %339 = vector.broadcast %cst_119 : f32 to vector<1x512xf32>
    %340 = arith.subf %339, %338 : vector<1x512xf32>
    %341 = arith.mulf %295, %340 : vector<1x512xf32>
    %342 = vector.broadcast %341 : vector<1x512xf32> to vector<3x512xf32>
    %343 = arith.mulf %342, %334 : vector<3x512xf32>
    %344 = arith.addf %289, %343 : vector<3x512xf32>
    %345 = arith.mulf %341, %296 : vector<1x512xf32>
    %346 = arith.addf %291, %345 : vector<1x512xf32>
    %347 = arith.addf %292, %341 : vector<1x512xf32>
    %cst_120 = arith.constant 1.000000e+00 : f32
    %348 = vector.broadcast %cst_120 : f32 to vector<1x512xf32>
    %349 = arith.subf %348, %340 : vector<1x512xf32>
    %350 = arith.mulf %295, %349 : vector<1x512xf32>
    %351 = arith.addf %296, %107 : vector<1x512xf32>
    %c2_i32 = arith.constant 2 : i32
    %352 = vector.broadcast %351 : vector<1x512xf32> to vector<24x512xf32>
    %353 = arith.mulf %352, %158 : vector<24x512xf32>
    %354 = arith.addf %159, %353 : vector<24x512xf32>
    %355 = math.floor %354 : vector<24x512xf32>
    %356 = arith.subf %354, %355 : vector<24x512xf32>
    %cst_121 = arith.constant 2.000000e+00 : f32
    %357 = vector.broadcast %cst_121 : f32 to vector<24x512xf32>
    %358 = arith.mulf %357, %356 : vector<24x512xf32>
    %cst_122 = arith.constant 1.000000e+00 : f32
    %359 = vector.broadcast %cst_122 : f32 to vector<24x512xf32>
    %360 = arith.subf %358, %359 : vector<24x512xf32>
    %361 = math.absf %360 : vector<24x512xf32>
    %362 = arith.truncf %361 : vector<24x512xf32> to vector<24x512xbf16>
    %cst_123 = arith.constant dense<0.000000e+00> : vector<64x512xf32>
    %363 = tpu.matmul %230, %362, %cst_123 {dimension_numbers = #tpu.dot_dimension_numbers<[1], [0], [0], [1], [0, 0, 1, 1], [], []>} : vector<64x24xbf16>, vector<24x512xbf16>, vector<64x512xf32> -> vector<64x512xf32>
    %cst_124 = arith.constant 0.000000e+00 : f32
    %364 = vector.broadcast %cst_124 : f32 to vector<64x512xf32>
    %365 = arith.maximumf %363, %364 : vector<64x512xf32>
    %366 = arith.truncf %365 : vector<64x512xf32> to vector<64x512xbf16>
    %cst_125 = arith.constant dense<0.000000e+00> : vector<16x512xf32>
    %367 = tpu.matmul %231, %366, %cst_125 {dimension_numbers = #tpu.dot_dimension_numbers<[1], [0], [0], [1], [0, 0, 1, 1], [], []>} : vector<16x64xbf16>, vector<64x512xbf16>, vector<16x512xf32> -> vector<16x512xf32>
    %368 = vector.extract_strided_slice %367 {offsets = [0, 0], sizes = [1, 512], strides = [1, 1]} : vector<16x512xf32> to vector<1x512xf32>
    %cst_126 = arith.constant 1.500000e+01 : f32
    %369 = vector.broadcast %cst_126 : f32 to vector<1x512xf32>
    %370 = arith.minimumf %368, %369 : vector<1x512xf32>
    %371 = math.exp %370 : vector<1x512xf32>
    %372 = arith.truncf %367 : vector<16x512xf32> to vector<16x512xbf16>
    %373 = tpu.concatenate %372, %229 in 0 : vector<16x512xbf16>, vector<16x512xbf16> -> vector<32x512xbf16>
    %cst_127 = arith.constant dense<0.000000e+00> : vector<64x512xf32>
    %374 = tpu.matmul %232, %373, %cst_127 {dimension_numbers = #tpu.dot_dimension_numbers<[1], [0], [0], [1], [0, 0, 1, 1], [], []>} : vector<64x32xbf16>, vector<32x512xbf16>, vector<64x512xf32> -> vector<64x512xf32>
    %cst_128 = arith.constant 0.000000e+00 : f32
    %375 = vector.broadcast %cst_128 : f32 to vector<64x512xf32>
    %376 = arith.maximumf %374, %375 : vector<64x512xf32>
    %377 = arith.truncf %376 : vector<64x512xf32> to vector<64x512xbf16>
    %cst_129 = arith.constant dense<0.000000e+00> : vector<64x512xf32>
    %378 = tpu.matmul %233, %377, %cst_129 {dimension_numbers = #tpu.dot_dimension_numbers<[1], [0], [0], [1], [0, 0, 1, 1], [], []>} : vector<64x64xbf16>, vector<64x512xbf16>, vector<64x512xf32> -> vector<64x512xf32>
    %cst_130 = arith.constant 0.000000e+00 : f32
    %379 = vector.broadcast %cst_130 : f32 to vector<64x512xf32>
    %380 = arith.maximumf %378, %379 : vector<64x512xf32>
    %381 = arith.truncf %380 : vector<64x512xf32> to vector<64x512xbf16>
    %cst_131 = arith.constant dense<0.000000e+00> : vector<8x512xf32>
    %382 = tpu.matmul %234, %381, %cst_131 {dimension_numbers = #tpu.dot_dimension_numbers<[1], [0], [0], [1], [0, 0, 1, 1], [], []>} : vector<8x64xbf16>, vector<64x512xbf16>, vector<8x512xf32> -> vector<8x512xf32>
    %383 = vector.extract_strided_slice %382 {offsets = [0, 0], sizes = [3, 512], strides = [1, 1]} : vector<8x512xf32> to vector<3x512xf32>
    %cst_132 = arith.constant 0.000000e+00 : f32
    %384 = vector.broadcast %cst_132 : f32 to vector<3x512xf32>
    %385 = arith.subf %384, %383 : vector<3x512xf32>
    %386 = math.exp %385 : vector<3x512xf32>
    %cst_133 = arith.constant 1.000000e+00 : f32
    %387 = vector.broadcast %cst_133 : f32 to vector<3x512xf32>
    %388 = arith.addf %387, %386 : vector<3x512xf32>
    %389 = tpu.reciprocal %388 {approx = true} : vector<3x512xf32> -> vector<3x512xf32>
    %cst_134 = arith.constant 0.000000e+00 : f32
    %390 = vector.broadcast %cst_134 : f32 to vector<1x512xf32>
    %391 = arith.subf %390, %371 : vector<1x512xf32>
    %392 = arith.mulf %391, %107 : vector<1x512xf32>
    %393 = math.exp %392 : vector<1x512xf32>
    %cst_135 = arith.constant 1.000000e+00 : f32
    %394 = vector.broadcast %cst_135 : f32 to vector<1x512xf32>
    %395 = arith.subf %394, %393 : vector<1x512xf32>
    %396 = arith.mulf %350, %395 : vector<1x512xf32>
    %397 = vector.broadcast %396 : vector<1x512xf32> to vector<3x512xf32>
    %398 = arith.mulf %397, %389 : vector<3x512xf32>
    %399 = arith.addf %344, %398 : vector<3x512xf32>
    %400 = arith.mulf %396, %351 : vector<1x512xf32>
    %401 = arith.addf %346, %400 : vector<1x512xf32>
    %402 = arith.addf %347, %396 : vector<1x512xf32>
    %cst_136 = arith.constant 1.000000e+00 : f32
    %403 = vector.broadcast %cst_136 : f32 to vector<1x512xf32>
    %404 = arith.subf %403, %395 : vector<1x512xf32>
    %405 = arith.mulf %350, %404 : vector<1x512xf32>
    %406 = arith.addf %351, %107 : vector<1x512xf32>
    %c3_i32 = arith.constant 3 : i32
    %407 = vector.broadcast %406 : vector<1x512xf32> to vector<24x512xf32>
    %408 = arith.mulf %407, %158 : vector<24x512xf32>
    %409 = arith.addf %159, %408 : vector<24x512xf32>
    %410 = math.floor %409 : vector<24x512xf32>
    %411 = arith.subf %409, %410 : vector<24x512xf32>
    %cst_137 = arith.constant 2.000000e+00 : f32
    %412 = vector.broadcast %cst_137 : f32 to vector<24x512xf32>
    %413 = arith.mulf %412, %411 : vector<24x512xf32>
    %cst_138 = arith.constant 1.000000e+00 : f32
    %414 = vector.broadcast %cst_138 : f32 to vector<24x512xf32>
    %415 = arith.subf %413, %414 : vector<24x512xf32>
    %416 = math.absf %415 : vector<24x512xf32>
    %417 = arith.truncf %416 : vector<24x512xf32> to vector<24x512xbf16>
    %cst_139 = arith.constant dense<0.000000e+00> : vector<64x512xf32>
    %418 = tpu.matmul %230, %417, %cst_139 {dimension_numbers = #tpu.dot_dimension_numbers<[1], [0], [0], [1], [0, 0, 1, 1], [], []>} : vector<64x24xbf16>, vector<24x512xbf16>, vector<64x512xf32> -> vector<64x512xf32>
    %cst_140 = arith.constant 0.000000e+00 : f32
    %419 = vector.broadcast %cst_140 : f32 to vector<64x512xf32>
    %420 = arith.maximumf %418, %419 : vector<64x512xf32>
    %421 = arith.truncf %420 : vector<64x512xf32> to vector<64x512xbf16>
    %cst_141 = arith.constant dense<0.000000e+00> : vector<16x512xf32>
    %422 = tpu.matmul %231, %421, %cst_141 {dimension_numbers = #tpu.dot_dimension_numbers<[1], [0], [0], [1], [0, 0, 1, 1], [], []>} : vector<16x64xbf16>, vector<64x512xbf16>, vector<16x512xf32> -> vector<16x512xf32>
    %423 = vector.extract_strided_slice %422 {offsets = [0, 0], sizes = [1, 512], strides = [1, 1]} : vector<16x512xf32> to vector<1x512xf32>
    %cst_142 = arith.constant 1.500000e+01 : f32
    %424 = vector.broadcast %cst_142 : f32 to vector<1x512xf32>
    %425 = arith.minimumf %423, %424 : vector<1x512xf32>
    %426 = math.exp %425 : vector<1x512xf32>
    %427 = arith.truncf %422 : vector<16x512xf32> to vector<16x512xbf16>
    %428 = tpu.concatenate %427, %229 in 0 : vector<16x512xbf16>, vector<16x512xbf16> -> vector<32x512xbf16>
    %cst_143 = arith.constant dense<0.000000e+00> : vector<64x512xf32>
    %429 = tpu.matmul %232, %428, %cst_143 {dimension_numbers = #tpu.dot_dimension_numbers<[1], [0], [0], [1], [0, 0, 1, 1], [], []>} : vector<64x32xbf16>, vector<32x512xbf16>, vector<64x512xf32> -> vector<64x512xf32>
    %cst_144 = arith.constant 0.000000e+00 : f32
    %430 = vector.broadcast %cst_144 : f32 to vector<64x512xf32>
    %431 = arith.maximumf %429, %430 : vector<64x512xf32>
    %432 = arith.truncf %431 : vector<64x512xf32> to vector<64x512xbf16>
    %cst_145 = arith.constant dense<0.000000e+00> : vector<64x512xf32>
    %433 = tpu.matmul %233, %432, %cst_145 {dimension_numbers = #tpu.dot_dimension_numbers<[1], [0], [0], [1], [0, 0, 1, 1], [], []>} : vector<64x64xbf16>, vector<64x512xbf16>, vector<64x512xf32> -> vector<64x512xf32>
    %cst_146 = arith.constant 0.000000e+00 : f32
    %434 = vector.broadcast %cst_146 : f32 to vector<64x512xf32>
    %435 = arith.maximumf %433, %434 : vector<64x512xf32>
    %436 = arith.truncf %435 : vector<64x512xf32> to vector<64x512xbf16>
    %cst_147 = arith.constant dense<0.000000e+00> : vector<8x512xf32>
    %437 = tpu.matmul %234, %436, %cst_147 {dimension_numbers = #tpu.dot_dimension_numbers<[1], [0], [0], [1], [0, 0, 1, 1], [], []>} : vector<8x64xbf16>, vector<64x512xbf16>, vector<8x512xf32> -> vector<8x512xf32>
    %438 = vector.extract_strided_slice %437 {offsets = [0, 0], sizes = [3, 512], strides = [1, 1]} : vector<8x512xf32> to vector<3x512xf32>
    %cst_148 = arith.constant 0.000000e+00 : f32
    %439 = vector.broadcast %cst_148 : f32 to vector<3x512xf32>
    %440 = arith.subf %439, %438 : vector<3x512xf32>
    %441 = math.exp %440 : vector<3x512xf32>
    %cst_149 = arith.constant 1.000000e+00 : f32
    %442 = vector.broadcast %cst_149 : f32 to vector<3x512xf32>
    %443 = arith.addf %442, %441 : vector<3x512xf32>
    %444 = tpu.reciprocal %443 {approx = true} : vector<3x512xf32> -> vector<3x512xf32>
    %cst_150 = arith.constant 0.000000e+00 : f32
    %445 = vector.broadcast %cst_150 : f32 to vector<1x512xf32>
    %446 = arith.subf %445, %426 : vector<1x512xf32>
    %447 = arith.mulf %446, %107 : vector<1x512xf32>
    %448 = math.exp %447 : vector<1x512xf32>
    %cst_151 = arith.constant 1.000000e+00 : f32
    %449 = vector.broadcast %cst_151 : f32 to vector<1x512xf32>
    %450 = arith.subf %449, %448 : vector<1x512xf32>
    %451 = arith.mulf %405, %450 : vector<1x512xf32>
    %452 = vector.broadcast %451 : vector<1x512xf32> to vector<3x512xf32>
    %453 = arith.mulf %452, %444 : vector<3x512xf32>
    %454 = arith.addf %399, %453 : vector<3x512xf32>
    %455 = arith.mulf %451, %406 : vector<1x512xf32>
    %456 = arith.addf %401, %455 : vector<1x512xf32>
    %457 = arith.addf %402, %451 : vector<1x512xf32>
    %cst_152 = arith.constant 1.000000e+00 : f32
    %458 = vector.broadcast %cst_152 : f32 to vector<1x512xf32>
    %459 = arith.subf %458, %450 : vector<1x512xf32>
    %460 = arith.mulf %405, %459 : vector<1x512xf32>
    %461 = arith.addf %406, %107 : vector<1x512xf32>
    %c4_i32 = arith.constant 4 : i32
    %462 = vector.broadcast %461 : vector<1x512xf32> to vector<24x512xf32>
    %463 = arith.mulf %462, %158 : vector<24x512xf32>
    %464 = arith.addf %159, %463 : vector<24x512xf32>
    %465 = math.floor %464 : vector<24x512xf32>
    %466 = arith.subf %464, %465 : vector<24x512xf32>
    %cst_153 = arith.constant 2.000000e+00 : f32
    %467 = vector.broadcast %cst_153 : f32 to vector<24x512xf32>
    %468 = arith.mulf %467, %466 : vector<24x512xf32>
    %cst_154 = arith.constant 1.000000e+00 : f32
    %469 = vector.broadcast %cst_154 : f32 to vector<24x512xf32>
    %470 = arith.subf %468, %469 : vector<24x512xf32>
    %471 = math.absf %470 : vector<24x512xf32>
    %472 = arith.truncf %471 : vector<24x512xf32> to vector<24x512xbf16>
    %cst_155 = arith.constant dense<0.000000e+00> : vector<64x512xf32>
    %473 = tpu.matmul %230, %472, %cst_155 {dimension_numbers = #tpu.dot_dimension_numbers<[1], [0], [0], [1], [0, 0, 1, 1], [], []>} : vector<64x24xbf16>, vector<24x512xbf16>, vector<64x512xf32> -> vector<64x512xf32>
    %cst_156 = arith.constant 0.000000e+00 : f32
    %474 = vector.broadcast %cst_156 : f32 to vector<64x512xf32>
    %475 = arith.maximumf %473, %474 : vector<64x512xf32>
    %476 = arith.truncf %475 : vector<64x512xf32> to vector<64x512xbf16>
    %cst_157 = arith.constant dense<0.000000e+00> : vector<16x512xf32>
    %477 = tpu.matmul %231, %476, %cst_157 {dimension_numbers = #tpu.dot_dimension_numbers<[1], [0], [0], [1], [0, 0, 1, 1], [], []>} : vector<16x64xbf16>, vector<64x512xbf16>, vector<16x512xf32> -> vector<16x512xf32>
    %478 = vector.extract_strided_slice %477 {offsets = [0, 0], sizes = [1, 512], strides = [1, 1]} : vector<16x512xf32> to vector<1x512xf32>
    %cst_158 = arith.constant 1.500000e+01 : f32
    %479 = vector.broadcast %cst_158 : f32 to vector<1x512xf32>
    %480 = arith.minimumf %478, %479 : vector<1x512xf32>
    %481 = math.exp %480 : vector<1x512xf32>
    %482 = arith.truncf %477 : vector<16x512xf32> to vector<16x512xbf16>
    %483 = tpu.concatenate %482, %229 in 0 : vector<16x512xbf16>, vector<16x512xbf16> -> vector<32x512xbf16>
    %cst_159 = arith.constant dense<0.000000e+00> : vector<64x512xf32>
    %484 = tpu.matmul %232, %483, %cst_159 {dimension_numbers = #tpu.dot_dimension_numbers<[1], [0], [0], [1], [0, 0, 1, 1], [], []>} : vector<64x32xbf16>, vector<32x512xbf16>, vector<64x512xf32> -> vector<64x512xf32>
    %cst_160 = arith.constant 0.000000e+00 : f32
    %485 = vector.broadcast %cst_160 : f32 to vector<64x512xf32>
    %486 = arith.maximumf %484, %485 : vector<64x512xf32>
    %487 = arith.truncf %486 : vector<64x512xf32> to vector<64x512xbf16>
    %cst_161 = arith.constant dense<0.000000e+00> : vector<64x512xf32>
    %488 = tpu.matmul %233, %487, %cst_161 {dimension_numbers = #tpu.dot_dimension_numbers<[1], [0], [0], [1], [0, 0, 1, 1], [], []>} : vector<64x64xbf16>, vector<64x512xbf16>, vector<64x512xf32> -> vector<64x512xf32>
    %cst_162 = arith.constant 0.000000e+00 : f32
    %489 = vector.broadcast %cst_162 : f32 to vector<64x512xf32>
    %490 = arith.maximumf %488, %489 : vector<64x512xf32>
    %491 = arith.truncf %490 : vector<64x512xf32> to vector<64x512xbf16>
    %cst_163 = arith.constant dense<0.000000e+00> : vector<8x512xf32>
    %492 = tpu.matmul %234, %491, %cst_163 {dimension_numbers = #tpu.dot_dimension_numbers<[1], [0], [0], [1], [0, 0, 1, 1], [], []>} : vector<8x64xbf16>, vector<64x512xbf16>, vector<8x512xf32> -> vector<8x512xf32>
    %493 = vector.extract_strided_slice %492 {offsets = [0, 0], sizes = [3, 512], strides = [1, 1]} : vector<8x512xf32> to vector<3x512xf32>
    %cst_164 = arith.constant 0.000000e+00 : f32
    %494 = vector.broadcast %cst_164 : f32 to vector<3x512xf32>
    %495 = arith.subf %494, %493 : vector<3x512xf32>
    %496 = math.exp %495 : vector<3x512xf32>
    %cst_165 = arith.constant 1.000000e+00 : f32
    %497 = vector.broadcast %cst_165 : f32 to vector<3x512xf32>
    %498 = arith.addf %497, %496 : vector<3x512xf32>
    %499 = tpu.reciprocal %498 {approx = true} : vector<3x512xf32> -> vector<3x512xf32>
    %cst_166 = arith.constant 0.000000e+00 : f32
    %500 = vector.broadcast %cst_166 : f32 to vector<1x512xf32>
    %501 = arith.subf %500, %481 : vector<1x512xf32>
    %502 = arith.mulf %501, %107 : vector<1x512xf32>
    %503 = math.exp %502 : vector<1x512xf32>
    %cst_167 = arith.constant 1.000000e+00 : f32
    %504 = vector.broadcast %cst_167 : f32 to vector<1x512xf32>
    %505 = arith.subf %504, %503 : vector<1x512xf32>
    %506 = arith.mulf %460, %505 : vector<1x512xf32>
    %507 = vector.broadcast %506 : vector<1x512xf32> to vector<3x512xf32>
    %508 = arith.mulf %507, %499 : vector<3x512xf32>
    %509 = arith.addf %454, %508 : vector<3x512xf32>
    %510 = arith.mulf %506, %461 : vector<1x512xf32>
    %511 = arith.addf %456, %510 : vector<1x512xf32>
    %512 = arith.addf %457, %506 : vector<1x512xf32>
    %cst_168 = arith.constant 1.000000e+00 : f32
    %513 = vector.broadcast %cst_168 : f32 to vector<1x512xf32>
    %514 = arith.subf %513, %505 : vector<1x512xf32>
    %515 = arith.mulf %460, %514 : vector<1x512xf32>
    %516 = arith.addf %461, %107 : vector<1x512xf32>
    %c5_i32 = arith.constant 5 : i32
    %517 = vector.broadcast %516 : vector<1x512xf32> to vector<24x512xf32>
    %518 = arith.mulf %517, %158 : vector<24x512xf32>
    %519 = arith.addf %159, %518 : vector<24x512xf32>
    %520 = math.floor %519 : vector<24x512xf32>
    %521 = arith.subf %519, %520 : vector<24x512xf32>
    %cst_169 = arith.constant 2.000000e+00 : f32
    %522 = vector.broadcast %cst_169 : f32 to vector<24x512xf32>
    %523 = arith.mulf %522, %521 : vector<24x512xf32>
    %cst_170 = arith.constant 1.000000e+00 : f32
    %524 = vector.broadcast %cst_170 : f32 to vector<24x512xf32>
    %525 = arith.subf %523, %524 : vector<24x512xf32>
    %526 = math.absf %525 : vector<24x512xf32>
    %527 = arith.truncf %526 : vector<24x512xf32> to vector<24x512xbf16>
    %cst_171 = arith.constant dense<0.000000e+00> : vector<64x512xf32>
    %528 = tpu.matmul %230, %527, %cst_171 {dimension_numbers = #tpu.dot_dimension_numbers<[1], [0], [0], [1], [0, 0, 1, 1], [], []>} : vector<64x24xbf16>, vector<24x512xbf16>, vector<64x512xf32> -> vector<64x512xf32>
    %cst_172 = arith.constant 0.000000e+00 : f32
    %529 = vector.broadcast %cst_172 : f32 to vector<64x512xf32>
    %530 = arith.maximumf %528, %529 : vector<64x512xf32>
    %531 = arith.truncf %530 : vector<64x512xf32> to vector<64x512xbf16>
    %cst_173 = arith.constant dense<0.000000e+00> : vector<16x512xf32>
    %532 = tpu.matmul %231, %531, %cst_173 {dimension_numbers = #tpu.dot_dimension_numbers<[1], [0], [0], [1], [0, 0, 1, 1], [], []>} : vector<16x64xbf16>, vector<64x512xbf16>, vector<16x512xf32> -> vector<16x512xf32>
    %533 = vector.extract_strided_slice %532 {offsets = [0, 0], sizes = [1, 512], strides = [1, 1]} : vector<16x512xf32> to vector<1x512xf32>
    %cst_174 = arith.constant 1.500000e+01 : f32
    %534 = vector.broadcast %cst_174 : f32 to vector<1x512xf32>
    %535 = arith.minimumf %533, %534 : vector<1x512xf32>
    %536 = math.exp %535 : vector<1x512xf32>
    %537 = arith.truncf %532 : vector<16x512xf32> to vector<16x512xbf16>
    %538 = tpu.concatenate %537, %229 in 0 : vector<16x512xbf16>, vector<16x512xbf16> -> vector<32x512xbf16>
    %cst_175 = arith.constant dense<0.000000e+00> : vector<64x512xf32>
    %539 = tpu.matmul %232, %538, %cst_175 {dimension_numbers = #tpu.dot_dimension_numbers<[1], [0], [0], [1], [0, 0, 1, 1], [], []>} : vector<64x32xbf16>, vector<32x512xbf16>, vector<64x512xf32> -> vector<64x512xf32>
    %cst_176 = arith.constant 0.000000e+00 : f32
    %540 = vector.broadcast %cst_176 : f32 to vector<64x512xf32>
    %541 = arith.maximumf %539, %540 : vector<64x512xf32>
    %542 = arith.truncf %541 : vector<64x512xf32> to vector<64x512xbf16>
    %cst_177 = arith.constant dense<0.000000e+00> : vector<64x512xf32>
    %543 = tpu.matmul %233, %542, %cst_177 {dimension_numbers = #tpu.dot_dimension_numbers<[1], [0], [0], [1], [0, 0, 1, 1], [], []>} : vector<64x64xbf16>, vector<64x512xbf16>, vector<64x512xf32> -> vector<64x512xf32>
    %cst_178 = arith.constant 0.000000e+00 : f32
    %544 = vector.broadcast %cst_178 : f32 to vector<64x512xf32>
    %545 = arith.maximumf %543, %544 : vector<64x512xf32>
    %546 = arith.truncf %545 : vector<64x512xf32> to vector<64x512xbf16>
    %cst_179 = arith.constant dense<0.000000e+00> : vector<8x512xf32>
    %547 = tpu.matmul %234, %546, %cst_179 {dimension_numbers = #tpu.dot_dimension_numbers<[1], [0], [0], [1], [0, 0, 1, 1], [], []>} : vector<8x64xbf16>, vector<64x512xbf16>, vector<8x512xf32> -> vector<8x512xf32>
    %548 = vector.extract_strided_slice %547 {offsets = [0, 0], sizes = [3, 512], strides = [1, 1]} : vector<8x512xf32> to vector<3x512xf32>
    %cst_180 = arith.constant 0.000000e+00 : f32
    %549 = vector.broadcast %cst_180 : f32 to vector<3x512xf32>
    %550 = arith.subf %549, %548 : vector<3x512xf32>
    %551 = math.exp %550 : vector<3x512xf32>
    %cst_181 = arith.constant 1.000000e+00 : f32
    %552 = vector.broadcast %cst_181 : f32 to vector<3x512xf32>
    %553 = arith.addf %552, %551 : vector<3x512xf32>
    %554 = tpu.reciprocal %553 {approx = true} : vector<3x512xf32> -> vector<3x512xf32>
    %cst_182 = arith.constant 0.000000e+00 : f32
    %555 = vector.broadcast %cst_182 : f32 to vector<1x512xf32>
    %556 = arith.subf %555, %536 : vector<1x512xf32>
    %557 = arith.mulf %556, %107 : vector<1x512xf32>
    %558 = math.exp %557 : vector<1x512xf32>
    %cst_183 = arith.constant 1.000000e+00 : f32
    %559 = vector.broadcast %cst_183 : f32 to vector<1x512xf32>
    %560 = arith.subf %559, %558 : vector<1x512xf32>
    %561 = arith.mulf %515, %560 : vector<1x512xf32>
    %562 = vector.broadcast %561 : vector<1x512xf32> to vector<3x512xf32>
    %563 = arith.mulf %562, %554 : vector<3x512xf32>
    %564 = arith.addf %509, %563 : vector<3x512xf32>
    %565 = arith.mulf %561, %516 : vector<1x512xf32>
    %566 = arith.addf %511, %565 : vector<1x512xf32>
    %567 = arith.addf %512, %561 : vector<1x512xf32>
    %cst_184 = arith.constant 1.000000e+00 : f32
    %568 = vector.broadcast %cst_184 : f32 to vector<1x512xf32>
    %569 = arith.subf %568, %560 : vector<1x512xf32>
    %570 = arith.mulf %515, %569 : vector<1x512xf32>
    %571 = arith.addf %516, %107 : vector<1x512xf32>
    %c6_i32 = arith.constant 6 : i32
    %572 = vector.broadcast %571 : vector<1x512xf32> to vector<24x512xf32>
    %573 = arith.mulf %572, %158 : vector<24x512xf32>
    %574 = arith.addf %159, %573 : vector<24x512xf32>
    %575 = math.floor %574 : vector<24x512xf32>
    %576 = arith.subf %574, %575 : vector<24x512xf32>
    %cst_185 = arith.constant 2.000000e+00 : f32
    %577 = vector.broadcast %cst_185 : f32 to vector<24x512xf32>
    %578 = arith.mulf %577, %576 : vector<24x512xf32>
    %cst_186 = arith.constant 1.000000e+00 : f32
    %579 = vector.broadcast %cst_186 : f32 to vector<24x512xf32>
    %580 = arith.subf %578, %579 : vector<24x512xf32>
    %581 = math.absf %580 : vector<24x512xf32>
    %582 = arith.truncf %581 : vector<24x512xf32> to vector<24x512xbf16>
    %cst_187 = arith.constant dense<0.000000e+00> : vector<64x512xf32>
    %583 = tpu.matmul %230, %582, %cst_187 {dimension_numbers = #tpu.dot_dimension_numbers<[1], [0], [0], [1], [0, 0, 1, 1], [], []>} : vector<64x24xbf16>, vector<24x512xbf16>, vector<64x512xf32> -> vector<64x512xf32>
    %cst_188 = arith.constant 0.000000e+00 : f32
    %584 = vector.broadcast %cst_188 : f32 to vector<64x512xf32>
    %585 = arith.maximumf %583, %584 : vector<64x512xf32>
    %586 = arith.truncf %585 : vector<64x512xf32> to vector<64x512xbf16>
    %cst_189 = arith.constant dense<0.000000e+00> : vector<16x512xf32>
    %587 = tpu.matmul %231, %586, %cst_189 {dimension_numbers = #tpu.dot_dimension_numbers<[1], [0], [0], [1], [0, 0, 1, 1], [], []>} : vector<16x64xbf16>, vector<64x512xbf16>, vector<16x512xf32> -> vector<16x512xf32>
    %588 = vector.extract_strided_slice %587 {offsets = [0, 0], sizes = [1, 512], strides = [1, 1]} : vector<16x512xf32> to vector<1x512xf32>
    %cst_190 = arith.constant 1.500000e+01 : f32
    %589 = vector.broadcast %cst_190 : f32 to vector<1x512xf32>
    %590 = arith.minimumf %588, %589 : vector<1x512xf32>
    %591 = math.exp %590 : vector<1x512xf32>
    %592 = arith.truncf %587 : vector<16x512xf32> to vector<16x512xbf16>
    %593 = tpu.concatenate %592, %229 in 0 : vector<16x512xbf16>, vector<16x512xbf16> -> vector<32x512xbf16>
    %cst_191 = arith.constant dense<0.000000e+00> : vector<64x512xf32>
    %594 = tpu.matmul %232, %593, %cst_191 {dimension_numbers = #tpu.dot_dimension_numbers<[1], [0], [0], [1], [0, 0, 1, 1], [], []>} : vector<64x32xbf16>, vector<32x512xbf16>, vector<64x512xf32> -> vector<64x512xf32>
    %cst_192 = arith.constant 0.000000e+00 : f32
    %595 = vector.broadcast %cst_192 : f32 to vector<64x512xf32>
    %596 = arith.maximumf %594, %595 : vector<64x512xf32>
    %597 = arith.truncf %596 : vector<64x512xf32> to vector<64x512xbf16>
    %cst_193 = arith.constant dense<0.000000e+00> : vector<64x512xf32>
    %598 = tpu.matmul %233, %597, %cst_193 {dimension_numbers = #tpu.dot_dimension_numbers<[1], [0], [0], [1], [0, 0, 1, 1], [], []>} : vector<64x64xbf16>, vector<64x512xbf16>, vector<64x512xf32> -> vector<64x512xf32>
    %cst_194 = arith.constant 0.000000e+00 : f32
    %599 = vector.broadcast %cst_194 : f32 to vector<64x512xf32>
    %600 = arith.maximumf %598, %599 : vector<64x512xf32>
    %601 = arith.truncf %600 : vector<64x512xf32> to vector<64x512xbf16>
    %cst_195 = arith.constant dense<0.000000e+00> : vector<8x512xf32>
    %602 = tpu.matmul %234, %601, %cst_195 {dimension_numbers = #tpu.dot_dimension_numbers<[1], [0], [0], [1], [0, 0, 1, 1], [], []>} : vector<8x64xbf16>, vector<64x512xbf16>, vector<8x512xf32> -> vector<8x512xf32>
    %603 = vector.extract_strided_slice %602 {offsets = [0, 0], sizes = [3, 512], strides = [1, 1]} : vector<8x512xf32> to vector<3x512xf32>
    %cst_196 = arith.constant 0.000000e+00 : f32
    %604 = vector.broadcast %cst_196 : f32 to vector<3x512xf32>
    %605 = arith.subf %604, %603 : vector<3x512xf32>
    %606 = math.exp %605 : vector<3x512xf32>
    %cst_197 = arith.constant 1.000000e+00 : f32
    %607 = vector.broadcast %cst_197 : f32 to vector<3x512xf32>
    %608 = arith.addf %607, %606 : vector<3x512xf32>
    %609 = tpu.reciprocal %608 {approx = true} : vector<3x512xf32> -> vector<3x512xf32>
    %cst_198 = arith.constant 0.000000e+00 : f32
    %610 = vector.broadcast %cst_198 : f32 to vector<1x512xf32>
    %611 = arith.subf %610, %591 : vector<1x512xf32>
    %612 = arith.mulf %611, %107 : vector<1x512xf32>
    %613 = math.exp %612 : vector<1x512xf32>
    %cst_199 = arith.constant 1.000000e+00 : f32
    %614 = vector.broadcast %cst_199 : f32 to vector<1x512xf32>
    %615 = arith.subf %614, %613 : vector<1x512xf32>
    %616 = arith.mulf %570, %615 : vector<1x512xf32>
    %617 = vector.broadcast %616 : vector<1x512xf32> to vector<3x512xf32>
    %618 = arith.mulf %617, %609 : vector<3x512xf32>
    %619 = arith.addf %564, %618 : vector<3x512xf32>
    %620 = arith.mulf %616, %571 : vector<1x512xf32>
    %621 = arith.addf %566, %620 : vector<1x512xf32>
    %622 = arith.addf %567, %616 : vector<1x512xf32>
    %cst_200 = arith.constant 1.000000e+00 : f32
    %623 = vector.broadcast %cst_200 : f32 to vector<1x512xf32>
    %624 = arith.subf %623, %615 : vector<1x512xf32>
    %625 = arith.mulf %570, %624 : vector<1x512xf32>
    %626 = arith.addf %571, %107 : vector<1x512xf32>
    %c7_i32 = arith.constant 7 : i32
    %627 = vector.broadcast %626 : vector<1x512xf32> to vector<24x512xf32>
    %628 = arith.mulf %627, %158 : vector<24x512xf32>
    %629 = arith.addf %159, %628 : vector<24x512xf32>
    %630 = math.floor %629 : vector<24x512xf32>
    %631 = arith.subf %629, %630 : vector<24x512xf32>
    %cst_201 = arith.constant 2.000000e+00 : f32
    %632 = vector.broadcast %cst_201 : f32 to vector<24x512xf32>
    %633 = arith.mulf %632, %631 : vector<24x512xf32>
    %cst_202 = arith.constant 1.000000e+00 : f32
    %634 = vector.broadcast %cst_202 : f32 to vector<24x512xf32>
    %635 = arith.subf %633, %634 : vector<24x512xf32>
    %636 = math.absf %635 : vector<24x512xf32>
    %637 = arith.truncf %636 : vector<24x512xf32> to vector<24x512xbf16>
    %cst_203 = arith.constant dense<0.000000e+00> : vector<64x512xf32>
    %638 = tpu.matmul %230, %637, %cst_203 {dimension_numbers = #tpu.dot_dimension_numbers<[1], [0], [0], [1], [0, 0, 1, 1], [], []>} : vector<64x24xbf16>, vector<24x512xbf16>, vector<64x512xf32> -> vector<64x512xf32>
    %cst_204 = arith.constant 0.000000e+00 : f32
    %639 = vector.broadcast %cst_204 : f32 to vector<64x512xf32>
    %640 = arith.maximumf %638, %639 : vector<64x512xf32>
    %641 = arith.truncf %640 : vector<64x512xf32> to vector<64x512xbf16>
    %cst_205 = arith.constant dense<0.000000e+00> : vector<16x512xf32>
    %642 = tpu.matmul %231, %641, %cst_205 {dimension_numbers = #tpu.dot_dimension_numbers<[1], [0], [0], [1], [0, 0, 1, 1], [], []>} : vector<16x64xbf16>, vector<64x512xbf16>, vector<16x512xf32> -> vector<16x512xf32>
    %643 = vector.extract_strided_slice %642 {offsets = [0, 0], sizes = [1, 512], strides = [1, 1]} : vector<16x512xf32> to vector<1x512xf32>
    %cst_206 = arith.constant 1.500000e+01 : f32
    %644 = vector.broadcast %cst_206 : f32 to vector<1x512xf32>
    %645 = arith.minimumf %643, %644 : vector<1x512xf32>
    %646 = math.exp %645 : vector<1x512xf32>
    %647 = arith.truncf %642 : vector<16x512xf32> to vector<16x512xbf16>
    %648 = tpu.concatenate %647, %229 in 0 : vector<16x512xbf16>, vector<16x512xbf16> -> vector<32x512xbf16>
    %cst_207 = arith.constant dense<0.000000e+00> : vector<64x512xf32>
    %649 = tpu.matmul %232, %648, %cst_207 {dimension_numbers = #tpu.dot_dimension_numbers<[1], [0], [0], [1], [0, 0, 1, 1], [], []>} : vector<64x32xbf16>, vector<32x512xbf16>, vector<64x512xf32> -> vector<64x512xf32>
    %cst_208 = arith.constant 0.000000e+00 : f32
    %650 = vector.broadcast %cst_208 : f32 to vector<64x512xf32>
    %651 = arith.maximumf %649, %650 : vector<64x512xf32>
    %652 = arith.truncf %651 : vector<64x512xf32> to vector<64x512xbf16>
    %cst_209 = arith.constant dense<0.000000e+00> : vector<64x512xf32>
    %653 = tpu.matmul %233, %652, %cst_209 {dimension_numbers = #tpu.dot_dimension_numbers<[1], [0], [0], [1], [0, 0, 1, 1], [], []>} : vector<64x64xbf16>, vector<64x512xbf16>, vector<64x512xf32> -> vector<64x512xf32>
    %cst_210 = arith.constant 0.000000e+00 : f32
    %654 = vector.broadcast %cst_210 : f32 to vector<64x512xf32>
    %655 = arith.maximumf %653, %654 : vector<64x512xf32>
    %656 = arith.truncf %655 : vector<64x512xf32> to vector<64x512xbf16>
    %cst_211 = arith.constant dense<0.000000e+00> : vector<8x512xf32>
    %657 = tpu.matmul %234, %656, %cst_211 {dimension_numbers = #tpu.dot_dimension_numbers<[1], [0], [0], [1], [0, 0, 1, 1], [], []>} : vector<8x64xbf16>, vector<64x512xbf16>, vector<8x512xf32> -> vector<8x512xf32>
    %658 = vector.extract_strided_slice %657 {offsets = [0, 0], sizes = [3, 512], strides = [1, 1]} : vector<8x512xf32> to vector<3x512xf32>
    %cst_212 = arith.constant 0.000000e+00 : f32
    %659 = vector.broadcast %cst_212 : f32 to vector<3x512xf32>
    %660 = arith.subf %659, %658 : vector<3x512xf32>
    %661 = math.exp %660 : vector<3x512xf32>
    %cst_213 = arith.constant 1.000000e+00 : f32
    %662 = vector.broadcast %cst_213 : f32 to vector<3x512xf32>
    %663 = arith.addf %662, %661 : vector<3x512xf32>
    %664 = tpu.reciprocal %663 {approx = true} : vector<3x512xf32> -> vector<3x512xf32>
    %cst_214 = arith.constant 0.000000e+00 : f32
    %665 = vector.broadcast %cst_214 : f32 to vector<1x512xf32>
    %666 = arith.subf %665, %646 : vector<1x512xf32>
    %667 = arith.mulf %666, %107 : vector<1x512xf32>
    %668 = math.exp %667 : vector<1x512xf32>
    %cst_215 = arith.constant 1.000000e+00 : f32
    %669 = vector.broadcast %cst_215 : f32 to vector<1x512xf32>
    %670 = arith.subf %669, %668 : vector<1x512xf32>
    %671 = arith.mulf %625, %670 : vector<1x512xf32>
    %672 = vector.broadcast %671 : vector<1x512xf32> to vector<3x512xf32>
    %673 = arith.mulf %672, %664 : vector<3x512xf32>
    %674 = arith.addf %619, %673 : vector<3x512xf32>
    %675 = arith.mulf %671, %626 : vector<1x512xf32>
    %676 = arith.addf %621, %675 : vector<1x512xf32>
    %677 = arith.addf %622, %671 : vector<1x512xf32>
    %cst_216 = arith.constant 1.000000e+00 : f32
    %678 = vector.broadcast %cst_216 : f32 to vector<1x512xf32>
    %679 = arith.subf %678, %670 : vector<1x512xf32>
    %680 = arith.mulf %625, %679 : vector<1x512xf32>
    %681 = arith.addf %626, %107 : vector<1x512xf32>
    %c0_217 = arith.constant 0 : index
    %c0_218 = arith.constant 0 : index
    %682 = vector.load %arg8[%c0_217, %c0_218] : memref<3x512xf32, #tpu.memory_space<vmem>>, vector<3x512xf32>
    tpu.vector_store %arg8[%c0_217, %c0_218], %674 {strides = array<i32>} : memref<3x512xf32, #tpu.memory_space<vmem>>, vector<3x512xf32>,
    %c0_219 = arith.constant 0 : index
    %c0_220 = arith.constant 0 : index
    %683 = vector.load %arg9[%c0_219, %c0_220] : memref<1x512xf32, #tpu.memory_space<vmem>>, vector<1x512xf32>
    tpu.vector_store %arg9[%c0_219, %c0_220], %676 {strides = array<i32>} : memref<1x512xf32, #tpu.memory_space<vmem>>, vector<1x512xf32>,
    %c0_221 = arith.constant 0 : index
    %c0_222 = arith.constant 0 : index
    %684 = vector.load %arg10[%c0_221, %c0_222] : memref<1x512xf32, #tpu.memory_space<vmem>>, vector<1x512xf32>
    tpu.vector_store %arg10[%c0_221, %c0_222], %677 {strides = array<i32>} : memref<1x512xf32, #tpu.memory_space<vmem>>, vector<1x512xf32>,
    return
  }
  func.func @transform_0(%arg0: i32) -> (i32, i32) {
    %c0_i32 = arith.constant 0 : i32
    %c0_i32_0 = arith.constant 0 : i32
    return %c0_i32, %arg0 : i32, i32
  }
  func.func @transform_1(%arg0: i32) -> (i32, i32) {
    %c0_i32 = arith.constant 0 : i32
    %c0_i32_0 = arith.constant 0 : i32
    return %c0_i32, %arg0 : i32, i32
  }
  func.func @transform_2(%arg0: i32) -> (i32, i32) {
    %c0_i32 = arith.constant 0 : i32
    %c0_i32_0 = arith.constant 0 : i32
    %c0_i32_1 = arith.constant 0 : i32
    return %c0_i32, %c0_i32_0 : i32, i32
  }
  func.func @transform_3(%arg0: i32) -> (i32, i32) {
    %c0_i32 = arith.constant 0 : i32
    %c0_i32_0 = arith.constant 0 : i32
    %c0_i32_1 = arith.constant 0 : i32
    return %c0_i32, %c0_i32_0 : i32, i32
  }
  func.func @transform_4(%arg0: i32) -> (i32, i32) {
    %c0_i32 = arith.constant 0 : i32
    %c0_i32_0 = arith.constant 0 : i32
    %c0_i32_1 = arith.constant 0 : i32
    return %c0_i32, %c0_i32_0 : i32, i32
  }
  func.func @transform_5(%arg0: i32) -> (i32, i32) {
    %c0_i32 = arith.constant 0 : i32
    %c0_i32_0 = arith.constant 0 : i32
    %c0_i32_1 = arith.constant 0 : i32
    return %c0_i32, %c0_i32_0 : i32, i32
  }
  func.func @transform_6(%arg0: i32) -> (i32, i32) {
    %c0_i32 = arith.constant 0 : i32
    %c0_i32_0 = arith.constant 0 : i32
    %c0_i32_1 = arith.constant 0 : i32
    return %c0_i32, %c0_i32_0 : i32, i32
  }
  func.func @transform_7(%arg0: i32) -> (i32, i32) {
    %c0_i32 = arith.constant 0 : i32
    %c0_i32_0 = arith.constant 0 : i32
    return %c0_i32, %arg0 : i32, i32
  }
  func.func @transform_8(%arg0: i32) -> (i32, i32) {
    %c0_i32 = arith.constant 0 : i32
    %c0_i32_0 = arith.constant 0 : i32
    return %c0_i32, %arg0 : i32, i32
  }
  func.func @transform_9(%arg0: i32) -> (i32, i32) {
    %c0_i32 = arith.constant 0 : i32
    %c0_i32_0 = arith.constant 0 : i32
    return %c0_i32, %arg0 : i32, i32
  }
}

</mosaic_0001>

<llo_original>
// kernel: tpu_custom_call.1
$region0: #{tpu_custom_call.1}
  #allocation0 [shape = 'u32[]', space=smem, size = 0x4, offset = 0x4, fixed_abs, tag = 'smem constant byte address 0x4 - core index']
  #allocation1 [shape = 'u32[72,128]{1,0:T(1,128)}', space=vmem, size = 0x9000, scoped, tag = 'internal scratch']
  %s0 = inlined_call_operand.vmem [shape: f32[3,1024], index: 0, kind: input, shape index: {}]
  %s1 = inlined_call_operand.hbm [shape: f32[12,1024], index: 1, kind: input, shape index: {}]
  %s2 = inlined_call_operand.vmem [shape: bf16[64,24], index: 2, kind: input, shape index: {}]
  %s3 = inlined_call_operand.vmem [shape: bf16[16,64], index: 3, kind: input, shape index: {}]
  %s4 = inlined_call_operand.vmem [shape: bf16[64,32], index: 4, kind: input, shape index: {}]
  %s5 = inlined_call_operand.vmem [shape: bf16[64,64], index: 5, kind: input, shape index: {}]
  %s6 = inlined_call_operand.vmem [shape: bf16[8,64], index: 6, kind: input, shape index: {}]
  %s7 = inlined_call_operand.hbm [shape: f32[3,1024], index: 7, kind: output, shape index: {0}]
  %s8 = inlined_call_operand.hbm [shape: f32[1,1024], index: 8, kind: output, shape index: {1}]
  %s9 = inlined_call_operand.hbm [shape: f32[1,1024], index: 9, kind: output, shape index: {2}]
  %10 = xla_tuple %s7, %s8, %s9
  %s11 = sld [smem:[#allocation0]]
  $region81: #{tpu_custom_call.1} parent=0
    _
  %s13 = ssub.s32 1, %s11
  %s14 = scalar_select 0, %s13, %s11
  $region1: #{tpu_custom_call.1} parent=0
    #allocation2 [shape = 'u8[65536]{0}', space=vmem, size = 0x10000, scoped, tag = 'input window, operand 1']
    #allocation3 [shape = 's32[2]{0}', space=sflag, size = 0x8, scoped, tag = 'scoped memory for tpu_custom_call.1']
    #allocation4 [shape = 's32[2]{0}', space=sflag, size = 0x8, scoped, tag = 'scoped memory for tpu_custom_call.1']
    #allocation5 [shape = 'u8[16384]{0}', space=vmem, size = 0x4000, scoped, tag = 'output window, operand 0']
    #allocation6 [shape = 'u8[4096]{0}', space=vmem, size = 0x1000, scoped, tag = 'output window, operand 1']
    #allocation7 [shape = 's32[2]{0}', space=sflag, size = 0x8, scoped, tag = 'scoped memory for tpu_custom_call.1']
    #allocation8 [shape = 'u8[4096]{0}', space=vmem, size = 0x1000, scoped, tag = 'output window, operand 2']
    %15 = vsyncpa [#allocation3], 0
    %s16 = scalar_lea.sflag [#allocation3], 1
    %17 = vsyncpa %s16, 0
    %18 = vsyncpa [#allocation4], 0
    %s19 = scalar_lea.sflag [#allocation4], 1
    %20 = vsyncpa %s19, 0
    %21 = vsyncpa [#allocation7], 0
    %s22 = scalar_lea.sflag [#allocation7], 1
    %23 = vsyncpa %s22, 0
    loop: start=0, step=1, limit=4
    $region2: #{tpu_custom_call.1} parent=1 // loop_pre_header
      _
    $region3: #{tpu_custom_call.1} parent=1 // loop_header
      %s25 = sphi 0, %s29
      %p26 = scmp.ge.s32.totalorder %s25, 4
      %s35 = sphi 0, %s37
      %s38 = sphi 0, %s35
      %s39 = sphi 0, %s38
      %s55 = sphi 0, %s39
      %s61 = sphi 0, %s63
      %s64 = sphi 0, %s61
      %s65 = sphi 0, %s64
      %s81 = sphi 0, %s65
      %s85 = sphi 0, %s85
      %s87 = sphi 0, %s85
      %s88 = sphi 0, %s87
      %s102 = sphi 0, %s88
      %s106 = sphi 0, %s106
      %s108 = sphi 0, %s106
      %s109 = sphi 0, %s108
      %s123 = sphi 0, %s109
      %s127 = sphi 0, %s127
      %s129 = sphi 0, %s127
      %s130 = sphi 0, %s129
      %s144 = sphi 0, %s130
      %s148 = sphi 0, %s148
      %s150 = sphi 0, %s148
      %s151 = sphi 0, %s150
      %s165 = sphi 0, %s151
      %s169 = sphi 0, %s169
      %s171 = sphi 0, %s169
      %s172 = sphi 0, %s171
      %s186 = sphi 0, %s172
      %s192 = sphi 0, %s194
      %s195 = sphi 0, %s192
      %s196 = sphi 0, %s195
      %s212 = sphi 0, %s196
      %s218 = sphi 0, %s220
      %s221 = sphi 0, %s218
      %s222 = sphi 0, %s221
      %s238 = sphi 0, %s222
      %s244 = sphi 0, %s246
      %s247 = sphi 0, %s244
      %s248 = sphi 0, %s247
      %s264 = sphi 0, %s248
    $region4: #{tpu_custom_call.1} parent=1 // loop_header_branch
      %28 = sbr.rel (%p26) target = $region8
    $region5: #{tpu_custom_call.1} parent=1 // loop_body
      %s30 = ssub.s32 %s25, 1
      %s31 = ssub.s32 %s25, 2
      %s32 = sadd.s32 %s25, 1
      %s33 = ssub.s32 %s25, %s32
      %p34 = scmp.eq.s32.totalorder %s33, 0
      %s36 = sadd.s32 %s35, 1
      %s37 = scalar_select %p34, %s35, %s36
      %p40 = pneg %p34
      %p41 = scmp.eq.s32.totalorder %s25, 1
      %p42 = por %p40, %p41
      %p43 = scmp.ne.s32.totalorder %s35, %s38
      %p44 = scmp.eq.s32.totalorder %s25, 0
      %p45 = por %p43, %p44
      %p46 = scmp.ne.s32.totalorder %s35, %s38
      %p47 = scmp.eq.s32.totalorder %s30, 1
      %p48 = por %p46, %p47
      %p49 = scmp.ne.s32.totalorder %s38, %s39
      %p50 = scmp.eq.s32.totalorder %s30, 0
      %p51 = por %p49, %p50
      %p52 = scmp.ne.s32.totalorder %s38, %s39
      %p53 = scmp.eq.s32.totalorder %s31, 1
      %p54 = por %p52, %p53
      %p56 = scmp.ne.s32.totalorder %s39, %s55
      %p57 = scmp.eq.s32.totalorder %s31, 0
      %p58 = por %p56, %p57
      %s59 = ssub.s32 %s25, %s32
      %p60 = scmp.eq.s32.totalorder %s59, 0
      %s62 = sadd.s32 %s61, 1
      %s63 = scalar_select %p60, %s61, %s62
      %p66 = pneg %p60
      %p67 = scmp.eq.s32.totalorder %s25, 1
      %p68 = por %p66, %p67
      %p69 = scmp.ne.s32.totalorder %s61, %s64
      %p70 = scmp.eq.s32.totalorder %s25, 0
      %p71 = por %p69, %p70
      %p72 = scmp.ne.s32.totalorder %s61, %s64
      %p73 = scmp.eq.s32.totalorder %s30, 1
      %p74 = por %p72, %p73
      %p75 = scmp.ne.s32.totalorder %s64, %s65
      %p76 = scmp.eq.s32.totalorder %s30, 0
      %p77 = por %p75, %p76
      %p78 = scmp.ne.s32.totalorder %s64, %s65
      %p79 = scmp.eq.s32.totalorder %s31, 1
      %p80 = por %p78, %p79
      %p82 = scmp.ne.s32.totalorder %s65, %s81
      %p83 = scmp.eq.s32.totalorder %s31, 0
      %p84 = por %p82, %p83
      %s86 = sadd.s32 %s85, 1
      %p89 = scmp.eq.s32.totalorder %s25, 1
      %p90 = scmp.ne.s32.totalorder %s85, %s87
      %p91 = scmp.eq.s32.totalorder %s25, 0
      %p92 = por %p90, %p91
      %p93 = scmp.ne.s32.totalorder %s85, %s87
      %p94 = scmp.eq.s32.totalorder %s30, 1
      %p95 = por %p93, %p94
      %p96 = scmp.ne.s32.totalorder %s87, %s88
      %p97 = scmp.eq.s32.totalorder %s30, 0
      %p98 = por %p96, %p97
      %p99 = scmp.ne.s32.totalorder %s87, %s88
      %p100 = scmp.eq.s32.totalorder %s31, 1
      %p101 = por %p99, %p100
      %p103 = scmp.ne.s32.totalorder %s88, %s102
      %p104 = scmp.eq.s32.totalorder %s31, 0
      %p105 = por %p103, %p104
      %s107 = sadd.s32 %s106, 1
      %p110 = scmp.eq.s32.totalorder %s25, 1
      %p111 = scmp.ne.s32.totalorder %s106, %s108
      %p112 = scmp.eq.s32.totalorder %s25, 0
      %p113 = por %p111, %p112
      %p114 = scmp.ne.s32.totalorder %s106, %s108
      %p115 = scmp.eq.s32.totalorder %s30, 1
      %p116 = por %p114, %p115
      %p117 = scmp.ne.s32.totalorder %s108, %s109
      %p118 = scmp.eq.s32.totalorder %s30, 0
      %p119 = por %p117, %p118
      %p120 = scmp.ne.s32.totalorder %s108, %s109
      %p121 = scmp.eq.s32.totalorder %s31, 1
      %p122 = por %p120, %p121
      %p124 = scmp.ne.s32.totalorder %s109, %s123
      %p125 = scmp.eq.s32.totalorder %s31, 0
      %p126 = por %p124, %p125
      %s128 = sadd.s32 %s127, 1
      %p131 = scmp.eq.s32.totalorder %s25, 1
      %p132 = scmp.ne.s32.totalorder %s127, %s129
      %p133 = scmp.eq.s32.totalorder %s25, 0
      %p134 = por %p132, %p133
      %p135 = scmp.ne.s32.totalorder %s127, %s129
      %p136 = scmp.eq.s32.totalorder %s30, 1
      %p137 = por %p135, %p136
      %p138 = scmp.ne.s32.totalorder %s129, %s130
      %p139 = scmp.eq.s32.totalorder %s30, 0
      %p140 = por %p138, %p139
      %p141 = scmp.ne.s32.totalorder %s129, %s130
      %p142 = scmp.eq.s32.totalorder %s31, 1
      %p143 = por %p141, %p142
      %p145 = scmp.ne.s32.totalorder %s130, %s144
      %p146 = scmp.eq.s32.totalorder %s31, 0
      %p147 = por %p145, %p146
      %s149 = sadd.s32 %s148, 1
      %p152 = scmp.eq.s32.totalorder %s25, 1
      %p153 = scmp.ne.s32.totalorder %s148, %s150
      %p154 = scmp.eq.s32.totalorder %s25, 0
      %p155 = por %p153, %p154
      %p156 = scmp.ne.s32.totalorder %s148, %s150
      %p157 = scmp.eq.s32.totalorder %s30, 1
      %p158 = por %p156, %p157
      %p159 = scmp.ne.s32.totalorder %s150, %s151
      %p160 = scmp.eq.s32.totalorder %s30, 0
      %p161 = por %p159, %p160
      %p162 = scmp.ne.s32.totalorder %s150, %s151
      %p163 = scmp.eq.s32.totalorder %s31, 1
      %p164 = por %p162, %p163
      %p166 = scmp.ne.s32.totalorder %s151, %s165
      %p167 = scmp.eq.s32.totalorder %s31, 0
      %p168 = por %p166, %p167
      %s170 = sadd.s32 %s169, 1
      %p173 = scmp.eq.s32.totalorder %s25, 1
      %p174 = scmp.ne.s32.totalorder %s169, %s171
      %p175 = scmp.eq.s32.totalorder %s25, 0
      %p176 = por %p174, %p175
      %p177 = scmp.ne.s32.totalorder %s169, %s171
      %p178 = scmp.eq.s32.totalorder %s30, 1
      %p179 = por %p177, %p178
      %p180 = scmp.ne.s32.totalorder %s171, %s172
      %p181 = scmp.eq.s32.totalorder %s30, 0
      %p182 = por %p180, %p181
      %p183 = scmp.ne.s32.totalorder %s171, %s172
      %p184 = scmp.eq.s32.totalorder %s31, 1
      %p185 = por %p183, %p184
      %p187 = scmp.ne.s32.totalorder %s172, %s186
      %p188 = scmp.eq.s32.totalorder %s31, 0
      %p189 = por %p187, %p188
      %s190 = ssub.s32 %s25, %s32
      %p191 = scmp.eq.s32.totalorder %s190, 0
      %s193 = sadd.s32 %s192, 1
      %s194 = scalar_select %p191, %s192, %s193
      %p197 = pneg %p191
      %p198 = scmp.eq.s32.totalorder %s25, 1
      %p199 = por %p197, %p198
      %p200 = scmp.ne.s32.totalorder %s192, %s195
      %p201 = scmp.eq.s32.totalorder %s25, 0
      %p202 = por %p200, %p201
      %p203 = scmp.ne.s32.totalorder %s192, %s195
      %p204 = scmp.eq.s32.totalorder %s30, 1
      %p205 = por %p203, %p204
      %p206 = scmp.ne.s32.totalorder %s195, %s196
      %p207 = scmp.eq.s32.totalorder %s30, 0
      %p208 = por %p206, %p207
      %p209 = scmp.ne.s32.totalorder %s195, %s196
      %p210 = scmp.eq.s32.totalorder %s31, 1
      %p211 = por %p209, %p210
      %p213 = scmp.ne.s32.totalorder %s196, %s212
      %p214 = scmp.eq.s32.totalorder %s31, 0
      %p215 = por %p213, %p214
      %s216 = ssub.s32 %s25, %s32
      %p217 = scmp.eq.s32.totalorder %s216, 0
      %s219 = sadd.s32 %s218, 1
      %s220 = scalar_select %p217, %s218, %s219
      %p223 = pneg %p217
      %p224 = scmp.eq.s32.totalorder %s25, 1
      %p225 = por %p223, %p224
      %p226 = scmp.ne.s32.totalorder %s218, %s221
      %p227 = scmp.eq.s32.totalorder %s25, 0
      %p228 = por %p226, %p227
      %p229 = scmp.ne.s32.totalorder %s218, %s221
      %p230 = scmp.eq.s32.totalorder %s30, 1
      %p231 = por %p229, %p230
      %p232 = scmp.ne.s32.totalorder %s221, %s222
      %p233 = scmp.eq.s32.totalorder %s30, 0
      %p234 = por %p232, %p233
      %p235 = scmp.ne.s32.totalorder %s221, %s222
      %p236 = scmp.eq.s32.totalorder %s31, 1
      %p237 = por %p235, %p236
      %p239 = scmp.ne.s32.totalorder %s222, %s238
      %p240 = scmp.eq.s32.totalorder %s31, 0
      %p241 = por %p239, %p240
      %s242 = ssub.s32 %s25, %s32
      %p243 = scmp.eq.s32.totalorder %s242, 0
      %s245 = sadd.s32 %s244, 1
      %s246 = scalar_select %p243, %s244, %s245
      %p249 = pneg %p243
      %p250 = scmp.eq.s32.totalorder %s25, 1
      %p251 = por %p249, %p250
      %p252 = scmp.ne.s32.totalorder %s244, %s247
      %p253 = scmp.eq.s32.totalorder %s25, 0
      %p254 = por %p252, %p253
      %p255 = scmp.ne.s32.totalorder %s244, %s247
      %p256 = scmp.eq.s32.totalorder %s30, 1
      %p257 = por %p255, %p256
      %p258 = scmp.ne.s32.totalorder %s247, %s248
      %p259 = scmp.eq.s32.totalorder %s30, 0
      %p260 = por %p258, %p259
      %p261 = scmp.ne.s32.totalorder %s247, %s248
      %p262 = scmp.eq.s32.totalorder %s31, 1
      %p263 = por %p261, %p262
      %p265 = scmp.ne.s32.totalorder %s248, %s264
      %p266 = scmp.eq.s32.totalorder %s31, 0
      %p267 = por %p265, %p266
      %p268 = scmp.le.s32.totalorder 1, %s25
      %p269 = scmp.lt.s32.totalorder %s25, 3
      %p270 = pnand %p268, %p269
      %p271 = pneg %p270
      // Predicated region
      $region9: #{tpu_custom_call.1} parent=5 // pred_check
        _
      $region10: #{tpu_custom_call.1} parent=5 // pred_check_branch
        %273 = sbr.rel (%p270) target = $region12
      $region11: #{tpu_custom_call.1} parent=5 // pred_region
        %s274 = ssub.s32 %s25, 1
        // Predicated region
        $region13: #{tpu_custom_call.1} parent=11 // pred_check
          %p275 = pneg %p98
        $region14: #{tpu_custom_call.1} parent=11 // pred_check_branch
          %277 = sbr.rel (%p275) target = $region16
        $region15: #{tpu_custom_call.1} parent=11 // pred_region
          _
        $region16: #{tpu_custom_call.1} parent=11 // pred_fallthru
          _
        // Predicated region
        $region17: #{tpu_custom_call.1} parent=11 // pred_check
          %p278 = pneg %p119
        $region18: #{tpu_custom_call.1} parent=11 // pred_check_branch
          %280 = sbr.rel (%p278) target = $region20
        $region19: #{tpu_custom_call.1} parent=11 // pred_region
          _
        $region20: #{tpu_custom_call.1} parent=11 // pred_fallthru
          _
        // Predicated region
        $region21: #{tpu_custom_call.1} parent=11 // pred_check
          %p281 = pneg %p140
        $region22: #{tpu_custom_call.1} parent=11 // pred_check_branch
          %283 = sbr.rel (%p281) target = $region24
        $region23: #{tpu_custom_call.1} parent=11 // pred_region
          _
        $region24: #{tpu_custom_call.1} parent=11 // pred_fallthru
          _
        // Predicated region
        $region25: #{tpu_custom_call.1} parent=11 // pred_check
          %p284 = pneg %p161
        $region26: #{tpu_custom_call.1} parent=11 // pred_check_branch
          %286 = sbr.rel (%p284) target = $region28
        $region27: #{tpu_custom_call.1} parent=11 // pred_region
          _
        $region28: #{tpu_custom_call.1} parent=11 // pred_fallthru
          _
        // Predicated region
        $region29: #{tpu_custom_call.1} parent=11 // pred_check
          %p287 = pneg %p182
        $region30: #{tpu_custom_call.1} parent=11 // pred_check_branch
          %289 = sbr.rel (%p287) target = $region32
        $region31: #{tpu_custom_call.1} parent=11 // pred_region
          _
        $region32: #{tpu_custom_call.1} parent=11 // pred_fallthru
          _
      $region12: #{tpu_custom_call.1} parent=5 // pred_fallthru
        _
      %p290 = scmp.lt.s32.totalorder %s25, 2
      // Predicated region
      $region33: #{tpu_custom_call.1} parent=5 // pred_check
        %p291 = pneg %p290
      $region34: #{tpu_custom_call.1} parent=5 // pred_check_branch
        %293 = sbr.rel (%p291) target = $region36
      $region35: #{tpu_custom_call.1} parent=5 // pred_region
        // Predicated region
        $region37: #{tpu_custom_call.1} parent=35 // pred_check
          %p294 = pneg %p45
        $region38: #{tpu_custom_call.1} parent=35 // pred_check_branch
          %296 = sbr.rel (%p294) target = $region40
        $region39: #{tpu_custom_call.1} parent=35 // pred_region
          %s297 = smul.u32 4, %s25
          %p298 = scmp.lt.s32.totalorder %s297, 7
          %s299 = scalar_select %p298, %s297, 7
          %s300 = smul.addr %s299, 4
          %s301 = scalar_lea.vmem %s0, %s300
          %s302 = smul.u32 4, %s25
        $region40: #{tpu_custom_call.1} parent=35 // pred_fallthru
          _
        // Predicated region
        $region41: #{tpu_custom_call.1} parent=35 // pred_check
          %p303 = pneg %p71
        $region42: #{tpu_custom_call.1} parent=35 // pred_check_branch
          %305 = sbr.rel (%p303) target = $region44
        $region43: #{tpu_custom_call.1} parent=35 // pred_region
          %s306 = sand.u32 %s61, 1
          %s307 = scalar_lea.sflag [#allocation3], %s306
          %s308 = sand.u32 %s61, 1
          %s309 = smul.addr %s308, 64
          %s310 = scalar_lea.vmem [#allocation2], %s309
          %s311 = smul.u32 4, %s25
          %313 = vsyncadd %s307, 0
          %s314 = smul.addr %s311, 8
          %s315 = scalar_lea.hbm %s1, %s314
          %s316 = sshll.u32 %s315, 4
          %s317 = int_to_ptr.hbm [resolvable:$true] %s316
          %s318 = sshll.u32 %s310, 4
          %s319 = int_to_ptr.vmem [resolvable:$true] %s318
          %324 = dma.hbm_to_vmem [thread:$0]  %s317, 1024, %s319, %s307, 1024, 512, 32
        $region44: #{tpu_custom_call.1} parent=35 // pred_fallthru
          _
      $region36: #{tpu_custom_call.1} parent=5 // pred_fallthru
        _
      %p325 = scmp.le.s32.totalorder 1, %s25
      %p326 = scmp.lt.s32.totalorder %s25, 3
      %p327 = pnand %p325, %p326
      %p328 = pneg %p327
      // Predicated region
      $region45: #{tpu_custom_call.1} parent=5 // pred_check
        _
      $region46: #{tpu_custom_call.1} parent=5 // pred_check_branch
        %330 = sbr.rel (%p327) target = $region48
      $region47: #{tpu_custom_call.1} parent=5 // pred_region
        %s331 = ssub.s32 %s25, 1
        %s332 = sand.u32 %s64, 1
        %s333 = scalar_lea.sflag [#allocation3], %s332
        %s334 = sand.u32 %s64, 1
        %s335 = smul.addr %s334, 64
        %s336 = scalar_lea.vmem [#allocation2], %s335
        // Predicated region
        $region49: #{tpu_custom_call.1} parent=47 // pred_check
          %p337 = pneg %p77
        $region50: #{tpu_custom_call.1} parent=47 // pred_check_branch
          %339 = sbr.rel (%p337) target = $region52
        $region51: #{tpu_custom_call.1} parent=47 // pred_region
          %341 = dma.done %s333, 1024
        $region52: #{tpu_custom_call.1} parent=47 // pred_fallthru
          _
        %s342 = smul.u32 4, %s30
        %p343 = scmp.lt.s32.totalorder %s342, 7
        %s344 = scalar_select %p343, %s342, 7
        %s345 = smul.addr %s344, 4
        %s346 = scalar_lea.vmem %s0, %s345
        %p347 = pneg %p51
        %p348 = pneg %p48
        %s349 = sand.u32 %s64, 1
        %s350 = scalar_lea.sflag [#allocation3], %s349
        %s351 = sand.u32 %s64, 1
        %s352 = smul.addr %s351, 64
        %s353 = scalar_lea.vmem [#allocation2], %s352
        %p354 = pneg %p77
        %p355 = pneg %p74
        %p356 = pneg %p98
        %p357 = pneg %p95
        %p358 = pneg %p119
        %p359 = pneg %p116
        %p360 = pneg %p140
        %p361 = pneg %p137
        %p362 = pneg %p161
        %p363 = pneg %p158
        %p364 = pneg %p182
        %p365 = pneg %p179
        %p366 = pneg %p208
        %p367 = pneg %p205
        %s368 = sand.u32 %s195, 1
        %s369 = scalar_lea.sflag [#allocation4], %s368
        %s370 = sand.u32 %s195, 1
        %s371 = smul.addr %s370, 16
        %s372 = scalar_lea.vmem [#allocation5], %s371
        %p373 = pneg %p234
        %p374 = pneg %p231
        %s375 = sand.u32 %s30, 1
        %s376 = scalar_lea.sflag [#allocation7], %s375
        %s377 = sand.u32 %s221, 1
        %s378 = smul.addr %s377, 4
        %s379 = scalar_lea.vmem [#allocation6], %s378
        %p380 = pneg %p260
        %p381 = pneg %p257
        %s382 = sand.u32 %s30, 1
        %s383 = scalar_lea.sflag [#allocation7], %s382
        %s384 = sand.u32 %s247, 1
        %s385 = smul.addr %s384, 4
        %s386 = scalar_lea.vmem [#allocation8], %s385
        %s387 = smul.u32 4, %s30
        %p388 = scmp.lt.s32.totalorder %s387, 7
        %s389 = scalar_select %p388, %s387, 7
        %s390 = smul.addr %s389, 4
        %s391 = scalar_lea.vmem %s0, %s390
        %s392 = smul.u32 4, %s30
        %s393 = smul.u32 4, %s30
        %s394 = smul.u32 4, %s30
        %s395 = smul.u32 4, %s30
        %s396 = smul.u32 4, %s30
        %v398 = vld [vmem:[%s391] sm:$0x77]
        %v399 = vld [vmem:[%s391 + $0x8] sm:$0x77]
        %v400 = vld [vmem:[%s336] sm:$0xff]
        %v401 = vld [vmem:[%s336 + $0x8] sm:$0xff]
        %v402 = vld [vmem:[%s336 + $0x10] sm:$0xff]
        %v403 = vld [vmem:[%s336 + $0x18] sm:$0xff]
        %v404 = vld [vmem:[%s336 + $0x20] sm:$0xf]
        %v405 = vld [vmem:[%s336 + $0x28] sm:$0xf]
        %v406 = vld [vmem:[%s336 + $0x30] sm:$0xf]
        %v407 = vld [vmem:[%s336 + $0x38] sm:$0xf]
        %v410 = vperm.slane %v398, 0
        %v411 = vperm.slane %v398, 4
        %v412 = vperm.slane %v399, 0
        %v413 = vperm.slane %v399, 4
        %v418 = vmul.f32 %v400, %v410
        %v419 = vmul.f32 %v401, %v411
        %v420 = vmul.f32 %v402, %v412
        %v421 = vmul.f32 %v403, %v413
        %v422 = vperm.slane %v398, 1
        %v423 = vperm.slane %v398, 5
        %v424 = vperm.slane %v399, 1
        %v425 = vperm.slane %v399, 5
        %v430 = vmul.f32 %v400, %v422
        %v431 = vmul.f32 %v401, %v423
        %v432 = vmul.f32 %v402, %v424
        %v433 = vmul.f32 %v403, %v425
        %v438 = vrot.slane %v430, 1
        %v439 = vrot.slane %v431, 1
        %v440 = vrot.slane %v432, 1
        %v441 = vrot.slane %v433, 1
        %v446 = vadd.f32 %v418, %v438
        %v447 = vadd.f32 %v419, %v439
        %v448 = vadd.f32 %v420, %v440
        %v449 = vadd.f32 %v421, %v441
        %v450 = vperm.slane %v398, 2
        %v451 = vperm.slane %v398, 6
        %v452 = vperm.slane %v399, 2
        %v453 = vperm.slane %v399, 6
        %v458 = vmul.f32 %v400, %v450
        %v459 = vmul.f32 %v401, %v451
        %v460 = vmul.f32 %v402, %v452
        %v461 = vmul.f32 %v403, %v453
        %v466 = vrot.slane %v458, 2
        %v467 = vrot.slane %v459, 2
        %v468 = vrot.slane %v460, 2
        %v469 = vrot.slane %v461, 2
        %v474 = vadd.f32 %v446, %v466
        %v475 = vadd.f32 %v447, %v467
        %v476 = vadd.f32 %v448, %v468
        %v477 = vadd.f32 %v449, %v469
        %v478 = vmul.f32 %v404, %v410
        %v479 = vmul.f32 %v405, %v411
        %v480 = vmul.f32 %v406, %v412
        %v481 = vmul.f32 %v407, %v413
        %v482 = vmul.f32 %v404, %v422
        %v483 = vmul.f32 %v405, %v423
        %v484 = vmul.f32 %v406, %v424
        %v485 = vmul.f32 %v407, %v425
        %v490 = vrot.slane %v482, 1
        %v491 = vrot.slane %v483, 1
        %v492 = vrot.slane %v484, 1
        %v493 = vrot.slane %v485, 1
        %v498 = vadd.f32 %v478, %v490
        %v499 = vadd.f32 %v479, %v491
        %v500 = vadd.f32 %v480, %v492
        %v501 = vadd.f32 %v481, %v493
        %v502 = vmul.f32 %v404, %v450
        %v503 = vmul.f32 %v405, %v451
        %v504 = vmul.f32 %v406, %v452
        %v505 = vmul.f32 %v407, %v453
        %v510 = vrot.slane %v502, 2
        %v511 = vrot.slane %v503, 2
        %v512 = vrot.slane %v504, 2
        %v513 = vrot.slane %v505, 2
        %v518 = vadd.f32 %v498, %v510
        %v519 = vadd.f32 %v499, %v511
        %v520 = vadd.f32 %v500, %v512
        %v521 = vadd.f32 %v501, %v513
        %v522 = vmul.f32 %v474, %v474
        %v523 = vmul.f32 %v475, %v475
        %v524 = vmul.f32 %v476, %v476
        %v525 = vmul.f32 %v477, %v477
        %v530 = vrot.slane %v522, 4
        %v531 = vrot.slane %v523, 4
        %v532 = vrot.slane %v524, 4
        %v533 = vrot.slane %v525, 4
        %v538 = vadd.f32 %v522, %v530
        %v539 = vadd.f32 %v523, %v531
        %v540 = vadd.f32 %v524, %v532
        %v541 = vadd.f32 %v525, %v533
        %v542 = vmul.f32 %v518, %v518
        %v543 = vmul.f32 %v519, %v519
        %v544 = vmul.f32 %v520, %v520
        %v545 = vmul.f32 %v521, %v521
        %v546 = vadd.f32 %v538, %v542
        %v547 = vadd.f32 %v539, %v543
        %v548 = vadd.f32 %v540, %v544
        %v549 = vadd.f32 %v541, %v545
        %v550 = vadd.f32 %v546, 1e-12
        %v551 = vadd.f32 %v547, 1e-12
        %v552 = vadd.f32 %v548, 1e-12
        %v553 = vadd.f32 %v549, 1e-12
        %v554 = vrsqrt.pop %v550
        %v555 = vmul.f32 %v554, %v550
        %v556 = vmul.f32 %v555, %v554
        %v557 = vmul.f32 0.5, %v556
        %v558 = vsub.f32 1.5, %v557
        %v559 = vmul.f32 %v554, %v558
        %vm560 = vweird.f32 %v550
        %vm561 = vweird.f32 %v554
        %vm562 = vmor %vm560, %vm561
        %v563 = vsel %vm562, %v554, %v559
        %v564 = vrsqrt.pop %v551
        %v565 = vmul.f32 %v564, %v551
        %v566 = vmul.f32 %v565, %v564
        %v567 = vmul.f32 0.5, %v566
        %v568 = vsub.f32 1.5, %v567
        %v569 = vmul.f32 %v564, %v568
        %vm570 = vweird.f32 %v551
        %vm571 = vweird.f32 %v564
        %vm572 = vmor %vm570, %vm571
        %v573 = vsel %vm572, %v564, %v569
        %v574 = vrsqrt.pop %v552
        %v575 = vmul.f32 %v574, %v552
        %v576 = vmul.f32 %v575, %v574
        %v577 = vmul.f32 0.5, %v576
        %v578 = vsub.f32 1.5, %v577
        %v579 = vmul.f32 %v574, %v578
        %vm580 = vweird.f32 %v552
        %vm581 = vweird.f32 %v574
        %vm582 = vmor %vm580, %vm581
        %v583 = vsel %vm582, %v574, %v579
        %v584 = vrsqrt.pop %v553
        %v585 = vmul.f32 %v584, %v553
        %v586 = vmul.f32 %v585, %v584
        %v587 = vmul.f32 0.5, %v586
        %v588 = vsub.f32 1.5, %v587
        %v589 = vmul.f32 %v584, %v588
        %vm590 = vweird.f32 %v553
        %vm591 = vweird.f32 %v584
        %vm592 = vmor %vm590, %vm591
        %v593 = vsel %vm592, %v584, %v589
        %v594 = vmul.f32 %v474, %v563
        %v595 = vmul.f32 %v475, %v573
        %v596 = vmul.f32 %v476, %v583
        %v597 = vmul.f32 %v477, %v593
        %v602 = vrot.slane %v563, 4
        %v603 = vrot.slane %v573, 4
        %v604 = vrot.slane %v583, 4
        %v605 = vrot.slane %v593, 4
        %v610 = vmul.f32 %v474, %v602
        %v611 = vmul.f32 %v475, %v603
        %v612 = vmul.f32 %v476, %v604
        %v613 = vmul.f32 %v477, %v605
        %v614 = vmul.f32 %v518, %v563
        %v615 = vmul.f32 %v519, %v573
        %v616 = vmul.f32 %v520, %v583
        %v617 = vmul.f32 %v521, %v593
        %v618 = vand.u32 2147483647, %v594
        %v619 = vand.u32 2147483647, %v595
        %v620 = vand.u32 2147483647, %v596
        %v621 = vand.u32 2147483647, %v597
        %vm622 = vcmp.lt.f32.partialorder %v618, 1e-08
        %vm623 = vcmp.lt.f32.partialorder %v619, 1e-08
        %vm624 = vcmp.lt.f32.partialorder %v620, 1e-08
        %vm625 = vcmp.lt.f32.partialorder %v621, 1e-08
        %vm626 = vcmp.ge.f32.partialorder %v594, 0.0
        %vm627 = vcmp.ge.f32.partialorder %v595, 0.0
        %vm628 = vcmp.ge.f32.partialorder %v596, 0.0
        %vm629 = vcmp.ge.f32.partialorder %v597, 0.0
        %v630 = vsel %vm626, 1e-08, -1e-08
        %v631 = vsel %vm627, 1e-08, -1e-08
        %v632 = vsel %vm628, 1e-08, -1e-08
        %v633 = vsel %vm629, 1e-08, -1e-08
        %v634 = vsel %vm622, %v630, %v594
        %v635 = vsel %vm623, %v631, %v595
        %v636 = vsel %vm624, %v632, %v596
        %v637 = vsel %vm625, %v633, %v597
        %v638 = vrcp.pop %v634
        %v639 = vrcp.pop %v635
        %v640 = vrcp.pop %v636
        %v641 = vrcp.pop %v637
        %v642 = vsub.f32 -0.5, %v400
        %v643 = vsub.f32 -0.5, %v401
        %v644 = vsub.f32 -0.5, %v402
        %v645 = vsub.f32 -0.5, %v403
        %v650 = vrot.slane %v638, 5
        %v651 = vrot.slane %v639, 5
        %v652 = vrot.slane %v640, 5
        %v653 = vrot.slane %v641, 5
        %v658 = vmul.f32 %v642, %v650
        %v659 = vmul.f32 %v643, %v651
        %v660 = vmul.f32 %v644, %v652
        %v661 = vmul.f32 %v645, %v653
        %v662 = vsub.f32 0.5, %v400
        %v663 = vsub.f32 0.5, %v401
        %v664 = vsub.f32 0.5, %v402
        %v665 = vsub.f32 0.5, %v403
        %v666 = vmul.f32 %v662, %v650
        %v667 = vmul.f32 %v663, %v651
        %v668 = vmul.f32 %v664, %v652
        %v669 = vmul.f32 %v665, %v653
        %v670 = vmin.f32 %v658, %v666
        %v671 = vmin.f32 %v659, %v667
        %v672 = vmin.f32 %v660, %v668
        %v673 = vmin.f32 %v661, %v669
        %v674 = vmax.f32 %v658, %v666
        %v675 = vmax.f32 %v659, %v667
        %v676 = vmax.f32 %v660, %v668
        %v677 = vmax.f32 %v661, %v669
        %v678 = vand.u32 2147483647, %v610
        %v679 = vand.u32 2147483647, %v611
        %v680 = vand.u32 2147483647, %v612
        %v681 = vand.u32 2147483647, %v613
        %vm682 = vcmp.lt.f32.partialorder %v678, 1e-08
        %vm683 = vcmp.lt.f32.partialorder %v679, 1e-08
        %vm684 = vcmp.lt.f32.partialorder %v680, 1e-08
        %vm685 = vcmp.lt.f32.partialorder %v681, 1e-08
        %vm686 = vcmp.ge.f32.partialorder %v610, 0.0
        %vm687 = vcmp.ge.f32.partialorder %v611, 0.0
        %vm688 = vcmp.ge.f32.partialorder %v612, 0.0
        %vm689 = vcmp.ge.f32.partialorder %v613, 0.0
        %v690 = vsel %vm686, 1e-08, -1e-08
        %v691 = vsel %vm687, 1e-08, -1e-08
        %v692 = vsel %vm688, 1e-08, -1e-08
        %v693 = vsel %vm689, 1e-08, -1e-08
        %v694 = vsel %vm682, %v690, %v610
        %v695 = vsel %vm683, %v691, %v611
        %v696 = vsel %vm684, %v692, %v612
        %v697 = vsel %vm685, %v693, %v613
        %v698 = vrcp.pop %v694
        %v699 = vrcp.pop %v695
        %v700 = vrcp.pop %v696
        %v701 = vrcp.pop %v697
        %v706 = vrot.slane %v698, 5
        %v707 = vrot.slane %v699, 5
        %v708 = vrot.slane %v700, 5
        %v709 = vrot.slane %v701, 5
        %v714 = vmul.f32 %v642, %v706
        %v715 = vmul.f32 %v643, %v707
        %v716 = vmul.f32 %v644, %v708
        %v717 = vmul.f32 %v645, %v709
        %v718 = vmul.f32 %v662, %v706
        %v719 = vmul.f32 %v663, %v707
        %v720 = vmul.f32 %v664, %v708
        %v721 = vmul.f32 %v665, %v709
        %v722 = vmin.f32 %v714, %v718
        %v723 = vmin.f32 %v715, %v719
        %v724 = vmin.f32 %v716, %v720
        %v725 = vmin.f32 %v717, %v721
        %v726 = vmax.f32 %v714, %v718
        %v727 = vmax.f32 %v715, %v719
        %v728 = vmax.f32 %v716, %v720
        %v729 = vmax.f32 %v717, %v721
        %v730 = vand.u32 2147483647, %v614
        %v731 = vand.u32 2147483647, %v615
        %v732 = vand.u32 2147483647, %v616
        %v733 = vand.u32 2147483647, %v617
        %vm734 = vcmp.lt.f32.partialorder %v730, 1e-08
        %vm735 = vcmp.lt.f32.partialorder %v731, 1e-08
        %vm736 = vcmp.lt.f32.partialorder %v732, 1e-08
        %vm737 = vcmp.lt.f32.partialorder %v733, 1e-08
        %vm738 = vcmp.ge.f32.partialorder %v614, 0.0
        %vm739 = vcmp.ge.f32.partialorder %v615, 0.0
        %vm740 = vcmp.ge.f32.partialorder %v616, 0.0
        %vm741 = vcmp.ge.f32.partialorder %v617, 0.0
        %v742 = vsel %vm738, 1e-08, -1e-08
        %v743 = vsel %vm739, 1e-08, -1e-08
        %v744 = vsel %vm740, 1e-08, -1e-08
        %v745 = vsel %vm741, 1e-08, -1e-08
        %v746 = vsel %vm734, %v742, %v614
        %v747 = vsel %vm735, %v743, %v615
        %v748 = vsel %vm736, %v744, %v616
        %v749 = vsel %vm737, %v745, %v617
        %v750 = vrcp.pop %v746
        %v751 = vrcp.pop %v747
        %v752 = vrcp.pop %v748
        %v753 = vrcp.pop %v749
        %v754 = vsub.f32 -0.5, %v404
        %v755 = vsub.f32 -0.5, %v405
        %v756 = vsub.f32 -0.5, %v406
        %v757 = vsub.f32 -0.5, %v407
        %v762 = vrot.slane %v750, 5
        %v763 = vrot.slane %v751, 5
        %v764 = vrot.slane %v752, 5
        %v765 = vrot.slane %v753, 5
        %v770 = vmul.f32 %v754, %v762
        %v771 = vmul.f32 %v755, %v763
        %v772 = vmul.f32 %v756, %v764
        %v773 = vmul.f32 %v757, %v765
        %v774 = vsub.f32 0.5, %v404
        %v775 = vsub.f32 0.5, %v405
        %v776 = vsub.f32 0.5, %v406
        %v777 = vsub.f32 0.5, %v407
        %v778 = vmul.f32 %v774, %v762
        %v779 = vmul.f32 %v775, %v763
        %v780 = vmul.f32 %v776, %v764
        %v781 = vmul.f32 %v777, %v765
        %v782 = vmin.f32 %v770, %v778
        %v783 = vmin.f32 %v771, %v779
        %v784 = vmin.f32 %v772, %v780
        %v785 = vmin.f32 %v773, %v781
        %v786 = vmax.f32 %v770, %v778
        %v787 = vmax.f32 %v771, %v779
        %v788 = vmax.f32 %v772, %v780
        %v789 = vmax.f32 %v773, %v781
        %v794 = vrot.slane %v722, 4
        %v795 = vrot.slane %v723, 4
        %v796 = vrot.slane %v724, 4
        %v797 = vrot.slane %v725, 4
        %v802 = vmax.f32 %v670, %v794
        %v803 = vmax.f32 %v671, %v795
        %v804 = vmax.f32 %v672, %v796
        %v805 = vmax.f32 %v673, %v797
        %v806 = vmax.f32 %v802, %v782
        %v807 = vmax.f32 %v803, %v783
        %v808 = vmax.f32 %v804, %v784
        %v809 = vmax.f32 %v805, %v785
        %v810 = vmax.f32 %v806, 0.05
        %v811 = vmax.f32 %v807, 0.05
        %v812 = vmax.f32 %v808, 0.05
        %v813 = vmax.f32 %v809, 0.05
        %v818 = vrot.slane %v726, 4
        %v819 = vrot.slane %v727, 4
        %v820 = vrot.slane %v728, 4
        %v821 = vrot.slane %v729, 4
        %v826 = vmin.f32 %v674, %v818
        %v827 = vmin.f32 %v675, %v819
        %v828 = vmin.f32 %v676, %v820
        %v829 = vmin.f32 %v677, %v821
        %v830 = vmin.f32 %v826, %v786
        %v831 = vmin.f32 %v827, %v787
        %v832 = vmin.f32 %v828, %v788
        %v833 = vmin.f32 %v829, %v789
        %v834 = vsub.f32 %v830, %v810
        %v835 = vsub.f32 %v831, %v811
        %v836 = vsub.f32 %v832, %v812
        %v837 = vsub.f32 %v833, %v813
        %v838 = vmax.f32 %v834, 0.0
        %v839 = vmax.f32 %v835, 0.0
        %v840 = vmax.f32 %v836, 0.0
        %v841 = vmax.f32 %v837, 0.0
        %v842 = vmul.f32 %v838, 0.125
        %v843 = vmul.f32 %v839, 0.125
        %v844 = vmul.f32 %v840, 0.125
        %v845 = vmul.f32 %v841, 0.125
        %v850 = vrot.slane %v610, 3
        %v851 = vrot.slane %v611, 3
        %v852 = vrot.slane %v612, 3
        %v853 = vrot.slane %v613, 3
        %v862 = vrot.slane %v614, 6
        %v863 = vrot.slane %v615, 6
        %v864 = vrot.slane %v616, 6
        %v865 = vrot.slane %v617, 6
        %vm870 = vcmask 1040384
        %v871 = vsel %vm870, %v594, %v850
        %v872 = vsel %vm870, %v595, %v851
        %v873 = vsel %vm870, %v596, %v852
        %v874 = vsel %vm870, %v597, %v853
        %vm875 = vcmask 1041408
        %v876 = vsel %vm875, %v871, %v862
        %v877 = vsel %vm875, %v872, %v863
        %v878 = vsel %vm875, %v873, %v864
        %v879 = vsel %vm875, %v874, %v865
        %v884 = vrot.slane %v400, 3
        %v885 = vrot.slane %v401, 3
        %v886 = vrot.slane %v402, 3
        %v887 = vrot.slane %v403, 3
        %v892 = vrot.slane %v400, 6
        %v893 = vrot.slane %v401, 6
        %v894 = vrot.slane %v402, 6
        %v895 = vrot.slane %v403, 6
        %v904 = vrot.slane %v404, 1
        %v905 = vrot.slane %v405, 1
        %v906 = vrot.slane %v406, 1
        %v907 = vrot.slane %v407, 1
        %v912 = vsel %vm870, %v884, %v892
        %v913 = vsel %vm870, %v885, %v893
        %v914 = vsel %vm870, %v886, %v894
        %v915 = vsel %vm870, %v887, %v895
        %v916 = vsel %vm875, %v912, %v904
        %v917 = vsel %vm875, %v913, %v905
        %v918 = vsel %vm875, %v914, %v906
        %v919 = vsel %vm875, %v915, %v907
        %v920 = vadd.f32 %v916, 0.5
        %v921 = vadd.f32 %v917, 0.5
        %v922 = vadd.f32 %v918, 0.5
        %v923 = vadd.f32 %v919, 0.5
        %v924 = vadd.f32 %v916, 1.0
        %v925 = vadd.f32 %v917, 1.0
        %v926 = vadd.f32 %v918, 1.0
        %v927 = vadd.f32 %v919, 1.0
        %v928 = vmul.f32 %v876, 2.0
        %v929 = vmul.f32 %v877, 2.0
        %v930 = vmul.f32 %v878, 2.0
        %v931 = vmul.f32 %v879, 2.0
        %v932 = vmul.f32 %v916, 2.0
        %v933 = vmul.f32 %v917, 2.0
        %v934 = vmul.f32 %v918, 2.0
        %v935 = vmul.f32 %v919, 2.0
        %v936 = vadd.f32 %v932, 1.0
        %v937 = vadd.f32 %v933, 1.0
        %v938 = vadd.f32 %v934, 1.0
        %v939 = vadd.f32 %v935, 1.0
        %v940 = vadd.f32 %v932, 1.5
        %v941 = vadd.f32 %v933, 1.5
        %v942 = vadd.f32 %v934, 1.5
        %v943 = vadd.f32 %v935, 1.5
        %v944 = vmul.f32 %v876, 4.0
        %v945 = vmul.f32 %v877, 4.0
        %v946 = vmul.f32 %v878, 4.0
        %v947 = vmul.f32 %v879, 4.0
        %v948 = vmul.f32 %v916, 4.0
        %v949 = vmul.f32 %v917, 4.0
        %v950 = vmul.f32 %v918, 4.0
        %v951 = vmul.f32 %v919, 4.0
        %v952 = vadd.f32 %v948, 2.0
        %v953 = vadd.f32 %v949, 2.0
        %v954 = vadd.f32 %v950, 2.0
        %v955 = vadd.f32 %v951, 2.0
        %v956 = vadd.f32 %v948, 2.5
        %v957 = vadd.f32 %v949, 2.5
        %v958 = vadd.f32 %v950, 2.5
        %v959 = vadd.f32 %v951, 2.5
        %v960 = vmul.f32 %v876, 8.0
        %v961 = vmul.f32 %v877, 8.0
        %v962 = vmul.f32 %v878, 8.0
        %v963 = vmul.f32 %v879, 8.0
        %v964 = vmul.f32 %v916, 8.0
        %v965 = vmul.f32 %v917, 8.0
        %v966 = vmul.f32 %v918, 8.0
        %v967 = vmul.f32 %v919, 8.0
        %v968 = vadd.f32 %v964, 4.0
        %v969 = vadd.f32 %v965, 4.0
        %v970 = vadd.f32 %v966, 4.0
        %v971 = vadd.f32 %v967, 4.0
        %v972 = vadd.f32 %v964, 4.5
        %v973 = vadd.f32 %v965, 4.5
        %v974 = vadd.f32 %v966, 4.5
        %v975 = vadd.f32 %v967, 4.5
        %v980 = vrot.slane %v876, 5
        %v981 = vrot.slane %v877, 5
        %v982 = vrot.slane %v878, 5
        %v983 = vrot.slane %v879, 5
        %v992 = vrot.slane %v928, 2
        %v993 = vrot.slane %v929, 2
        %v994 = vrot.slane %v930, 2
        %v995 = vrot.slane %v931, 2
        %v1000 = vrot.slane %v928, 7
        %v1001 = vrot.slane %v929, 7
        %v1002 = vrot.slane %v930, 7
        %v1003 = vrot.slane %v931, 7
        %v1012 = vrot.slane %v944, 4
        %v1013 = vrot.slane %v945, 4
        %v1014 = vrot.slane %v946, 4
        %v1015 = vrot.slane %v947, 4
        %v1020 = vrot.slane %v944, 1
        %v1021 = vrot.slane %v945, 1
        %v1022 = vrot.slane %v946, 1
        %v1023 = vrot.slane %v947, 1
        %v1032 = vrot.slane %v960, 6
        %v1033 = vrot.slane %v961, 6
        %v1034 = vrot.slane %v962, 6
        %v1035 = vrot.slane %v963, 6
        %v1040 = vrot.slane %v960, 3
        %v1041 = vrot.slane %v961, 3
        %v1042 = vrot.slane %v962, 3
        %v1043 = vrot.slane %v963, 3
        %vm1048 = vcmask 1042432
        %v1049 = vsel %vm1048, %v876, %v980
        %v1050 = vsel %vm1048, %v877, %v981
        %v1051 = vsel %vm1048, %v878, %v982
        %v1052 = vsel %vm1048, %v879, %v983
        %vm1053 = vcmask 1045504
        %v1054 = vsel %vm1053, %v1049, %v992
        %v1055 = vsel %vm1053, %v1050, %v993
        %v1056 = vsel %vm1053, %v1051, %v994
        %v1057 = vsel %vm1053, %v1052, %v995
        %v1058 = vsel %vm870, %v992, %v1000
        %v1059 = vsel %vm870, %v993, %v1001
        %v1060 = vsel %vm870, %v994, %v1002
        %v1061 = vsel %vm870, %v995, %v1003
        %vm1062 = vcmask 1043456
        %v1063 = vsel %vm1062, %v1058, %v1012
        %v1064 = vsel %vm1062, %v1059, %v1013
        %v1065 = vsel %vm1062, %v1060, %v1014
        %v1066 = vsel %vm1062, %v1061, %v1015
        %vm1067 = vcmask 1046528
        %v1068 = vsel %vm1067, %v1063, %v1020
        %v1069 = vsel %vm1067, %v1064, %v1021
        %v1070 = vsel %vm1067, %v1065, %v1022
        %v1071 = vsel %vm1067, %v1066, %v1023
        %v1072 = vsel %vm875, %v1020, %v1032
        %v1073 = vsel %vm875, %v1021, %v1033
        %v1074 = vsel %vm875, %v1022, %v1034
        %v1075 = vsel %vm875, %v1023, %v1035
        %vm1076 = vcmask 1044480
        %v1077 = vsel %vm1076, %v1072, %v1040
        %v1078 = vsel %vm1076, %v1073, %v1041
        %v1079 = vsel %vm1076, %v1074, %v1042
        %v1080 = vsel %vm1076, %v1075, %v1043
        %v1085 = vrot.slane %v924, 5
        %v1086 = vrot.slane %v925, 5
        %v1087 = vrot.slane %v926, 5
        %v1088 = vrot.slane %v927, 5
        %v1097 = vrot.slane %v936, 2
        %v1098 = vrot.slane %v937, 2
        %v1099 = vrot.slane %v938, 2
        %v1100 = vrot.slane %v939, 2
        %v1109 = vrot.slane %v940, 7
        %v1110 = vrot.slane %v941, 7
        %v1111 = vrot.slane %v942, 7
        %v1112 = vrot.slane %v943, 7
        %v1121 = vrot.slane %v952, 4
        %v1122 = vrot.slane %v953, 4
        %v1123 = vrot.slane %v954, 4
        %v1124 = vrot.slane %v955, 4
        %v1133 = vrot.slane %v956, 1
        %v1134 = vrot.slane %v957, 1
        %v1135 = vrot.slane %v958, 1
        %v1136 = vrot.slane %v959, 1
        %v1145 = vrot.slane %v968, 6
        %v1146 = vrot.slane %v969, 6
        %v1147 = vrot.slane %v970, 6
        %v1148 = vrot.slane %v971, 6
        %v1157 = vrot.slane %v972, 3
        %v1158 = vrot.slane %v973, 3
        %v1159 = vrot.slane %v974, 3
        %v1160 = vrot.slane %v975, 3
        %v1165 = vsel %vm1048, %v920, %v1085
        %v1166 = vsel %vm1048, %v921, %v1086
        %v1167 = vsel %vm1048, %v922, %v1087
        %v1168 = vsel %vm1048, %v923, %v1088
        %v1169 = vsel %vm1053, %v1165, %v1097
        %v1170 = vsel %vm1053, %v1166, %v1098
        %v1171 = vsel %vm1053, %v1167, %v1099
        %v1172 = vsel %vm1053, %v1168, %v1100
        %v1173 = vsel %vm870, %v1097, %v1109
        %v1174 = vsel %vm870, %v1098, %v1110
        %v1175 = vsel %vm870, %v1099, %v1111
        %v1176 = vsel %vm870, %v1100, %v1112
        %v1177 = vsel %vm1062, %v1173, %v1121
        %v1178 = vsel %vm1062, %v1174, %v1122
        %v1179 = vsel %vm1062, %v1175, %v1123
        %v1180 = vsel %vm1062, %v1176, %v1124
        %v1181 = vsel %vm1067, %v1177, %v1133
        %v1182 = vsel %vm1067, %v1178, %v1134
        %v1183 = vsel %vm1067, %v1179, %v1135
        %v1184 = vsel %vm1067, %v1180, %v1136
        %v1185 = vsel %vm875, %v1133, %v1145
        %v1186 = vsel %vm875, %v1134, %v1146
        %v1187 = vsel %vm875, %v1135, %v1147
        %v1188 = vsel %vm875, %v1136, %v1148
        %v1189 = vsel %vm1076, %v1185, %v1157
        %v1190 = vsel %vm1076, %v1186, %v1158
        %v1191 = vsel %vm1076, %v1187, %v1159
        %v1192 = vsel %vm1076, %v1188, %v1160
        %v1193 = vmul.f32 %v594, %v594
        %v1194 = vmul.f32 %v595, %v595
        %v1195 = vmul.f32 %v596, %v596
        %v1196 = vmul.f32 %v597, %v597
        %v1197 = vmul.f32 %v610, %v610
        %v1198 = vmul.f32 %v611, %v611
        %v1199 = vmul.f32 %v612, %v612
        %v1200 = vmul.f32 %v613, %v613
        %v1201 = vmul.f32 %v614, %v614
        %v1202 = vmul.f32 %v615, %v615
        %v1203 = vmul.f32 %v616, %v616
        %v1204 = vmul.f32 %v617, %v617
        %v1205 = vrot.slane %v610, 4
        %v1206 = vrot.slane %v611, 4
        %v1207 = vrot.slane %v612, 4
        %v1208 = vrot.slane %v613, 4
        %v1213 = vmul.f32 %v594, %v1205
        %v1214 = vmul.f32 %v595, %v1206
        %v1215 = vmul.f32 %v596, %v1207
        %v1216 = vmul.f32 %v597, %v1208
        %v1217 = vrot.slane %v614, 4
        %v1218 = vrot.slane %v615, 4
        %v1219 = vrot.slane %v616, 4
        %v1220 = vrot.slane %v617, 4
        %v1225 = vmul.f32 %v610, %v1217
        %v1226 = vmul.f32 %v611, %v1218
        %v1227 = vmul.f32 %v612, %v1219
        %v1228 = vmul.f32 %v613, %v1220
        %v1229 = vmul.f32 %v594, %v614
        %v1230 = vmul.f32 %v595, %v615
        %v1231 = vmul.f32 %v596, %v616
        %v1232 = vmul.f32 %v597, %v617
        %v1233 = vmul.f32 %v610, -0.48860252
        %v1234 = vmul.f32 %v611, -0.48860252
        %v1235 = vmul.f32 %v612, -0.48860252
        %v1236 = vmul.f32 %v613, -0.48860252
        %v1237 = vmul.f32 %v614, 0.48860252
        %v1238 = vmul.f32 %v615, 0.48860252
        %v1239 = vmul.f32 %v616, 0.48860252
        %v1240 = vmul.f32 %v617, 0.48860252
        %v1241 = vmul.f32 %v594, -0.48860252
        %v1242 = vmul.f32 %v595, -0.48860252
        %v1243 = vmul.f32 %v596, -0.48860252
        %v1244 = vmul.f32 %v597, -0.48860252
        %v1245 = vmul.f32 %v1213, 1.0925485
        %v1246 = vmul.f32 %v1214, 1.0925485
        %v1247 = vmul.f32 %v1215, 1.0925485
        %v1248 = vmul.f32 %v1216, 1.0925485
        %v1249 = vmul.f32 %v1225, -1.0925485
        %v1250 = vmul.f32 %v1226, -1.0925485
        %v1251 = vmul.f32 %v1227, -1.0925485
        %v1252 = vmul.f32 %v1228, -1.0925485
        %v1253 = vmul.f32 %v1201, 0.9461747
        %v1254 = vmul.f32 %v1202, 0.9461747
        %v1255 = vmul.f32 %v1203, 0.9461747
        %v1256 = vmul.f32 %v1204, 0.9461747
        %v1257 = vsub.f32 %v1253, 0.31539157
        %v1258 = vsub.f32 %v1254, 0.31539157
        %v1259 = vsub.f32 %v1255, 0.31539157
        %v1260 = vsub.f32 %v1256, 0.31539157
        %v1261 = vmul.f32 %v1229, -1.0925485
        %v1262 = vmul.f32 %v1230, -1.0925485
        %v1263 = vmul.f32 %v1231, -1.0925485
        %v1264 = vmul.f32 %v1232, -1.0925485
        %v1269 = vrot.slane %v1197, 4
        %v1270 = vrot.slane %v1198, 4
        %v1271 = vrot.slane %v1199, 4
        %v1272 = vrot.slane %v1200, 4
        %v1277 = vsub.f32 %v1193, %v1269
        %v1278 = vsub.f32 %v1194, %v1270
        %v1279 = vsub.f32 %v1195, %v1271
        %v1280 = vsub.f32 %v1196, %v1272
        %v1281 = vmul.f32 %v1277, 0.54627424
        %v1282 = vmul.f32 %v1278, 0.54627424
        %v1283 = vmul.f32 %v1279, 0.54627424
        %v1284 = vmul.f32 %v1280, 0.54627424
        %v1285 = vmul.f32 %v610, -0.5900436
        %v1286 = vmul.f32 %v611, -0.5900436
        %v1287 = vmul.f32 %v612, -0.5900436
        %v1288 = vmul.f32 %v613, -0.5900436
        %v1289 = vmul.f32 %v1193, 3.0
        %v1290 = vmul.f32 %v1194, 3.0
        %v1291 = vmul.f32 %v1195, 3.0
        %v1292 = vmul.f32 %v1196, 3.0
        %v1293 = vsub.f32 %v1289, %v1269
        %v1294 = vsub.f32 %v1290, %v1270
        %v1295 = vsub.f32 %v1291, %v1271
        %v1296 = vsub.f32 %v1292, %v1272
        %v1301 = vrot.slane %v1293, 4
        %v1302 = vrot.slane %v1294, 4
        %v1303 = vrot.slane %v1295, 4
        %v1304 = vrot.slane %v1296, 4
        %v1309 = vmul.f32 %v1285, %v1301
        %v1310 = vmul.f32 %v1286, %v1302
        %v1311 = vmul.f32 %v1287, %v1303
        %v1312 = vmul.f32 %v1288, %v1304
        %v1313 = vmul.f32 %v1213, 2.8906114
        %v1314 = vmul.f32 %v1214, 2.8906114
        %v1315 = vmul.f32 %v1215, 2.8906114
        %v1316 = vmul.f32 %v1216, 2.8906114
        %v1317 = vmul.f32 %v1313, %v614
        %v1318 = vmul.f32 %v1314, %v615
        %v1319 = vmul.f32 %v1315, %v616
        %v1320 = vmul.f32 %v1316, %v617
        %v1321 = vmul.f32 %v610, 0.4570458
        %v1322 = vmul.f32 %v611, 0.4570458
        %v1323 = vmul.f32 %v612, 0.4570458
        %v1324 = vmul.f32 %v613, 0.4570458
        %v1325 = vmul.f32 %v1201, 5.0
        %v1326 = vmul.f32 %v1202, 5.0
        %v1327 = vmul.f32 %v1203, 5.0
        %v1328 = vmul.f32 %v1204, 5.0
        %v1329 = vsub.f32 1.0, %v1325
        %v1330 = vsub.f32 1.0, %v1326
        %v1331 = vsub.f32 1.0, %v1327
        %v1332 = vsub.f32 1.0, %v1328
        %v1337 = vrot.slane %v1329, 4
        %v1338 = vrot.slane %v1330, 4
        %v1339 = vrot.slane %v1331, 4
        %v1340 = vrot.slane %v1332, 4
        %v1345 = vmul.f32 %v1321, %v1337
        %v1346 = vmul.f32 %v1322, %v1338
        %v1347 = vmul.f32 %v1323, %v1339
        %v1348 = vmul.f32 %v1324, %v1340
        %v1349 = vmul.f32 %v614, 0.37317634
        %v1350 = vmul.f32 %v615, 0.37317634
        %v1351 = vmul.f32 %v616, 0.37317634
        %v1352 = vmul.f32 %v617, 0.37317634
        %v1353 = vsub.f32 %v1325, 3.0
        %v1354 = vsub.f32 %v1326, 3.0
        %v1355 = vsub.f32 %v1327, 3.0
        %v1356 = vsub.f32 %v1328, 3.0
        %v1357 = vmul.f32 %v1349, %v1353
        %v1358 = vmul.f32 %v1350, %v1354
        %v1359 = vmul.f32 %v1351, %v1355
        %v1360 = vmul.f32 %v1352, %v1356
        %v1361 = vmul.f32 %v594, 0.4570458
        %v1362 = vmul.f32 %v595, 0.4570458
        %v1363 = vmul.f32 %v596, 0.4570458
        %v1364 = vmul.f32 %v597, 0.4570458
        %v1365 = vmul.f32 %v1361, %v1329
        %v1366 = vmul.f32 %v1362, %v1330
        %v1367 = vmul.f32 %v1363, %v1331
        %v1368 = vmul.f32 %v1364, %v1332
        %v1369 = vmul.f32 %v614, 1.4453057
        %v1370 = vmul.f32 %v615, 1.4453057
        %v1371 = vmul.f32 %v616, 1.4453057
        %v1372 = vmul.f32 %v617, 1.4453057
        %v1373 = vmul.f32 %v1369, %v1277
        %v1374 = vmul.f32 %v1370, %v1278
        %v1375 = vmul.f32 %v1371, %v1279
        %v1376 = vmul.f32 %v1372, %v1280
        %v1377 = vmul.f32 %v594, 0.5900436
        %v1378 = vmul.f32 %v595, 0.5900436
        %v1379 = vmul.f32 %v596, 0.5900436
        %v1380 = vmul.f32 %v597, 0.5900436
        %v1381 = vmul.f32 %v1197, 3.0
        %v1382 = vmul.f32 %v1198, 3.0
        %v1383 = vmul.f32 %v1199, 3.0
        %v1384 = vmul.f32 %v1200, 3.0
        %v1389 = vrot.slane %v1381, 4
        %v1390 = vrot.slane %v1382, 4
        %v1391 = vrot.slane %v1383, 4
        %v1392 = vrot.slane %v1384, 4
        %v1397 = vsub.f32 %v1193, %v1389
        %v1398 = vsub.f32 %v1194, %v1390
        %v1399 = vsub.f32 %v1195, %v1391
        %v1400 = vsub.f32 %v1196, %v1392
        %v1401 = vmul.f32 %v1377, %v1397
        %v1402 = vmul.f32 %v1378, %v1398
        %v1403 = vmul.f32 %v1379, %v1399
        %v1404 = vmul.f32 %v1380, %v1400
        %v1409 = vrot.slane %v1233, 3
        %v1410 = vrot.slane %v1234, 3
        %v1411 = vrot.slane %v1235, 3
        %v1412 = vrot.slane %v1236, 3
        %v1421 = vrot.slane %v1237, 6
        %v1422 = vrot.slane %v1238, 6
        %v1423 = vrot.slane %v1239, 6
        %v1424 = vrot.slane %v1240, 6
        %v1433 = vrot.slane %v1241, 5
        %v1434 = vrot.slane %v1242, 5
        %v1435 = vrot.slane %v1243, 5
        %v1436 = vrot.slane %v1244, 5
        %v1445 = vrot.slane %v1245, 4
        %v1446 = vrot.slane %v1246, 4
        %v1447 = vrot.slane %v1247, 4
        %v1448 = vrot.slane %v1248, 4
        %v1457 = vrot.slane %v1249, 7
        %v1458 = vrot.slane %v1250, 7
        %v1459 = vrot.slane %v1251, 7
        %v1460 = vrot.slane %v1252, 7
        %v1469 = vrot.slane %v1257, 2
        %v1470 = vrot.slane %v1258, 2
        %v1471 = vrot.slane %v1259, 2
        %v1472 = vrot.slane %v1260, 2
        %v1481 = vrot.slane %v1261, 1
        %v1482 = vrot.slane %v1262, 1
        %v1483 = vrot.slane %v1263, 1
        %v1484 = vrot.slane %v1264, 1
        %v1493 = vrot.slane %v1309, 3
        %v1494 = vrot.slane %v1310, 3
        %v1495 = vrot.slane %v1311, 3
        %v1496 = vrot.slane %v1312, 3
        %v1505 = vrot.slane %v1317, 6
        %v1506 = vrot.slane %v1318, 6
        %v1507 = vrot.slane %v1319, 6
        %v1508 = vrot.slane %v1320, 6
        %v1517 = vrot.slane %v1345, 1
        %v1518 = vrot.slane %v1346, 1
        %v1519 = vrot.slane %v1347, 1
        %v1520 = vrot.slane %v1348, 1
        %v1529 = vrot.slane %v1357, 4
        %v1530 = vrot.slane %v1358, 4
        %v1531 = vrot.slane %v1359, 4
        %v1532 = vrot.slane %v1360, 4
        %v1541 = vrot.slane %v1365, 3
        %v1542 = vrot.slane %v1366, 3
        %v1543 = vrot.slane %v1367, 3
        %v1544 = vrot.slane %v1368, 3
        %v1553 = vrot.slane %v1373, 2
        %v1554 = vrot.slane %v1374, 2
        %v1555 = vrot.slane %v1375, 2
        %v1556 = vrot.slane %v1376, 2
        %v1565 = vrot.slane %v1401, 1
        %v1566 = vrot.slane %v1402, 1
        %v1567 = vrot.slane %v1403, 1
        %v1568 = vrot.slane %v1404, 1
        %v1573 = vsel %vm870, 0.2820948, %v1409
        %v1574 = vsel %vm870, 0.2820948, %v1410
        %v1575 = vsel %vm870, 0.2820948, %v1411
        %v1576 = vsel %vm870, 0.2820948, %v1412
        %v1577 = vsel %vm875, %v1573, %v1421
        %v1578 = vsel %vm875, %v1574, %v1422
        %v1579 = vsel %vm875, %v1575, %v1423
        %v1580 = vsel %vm875, %v1576, %v1424
        %v1581 = vsel %vm1048, %v1577, %v1433
        %v1582 = vsel %vm1048, %v1578, %v1434
        %v1583 = vsel %vm1048, %v1579, %v1435
        %v1584 = vsel %vm1048, %v1580, %v1436
        %v1585 = vsel %vm1062, %v1581, %v1445
        %v1586 = vsel %vm1062, %v1582, %v1446
        %v1587 = vsel %vm1062, %v1583, %v1447
        %v1588 = vsel %vm1062, %v1584, %v1448
        %v1589 = vsel %vm1076, %v1585, %v1457
        %v1590 = vsel %vm1076, %v1586, %v1458
        %v1591 = vsel %vm1076, %v1587, %v1459
        %v1592 = vsel %vm1076, %v1588, %v1460
        %v1593 = vsel %vm1053, %v1589, %v1469
        %v1594 = vsel %vm1053, %v1590, %v1470
        %v1595 = vsel %vm1053, %v1591, %v1471
        %v1596 = vsel %vm1053, %v1592, %v1472
        %v1597 = vsel %vm1067, %v1593, %v1481
        %v1598 = vsel %vm1067, %v1594, %v1482
        %v1599 = vsel %vm1067, %v1595, %v1483
        %v1600 = vsel %vm1067, %v1596, %v1484
        %v1601 = vsel %vm870, %v1281, %v1493
        %v1602 = vsel %vm870, %v1282, %v1494
        %v1603 = vsel %vm870, %v1283, %v1495
        %v1604 = vsel %vm870, %v1284, %v1496
        %v1605 = vsel %vm875, %v1601, %v1505
        %v1606 = vsel %vm875, %v1602, %v1506
        %v1607 = vsel %vm875, %v1603, %v1507
        %v1608 = vsel %vm875, %v1604, %v1508
        %v1609 = vsel %vm1048, %v1605, %v1517
        %v1610 = vsel %vm1048, %v1606, %v1518
        %v1611 = vsel %vm1048, %v1607, %v1519
        %v1612 = vsel %vm1048, %v1608, %v1520
        %v1613 = vsel %vm1062, %v1609, %v1529
        %v1614 = vsel %vm1062, %v1610, %v1530
        %v1615 = vsel %vm1062, %v1611, %v1531
        %v1616 = vsel %vm1062, %v1612, %v1532
        %v1617 = vsel %vm1076, %v1613, %v1541
        %v1618 = vsel %vm1076, %v1614, %v1542
        %v1619 = vsel %vm1076, %v1615, %v1543
        %v1620 = vsel %vm1076, %v1616, %v1544
        %v1621 = vsel %vm1053, %v1617, %v1553
        %v1622 = vsel %vm1053, %v1618, %v1554
        %v1623 = vsel %vm1053, %v1619, %v1555
        %v1624 = vsel %vm1053, %v1620, %v1556
        %v1625 = vsel %vm1067, %v1621, %v1565
        %v1626 = vsel %vm1067, %v1622, %v1566
        %v1627 = vsel %vm1067, %v1623, %v1567
        %v1628 = vsel %vm1067, %v1624, %v1568
        %v1629 = vpack.c.bf16 %v1598, %v1597
        %v1630 = vpack.c.bf16 %v1600, %v1599
        %v1631 = vpack.c.bf16 %v1626, %v1625
        %v1632 = vpack.c.bf16 %v1628, %v1627
        %v1633 = vld [vmem:[%s2] sm:$0xf]
        %v1634 = vld [vmem:[%s2 + $0x4] sm:$0xf]
        %v1635 = vld [vmem:[%s2 + $0x8] sm:$0xf]
        %v1636 = vld [vmem:[%s2 + $0xc] sm:$0xf]
        %v1637 = vld [vmem:[%s2 + $0x10] sm:$0xf]
        %v1638 = vld [vmem:[%s2 + $0x14] sm:$0xf]
        %v1639 = vld [vmem:[%s2 + $0x18] sm:$0xf]
        %v1640 = vld [vmem:[%s2 + $0x1c] sm:$0xf]
        %v1641 = vld [vmem:[%s3] sm:$0xf]
        %v1642 = vld [vmem:[%s3 + $0x4] sm:$0xf]
        %v1643 = vld [vmem:[%s4] sm:$0xf]
        %v1644 = vld [vmem:[%s4 + $0x4] sm:$0xf]
        %v1645 = vld [vmem:[%s4 + $0x8] sm:$0xf]
        %v1646 = vld [vmem:[%s4 + $0xc] sm:$0xf]
        %v1647 = vld [vmem:[%s4 + $0x10] sm:$0xf]
        %v1648 = vld [vmem:[%s4 + $0x14] sm:$0xf]
        %v1649 = vld [vmem:[%s4 + $0x18] sm:$0xf]
        %v1650 = vld [vmem:[%s4 + $0x1c] sm:$0xf]
        %v1651 = vld [vmem:[%s5] sm:$0xf]
        %v1652 = vld [vmem:[%s5 + $0x4] sm:$0xf]
        %v1653 = vld [vmem:[%s5 + $0x8] sm:$0xf]
        %v1654 = vld [vmem:[%s5 + $0xc] sm:$0xf]
        %v1655 = vld [vmem:[%s5 + $0x10] sm:$0xf]
        %v1656 = vld [vmem:[%s5 + $0x14] sm:$0xf]
        %v1657 = vld [vmem:[%s5 + $0x18] sm:$0xf]
        %v1658 = vld [vmem:[%s5 + $0x1c] sm:$0xf]
        %v1659 = vld [vmem:[%s6] sm:$0xf]
        %v1660 = vmul.f32 %v842, 0.5
        %v1661 = vmul.f32 %v843, 0.5
        %v1662 = vmul.f32 %v844, 0.5
        %v1663 = vmul.f32 %v845, 0.5
        %v1664 = vadd.f32 %v810, %v1660
        %v1665 = vadd.f32 %v811, %v1661
        %v1666 = vadd.f32 %v812, %v1662
        %v1667 = vadd.f32 %v813, %v1663
        %v1668 = vperm.slane %v1664, 3
        %v1669 = vperm.slane %v1665, 3
        %v1670 = vperm.slane %v1666, 3
        %v1671 = vperm.slane %v1667, 3
        %v1672 = vmul.f32 %v1668, %v1054
        %v1673 = vmul.f32 %v1669, %v1055
        %v1674 = vmul.f32 %v1670, %v1056
        %v1675 = vmul.f32 %v1671, %v1057
        %v1676 = vmul.f32 %v1668, %v1068
        %v1677 = vmul.f32 %v1669, %v1069
        %v1678 = vmul.f32 %v1670, %v1070
        %v1679 = vmul.f32 %v1671, %v1071
        %v1680 = vmul.f32 %v1668, %v1077
        %v1681 = vmul.f32 %v1669, %v1078
        %v1682 = vmul.f32 %v1670, %v1079
        %v1683 = vmul.f32 %v1671, %v1080
        %v1684 = vadd.f32 %v1169, %v1672
        %v1685 = vadd.f32 %v1170, %v1673
        %v1686 = vadd.f32 %v1171, %v1674
        %v1687 = vadd.f32 %v1172, %v1675
        %v1688 = vadd.f32 %v1181, %v1676
        %v1689 = vadd.f32 %v1182, %v1677
        %v1690 = vadd.f32 %v1183, %v1678
        %v1691 = vadd.f32 %v1184, %v1679
        %v1692 = vadd.f32 %v1189, %v1680
        %v1693 = vadd.f32 %v1190, %v1681
        %v1694 = vadd.f32 %v1191, %v1682
        %v1695 = vadd.f32 %v1192, %v1683
        %v1696 = vfloor.f32 %v1684
        %v1697 = vfloor.f32 %v1685
        %v1698 = vfloor.f32 %v1686
        %v1699 = vfloor.f32 %v1687
        %v1700 = vfloor.f32 %v1688
        %v1701 = vfloor.f32 %v1689
        %v1702 = vfloor.f32 %v1690
        %v1703 = vfloor.f32 %v1691
        %v1704 = vfloor.f32 %v1692
        %v1705 = vfloor.f32 %v1693
        %v1706 = vfloor.f32 %v1694
        %v1707 = vfloor.f32 %v1695
        %v1708 = vsub.f32 %v1684, %v1696
        %v1709 = vsub.f32 %v1685, %v1697
        %v1710 = vsub.f32 %v1686, %v1698
        %v1711 = vsub.f32 %v1687, %v1699
        %v1712 = vsub.f32 %v1688, %v1700
        %v1713 = vsub.f32 %v1689, %v1701
        %v1714 = vsub.f32 %v1690, %v1702
        %v1715 = vsub.f32 %v1691, %v1703
        %v1716 = vsub.f32 %v1692, %v1704
        %v1717 = vsub.f32 %v1693, %v1705
        %v1718 = vsub.f32 %v1694, %v1706
        %v1719 = vsub.f32 %v1695, %v1707
        %v1720 = vmul.f32 %v1708, 2.0
        %v1721 = vmul.f32 %v1709, 2.0
        %v1722 = vmul.f32 %v1710, 2.0
        %v1723 = vmul.f32 %v1711, 2.0
        %v1724 = vmul.f32 %v1712, 2.0
        %v1725 = vmul.f32 %v1713, 2.0
        %v1726 = vmul.f32 %v1714, 2.0
        %v1727 = vmul.f32 %v1715, 2.0
        %v1728 = vmul.f32 %v1716, 2.0
        %v1729 = vmul.f32 %v1717, 2.0
        %v1730 = vmul.f32 %v1718, 2.0
        %v1731 = vmul.f32 %v1719, 2.0
        %v1732 = vsub.f32 %v1720, 1.0
        %v1733 = vsub.f32 %v1721, 1.0
        %v1734 = vsub.f32 %v1722, 1.0
        %v1735 = vsub.f32 %v1723, 1.0
        %v1736 = vsub.f32 %v1724, 1.0
        %v1737 = vsub.f32 %v1725, 1.0
        %v1738 = vsub.f32 %v1726, 1.0
        %v1739 = vsub.f32 %v1727, 1.0
        %v1740 = vsub.f32 %v1728, 1.0
        %v1741 = vsub.f32 %v1729, 1.0
        %v1742 = vsub.f32 %v1730, 1.0
        %v1743 = vsub.f32 %v1731, 1.0
        %v1744 = vand.u32 2147483647, %v1732
        %v1745 = vand.u32 2147483647, %v1733
        %v1746 = vand.u32 2147483647, %v1734
        %v1747 = vand.u32 2147483647, %v1735
        %v1748 = vand.u32 2147483647, %v1736
        %v1749 = vand.u32 2147483647, %v1737
        %v1750 = vand.u32 2147483647, %v1738
        %v1751 = vand.u32 2147483647, %v1739
        %v1752 = vand.u32 2147483647, %v1740
        %v1753 = vand.u32 2147483647, %v1741
        %v1754 = vand.u32 2147483647, %v1742
        %v1755 = vand.u32 2147483647, %v1743
        %v1756 = vpack.c.bf16 %v1748, %v1744
        %v1757 = vpack.c.bf16 %v1749, %v1745
        %v1758 = vpack.c.bf16 %v1750, %v1746
        %v1759 = vpack.c.bf16 %v1751, %v1747
        %v1760 = vpack.c.bf16 %v1752, %v1752
        %v1761 = vpack.c.bf16 %v1753, %v1753
        %v1762 = vpack.c.bf16 %v1754, %v1754
        %v1763 = vpack.c.bf16 %v1755, %v1755
        %v1772 = vunpack.c.l.b16 %v1633
        %v1773 = vunpack.c.l.b16 %v1634
        %v1774 = vunpack.c.l.b16 %v1635
        %v1775 = vunpack.c.l.b16 %v1636
        %v1776 = vunpack.c.l.b16 %v1637
        %v1777 = vunpack.c.l.b16 %v1638
        %v1778 = vunpack.c.l.b16 %v1639
        %v1779 = vunpack.c.l.b16 %v1640
        %v1780 = vpack.c.b16 %v1773, %v1772
        %v1781 = vpack.c.b16 %v1775, %v1774
        %v1782 = vpack.c.b16 %v1777, %v1776
        %v1783 = vpack.c.b16 %v1779, %v1778
        %vm1784 = vcmask 195584
        %v1786 = vsel %vm1784, %v1780, 0
        %v1789 = vsel %vm1784, %v1781, 0
        %v1792 = vsel %vm1784, %v1782, 0
        %v1795 = vsel %vm1784, %v1783, 0
        %v1798 = vsel %vm1062, %v1760, 0
        %v1801 = vsel %vm1062, %v1761, 0
        %v1804 = vsel %vm1062, %v1762, 0
        %v1807 = vsel %vm1062, %v1763, 0
        %1809 = vmatpush.bf16.msra.mxu0 0
        %1810 = vmatpush.bf16.msra.mxu0 0
        %1811 = vmatpush.bf16.msra.mxu0 0
        %1812 = vmatpush.bf16.msra.mxu0 0
        %1813 = vmatpush.bf16.msra.mxu0 0
        %1814 = vmatpush.bf16.msra.mxu0 0
        %1815 = vmatpush.bf16.msra.mxu0 %v1798
        %1816 = vmatpush.bf16.msra.mxu0 %v1756
        %1817 = vmatmul.bf16.gmra.mxu0 %v1786
        %v1818 = vpop.f32.mrf.mxu0
        %v1819 = vadd.f32 0.0, %v1818
        %v1820 = vpop.f32.mrf.mxu0
        %v1821 = vadd.f32 0.0, %v1820
        %1822 = vmatmul.bf16.gmra.mxu0 %v1789
        %v1823 = vpop.f32.mrf.mxu0
        %v1824 = vadd.f32 0.0, %v1823
        %v1825 = vpop.f32.mrf.mxu0
        %v1826 = vadd.f32 0.0, %v1825
        %1827 = vmatmul.bf16.gmra.mxu0 %v1792
        %v1828 = vpop.f32.mrf.mxu0
        %v1829 = vadd.f32 0.0, %v1828
        %v1830 = vpop.f32.mrf.mxu0
        %v1831 = vadd.f32 0.0, %v1830
        %1832 = vmatmul.bf16.gmra.mxu0 %v1795
        %v1833 = vpop.f32.mrf.mxu0
        %v1834 = vadd.f32 0.0, %v1833
        %v1835 = vpop.f32.mrf.mxu0
        %v1836 = vadd.f32 0.0, %v1835
        %1837 = vdwg.mxu0
        %1838 = vmatpush.bf16.msra.mxu0 0
        %1839 = vmatpush.bf16.msra.mxu0 0
        %1840 = vmatpush.bf16.msra.mxu0 0
        %1841 = vmatpush.bf16.msra.mxu0 0
        %1842 = vmatpush.bf16.msra.mxu0 0
        %1843 = vmatpush.bf16.msra.mxu0 0
        %1844 = vmatpush.bf16.msra.mxu0 %v1801
        %1845 = vmatpush.bf16.msra.mxu0 %v1757
        %1846 = vmatmul.bf16.gmra.mxu0 %v1786
        %v1847 = vpop.f32.mrf.mxu0
        %v1848 = vadd.f32 0.0, %v1847
        %v1849 = vpop.f32.mrf.mxu0
        %v1850 = vadd.f32 0.0, %v1849
        %1851 = vmatmul.bf16.gmra.mxu0 %v1789
        %v1852 = vpop.f32.mrf.mxu0
        %v1853 = vadd.f32 0.0, %v1852
        %v1854 = vpop.f32.mrf.mxu0
        %v1855 = vadd.f32 0.0, %v1854
        %1856 = vmatmul.bf16.gmra.mxu0 %v1792
        %v1857 = vpop.f32.mrf.mxu0
        %v1858 = vadd.f32 0.0, %v1857
        %v1859 = vpop.f32.mrf.mxu0
        %v1860 = vadd.f32 0.0, %v1859
        %1861 = vmatmul.bf16.gmra.mxu0 %v1795
        %v1862 = vpop.f32.mrf.mxu0
        %v1863 = vadd.f32 0.0, %v1862
        %v1864 = vpop.f32.mrf.mxu0
        %v1865 = vadd.f32 0.0, %v1864
        %1866 = vdwg.mxu0
        %1867 = vmatpush.bf16.msra.mxu0 0
        %1868 = vmatpush.bf16.msra.mxu0 0
        %1869 = vmatpush.bf16.msra.mxu0 0
        %1870 = vmatpush.bf16.msra.mxu0 0
        %1871 = vmatpush.bf16.msra.mxu0 0
        %1872 = vmatpush.bf16.msra.mxu0 0
        %1873 = vmatpush.bf16.msra.mxu0 %v1804
        %1874 = vmatpush.bf16.msra.mxu0 %v1758
        %1875 = vmatmul.bf16.gmra.mxu0 %v1786
        %v1876 = vpop.f32.mrf.mxu0
        %v1877 = vadd.f32 0.0, %v1876
        %v1878 = vpop.f32.mrf.mxu0
        %v1879 = vadd.f32 0.0, %v1878
        %1880 = vmatmul.bf16.gmra.mxu0 %v1789
        %v1881 = vpop.f32.mrf.mxu0
        %v1882 = vadd.f32 0.0, %v1881
        %v1883 = vpop.f32.mrf.mxu0
        %v1884 = vadd.f32 0.0, %v1883
        %1885 = vmatmul.bf16.gmra.mxu0 %v1792
        %v1886 = vpop.f32.mrf.mxu0
        %v1887 = vadd.f32 0.0, %v1886
        %v1888 = vpop.f32.mrf.mxu0
        %v1889 = vadd.f32 0.0, %v1888
        %1890 = vmatmul.bf16.gmra.mxu0 %v1795
        %v1891 = vpop.f32.mrf.mxu0
        %v1892 = vadd.f32 0.0, %v1891
        %v1893 = vpop.f32.mrf.mxu0
        %v1894 = vadd.f32 0.0, %v1893
        %1895 = vdwg.mxu0
        %1896 = vmatpush.bf16.msra.mxu0 0
        %1897 = vmatpush.bf16.msra.mxu0 0
        %1898 = vmatpush.bf16.msra.mxu0 0
        %1899 = vmatpush.bf16.msra.mxu0 0
        %1900 = vmatpush.bf16.msra.mxu0 0
        %1901 = vmatpush.bf16.msra.mxu0 0
        %1902 = vmatpush.bf16.msra.mxu0 %v1807
        %1903 = vmatpush.bf16.msra.mxu0 %v1759
        %1904 = vmatmul.bf16.gmra.mxu0 %v1786
        %v1905 = vpop.f32.mrf.mxu0
        %v1906 = vadd.f32 0.0, %v1905
        %v1907 = vpop.f32.mrf.mxu0
        %v1908 = vadd.f32 0.0, %v1907
        %1909 = vmatmul.bf16.gmra.mxu0 %v1789
        %v1910 = vpop.f32.mrf.mxu0
        %v1911 = vadd.f32 0.0, %v1910
        %v1912 = vpop.f32.mrf.mxu0
        %v1913 = vadd.f32 0.0, %v1912
        %1914 = vmatmul.bf16.gmra.mxu0 %v1792
        %v1915 = vpop.f32.mrf.mxu0
        %v1916 = vadd.f32 0.0, %v1915
        %v1917 = vpop.f32.mrf.mxu0
        %v1918 = vadd.f32 0.0, %v1917
        %1919 = vmatmul.bf16.gmra.mxu0 %v1795
        %v1920 = vpop.f32.mrf.mxu0
        %v1921 = vadd.f32 0.0, %v1920
        %v1922 = vpop.f32.mrf.mxu0
        %v1923 = vadd.f32 0.0, %v1922
        %1924 = vdwg.mxu0
        %v1925 = vmax.f32 %v1819, 0.0
        %v1926 = vmax.f32 %v1848, 0.0
        %v1927 = vmax.f32 %v1877, 0.0
        %v1928 = vmax.f32 %v1906, 0.0
        %v1929 = vmax.f32 %v1821, 0.0
        %v1930 = vmax.f32 %v1850, 0.0
        %v1931 = vmax.f32 %v1879, 0.0
        %v1932 = vmax.f32 %v1908, 0.0
        %v1933 = vmax.f32 %v1824, 0.0
        %v1934 = vmax.f32 %v1853, 0.0
        %v1935 = vmax.f32 %v1882, 0.0
        %v1936 = vmax.f32 %v1911, 0.0
        %v1937 = vmax.f32 %v1826, 0.0
        %v1938 = vmax.f32 %v1855, 0.0
        %v1939 = vmax.f32 %v1884, 0.0
        %v1940 = vmax.f32 %v1913, 0.0
        %v1941 = vmax.f32 %v1829, 0.0
        %v1942 = vmax.f32 %v1858, 0.0
        %v1943 = vmax.f32 %v1887, 0.0
        %v1944 = vmax.f32 %v1916, 0.0
        %v1945 = vmax.f32 %v1831, 0.0
        %v1946 = vmax.f32 %v1860, 0.0
        %v1947 = vmax.f32 %v1889, 0.0
        %v1948 = vmax.f32 %v1918, 0.0
        %v1949 = vmax.f32 %v1834, 0.0
        %v1950 = vmax.f32 %v1863, 0.0
        %v1951 = vmax.f32 %v1892, 0.0
        %v1952 = vmax.f32 %v1921, 0.0
        %v1953 = vmax.f32 %v1836, 0.0
        %v1954 = vmax.f32 %v1865, 0.0
        %v1955 = vmax.f32 %v1894, 0.0
        %v1956 = vmax.f32 %v1923, 0.0
        %v1957 = vpack.c.bf16 %v1929, %v1925
        %v1958 = vpack.c.bf16 %v1930, %v1926
        %v1959 = vpack.c.bf16 %v1931, %v1927
        %v1960 = vpack.c.bf16 %v1932, %v1928
        %v1961 = vpack.c.bf16 %v1937, %v1933
        %v1962 = vpack.c.bf16 %v1938, %v1934
        %v1963 = vpack.c.bf16 %v1939, %v1935
        %v1964 = vpack.c.bf16 %v1940, %v1936
        %v1965 = vpack.c.bf16 %v1945, %v1941
        %v1966 = vpack.c.bf16 %v1946, %v1942
        %v1967 = vpack.c.bf16 %v1947, %v1943
        %v1968 = vpack.c.bf16 %v1948, %v1944
        %v1969 = vpack.c.bf16 %v1953, %v1949
        %v1970 = vpack.c.bf16 %v1954, %v1950
        %v1971 = vpack.c.bf16 %v1955, %v1951
        %v1972 = vpack.c.bf16 %v1956, %v1952
        %v1975 = vunpack.c.l.b16 %v1641
        %v1976 = vunpack.c.l.b16 %v1642
        %v1977 = vpack.c.b16 %v1976, %v1975
        %vm1978 = vcmask 523264
        %v1980 = vsel %vm1978, %v1977, 0
        %1982 = vmatpush.bf16.msra.mxu0 0
        %1983 = vmatpush.bf16.msra.mxu0 0
        %1984 = vmatpush.bf16.msra.mxu0 0
        %1985 = vmatpush.bf16.msra.mxu0 0
        %1986 = vmatpush.bf16.msra.mxu0 %v1969
        %1987 = vmatpush.bf16.msra.mxu0 %v1965
        %1988 = vmatpush.bf16.msra.mxu0 %v1961
        %1989 = vmatpush.bf16.msra.mxu0 %v1957
        %1990 = vmatmul.bf16.gmra.mxu0 %v1980
        %v1991 = vpop.f32.mrf.mxu0
        %v1992 = vadd.f32 0.0, %v1991
        %v1993 = vpop.f32.mrf.mxu0
        %v1994 = vadd.f32 0.0, %v1993
        %1995 = vdwg.mxu0
        %1996 = vmatpush.bf16.msra.mxu0 0
        %1997 = vmatpush.bf16.msra.mxu0 0
        %1998 = vmatpush.bf16.msra.mxu0 0
        %1999 = vmatpush.bf16.msra.mxu0 0
        %2000 = vmatpush.bf16.msra.mxu0 %v1970
        %2001 = vmatpush.bf16.msra.mxu0 %v1966
        %2002 = vmatpush.bf16.msra.mxu0 %v1962
        %2003 = vmatpush.bf16.msra.mxu0 %v1958
        %2004 = vmatmul.bf16.gmra.mxu0 %v1980
        %v2005 = vpop.f32.mrf.mxu0
        %v2006 = vadd.f32 0.0, %v2005
        %v2007 = vpop.f32.mrf.mxu0
        %v2008 = vadd.f32 0.0, %v2007
        %2009 = vdwg.mxu0
        %2010 = vmatpush.bf16.msra.mxu0 0
        %2011 = vmatpush.bf16.msra.mxu0 0
        %2012 = vmatpush.bf16.msra.mxu0 0
        %2013 = vmatpush.bf16.msra.mxu0 0
        %2014 = vmatpush.bf16.msra.mxu0 %v1971
        %2015 = vmatpush.bf16.msra.mxu0 %v1967
        %2016 = vmatpush.bf16.msra.mxu0 %v1963
        %2017 = vmatpush.bf16.msra.mxu0 %v1959
        %2018 = vmatmul.bf16.gmra.mxu0 %v1980
        %v2019 = vpop.f32.mrf.mxu0
        %v2020 = vadd.f32 0.0, %v2019
        %v2021 = vpop.f32.mrf.mxu0
        %v2022 = vadd.f32 0.0, %v2021
        %2023 = vdwg.mxu0
        %2024 = vmatpush.bf16.msra.mxu0 0
        %2025 = vmatpush.bf16.msra.mxu0 0
        %2026 = vmatpush.bf16.msra.mxu0 0
        %2027 = vmatpush.bf16.msra.mxu0 0
        %2028 = vmatpush.bf16.msra.mxu0 %v1972
        %2029 = vmatpush.bf16.msra.mxu0 %v1968
        %2030 = vmatpush.bf16.msra.mxu0 %v1964
        %2031 = vmatpush.bf16.msra.mxu0 %v1960
        %2032 = vmatmul.bf16.gmra.mxu0 %v1980
        %v2033 = vpop.f32.mrf.mxu0
        %v2034 = vadd.f32 0.0, %v2033
        %v2035 = vpop.f32.mrf.mxu0
        %v2036 = vadd.f32 0.0, %v2035
        %2037 = vdwg.mxu0
        %v2038 = vmin.f32 %v1992, 15.0
        %v2039 = vmin.f32 %v2006, 15.0
        %v2040 = vmin.f32 %v2020, 15.0
        %v2041 = vmin.f32 %v2034, 15.0
        %v2042 = vmul.f32 %v2038, 1.442695
        %v2043 = vpow.pop %v2042
        %v2044 = vmul.f32 %v2039, 1.442695
        %v2045 = vpow.pop %v2044
        %v2046 = vmul.f32 %v2040, 1.442695
        %v2047 = vpow.pop %v2046
        %v2048 = vmul.f32 %v2041, 1.442695
        %v2049 = vpow.pop %v2048
        %v2050 = vpack.c.bf16 %v2006, %v1992
        %v2051 = vpack.c.bf16 %v2034, %v2020
        %v2052 = vpack.c.bf16 %v2008, %v1994
        %v2053 = vpack.c.bf16 %v2036, %v2022
        %v2058 = vunpack.c.l.b16 %v2050
        %v2059 = vunpack.c.h.b16 %v2050
        %v2060 = vunpack.c.l.b16 %v2051
        %v2061 = vunpack.c.h.b16 %v2051
        %v2062 = vunpack.c.l.b16 %v2052
        %v2063 = vunpack.c.h.b16 %v2052
        %v2064 = vunpack.c.l.b16 %v2053
        %v2065 = vunpack.c.h.b16 %v2053
        %v2066 = vpack.c.b16 %v2062, %v2058
        %v2067 = vpack.c.b16 %v2063, %v2059
        %v2068 = vpack.c.b16 %v2064, %v2060
        %v2069 = vpack.c.b16 %v2065, %v2061
        %v2078 = vunpack.c.l.b16 %v1629
        %v2079 = vunpack.c.h.b16 %v1629
        %v2080 = vunpack.c.l.b16 %v1630
        %v2081 = vunpack.c.h.b16 %v1630
        %v2082 = vunpack.c.l.b16 %v1631
        %v2083 = vunpack.c.h.b16 %v1631
        %v2084 = vunpack.c.l.b16 %v1632
        %v2085 = vunpack.c.h.b16 %v1632
        %v2086 = vpack.c.b16 %v2082, %v2078
        %v2087 = vpack.c.b16 %v2083, %v2079
        %v2088 = vpack.c.b16 %v2084, %v2080
        %v2089 = vpack.c.b16 %v2085, %v2081
        %v2102 = vunpack.c.l.b16 %v1643
        %v2103 = vunpack.c.l.b16 %v1644
        %v2104 = vunpack.c.l.b16 %v1645
        %v2105 = vunpack.c.l.b16 %v1646
        %v2106 = vunpack.c.l.b16 %v1647
        %v2107 = vunpack.c.l.b16 %v1648
        %v2108 = vunpack.c.l.b16 %v1649
        %v2109 = vunpack.c.l.b16 %v1650
        %v2110 = vpack.c.b16 %v2103, %v2102
        %v2111 = vpack.c.b16 %v2105, %v2104
        %v2112 = vpack.c.b16 %v2107, %v2106
        %v2113 = vpack.c.b16 %v2109, %v2108
        %vm2114 = vcmask 261120
        %v2116 = vsel %vm2114, %v2110, 0
        %v2119 = vsel %vm2114, %v2111, 0
        %v2122 = vsel %vm2114, %v2112, 0
        %v2125 = vsel %vm2114, %v2113, 0
        %2127 = vmatpush.bf16.msra.mxu0 0
        %2128 = vmatpush.bf16.msra.mxu0 0
        %2129 = vmatpush.bf16.msra.mxu0 0
        %2130 = vmatpush.bf16.msra.mxu0 0
        %2131 = vmatpush.bf16.msra.mxu0 0
        %2132 = vmatpush.bf16.msra.mxu0 0
        %2133 = vmatpush.bf16.msra.mxu0 %v2086
        %2134 = vmatpush.bf16.msra.mxu0 %v2066
        %2135 = vmatmul.bf16.gmra.mxu0 %v2116
        %v2136 = vpop.f32.mrf.mxu0
        %v2137 = vadd.f32 0.0, %v2136
        %v2138 = vpop.f32.mrf.mxu0
        %v2139 = vadd.f32 0.0, %v2138
        %2140 = vmatmul.bf16.gmra.mxu0 %v2119
        %v2141 = vpop.f32.mrf.mxu0
        %v2142 = vadd.f32 0.0, %v2141
        %v2143 = vpop.f32.mrf.mxu0
        %v2144 = vadd.f32 0.0, %v2143
        %2145 = vmatmul.bf16.gmra.mxu0 %v2122
        %v2146 = vpop.f32.mrf.mxu0
        %v2147 = vadd.f32 0.0, %v2146
        %v2148 = vpop.f32.mrf.mxu0
        %v2149 = vadd.f32 0.0, %v2148
        %2150 = vmatmul.bf16.gmra.mxu0 %v2125
        %v2151 = vpop.f32.mrf.mxu0
        %v2152 = vadd.f32 0.0, %v2151
        %v2153 = vpop.f32.mrf.mxu0
        %v2154 = vadd.f32 0.0, %v2153
        %2155 = vdwg.mxu0
        %2156 = vmatpush.bf16.msra.mxu0 0
        %2157 = vmatpush.bf16.msra.mxu0 0
        %2158 = vmatpush.bf16.msra.mxu0 0
        %2159 = vmatpush.bf16.msra.mxu0 0
        %2160 = vmatpush.bf16.msra.mxu0 0
        %2161 = vmatpush.bf16.msra.mxu0 0
        %2162 = vmatpush.bf16.msra.mxu0 %v2087
        %2163 = vmatpush.bf16.msra.mxu0 %v2067
        %2164 = vmatmul.bf16.gmra.mxu0 %v2116
        %v2165 = vpop.f32.mrf.mxu0
        %v2166 = vadd.f32 0.0, %v2165
        %v2167 = vpop.f32.mrf.mxu0
        %v2168 = vadd.f32 0.0, %v2167
        %2169 = vmatmul.bf16.gmra.mxu0 %v2119
        %v2170 = vpop.f32.mrf.mxu0
        %v2171 = vadd.f32 0.0, %v2170
        %v2172 = vpop.f32.mrf.mxu0
        %v2173 = vadd.f32 0.0, %v2172
        %2174 = vmatmul.bf16.gmra.mxu0 %v2122
        %v2175 = vpop.f32.mrf.mxu0
        %v2176 = vadd.f32 0.0, %v2175
        %v2177 = vpop.f32.mrf.mxu0
        %v2178 = vadd.f32 0.0, %v2177
        %2179 = vmatmul.bf16.gmra.mxu0 %v2125
        %v2180 = vpop.f32.mrf.mxu0
        %v2181 = vadd.f32 0.0, %v2180
        %v2182 = vpop.f32.mrf.mxu0
        %v2183 = vadd.f32 0.0, %v2182
        %2184 = vdwg.mxu0
        %2185 = vmatpush.bf16.msra.mxu0 0
        %2186 = vmatpush.bf16.msra.mxu0 0
        %2187 = vmatpush.bf16.msra.mxu0 0
        %2188 = vmatpush.bf16.msra.mxu0 0
        %2189 = vmatpush.bf16.msra.mxu0 0
        %2190 = vmatpush.bf16.msra.mxu0 0
        %2191 = vmatpush.bf16.msra.mxu0 %v2088
        %2192 = vmatpush.bf16.msra.mxu0 %v2068
        %2193 = vmatmul.bf16.gmra.mxu0 %v2116
        %v2194 = vpop.f32.mrf.mxu0
        %v2195 = vadd.f32 0.0, %v2194
        %v2196 = vpop.f32.mrf.mxu0
        %v2197 = vadd.f32 0.0, %v2196
        %2198 = vmatmul.bf16.gmra.mxu0 %v2119
        %v2199 = vpop.f32.mrf.mxu0
        %v2200 = vadd.f32 0.0, %v2199
        %v2201 = vpop.f32.mrf.mxu0
        %v2202 = vadd.f32 0.0, %v2201
        %2203 = vmatmul.bf16.gmra.mxu0 %v2122
        %v2204 = vpop.f32.mrf.mxu0
        %v2205 = vadd.f32 0.0, %v2204
        %v2206 = vpop.f32.mrf.mxu0
        %v2207 = vadd.f32 0.0, %v2206
        %2208 = vmatmul.bf16.gmra.mxu0 %v2125
        %v2209 = vpop.f32.mrf.mxu0
        %v2210 = vadd.f32 0.0, %v2209
        %v2211 = vpop.f32.mrf.mxu0
        %v2212 = vadd.f32 0.0, %v2211
        %2213 = vdwg.mxu0
        %2214 = vmatpush.bf16.msra.mxu0 0
        %2215 = vmatpush.bf16.msra.mxu0 0
        %2216 = vmatpush.bf16.msra.mxu0 0
        %2217 = vmatpush.bf16.msra.mxu0 0
        %2218 = vmatpush.bf16.msra.mxu0 0
        %2219 = vmatpush.bf16.msra.mxu0 0
        %2220 = vmatpush.bf16.msra.mxu0 %v2089
        %2221 = vmatpush.bf16.msra.mxu0 %v2069
        %2222 = vmatmul.bf16.gmra.mxu0 %v2116
        %v2223 = vpop.f32.mrf.mxu0
        %v2224 = vadd.f32 0.0, %v2223
        %v2225 = vpop.f32.mrf.mxu0
        %v2226 = vadd.f32 0.0, %v2225
        %2227 = vmatmul.bf16.gmra.mxu0 %v2119
        %v2228 = vpop.f32.mrf.mxu0
        %v2229 = vadd.f32 0.0, %v2228
        %v2230 = vpop.f32.mrf.mxu0
        %v2231 = vadd.f32 0.0, %v2230
        %2232 = vmatmul.bf16.gmra.mxu0 %v2122
        %v2233 = vpop.f32.mrf.mxu0
        %v2234 = vadd.f32 0.0, %v2233
        %v2235 = vpop.f32.mrf.mxu0
        %v2236 = vadd.f32 0.0, %v2235
        %2237 = vmatmul.bf16.gmra.mxu0 %v2125
        %v2238 = vpop.f32.mrf.mxu0
        %v2239 = vadd.f32 0.0, %v2238
        %v2240 = vpop.f32.mrf.mxu0
        %v2241 = vadd.f32 0.0, %v2240
        %2242 = vdwg.mxu0
        %v2243 = vmax.f32 %v2137, 0.0
        %v2244 = vmax.f32 %v2166, 0.0
        %v2245 = vmax.f32 %v2195, 0.0
        %v2246 = vmax.f32 %v2224, 0.0
        %v2247 = vmax.f32 %v2139, 0.0
        %v2248 = vmax.f32 %v2168, 0.0
        %v2249 = vmax.f32 %v2197, 0.0
        %v2250 = vmax.f32 %v2226, 0.0
        %v2251 = vmax.f32 %v2142, 0.0
        %v2252 = vmax.f32 %v2171, 0.0
        %v2253 = vmax.f32 %v2200, 0.0
        %v2254 = vmax.f32 %v2229, 0.0
        %v2255 = vmax.f32 %v2144, 0.0
        %v2256 = vmax.f32 %v2173, 0.0
        %v2257 = vmax.f32 %v2202, 0.0
        %v2258 = vmax.f32 %v2231, 0.0
        %v2259 = vmax.f32 %v2147, 0.0
        %v2260 = vmax.f32 %v2176, 0.0
        %v2261 = vmax.f32 %v2205, 0.0
        %v2262 = vmax.f32 %v2234, 0.0
        %v2263 = vmax.f32 %v2149, 0.0
        %v2264 = vmax.f32 %v2178, 0.0
        %v2265 = vmax.f32 %v2207, 0.0
        %v2266 = vmax.f32 %v2236, 0.0
        %v2267 = vmax.f32 %v2152, 0.0
        %v2268 = vmax.f32 %v2181, 0.0
        %v2269 = vmax.f32 %v2210, 0.0
        %v2270 = vmax.f32 %v2239, 0.0
        %v2271 = vmax.f32 %v2154, 0.0
        %v2272 = vmax.f32 %v2183, 0.0
        %v2273 = vmax.f32 %v2212, 0.0
        %v2274 = vmax.f32 %v2241, 0.0
        %v2275 = vpack.c.bf16 %v2247, %v2243
        %v2276 = vpack.c.bf16 %v2248, %v2244
        %v2277 = vpack.c.bf16 %v2249, %v2245
        %v2278 = vpack.c.bf16 %v2250, %v2246
        %v2279 = vpack.c.bf16 %v2255, %v2251
        %v2280 = vpack.c.bf16 %v2256, %v2252
        %v2281 = vpack.c.bf16 %v2257, %v2253
        %v2282 = vpack.c.bf16 %v2258, %v2254
        %v2283 = vpack.c.bf16 %v2263, %v2259
        %v2284 = vpack.c.bf16 %v2264, %v2260
        %v2285 = vpack.c.bf16 %v2265, %v2261
        %v2286 = vpack.c.bf16 %v2266, %v2262
        %v2287 = vpack.c.bf16 %v2271, %v2267
        %v2288 = vpack.c.bf16 %v2272, %v2268
        %v2289 = vpack.c.bf16 %v2273, %v2269
        %v2290 = vpack.c.bf16 %v2274, %v2270
        %v2299 = vunpack.c.l.b16 %v1651
        %v2300 = vunpack.c.l.b16 %v1652
        %v2301 = vunpack.c.l.b16 %v1653
        %v2302 = vunpack.c.l.b16 %v1654
        %v2303 = vunpack.c.l.b16 %v1655
        %v2304 = vunpack.c.l.b16 %v1656
        %v2305 = vunpack.c.l.b16 %v1657
        %v2306 = vunpack.c.l.b16 %v1658
        %v2307 = vpack.c.b16 %v2300, %v2299
        %v2308 = vpack.c.b16 %v2302, %v2301
        %v2309 = vpack.c.b16 %v2304, %v2303
        %v2310 = vpack.c.b16 %v2306, %v2305
        %v2312 = vsel %vm1978, %v2307, 0
        %v2315 = vsel %vm1978, %v2308, 0
        %v2318 = vsel %vm1978, %v2309, 0
        %v2321 = vsel %vm1978, %v2310, 0
        %2323 = vmatpush.bf16.msra.mxu0 0
        %2324 = vmatpush.bf16.msra.mxu0 0
        %2325 = vmatpush.bf16.msra.mxu0 0
        %2326 = vmatpush.bf16.msra.mxu0 0
        %2327 = vmatpush.bf16.msra.mxu0 %v2287
        %2328 = vmatpush.bf16.msra.mxu0 %v2283
        %2329 = vmatpush.bf16.msra.mxu0 %v2279
        %2330 = vmatpush.bf16.msra.mxu0 %v2275
        %2331 = vmatmul.bf16.gmra.mxu0 %v2312
        %v2332 = vpop.f32.mrf.mxu0
        %v2333 = vadd.f32 0.0, %v2332
        %v2334 = vpop.f32.mrf.mxu0
        %v2335 = vadd.f32 0.0, %v2334
        %2336 = vmatmul.bf16.gmra.mxu0 %v2315
        %v2337 = vpop.f32.mrf.mxu0
        %v2338 = vadd.f32 0.0, %v2337
        %v2339 = vpop.f32.mrf.mxu0
        %v2340 = vadd.f32 0.0, %v2339
        %2341 = vmatmul.bf16.gmra.mxu0 %v2318
        %v2342 = vpop.f32.mrf.mxu0
        %v2343 = vadd.f32 0.0, %v2342
        %v2344 = vpop.f32.mrf.mxu0
        %v2345 = vadd.f32 0.0, %v2344
        %2346 = vmatmul.bf16.gmra.mxu0 %v2321
        %v2347 = vpop.f32.mrf.mxu0
        %v2348 = vadd.f32 0.0, %v2347
        %v2349 = vpop.f32.mrf.mxu0
        %v2350 = vadd.f32 0.0, %v2349
        %2351 = vdwg.mxu0
        %2352 = vmatpush.bf16.msra.mxu0 0
        %2353 = vmatpush.bf16.msra.mxu0 0
        %2354 = vmatpush.bf16.msra.mxu0 0
        %2355 = vmatpush.bf16.msra.mxu0 0
        %2356 = vmatpush.bf16.msra.mxu0 %v2288
        %2357 = vmatpush.bf16.msra.mxu0 %v2284
        %2358 = vmatpush.bf16.msra.mxu0 %v2280
        %2359 = vmatpush.bf16.msra.mxu0 %v2276
        %2360 = vmatmul.bf16.gmra.mxu0 %v2312
        %v2361 = vpop.f32.mrf.mxu0
        %v2362 = vadd.f32 0.0, %v2361
        %v2363 = vpop.f32.mrf.mxu0
        %v2364 = vadd.f32 0.0, %v2363
        %2365 = vmatmul.bf16.gmra.mxu0 %v2315
        %v2366 = vpop.f32.mrf.mxu0
        %v2367 = vadd.f32 0.0, %v2366
        %v2368 = vpop.f32.mrf.mxu0
        %v2369 = vadd.f32 0.0, %v2368
        %2370 = vmatmul.bf16.gmra.mxu0 %v2318
        %v2371 = vpop.f32.mrf.mxu0
        %v2372 = vadd.f32 0.0, %v2371
        %v2373 = vpop.f32.mrf.mxu0
        %v2374 = vadd.f32 0.0, %v2373
        %2375 = vmatmul.bf16.gmra.mxu0 %v2321
        %v2376 = vpop.f32.mrf.mxu0
        %v2377 = vadd.f32 0.0, %v2376
        %v2378 = vpop.f32.mrf.mxu0
        %v2379 = vadd.f32 0.0, %v2378
        %2380 = vdwg.mxu0
        %2381 = vmatpush.bf16.msra.mxu0 0
        %2382 = vmatpush.bf16.msra.mxu0 0
        %2383 = vmatpush.bf16.msra.mxu0 0
        %2384 = vmatpush.bf16.msra.mxu0 0
        %2385 = vmatpush.bf16.msra.mxu0 %v2289
        %2386 = vmatpush.bf16.msra.mxu0 %v2285
        %2387 = vmatpush.bf16.msra.mxu0 %v2281
        %2388 = vmatpush.bf16.msra.mxu0 %v2277
        %2389 = vmatmul.bf16.gmra.mxu0 %v2312
        %v2390 = vpop.f32.mrf.mxu0
        %v2391 = vadd.f32 0.0, %v2390
        %v2392 = vpop.f32.mrf.mxu0
        %v2393 = vadd.f32 0.0, %v2392
        %2394 = vmatmul.bf16.gmra.mxu0 %v2315
        %v2395 = vpop.f32.mrf.mxu0
        %v2396 = vadd.f32 0.0, %v2395
        %v2397 = vpop.f32.mrf.mxu0
        %v2398 = vadd.f32 0.0, %v2397
        %2399 = vmatmul.bf16.gmra.mxu0 %v2318
        %v2400 = vpop.f32.mrf.mxu0
        %v2401 = vadd.f32 0.0, %v2400
        %v2402 = vpop.f32.mrf.mxu0
        %v2403 = vadd.f32 0.0, %v2402
        %2404 = vmatmul.bf16.gmra.mxu0 %v2321
        %v2405 = vpop.f32.mrf.mxu0
        %v2406 = vadd.f32 0.0, %v2405
        %v2407 = vpop.f32.mrf.mxu0
        %v2408 = vadd.f32 0.0, %v2407
        %2409 = vdwg.mxu0
        %2410 = vmatpush.bf16.msra.mxu0 0
        %2411 = vmatpush.bf16.msra.mxu0 0
        %2412 = vmatpush.bf16.msra.mxu0 0
        %2413 = vmatpush.bf16.msra.mxu0 0
        %2414 = vmatpush.bf16.msra.mxu0 %v2290
        %2415 = vmatpush.bf16.msra.mxu0 %v2286
        %2416 = vmatpush.bf16.msra.mxu0 %v2282
        %2417 = vmatpush.bf16.msra.mxu0 %v2278
        %2418 = vmatmul.bf16.gmra.mxu0 %v2312
        %v2419 = vpop.f32.mrf.mxu0
        %v2420 = vadd.f32 0.0, %v2419
        %v2421 = vpop.f32.mrf.mxu0
        %v2422 = vadd.f32 0.0, %v2421
        %2423 = vmatmul.bf16.gmra.mxu0 %v2315
        %v2424 = vpop.f32.mrf.mxu0
        %v2425 = vadd.f32 0.0, %v2424
        %v2426 = vpop.f32.mrf.mxu0
        %v2427 = vadd.f32 0.0, %v2426
        %2428 = vmatmul.bf16.gmra.mxu0 %v2318
        %v2429 = vpop.f32.mrf.mxu0
        %v2430 = vadd.f32 0.0, %v2429
        %v2431 = vpop.f32.mrf.mxu0
        %v2432 = vadd.f32 0.0, %v2431
        %2433 = vmatmul.bf16.gmra.mxu0 %v2321
        %v2434 = vpop.f32.mrf.mxu0
        %v2435 = vadd.f32 0.0, %v2434
        %v2436 = vpop.f32.mrf.mxu0
        %v2437 = vadd.f32 0.0, %v2436
        %2438 = vdwg.mxu0
        %v2439 = vmax.f32 %v2333, 0.0
        %v2440 = vmax.f32 %v2362, 0.0
        %v2441 = vmax.f32 %v2391, 0.0
        %v2442 = vmax.f32 %v2420, 0.0
        %v2443 = vmax.f32 %v2335, 0.0
        %v2444 = vmax.f32 %v2364, 0.0
        %v2445 = vmax.f32 %v2393, 0.0
        %v2446 = vmax.f32 %v2422, 0.0
        %v2447 = vmax.f32 %v2338, 0.0
        %v2448 = vmax.f32 %v2367, 0.0
        %v2449 = vmax.f32 %v2396, 0.0
        %v2450 = vmax.f32 %v2425, 0.0
        %v2451 = vmax.f32 %v2340, 0.0
        %v2452 = vmax.f32 %v2369, 0.0
        %v2453 = vmax.f32 %v2398, 0.0
        %v2454 = vmax.f32 %v2427, 0.0
        %v2455 = vmax.f32 %v2343, 0.0
        %v2456 = vmax.f32 %v2372, 0.0
        %v2457 = vmax.f32 %v2401, 0.0
        %v2458 = vmax.f32 %v2430, 0.0
        %v2459 = vmax.f32 %v2345, 0.0
        %v2460 = vmax.f32 %v2374, 0.0
        %v2461 = vmax.f32 %v2403, 0.0
        %v2462 = vmax.f32 %v2432, 0.0
        %v2463 = vmax.f32 %v2348, 0.0
        %v2464 = vmax.f32 %v2377, 0.0
        %v2465 = vmax.f32 %v2406, 0.0
        %v2466 = vmax.f32 %v2435, 0.0
        %v2467 = vmax.f32 %v2350, 0.0
        %v2468 = vmax.f32 %v2379, 0.0
        %v2469 = vmax.f32 %v2408, 0.0
        %v2470 = vmax.f32 %v2437, 0.0
        %v2471 = vpack.c.bf16 %v2443, %v2439
        %v2472 = vpack.c.bf16 %v2444, %v2440
        %v2473 = vpack.c.bf16 %v2445, %v2441
        %v2474 = vpack.c.bf16 %v2446, %v2442
        %v2475 = vpack.c.bf16 %v2451, %v2447
        %v2476 = vpack.c.bf16 %v2452, %v2448
        %v2477 = vpack.c.bf16 %v2453, %v2449
        %v2478 = vpack.c.bf16 %v2454, %v2450
        %v2479 = vpack.c.bf16 %v2459, %v2455
        %v2480 = vpack.c.bf16 %v2460, %v2456
        %v2481 = vpack.c.bf16 %v2461, %v2457
        %v2482 = vpack.c.bf16 %v2462, %v2458
        %v2483 = vpack.c.bf16 %v2467, %v2463
        %v2484 = vpack.c.bf16 %v2468, %v2464
        %v2485 = vpack.c.bf16 %v2469, %v2465
        %v2486 = vpack.c.bf16 %v2470, %v2466
        %v2488 = vsel %vm1978, %v1659, 0
        %2490 = vmatpush.bf16.msra.mxu0 0
        %2491 = vmatpush.bf16.msra.mxu0 0
        %2492 = vmatpush.bf16.msra.mxu0 0
        %2493 = vmatpush.bf16.msra.mxu0 0
        %2494 = vmatpush.bf16.msra.mxu0 %v2483
        %2495 = vmatpush.bf16.msra.mxu0 %v2479
        %2496 = vmatpush.bf16.msra.mxu0 %v2475
        %2497 = vmatpush.bf16.msra.mxu0 %v2471
        %2498 = vmatmul.bf16.gmra.mxu0 %v2488
        %v2499 = vpop.f32.mrf.mxu0
        %v2500 = vadd.f32 0.0, %v2499
        %v2501 = vpop.f32.mrf.mxu0
        %2502 = vdwg.mxu0
        %2503 = vmatpush.bf16.msra.mxu0 0
        %2504 = vmatpush.bf16.msra.mxu0 0
        %2505 = vmatpush.bf16.msra.mxu0 0
        %2506 = vmatpush.bf16.msra.mxu0 0
        %2507 = vmatpush.bf16.msra.mxu0 %v2484
        %2508 = vmatpush.bf16.msra.mxu0 %v2480
        %2509 = vmatpush.bf16.msra.mxu0 %v2476
        %2510 = vmatpush.bf16.msra.mxu0 %v2472
        %2511 = vmatmul.bf16.gmra.mxu0 %v2488
        %v2512 = vpop.f32.mrf.mxu0
        %v2513 = vadd.f32 0.0, %v2512
        %v2514 = vpop.f32.mrf.mxu0
        %2515 = vdwg.mxu0
        %2516 = vmatpush.bf16.msra.mxu0 0
        %2517 = vmatpush.bf16.msra.mxu0 0
        %2518 = vmatpush.bf16.msra.mxu0 0
        %2519 = vmatpush.bf16.msra.mxu0 0
        %2520 = vmatpush.bf16.msra.mxu0 %v2485
        %2521 = vmatpush.bf16.msra.mxu0 %v2481
        %2522 = vmatpush.bf16.msra.mxu0 %v2477
        %2523 = vmatpush.bf16.msra.mxu0 %v2473
        %2524 = vmatmul.bf16.gmra.mxu0 %v2488
        %v2525 = vpop.f32.mrf.mxu0
        %v2526 = vadd.f32 0.0, %v2525
        %v2527 = vpop.f32.mrf.mxu0
        %2528 = vdwg.mxu0
        %2529 = vmatpush.bf16.msra.mxu0 0
        %2530 = vmatpush.bf16.msra.mxu0 0
        %2531 = vmatpush.bf16.msra.mxu0 0
        %2532 = vmatpush.bf16.msra.mxu0 0
        %2533 = vmatpush.bf16.msra.mxu0 %v2486
        %2534 = vmatpush.bf16.msra.mxu0 %v2482
        %2535 = vmatpush.bf16.msra.mxu0 %v2478
        %2536 = vmatpush.bf16.msra.mxu0 %v2474
        %2537 = vmatmul.bf16.gmra.mxu0 %v2488
        %v2538 = vpop.f32.mrf.mxu0
        %v2539 = vadd.f32 0.0, %v2538
        %v2540 = vpop.f32.mrf.mxu0
        %2541 = vdwg.mxu0
        %v2542 = vsub.f32 0.0, %v2500
        %v2543 = vsub.f32 0.0, %v2513
        %v2544 = vsub.f32 0.0, %v2526
        %v2545 = vsub.f32 0.0, %v2539
        %v2546 = vmul.f32 %v2542, 1.442695
        %v2547 = vpow.pop %v2546
        %v2548 = vmul.f32 %v2543, 1.442695
        %v2549 = vpow.pop %v2548
        %v2550 = vmul.f32 %v2544, 1.442695
        %v2551 = vpow.pop %v2550
        %v2552 = vmul.f32 %v2545, 1.442695
        %v2553 = vpow.pop %v2552
        %v2554 = vadd.f32 %v2547, 1.0
        %v2555 = vadd.f32 %v2549, 1.0
        %v2556 = vadd.f32 %v2551, 1.0
        %v2557 = vadd.f32 %v2553, 1.0
        %v2558 = vrcp.pop %v2554
        %v2559 = vrcp.pop %v2555
        %v2560 = vrcp.pop %v2556
        %v2561 = vrcp.pop %v2557
        %v2562 = vsub.f32 0.0, %v2043
        %v2563 = vsub.f32 0.0, %v2045
        %v2564 = vsub.f32 0.0, %v2047
        %v2565 = vsub.f32 0.0, %v2049
        %v2570 = vrot.slane %v842, 3
        %v2571 = vrot.slane %v843, 3
        %v2572 = vrot.slane %v844, 3
        %v2573 = vrot.slane %v845, 3
        %v2578 = vmul.f32 %v2562, %v2570
        %v2579 = vmul.f32 %v2563, %v2571
        %v2580 = vmul.f32 %v2564, %v2572
        %v2581 = vmul.f32 %v2565, %v2573
        %v2582 = vmul.f32 %v2578, 1.442695
        %v2583 = vpow.pop %v2582
        %v2584 = vmul.f32 %v2579, 1.442695
        %v2585 = vpow.pop %v2584
        %v2586 = vmul.f32 %v2580, 1.442695
        %v2587 = vpow.pop %v2586
        %v2588 = vmul.f32 %v2581, 1.442695
        %v2589 = vpow.pop %v2588
        %v2590 = vsub.f32 1.0, %v2583
        %v2591 = vsub.f32 1.0, %v2585
        %v2592 = vsub.f32 1.0, %v2587
        %v2593 = vsub.f32 1.0, %v2589
        %v2594 = vperm.slane %v2590, 0
        %v2595 = vperm.slane %v2591, 0
        %v2596 = vperm.slane %v2592, 0
        %v2597 = vperm.slane %v2593, 0
        %v2598 = vmul.f32 %v2594, %v2558
        %v2599 = vmul.f32 %v2595, %v2559
        %v2600 = vmul.f32 %v2596, %v2560
        %v2601 = vmul.f32 %v2597, %v2561
        %v2602 = vadd.f32 %v2598, 0.0
        %v2603 = vadd.f32 %v2599, 0.0
        %v2604 = vadd.f32 %v2600, 0.0
        %v2605 = vadd.f32 %v2601, 0.0
        %v2610 = vrot.slane %v1664, 3
        %v2611 = vrot.slane %v1665, 3
        %v2612 = vrot.slane %v1666, 3
        %v2613 = vrot.slane %v1667, 3
        %v2618 = vmul.f32 %v2590, %v2610
        %v2619 = vmul.f32 %v2591, %v2611
        %v2620 = vmul.f32 %v2592, %v2612
        %v2621 = vmul.f32 %v2593, %v2613
        %v2622 = vadd.f32 %v2618, 0.0
        %v2623 = vadd.f32 %v2619, 0.0
        %v2624 = vadd.f32 %v2620, 0.0
        %v2625 = vadd.f32 %v2621, 0.0
        %v2626 = vadd.f32 %v2590, 0.0
        %v2627 = vadd.f32 %v2591, 0.0
        %v2628 = vadd.f32 %v2592, 0.0
        %v2629 = vadd.f32 %v2593, 0.0
        %v2630 = vsub.f32 1.0, %v2590
        %v2631 = vsub.f32 1.0, %v2591
        %v2632 = vsub.f32 1.0, %v2592
        %v2633 = vsub.f32 1.0, %v2593
        %v2634 = vadd.f32 %v1664, %v842
        %v2635 = vadd.f32 %v1665, %v843
        %v2636 = vadd.f32 %v1666, %v844
        %v2637 = vadd.f32 %v1667, %v845
        %v2638 = vperm.slane %v2634, 3
        %v2639 = vperm.slane %v2635, 3
        %v2640 = vperm.slane %v2636, 3
        %v2641 = vperm.slane %v2637, 3
        %v2642 = vmul.f32 %v2638, %v1054
        %v2643 = vmul.f32 %v2639, %v1055
        %v2644 = vmul.f32 %v2640, %v1056
        %v2645 = vmul.f32 %v2641, %v1057
        %v2646 = vmul.f32 %v2638, %v1068
        %v2647 = vmul.f32 %v2639, %v1069
        %v2648 = vmul.f32 %v2640, %v1070
        %v2649 = vmul.f32 %v2641, %v1071
        %v2650 = vmul.f32 %v2638, %v1077
        %v2651 = vmul.f32 %v2639, %v1078
        %v2652 = vmul.f32 %v2640, %v1079
        %v2653 = vmul.f32 %v2641, %v1080
        %v2654 = vadd.f32 %v1169, %v2642
        %v2655 = vadd.f32 %v1170, %v2643
        %v2656 = vadd.f32 %v1171, %v2644
        %v2657 = vadd.f32 %v1172, %v2645
        %v2658 = vadd.f32 %v1181, %v2646
        %v2659 = vadd.f32 %v1182, %v2647
        %v2660 = vadd.f32 %v1183, %v2648
        %v2661 = vadd.f32 %v1184, %v2649
        %v2662 = vadd.f32 %v1189, %v2650
        %v2663 = vadd.f32 %v1190, %v2651
        %v2664 = vadd.f32 %v1191, %v2652
        %v2665 = vadd.f32 %v1192, %v2653
        %v2666 = vfloor.f32 %v2654
        %v2667 = vfloor.f32 %v2655
        %v2668 = vfloor.f32 %v2656
        %v2669 = vfloor.f32 %v2657
        %v2670 = vfloor.f32 %v2658
        %v2671 = vfloor.f32 %v2659
        %v2672 = vfloor.f32 %v2660
        %v2673 = vfloor.f32 %v2661
        %v2674 = vfloor.f32 %v2662
        %v2675 = vfloor.f32 %v2663
        %v2676 = vfloor.f32 %v2664
        %v2677 = vfloor.f32 %v2665
        %v2678 = vsub.f32 %v2654, %v2666
        %v2679 = vsub.f32 %v2655, %v2667
        %v2680 = vsub.f32 %v2656, %v2668
        %v2681 = vsub.f32 %v2657, %v2669
        %v2682 = vsub.f32 %v2658, %v2670
        %v2683 = vsub.f32 %v2659, %v2671
        %v2684 = vsub.f32 %v2660, %v2672
        %v2685 = vsub.f32 %v2661, %v2673
        %v2686 = vsub.f32 %v2662, %v2674
        %v2687 = vsub.f32 %v2663, %v2675
        %v2688 = vsub.f32 %v2664, %v2676
        %v2689 = vsub.f32 %v2665, %v2677
        %v2690 = vmul.f32 %v2678, 2.0
        %v2691 = vmul.f32 %v2679, 2.0
        %v2692 = vmul.f32 %v2680, 2.0
        %v2693 = vmul.f32 %v2681, 2.0
        %v2694 = vmul.f32 %v2682, 2.0
        %v2695 = vmul.f32 %v2683, 2.0
        %v2696 = vmul.f32 %v2684, 2.0
        %v2697 = vmul.f32 %v2685, 2.0
        %v2698 = vmul.f32 %v2686, 2.0
        %v2699 = vmul.f32 %v2687, 2.0
        %v2700 = vmul.f32 %v2688, 2.0
        %v2701 = vmul.f32 %v2689, 2.0
        %v2702 = vsub.f32 %v2690, 1.0
        %v2703 = vsub.f32 %v2691, 1.0
        %v2704 = vsub.f32 %v2692, 1.0
        %v2705 = vsub.f32 %v2693, 1.0
        %v2706 = vsub.f32 %v2694, 1.0
        %v2707 = vsub.f32 %v2695, 1.0
        %v2708 = vsub.f32 %v2696, 1.0
        %v2709 = vsub.f32 %v2697, 1.0
        %v2710 = vsub.f32 %v2698, 1.0
        %v2711 = vsub.f32 %v2699, 1.0
        %v2712 = vsub.f32 %v2700, 1.0
        %v2713 = vsub.f32 %v2701, 1.0
        %v2714 = vand.u32 2147483647, %v2702
        %v2715 = vand.u32 2147483647, %v2703
        %v2716 = vand.u32 2147483647, %v2704
        %v2717 = vand.u32 2147483647, %v2705
        %v2718 = vand.u32 2147483647, %v2706
        %v2719 = vand.u32 2147483647, %v2707
        %v2720 = vand.u32 2147483647, %v2708
        %v2721 = vand.u32 2147483647, %v2709
        %v2722 = vand.u32 2147483647, %v2710
        %v2723 = vand.u32 2147483647, %v2711
        %v2724 = vand.u32 2147483647, %v2712
        %v2725 = vand.u32 2147483647, %v2713
        %v2726 = vpack.c.bf16 %v2718, %v2714
        %v2727 = vpack.c.bf16 %v2719, %v2715
        %v2728 = vpack.c.bf16 %v2720, %v2716
        %v2729 = vpack.c.bf16 %v2721, %v2717
        %v2730 = vpack.c.bf16 %v2722, %v2722
        %v2731 = vpack.c.bf16 %v2723, %v2723
        %v2732 = vpack.c.bf16 %v2724, %v2724
        %v2733 = vpack.c.bf16 %v2725, %v2725
        %v2735 = vsel %vm1062, %v2730, 0
        %v2738 = vsel %vm1062, %v2731, 0
        %v2741 = vsel %vm1062, %v2732, 0
        %v2744 = vsel %vm1062, %v2733, 0
        %2746 = vmatpush.bf16.msra.mxu0 0
        %2747 = vmatpush.bf16.msra.mxu0 0
        %2748 = vmatpush.bf16.msra.mxu0 0
        %2749 = vmatpush.bf16.msra.mxu0 0
        %2750 = vmatpush.bf16.msra.mxu0 0
        %2751 = vmatpush.bf16.msra.mxu0 0
        %2752 = vmatpush.bf16.msra.mxu0 %v2735
        %2753 = vmatpush.bf16.msra.mxu0 %v2726
        %2754 = vmatmul.bf16.gmra.mxu0 %v1786
        %v2755 = vpop.f32.mrf.mxu0
        %v2756 = vadd.f32 0.0, %v2755
        %v2757 = vpop.f32.mrf.mxu0
        %v2758 = vadd.f32 0.0, %v2757
        %2759 = vmatmul.bf16.gmra.mxu0 %v1789
        %v2760 = vpop.f32.mrf.mxu0
        %v2761 = vadd.f32 0.0, %v2760
        %v2762 = vpop.f32.mrf.mxu0
        %v2763 = vadd.f32 0.0, %v2762
        %2764 = vmatmul.bf16.gmra.mxu0 %v1792
        %v2765 = vpop.f32.mrf.mxu0
        %v2766 = vadd.f32 0.0, %v2765
        %v2767 = vpop.f32.mrf.mxu0
        %v2768 = vadd.f32 0.0, %v2767
        %2769 = vmatmul.bf16.gmra.mxu0 %v1795
        %v2770 = vpop.f32.mrf.mxu0
        %v2771 = vadd.f32 0.0, %v2770
        %v2772 = vpop.f32.mrf.mxu0
        %v2773 = vadd.f32 0.0, %v2772
        %2774 = vdwg.mxu0
        %2775 = vmatpush.bf16.msra.mxu0 0
        %2776 = vmatpush.bf16.msra.mxu0 0
        %2777 = vmatpush.bf16.msra.mxu0 0
        %2778 = vmatpush.bf16.msra.mxu0 0
        %2779 = vmatpush.bf16.msra.mxu0 0
        %2780 = vmatpush.bf16.msra.mxu0 0
        %2781 = vmatpush.bf16.msra.mxu0 %v2738
        %2782 = vmatpush.bf16.msra.mxu0 %v2727
        %2783 = vmatmul.bf16.gmra.mxu0 %v1786
        %v2784 = vpop.f32.mrf.mxu0
        %v2785 = vadd.f32 0.0, %v2784
        %v2786 = vpop.f32.mrf.mxu0
        %v2787 = vadd.f32 0.0, %v2786
        %2788 = vmatmul.bf16.gmra.mxu0 %v1789
        %v2789 = vpop.f32.mrf.mxu0
        %v2790 = vadd.f32 0.0, %v2789
        %v2791 = vpop.f32.mrf.mxu0
        %v2792 = vadd.f32 0.0, %v2791
        %2793 = vmatmul.bf16.gmra.mxu0 %v1792
        %v2794 = vpop.f32.mrf.mxu0
        %v2795 = vadd.f32 0.0, %v2794
        %v2796 = vpop.f32.mrf.mxu0
        %v2797 = vadd.f32 0.0, %v2796
        %2798 = vmatmul.bf16.gmra.mxu0 %v1795
        %v2799 = vpop.f32.mrf.mxu0
        %v2800 = vadd.f32 0.0, %v2799
        %v2801 = vpop.f32.mrf.mxu0
        %v2802 = vadd.f32 0.0, %v2801
        %2803 = vdwg.mxu0
        %2804 = vmatpush.bf16.msra.mxu0 0
        %2805 = vmatpush.bf16.msra.mxu0 0
        %2806 = vmatpush.bf16.msra.mxu0 0
        %2807 = vmatpush.bf16.msra.mxu0 0
        %2808 = vmatpush.bf16.msra.mxu0 0
        %2809 = vmatpush.bf16.msra.mxu0 0
        %2810 = vmatpush.bf16.msra.mxu0 %v2741
        %2811 = vmatpush.bf16.msra.mxu0 %v2728
        %2812 = vmatmul.bf16.gmra.mxu0 %v1786
        %v2813 = vpop.f32.mrf.mxu0
        %v2814 = vadd.f32 0.0, %v2813
        %v2815 = vpop.f32.mrf.mxu0
        %v2816 = vadd.f32 0.0, %v2815
        %2817 = vmatmul.bf16.gmra.mxu0 %v1789
        %v2818 = vpop.f32.mrf.mxu0
        %v2819 = vadd.f32 0.0, %v2818
        %v2820 = vpop.f32.mrf.mxu0
        %v2821 = vadd.f32 0.0, %v2820
        %2822 = vmatmul.bf16.gmra.mxu0 %v1792
        %v2823 = vpop.f32.mrf.mxu0
        %v2824 = vadd.f32 0.0, %v2823
        %v2825 = vpop.f32.mrf.mxu0
        %v2826 = vadd.f32 0.0, %v2825
        %2827 = vmatmul.bf16.gmra.mxu0 %v1795
        %v2828 = vpop.f32.mrf.mxu0
        %v2829 = vadd.f32 0.0, %v2828
        %v2830 = vpop.f32.mrf.mxu0
        %v2831 = vadd.f32 0.0, %v2830
        %2832 = vdwg.mxu0
        %2833 = vmatpush.bf16.msra.mxu0 0
        %2834 = vmatpush.bf16.msra.mxu0 0
        %2835 = vmatpush.bf16.msra.mxu0 0
        %2836 = vmatpush.bf16.msra.mxu0 0
        %2837 = vmatpush.bf16.msra.mxu0 0
        %2838 = vmatpush.bf16.msra.mxu0 0
        %2839 = vmatpush.bf16.msra.mxu0 %v2744
        %2840 = vmatpush.bf16.msra.mxu0 %v2729
        %2841 = vmatmul.bf16.gmra.mxu0 %v1786
        %v2842 = vpop.f32.mrf.mxu0
        %v2843 = vadd.f32 0.0, %v2842
        %v2844 = vpop.f32.mrf.mxu0
        %v2845 = vadd.f32 0.0, %v2844
        %2846 = vmatmul.bf16.gmra.mxu0 %v1789
        %v2847 = vpop.f32.mrf.mxu0
        %v2848 = vadd.f32 0.0, %v2847
        %v2849 = vpop.f32.mrf.mxu0
        %v2850 = vadd.f32 0.0, %v2849
        %2851 = vmatmul.bf16.gmra.mxu0 %v1792
        %v2852 = vpop.f32.mrf.mxu0
        %v2853 = vadd.f32 0.0, %v2852
        %v2854 = vpop.f32.mrf.mxu0
        %v2855 = vadd.f32 0.0, %v2854
        %2856 = vmatmul.bf16.gmra.mxu0 %v1795
        %v2857 = vpop.f32.mrf.mxu0
        %v2858 = vadd.f32 0.0, %v2857
        %v2859 = vpop.f32.mrf.mxu0
        %v2860 = vadd.f32 0.0, %v2859
        %2861 = vdwg.mxu0
        %v2862 = vmax.f32 %v2756, 0.0
        %v2863 = vmax.f32 %v2785, 0.0
        %v2864 = vmax.f32 %v2814, 0.0
        %v2865 = vmax.f32 %v2843, 0.0
        %v2866 = vmax.f32 %v2758, 0.0
        %v2867 = vmax.f32 %v2787, 0.0
        %v2868 = vmax.f32 %v2816, 0.0
        %v2869 = vmax.f32 %v2845, 0.0
        %v2870 = vmax.f32 %v2761, 0.0
        %v2871 = vmax.f32 %v2790, 0.0
        %v2872 = vmax.f32 %v2819, 0.0
        %v2873 = vmax.f32 %v2848, 0.0
        %v2874 = vmax.f32 %v2763, 0.0
        %v2875 = vmax.f32 %v2792, 0.0
        %v2876 = vmax.f32 %v2821, 0.0
        %v2877 = vmax.f32 %v2850, 0.0
        %v2878 = vmax.f32 %v2766, 0.0
        %v2879 = vmax.f32 %v2795, 0.0
        %v2880 = vmax.f32 %v2824, 0.0
        %v2881 = vmax.f32 %v2853, 0.0
        %v2882 = vmax.f32 %v2768, 0.0
        %v2883 = vmax.f32 %v2797, 0.0
        %v2884 = vmax.f32 %v2826, 0.0
        %v2885 = vmax.f32 %v2855, 0.0
        %v2886 = vmax.f32 %v2771, 0.0
        %v2887 = vmax.f32 %v2800, 0.0
        %v2888 = vmax.f32 %v2829, 0.0
        %v2889 = vmax.f32 %v2858, 0.0
        %v2890 = vmax.f32 %v2773, 0.0
        %v2891 = vmax.f32 %v2802, 0.0
        %v2892 = vmax.f32 %v2831, 0.0
        %v2893 = vmax.f32 %v2860, 0.0
        %v2894 = vpack.c.bf16 %v2866, %v2862
        %v2895 = vpack.c.bf16 %v2867, %v2863
        %v2896 = vpack.c.bf16 %v2868, %v2864
        %v2897 = vpack.c.bf16 %v2869, %v2865
        %v2898 = vpack.c.bf16 %v2874, %v2870
        %v2899 = vpack.c.bf16 %v2875, %v2871
        %v2900 = vpack.c.bf16 %v2876, %v2872
        %v2901 = vpack.c.bf16 %v2877, %v2873
        %v2902 = vpack.c.bf16 %v2882, %v2878
        %v2903 = vpack.c.bf16 %v2883, %v2879
        %v2904 = vpack.c.bf16 %v2884, %v2880
        %v2905 = vpack.c.bf16 %v2885, %v2881
        %v2906 = vpack.c.bf16 %v2890, %v2886
        %v2907 = vpack.c.bf16 %v2891, %v2887
        %v2908 = vpack.c.bf16 %v2892, %v2888
        %v2909 = vpack.c.bf16 %v2893, %v2889
        %2910 = vmatpush.bf16.msra.mxu0 0
        %2911 = vmatpush.bf16.msra.mxu0 0
        %2912 = vmatpush.bf16.msra.mxu0 0
        %2913 = vmatpush.bf16.msra.mxu0 0
        %2914 = vmatpush.bf16.msra.mxu0 %v2906
        %2915 = vmatpush.bf16.msra.mxu0 %v2902
        %2916 = vmatpush.bf16.msra.mxu0 %v2898
        %2917 = vmatpush.bf16.msra.mxu0 %v2894
        %2918 = vmatmul.bf16.gmra.mxu0 %v1980
        %v2919 = vpop.f32.mrf.mxu0
        %v2920 = vadd.f32 0.0, %v2919
        %v2921 = vpop.f32.mrf.mxu0
        %v2922 = vadd.f32 0.0, %v2921
        %2923 = vdwg.mxu0
        %2924 = vmatpush.bf16.msra.mxu0 0
        %2925 = vmatpush.bf16.msra.mxu0 0
        %2926 = vmatpush.bf16.msra.mxu0 0
        %2927 = vmatpush.bf16.msra.mxu0 0
        %2928 = vmatpush.bf16.msra.mxu0 %v2907
        %2929 = vmatpush.bf16.msra.mxu0 %v2903
        %2930 = vmatpush.bf16.msra.mxu0 %v2899
        %2931 = vmatpush.bf16.msra.mxu0 %v2895
        %2932 = vmatmul.bf16.gmra.mxu0 %v1980
        %v2933 = vpop.f32.mrf.mxu0
        %v2934 = vadd.f32 0.0, %v2933
        %v2935 = vpop.f32.mrf.mxu0
        %v2936 = vadd.f32 0.0, %v2935
        %2937 = vdwg.mxu0
        %2938 = vmatpush.bf16.msra.mxu0 0
        %2939 = vmatpush.bf16.msra.mxu0 0
        %2940 = vmatpush.bf16.msra.mxu0 0
        %2941 = vmatpush.bf16.msra.mxu0 0
        %2942 = vmatpush.bf16.msra.mxu0 %v2908
        %2943 = vmatpush.bf16.msra.mxu0 %v2904
        %2944 = vmatpush.bf16.msra.mxu0 %v2900
        %2945 = vmatpush.bf16.msra.mxu0 %v2896
        %2946 = vmatmul.bf16.gmra.mxu0 %v1980
        %v2947 = vpop.f32.mrf.mxu0
        %v2948 = vadd.f32 0.0, %v2947
        %v2949 = vpop.f32.mrf.mxu0
        %v2950 = vadd.f32 0.0, %v2949
        %2951 = vdwg.mxu0
        %2952 = vmatpush.bf16.msra.mxu0 0
        %2953 = vmatpush.bf16.msra.mxu0 0
        %2954 = vmatpush.bf16.msra.mxu0 0
        %2955 = vmatpush.bf16.msra.mxu0 0
        %2956 = vmatpush.bf16.msra.mxu0 %v2909
        %2957 = vmatpush.bf16.msra.mxu0 %v2905
        %2958 = vmatpush.bf16.msra.mxu0 %v2901
        %2959 = vmatpush.bf16.msra.mxu0 %v2897
        %2960 = vmatmul.bf16.gmra.mxu0 %v1980
        %v2961 = vpop.f32.mrf.mxu0
        %v2962 = vadd.f32 0.0, %v2961
        %v2963 = vpop.f32.mrf.mxu0
        %v2964 = vadd.f32 0.0, %v2963
        %2965 = vdwg.mxu0
        %v2966 = vmin.f32 %v2920, 15.0
        %v2967 = vmin.f32 %v2934, 15.0
        %v2968 = vmin.f32 %v2948, 15.0
        %v2969 = vmin.f32 %v2962, 15.0
        %v2970 = vmul.f32 %v2966, 1.442695
        %v2971 = vpow.pop %v2970
        %v2972 = vmul.f32 %v2967, 1.442695
        %v2973 = vpow.pop %v2972
        %v2974 = vmul.f32 %v2968, 1.442695
        %v2975 = vpow.pop %v2974
        %v2976 = vmul.f32 %v2969, 1.442695
        %v2977 = vpow.pop %v2976
        %v2978 = vpack.c.bf16 %v2934, %v2920
        %v2979 = vpack.c.bf16 %v2962, %v2948
        %v2980 = vpack.c.bf16 %v2936, %v2922
        %v2981 = vpack.c.bf16 %v2964, %v2950
        %v2986 = vunpack.c.l.b16 %v2978
        %v2987 = vunpack.c.h.b16 %v2978
        %v2988 = vunpack.c.l.b16 %v2979
        %v2989 = vunpack.c.h.b16 %v2979
        %v2990 = vunpack.c.l.b16 %v2980
        %v2991 = vunpack.c.h.b16 %v2980
        %v2992 = vunpack.c.l.b16 %v2981
        %v2993 = vunpack.c.h.b16 %v2981
        %v2994 = vpack.c.b16 %v2990, %v2986
        %v2995 = vpack.c.b16 %v2991, %v2987
        %v2996 = vpack.c.b16 %v2992, %v2988
        %v2997 = vpack.c.b16 %v2993, %v2989
        %3002 = vmatpush.bf16.msra.mxu0 0
        %3003 = vmatpush.bf16.msra.mxu0 0
        %3004 = vmatpush.bf16.msra.mxu0 0
        %3005 = vmatpush.bf16.msra.mxu0 0
        %3006 = vmatpush.bf16.msra.mxu0 0
        %3007 = vmatpush.bf16.msra.mxu0 0
        %3008 = vmatpush.bf16.msra.mxu0 %v2086
        %3009 = vmatpush.bf16.msra.mxu0 %v2994
        %3010 = vmatmul.bf16.gmra.mxu0 %v2116
        %v3011 = vpop.f32.mrf.mxu0
        %v3012 = vadd.f32 0.0, %v3011
        %v3013 = vpop.f32.mrf.mxu0
        %v3014 = vadd.f32 0.0, %v3013
        %3015 = vmatmul.bf16.gmra.mxu0 %v2119
        %v3016 = vpop.f32.mrf.mxu0
        %v3017 = vadd.f32 0.0, %v3016
        %v3018 = vpop.f32.mrf.mxu0
        %v3019 = vadd.f32 0.0, %v3018
        %3020 = vmatmul.bf16.gmra.mxu0 %v2122
        %v3021 = vpop.f32.mrf.mxu0
        %v3022 = vadd.f32 0.0, %v3021
        %v3023 = vpop.f32.mrf.mxu0
        %v3024 = vadd.f32 0.0, %v3023
        %3025 = vmatmul.bf16.gmra.mxu0 %v2125
        %v3026 = vpop.f32.mrf.mxu0
        %v3027 = vadd.f32 0.0, %v3026
        %v3028 = vpop.f32.mrf.mxu0
        %v3029 = vadd.f32 0.0, %v3028
        %3030 = vdwg.mxu0
        %3031 = vmatpush.bf16.msra.mxu0 0
        %3032 = vmatpush.bf16.msra.mxu0 0
        %3033 = vmatpush.bf16.msra.mxu0 0
        %3034 = vmatpush.bf16.msra.mxu0 0
        %3035 = vmatpush.bf16.msra.mxu0 0
        %3036 = vmatpush.bf16.msra.mxu0 0
        %3037 = vmatpush.bf16.msra.mxu0 %v2087
        %3038 = vmatpush.bf16.msra.mxu0 %v2995
        %3039 = vmatmul.bf16.gmra.mxu0 %v2116
        %v3040 = vpop.f32.mrf.mxu0
        %v3041 = vadd.f32 0.0, %v3040
        %v3042 = vpop.f32.mrf.mxu0
        %v3043 = vadd.f32 0.0, %v3042
        %3044 = vmatmul.bf16.gmra.mxu0 %v2119
        %v3045 = vpop.f32.mrf.mxu0
        %v3046 = vadd.f32 0.0, %v3045
        %v3047 = vpop.f32.mrf.mxu0
        %v3048 = vadd.f32 0.0, %v3047
        %3049 = vmatmul.bf16.gmra.mxu0 %v2122
        %v3050 = vpop.f32.mrf.mxu0
        %v3051 = vadd.f32 0.0, %v3050
        %v3052 = vpop.f32.mrf.mxu0
        %v3053 = vadd.f32 0.0, %v3052
        %3054 = vmatmul.bf16.gmra.mxu0 %v2125
        %v3055 = vpop.f32.mrf.mxu0
        %v3056 = vadd.f32 0.0, %v3055
        %v3057 = vpop.f32.mrf.mxu0
        %v3058 = vadd.f32 0.0, %v3057
        %3059 = vdwg.mxu0
        %3060 = vmatpush.bf16.msra.mxu0 0
        %3061 = vmatpush.bf16.msra.mxu0 0
        %3062 = vmatpush.bf16.msra.mxu0 0
        %3063 = vmatpush.bf16.msra.mxu0 0
        %3064 = vmatpush.bf16.msra.mxu0 0
        %3065 = vmatpush.bf16.msra.mxu0 0
        %3066 = vmatpush.bf16.msra.mxu0 %v2088
        %3067 = vmatpush.bf16.msra.mxu0 %v2996
        %3068 = vmatmul.bf16.gmra.mxu0 %v2116
        %v3069 = vpop.f32.mrf.mxu0
        %v3070 = vadd.f32 0.0, %v3069
        %v3071 = vpop.f32.mrf.mxu0
        %v3072 = vadd.f32 0.0, %v3071
        %3073 = vmatmul.bf16.gmra.mxu0 %v2119
        %v3074 = vpop.f32.mrf.mxu0
        %v3075 = vadd.f32 0.0, %v3074
        %v3076 = vpop.f32.mrf.mxu0
        %v3077 = vadd.f32 0.0, %v3076
        %3078 = vmatmul.bf16.gmra.mxu0 %v2122
        %v3079 = vpop.f32.mrf.mxu0
        %v3080 = vadd.f32 0.0, %v3079
        %v3081 = vpop.f32.mrf.mxu0
        %v3082 = vadd.f32 0.0, %v3081
        %3083 = vmatmul.bf16.gmra.mxu0 %v2125
        %v3084 = vpop.f32.mrf.mxu0
        %v3085 = vadd.f32 0.0, %v3084
        %v3086 = vpop.f32.mrf.mxu0
        %v3087 = vadd.f32 0.0, %v3086
        %3088 = vdwg.mxu0
        %3089 = vmatpush.bf16.msra.mxu0 0
        %3090 = vmatpush.bf16.msra.mxu0 0
        %3091 = vmatpush.bf16.msra.mxu0 0
        %3092 = vmatpush.bf16.msra.mxu0 0
        %3093 = vmatpush.bf16.msra.mxu0 0
        %3094 = vmatpush.bf16.msra.mxu0 0
        %3095 = vmatpush.bf16.msra.mxu0 %v2089
        %3096 = vmatpush.bf16.msra.mxu0 %v2997
        %3097 = vmatmul.bf16.gmra.mxu0 %v2116
        %v3098 = vpop.f32.mrf.mxu0
        %v3099 = vadd.f32 0.0, %v3098
        %v3100 = vpop.f32.mrf.mxu0
        %v3101 = vadd.f32 0.0, %v3100
        %3102 = vmatmul.bf16.gmra.mxu0 %v2119
        %v3103 = vpop.f32.mrf.mxu0
        %v3104 = vadd.f32 0.0, %v3103
        %v3105 = vpop.f32.mrf.mxu0
        %v3106 = vadd.f32 0.0, %v3105
        %3107 = vmatmul.bf16.gmra.mxu0 %v2122
        %v3108 = vpop.f32.mrf.mxu0
        %v3109 = vadd.f32 0.0, %v3108
        %v3110 = vpop.f32.mrf.mxu0
        %v3111 = vadd.f32 0.0, %v3110
        %3112 = vmatmul.bf16.gmra.mxu0 %v2125
        %v3113 = vpop.f32.mrf.mxu0
        %v3114 = vadd.f32 0.0, %v3113
        %v3115 = vpop.f32.mrf.mxu0
        %v3116 = vadd.f32 0.0, %v3115
        %3117 = vdwg.mxu0
        %v3118 = vmax.f32 %v3012, 0.0
        %v3119 = vmax.f32 %v3041, 0.0
        %v3120 = vmax.f32 %v3070, 0.0
        %v3121 = vmax.f32 %v3099, 0.0
        %v3122 = vmax.f32 %v3014, 0.0
        %v3123 = vmax.f32 %v3043, 0.0
        %v3124 = vmax.f32 %v3072, 0.0
        %v3125 = vmax.f32 %v3101, 0.0
        %v3126 = vmax.f32 %v3017, 0.0
        %v3127 = vmax.f32 %v3046, 0.0
        %v3128 = vmax.f32 %v3075, 0.0
        %v3129 = vmax.f32 %v3104, 0.0
        %v3130 = vmax.f32 %v3019, 0.0
        %v3131 = vmax.f32 %v3048, 0.0
        %v3132 = vmax.f32 %v3077, 0.0
        %v3133 = vmax.f32 %v3106, 0.0
        %v3134 = vmax.f32 %v3022, 0.0
        %v3135 = vmax.f32 %v3051, 0.0
        %v3136 = vmax.f32 %v3080, 0.0
        %v3137 = vmax.f32 %v3109, 0.0
        %v3138 = vmax.f32 %v3024, 0.0
        %v3139 = vmax.f32 %v3053, 0.0
        %v3140 = vmax.f32 %v3082, 0.0
        %v3141 = vmax.f32 %v3111, 0.0
        %v3142 = vmax.f32 %v3027, 0.0
        %v3143 = vmax.f32 %v3056, 0.0
        %v3144 = vmax.f32 %v3085, 0.0
        %v3145 = vmax.f32 %v3114, 0.0
        %v3146 = vmax.f32 %v3029, 0.0
        %v3147 = vmax.f32 %v3058, 0.0
        %v3148 = vmax.f32 %v3087, 0.0
        %v3149 = vmax.f32 %v3116, 0.0
        %v3150 = vpack.c.bf16 %v3122, %v3118
        %v3151 = vpack.c.bf16 %v3123, %v3119
        %v3152 = vpack.c.bf16 %v3124, %v3120
        %v3153 = vpack.c.bf16 %v3125, %v3121
        %v3154 = vpack.c.bf16 %v3130, %v3126
        %v3155 = vpack.c.bf16 %v3131, %v3127
        %v3156 = vpack.c.bf16 %v3132, %v3128
        %v3157 = vpack.c.bf16 %v3133, %v3129
        %v3158 = vpack.c.bf16 %v3138, %v3134
        %v3159 = vpack.c.bf16 %v3139, %v3135
        %v3160 = vpack.c.bf16 %v3140, %v3136
        %v3161 = vpack.c.bf16 %v3141, %v3137
        %v3162 = vpack.c.bf16 %v3146, %v3142
        %v3163 = vpack.c.bf16 %v3147, %v3143
        %v3164 = vpack.c.bf16 %v3148, %v3144
        %v3165 = vpack.c.bf16 %v3149, %v3145
        %3166 = vmatpush.bf16.msra.mxu0 0
        %3167 = vmatpush.bf16.msra.mxu0 0
        %3168 = vmatpush.bf16.msra.mxu0 0
        %3169 = vmatpush.bf16.msra.mxu0 0
        %3170 = vmatpush.bf16.msra.mxu0 %v3162
        %3171 = vmatpush.bf16.msra.mxu0 %v3158
        %3172 = vmatpush.bf16.msra.mxu0 %v3154
        %3173 = vmatpush.bf16.msra.mxu0 %v3150
        %3174 = vmatmul.bf16.gmra.mxu0 %v2312
        %v3175 = vpop.f32.mrf.mxu0
        %v3176 = vadd.f32 0.0, %v3175
        %v3177 = vpop.f32.mrf.mxu0
        %v3178 = vadd.f32 0.0, %v3177
        %3179 = vmatmul.bf16.gmra.mxu0 %v2315
        %v3180 = vpop.f32.mrf.mxu0
        %v3181 = vadd.f32 0.0, %v3180
        %v3182 = vpop.f32.mrf.mxu0
        %v3183 = vadd.f32 0.0, %v3182
        %3184 = vmatmul.bf16.gmra.mxu0 %v2318
        %v3185 = vpop.f32.mrf.mxu0
        %v3186 = vadd.f32 0.0, %v3185
        %v3187 = vpop.f32.mrf.mxu0
        %v3188 = vadd.f32 0.0, %v3187
        %3189 = vmatmul.bf16.gmra.mxu0 %v2321
        %v3190 = vpop.f32.mrf.mxu0
        %v3191 = vadd.f32 0.0, %v3190
        %v3192 = vpop.f32.mrf.mxu0
        %v3193 = vadd.f32 0.0, %v3192
        %3194 = vdwg.mxu0
        %3195 = vmatpush.bf16.msra.mxu0 0
        %3196 = vmatpush.bf16.msra.mxu0 0
        %3197 = vmatpush.bf16.msra.mxu0 0
        %3198 = vmatpush.bf16.msra.mxu0 0
        %3199 = vmatpush.bf16.msra.mxu0 %v3163
        %3200 = vmatpush.bf16.msra.mxu0 %v3159
        %3201 = vmatpush.bf16.msra.mxu0 %v3155
        %3202 = vmatpush.bf16.msra.mxu0 %v3151
        %3203 = vmatmul.bf16.gmra.mxu0 %v2312
        %v3204 = vpop.f32.mrf.mxu0
        %v3205 = vadd.f32 0.0, %v3204
        %v3206 = vpop.f32.mrf.mxu0
        %v3207 = vadd.f32 0.0, %v3206
        %3208 = vmatmul.bf16.gmra.mxu0 %v2315
        %v3209 = vpop.f32.mrf.mxu0
        %v3210 = vadd.f32 0.0, %v3209
        %v3211 = vpop.f32.mrf.mxu0
        %v3212 = vadd.f32 0.0, %v3211
        %3213 = vmatmul.bf16.gmra.mxu0 %v2318
        %v3214 = vpop.f32.mrf.mxu0
        %v3215 = vadd.f32 0.0, %v3214
        %v3216 = vpop.f32.mrf.mxu0
        %v3217 = vadd.f32 0.0, %v3216
        %3218 = vmatmul.bf16.gmra.mxu0 %v2321
        %v3219 = vpop.f32.mrf.mxu0
        %v3220 = vadd.f32 0.0, %v3219
        %v3221 = vpop.f32.mrf.mxu0
        %v3222 = vadd.f32 0.0, %v3221
        %3223 = vdwg.mxu0
        %3224 = vmatpush.bf16.msra.mxu0 0
        %3225 = vmatpush.bf16.msra.mxu0 0
        %3226 = vmatpush.bf16.msra.mxu0 0
        %3227 = vmatpush.bf16.msra.mxu0 0
        %3228 = vmatpush.bf16.msra.mxu0 %v3164
        %3229 = vmatpush.bf16.msra.mxu0 %v3160
        %3230 = vmatpush.bf16.msra.mxu0 %v3156
        %3231 = vmatpush.bf16.msra.mxu0 %v3152
        %3232 = vmatmul.bf16.gmra.mxu0 %v2312
        %v3233 = vpop.f32.mrf.mxu0
        %v3234 = vadd.f32 0.0, %v3233
        %v3235 = vpop.f32.mrf.mxu0
        %v3236 = vadd.f32 0.0, %v3235
        %3237 = vmatmul.bf16.gmra.mxu0 %v2315
        %v3238 = vpop.f32.mrf.mxu0
        %v3239 = vadd.f32 0.0, %v3238
        %v3240 = vpop.f32.mrf.mxu0
        %v3241 = vadd.f32 0.0, %v3240
        %3242 = vmatmul.bf16.gmra.mxu0 %v2318
        %v3243 = vpop.f32.mrf.mxu0
        %v3244 = vadd.f32 0.0, %v3243
        %v3245 = vpop.f32.mrf.mxu0
        %v3246 = vadd.f32 0.0, %v3245
        %3247 = vmatmul.bf16.gmra.mxu0 %v2321
        %v3248 = vpop.f32.mrf.mxu0
        %v3249 = vadd.f32 0.0, %v3248
        %v3250 = vpop.f32.mrf.mxu0
        %v3251 = vadd.f32 0.0, %v3250
        %3252 = vdwg.mxu0
        %3253 = vmatpush.bf16.msra.mxu0 0
        %3254 = vmatpush.bf16.msra.mxu0 0
        %3255 = vmatpush.bf16.msra.mxu0 0
        %3256 = vmatpush.bf16.msra.mxu0 0
        %3257 = vmatpush.bf16.msra.mxu0 %v3165
        %3258 = vmatpush.bf16.msra.mxu0 %v3161
        %3259 = vmatpush.bf16.msra.mxu0 %v3157
        %3260 = vmatpush.bf16.msra.mxu0 %v3153
        %3261 = vmatmul.bf16.gmra.mxu0 %v2312
        %v3262 = vpop.f32.mrf.mxu0
        %v3263 = vadd.f32 0.0, %v3262
        %v3264 = vpop.f32.mrf.mxu0
        %v3265 = vadd.f32 0.0, %v3264
        %3266 = vmatmul.bf16.gmra.mxu0 %v2315
        %v3267 = vpop.f32.mrf.mxu0
        %v3268 = vadd.f32 0.0, %v3267
        %v3269 = vpop.f32.mrf.mxu0
        %v3270 = vadd.f32 0.0, %v3269
        %3271 = vmatmul.bf16.gmra.mxu0 %v2318
        %v3272 = vpop.f32.mrf.mxu0
        %v3273 = vadd.f32 0.0, %v3272
        %v3274 = vpop.f32.mrf.mxu0
        %v3275 = vadd.f32 0.0, %v3274
        %3276 = vmatmul.bf16.gmra.mxu0 %v2321
        %v3277 = vpop.f32.mrf.mxu0
        %v3278 = vadd.f32 0.0, %v3277
        %v3279 = vpop.f32.mrf.mxu0
        %v3280 = vadd.f32 0.0, %v3279
        %3281 = vdwg.mxu0
        %v3282 = vmax.f32 %v3176, 0.0
        %v3283 = vmax.f32 %v3205, 0.0
        %v3284 = vmax.f32 %v3234, 0.0
        %v3285 = vmax.f32 %v3263, 0.0
        %v3286 = vmax.f32 %v3178, 0.0
        %v3287 = vmax.f32 %v3207, 0.0
        %v3288 = vmax.f32 %v3236, 0.0
        %v3289 = vmax.f32 %v3265, 0.0
        %v3290 = vmax.f32 %v3181, 0.0
        %v3291 = vmax.f32 %v3210, 0.0
        %v3292 = vmax.f32 %v3239, 0.0
        %v3293 = vmax.f32 %v3268, 0.0
        %v3294 = vmax.f32 %v3183, 0.0
        %v3295 = vmax.f32 %v3212, 0.0
        %v3296 = vmax.f32 %v3241, 0.0
        %v3297 = vmax.f32 %v3270, 0.0
        %v3298 = vmax.f32 %v3186, 0.0
        %v3299 = vmax.f32 %v3215, 0.0
        %v3300 = vmax.f32 %v3244, 0.0
        %v3301 = vmax.f32 %v3273, 0.0
        %v3302 = vmax.f32 %v3188, 0.0
        %v3303 = vmax.f32 %v3217, 0.0
        %v3304 = vmax.f32 %v3246, 0.0
        %v3305 = vmax.f32 %v3275, 0.0
        %v3306 = vmax.f32 %v3191, 0.0
        %v3307 = vmax.f32 %v3220, 0.0
        %v3308 = vmax.f32 %v3249, 0.0
        %v3309 = vmax.f32 %v3278, 0.0
        %v3310 = vmax.f32 %v3193, 0.0
        %v3311 = vmax.f32 %v3222, 0.0
        %v3312 = vmax.f32 %v3251, 0.0
        %v3313 = vmax.f32 %v3280, 0.0
        %v3314 = vpack.c.bf16 %v3286, %v3282
        %v3315 = vpack.c.bf16 %v3287, %v3283
        %v3316 = vpack.c.bf16 %v3288, %v3284
        %v3317 = vpack.c.bf16 %v3289, %v3285
        %v3318 = vpack.c.bf16 %v3294, %v3290
        %v3319 = vpack.c.bf16 %v3295, %v3291
        %v3320 = vpack.c.bf16 %v3296, %v3292
        %v3321 = vpack.c.bf16 %v3297, %v3293
        %v3322 = vpack.c.bf16 %v3302, %v3298
        %v3323 = vpack.c.bf16 %v3303, %v3299
        %v3324 = vpack.c.bf16 %v3304, %v3300
        %v3325 = vpack.c.bf16 %v3305, %v3301
        %v3326 = vpack.c.bf16 %v3310, %v3306
        %v3327 = vpack.c.bf16 %v3311, %v3307
        %v3328 = vpack.c.bf16 %v3312, %v3308
        %v3329 = vpack.c.bf16 %v3313, %v3309
        %3330 = vmatpush.bf16.msra.mxu0 0
        %3331 = vmatpush.bf16.msra.mxu0 0
        %3332 = vmatpush.bf16.msra.mxu0 0
        %3333 = vmatpush.bf16.msra.mxu0 0
        %3334 = vmatpush.bf16.msra.mxu0 %v3326
        %3335 = vmatpush.bf16.msra.mxu0 %v3322
        %3336 = vmatpush.bf16.msra.mxu0 %v3318
        %3337 = vmatpush.bf16.msra.mxu0 %v3314
        %3338 = vmatmul.bf16.gmra.mxu0 %v2488
        %v3339 = vpop.f32.mrf.mxu0
        %v3340 = vadd.f32 0.0, %v3339
        %v3341 = vpop.f32.mrf.mxu0
        %3342 = vdwg.mxu0
        %3343 = vmatpush.bf16.msra.mxu0 0
        %3344 = vmatpush.bf16.msra.mxu0 0
        %3345 = vmatpush.bf16.msra.mxu0 0
        %3346 = vmatpush.bf16.msra.mxu0 0
        %3347 = vmatpush.bf16.msra.mxu0 %v3327
        %3348 = vmatpush.bf16.msra.mxu0 %v3323
        %3349 = vmatpush.bf16.msra.mxu0 %v3319
        %3350 = vmatpush.bf16.msra.mxu0 %v3315
        %3351 = vmatmul.bf16.gmra.mxu0 %v2488
        %v3352 = vpop.f32.mrf.mxu0
        %v3353 = vadd.f32 0.0, %v3352
        %v3354 = vpop.f32.mrf.mxu0
        %3355 = vdwg.mxu0
        %3356 = vmatpush.bf16.msra.mxu0 0
        %3357 = vmatpush.bf16.msra.mxu0 0
        %3358 = vmatpush.bf16.msra.mxu0 0
        %3359 = vmatpush.bf16.msra.mxu0 0
        %3360 = vmatpush.bf16.msra.mxu0 %v3328
        %3361 = vmatpush.bf16.msra.mxu0 %v3324
        %3362 = vmatpush.bf16.msra.mxu0 %v3320
        %3363 = vmatpush.bf16.msra.mxu0 %v3316
        %3364 = vmatmul.bf16.gmra.mxu0 %v2488
        %v3365 = vpop.f32.mrf.mxu0
        %v3366 = vadd.f32 0.0, %v3365
        %v3367 = vpop.f32.mrf.mxu0
        %3368 = vdwg.mxu0
        %3369 = vmatpush.bf16.msra.mxu0 0
        %3370 = vmatpush.bf16.msra.mxu0 0
        %3371 = vmatpush.bf16.msra.mxu0 0
        %3372 = vmatpush.bf16.msra.mxu0 0
        %3373 = vmatpush.bf16.msra.mxu0 %v3329
        %3374 = vmatpush.bf16.msra.mxu0 %v3325
        %3375 = vmatpush.bf16.msra.mxu0 %v3321
        %3376 = vmatpush.bf16.msra.mxu0 %v3317
        %3377 = vmatmul.bf16.gmra.mxu0 %v2488
        %v3378 = vpop.f32.mrf.mxu0
        %v3379 = vadd.f32 0.0, %v3378
        %v3380 = vpop.f32.mrf.mxu0
        %3381 = vdwg.mxu0
        %v3382 = vsub.f32 0.0, %v3340
        %v3383 = vsub.f32 0.0, %v3353
        %v3384 = vsub.f32 0.0, %v3366
        %v3385 = vsub.f32 0.0, %v3379
        %v3386 = vmul.f32 %v3382, 1.442695
        %v3387 = vpow.pop %v3386
        %v3388 = vmul.f32 %v3383, 1.442695
        %v3389 = vpow.pop %v3388
        %v3390 = vmul.f32 %v3384, 1.442695
        %v3391 = vpow.pop %v3390
        %v3392 = vmul.f32 %v3385, 1.442695
        %v3393 = vpow.pop %v3392
        %v3394 = vadd.f32 %v3387, 1.0
        %v3395 = vadd.f32 %v3389, 1.0
        %v3396 = vadd.f32 %v3391, 1.0
        %v3397 = vadd.f32 %v3393, 1.0
        %v3398 = vrcp.pop %v3394
        %v3399 = vrcp.pop %v3395
        %v3400 = vrcp.pop %v3396
        %v3401 = vrcp.pop %v3397
        %v3402 = vsub.f32 0.0, %v2971
        %v3403 = vsub.f32 0.0, %v2973
        %v3404 = vsub.f32 0.0, %v2975
        %v3405 = vsub.f32 0.0, %v2977
        %v3406 = vmul.f32 %v3402, %v2570
        %v3407 = vmul.f32 %v3403, %v2571
        %v3408 = vmul.f32 %v3404, %v2572
        %v3409 = vmul.f32 %v3405, %v2573
        %v3410 = vmul.f32 %v3406, 1.442695
        %v3411 = vpow.pop %v3410
        %v3412 = vmul.f32 %v3407, 1.442695
        %v3413 = vpow.pop %v3412
        %v3414 = vmul.f32 %v3408, 1.442695
        %v3415 = vpow.pop %v3414
        %v3416 = vmul.f32 %v3409, 1.442695
        %v3417 = vpow.pop %v3416
        %v3418 = vsub.f32 1.0, %v3411
        %v3419 = vsub.f32 1.0, %v3413
        %v3420 = vsub.f32 1.0, %v3415
        %v3421 = vsub.f32 1.0, %v3417
        %v3422 = vmul.f32 %v2630, %v3418
        %v3423 = vmul.f32 %v2631, %v3419
        %v3424 = vmul.f32 %v2632, %v3420
        %v3425 = vmul.f32 %v2633, %v3421
        %v3426 = vperm.slane %v3422, 0
        %v3427 = vperm.slane %v3423, 0
        %v3428 = vperm.slane %v3424, 0
        %v3429 = vperm.slane %v3425, 0
        %v3430 = vmul.f32 %v3426, %v3398
        %v3431 = vmul.f32 %v3427, %v3399
        %v3432 = vmul.f32 %v3428, %v3400
        %v3433 = vmul.f32 %v3429, %v3401
        %v3434 = vadd.f32 %v2602, %v3430
        %v3435 = vadd.f32 %v2603, %v3431
        %v3436 = vadd.f32 %v2604, %v3432
        %v3437 = vadd.f32 %v2605, %v3433
        %v3442 = vrot.slane %v2634, 3
        %v3443 = vrot.slane %v2635, 3
        %v3444 = vrot.slane %v2636, 3
        %v3445 = vrot.slane %v2637, 3
        %v3450 = vmul.f32 %v3422, %v3442
        %v3451 = vmul.f32 %v3423, %v3443
        %v3452 = vmul.f32 %v3424, %v3444
        %v3453 = vmul.f32 %v3425, %v3445
        %v3454 = vadd.f32 %v2622, %v3450
        %v3455 = vadd.f32 %v2623, %v3451
        %v3456 = vadd.f32 %v2624, %v3452
        %v3457 = vadd.f32 %v2625, %v3453
        %v3458 = vadd.f32 %v2626, %v3422
        %v3459 = vadd.f32 %v2627, %v3423
        %v3460 = vadd.f32 %v2628, %v3424
        %v3461 = vadd.f32 %v2629, %v3425
        %v3462 = vsub.f32 1.0, %v3418
        %v3463 = vsub.f32 1.0, %v3419
        %v3464 = vsub.f32 1.0, %v3420
        %v3465 = vsub.f32 1.0, %v3421
        %v3466 = vmul.f32 %v2630, %v3462
        %v3467 = vmul.f32 %v2631, %v3463
        %v3468 = vmul.f32 %v2632, %v3464
        %v3469 = vmul.f32 %v2633, %v3465
        %v3470 = vadd.f32 %v2634, %v842
        %v3471 = vadd.f32 %v2635, %v843
        %v3472 = vadd.f32 %v2636, %v844
        %v3473 = vadd.f32 %v2637, %v845
        %v3474 = vperm.slane %v3470, 3
        %v3475 = vperm.slane %v3471, 3
        %v3476 = vperm.slane %v3472, 3
        %v3477 = vperm.slane %v3473, 3
        %v3478 = vmul.f32 %v3474, %v1054
        %v3479 = vmul.f32 %v3475, %v1055
        %v3480 = vmul.f32 %v3476, %v1056
        %v3481 = vmul.f32 %v3477, %v1057
        %v3482 = vmul.f32 %v3474, %v1068
        %v3483 = vmul.f32 %v3475, %v1069
        %v3484 = vmul.f32 %v3476, %v1070
        %v3485 = vmul.f32 %v3477, %v1071
        %v3486 = vmul.f32 %v3474, %v1077
        %v3487 = vmul.f32 %v3475, %v1078
        %v3488 = vmul.f32 %v3476, %v1079
        %v3489 = vmul.f32 %v3477, %v1080
        %v3490 = vadd.f32 %v1169, %v3478
        %v3491 = vadd.f32 %v1170, %v3479
        %v3492 = vadd.f32 %v1171, %v3480
        %v3493 = vadd.f32 %v1172, %v3481
        %v3494 = vadd.f32 %v1181, %v3482
        %v3495 = vadd.f32 %v1182, %v3483
        %v3496 = vadd.f32 %v1183, %v3484
        %v3497 = vadd.f32 %v1184, %v3485
        %v3498 = vadd.f32 %v1189, %v3486
        %v3499 = vadd.f32 %v1190, %v3487
        %v3500 = vadd.f32 %v1191, %v3488
        %v3501 = vadd.f32 %v1192, %v3489
        %v3502 = vfloor.f32 %v3490
        %v3503 = vfloor.f32 %v3491
        %v3504 = vfloor.f32 %v3492
        %v3505 = vfloor.f32 %v3493
        %v3506 = vfloor.f32 %v3494
        %v3507 = vfloor.f32 %v3495
        %v3508 = vfloor.f32 %v3496
        %v3509 = vfloor.f32 %v3497
        %v3510 = vfloor.f32 %v3498
        %v3511 = vfloor.f32 %v3499
        %v3512 = vfloor.f32 %v3500
        %v3513 = vfloor.f32 %v3501
        %v3514 = vsub.f32 %v3490, %v3502
        %v3515 = vsub.f32 %v3491, %v3503
        %v3516 = vsub.f32 %v3492, %v3504
        %v3517 = vsub.f32 %v3493, %v3505
        %v3518 = vsub.f32 %v3494, %v3506
        %v3519 = vsub.f32 %v3495, %v3507
        %v3520 = vsub.f32 %v3496, %v3508
        %v3521 = vsub.f32 %v3497, %v3509
        %v3522 = vsub.f32 %v3498, %v3510
        %v3523 = vsub.f32 %v3499, %v3511
        %v3524 = vsub.f32 %v3500, %v3512
        %v3525 = vsub.f32 %v3501, %v3513
        %v3526 = vmul.f32 %v3514, 2.0
        %v3527 = vmul.f32 %v3515, 2.0
        %v3528 = vmul.f32 %v3516, 2.0
        %v3529 = vmul.f32 %v3517, 2.0
        %v3530 = vmul.f32 %v3518, 2.0
        %v3531 = vmul.f32 %v3519, 2.0
        %v3532 = vmul.f32 %v3520, 2.0
        %v3533 = vmul.f32 %v3521, 2.0
        %v3534 = vmul.f32 %v3522, 2.0
        %v3535 = vmul.f32 %v3523, 2.0
        %v3536 = vmul.f32 %v3524, 2.0
        %v3537 = vmul.f32 %v3525, 2.0
        %v3538 = vsub.f32 %v3526, 1.0
        %v3539 = vsub.f32 %v3527, 1.0
        %v3540 = vsub.f32 %v3528, 1.0
        %v3541 = vsub.f32 %v3529, 1.0
        %v3542 = vsub.f32 %v3530, 1.0
        %v3543 = vsub.f32 %v3531, 1.0
        %v3544 = vsub.f32 %v3532, 1.0
        %v3545 = vsub.f32 %v3533, 1.0
        %v3546 = vsub.f32 %v3534, 1.0
        %v3547 = vsub.f32 %v3535, 1.0
        %v3548 = vsub.f32 %v3536, 1.0
        %v3549 = vsub.f32 %v3537, 1.0
        %v3550 = vand.u32 2147483647, %v3538
        %v3551 = vand.u32 2147483647, %v3539
        %v3552 = vand.u32 2147483647, %v3540
        %v3553 = vand.u32 2147483647, %v3541
        %v3554 = vand.u32 2147483647, %v3542
        %v3555 = vand.u32 2147483647, %v3543
        %v3556 = vand.u32 2147483647, %v3544
        %v3557 = vand.u32 2147483647, %v3545
        %v3558 = vand.u32 2147483647, %v3546
        %v3559 = vand.u32 2147483647, %v3547
        %v3560 = vand.u32 2147483647, %v3548
        %v3561 = vand.u32 2147483647, %v3549
        %v3562 = vpack.c.bf16 %v3554, %v3550
        %v3563 = vpack.c.bf16 %v3555, %v3551
        %v3564 = vpack.c.bf16 %v3556, %v3552
        %v3565 = vpack.c.bf16 %v3557, %v3553
        %v3566 = vpack.c.bf16 %v3558, %v3558
        %v3567 = vpack.c.bf16 %v3559, %v3559
        %v3568 = vpack.c.bf16 %v3560, %v3560
        %v3569 = vpack.c.bf16 %v3561, %v3561
        %v3571 = vsel %vm1062, %v3566, 0
        %v3574 = vsel %vm1062, %v3567, 0
        %v3577 = vsel %vm1062, %v3568, 0
        %v3580 = vsel %vm1062, %v3569, 0
        %3582 = vmatpush.bf16.msra.mxu0 0
        %3583 = vmatpush.bf16.msra.mxu0 0
        %3584 = vmatpush.bf16.msra.mxu0 0
        %3585 = vmatpush.bf16.msra.mxu0 0
        %3586 = vmatpush.bf16.msra.mxu0 0
        %3587 = vmatpush.bf16.msra.mxu0 0
        %3588 = vmatpush.bf16.msra.mxu0 %v3571
        %3589 = vmatpush.bf16.msra.mxu0 %v3562
        %3590 = vmatmul.bf16.gmra.mxu0 %v1786
        %v3591 = vpop.f32.mrf.mxu0
        %v3592 = vadd.f32 0.0, %v3591
        %v3593 = vpop.f32.mrf.mxu0
        %v3594 = vadd.f32 0.0, %v3593
        %3595 = vmatmul.bf16.gmra.mxu0 %v1789
        %v3596 = vpop.f32.mrf.mxu0
        %v3597 = vadd.f32 0.0, %v3596
        %v3598 = vpop.f32.mrf.mxu0
        %v3599 = vadd.f32 0.0, %v3598
        %3600 = vmatmul.bf16.gmra.mxu0 %v1792
        %v3601 = vpop.f32.mrf.mxu0
        %v3602 = vadd.f32 0.0, %v3601
        %v3603 = vpop.f32.mrf.mxu0
        %v3604 = vadd.f32 0.0, %v3603
        %3605 = vmatmul.bf16.gmra.mxu0 %v1795
        %v3606 = vpop.f32.mrf.mxu0
        %v3607 = vadd.f32 0.0, %v3606
        %v3608 = vpop.f32.mrf.mxu0
        %v3609 = vadd.f32 0.0, %v3608
        %3610 = vdwg.mxu0
        %3611 = vmatpush.bf16.msra.mxu0 0
        %3612 = vmatpush.bf16.msra.mxu0 0
        %3613 = vmatpush.bf16.msra.mxu0 0
        %3614 = vmatpush.bf16.msra.mxu0 0
        %3615 = vmatpush.bf16.msra.mxu0 0
        %3616 = vmatpush.bf16.msra.mxu0 0
        %3617 = vmatpush.bf16.msra.mxu0 %v3574
        %3618 = vmatpush.bf16.msra.mxu0 %v3563
        %3619 = vmatmul.bf16.gmra.mxu0 %v1786
        %v3620 = vpop.f32.mrf.mxu0
        %v3621 = vadd.f32 0.0, %v3620
        %v3622 = vpop.f32.mrf.mxu0
        %v3623 = vadd.f32 0.0, %v3622
        %3624 = vmatmul.bf16.gmra.mxu0 %v1789
        %v3625 = vpop.f32.mrf.mxu0
        %v3626 = vadd.f32 0.0, %v3625
        %v3627 = vpop.f32.mrf.mxu0
        %v3628 = vadd.f32 0.0, %v3627
        %3629 = vmatmul.bf16.gmra.mxu0 %v1792
        %v3630 = vpop.f32.mrf.mxu0
        %v3631 = vadd.f32 0.0, %v3630
        %v3632 = vpop.f32.mrf.mxu0
        %v3633 = vadd.f32 0.0, %v3632
        %3634 = vmatmul.bf16.gmra.mxu0 %v1795
        %v3635 = vpop.f32.mrf.mxu0
        %v3636 = vadd.f32 0.0, %v3635
        %v3637 = vpop.f32.mrf.mxu0
        %v3638 = vadd.f32 0.0, %v3637
        %3639 = vdwg.mxu0
        %3640 = vmatpush.bf16.msra.mxu0 0
        %3641 = vmatpush.bf16.msra.mxu0 0
        %3642 = vmatpush.bf16.msra.mxu0 0
        %3643 = vmatpush.bf16.msra.mxu0 0
        %3644 = vmatpush.bf16.msra.mxu0 0
        %3645 = vmatpush.bf16.msra.mxu0 0
        %3646 = vmatpush.bf16.msra.mxu0 %v3577
        %3647 = vmatpush.bf16.msra.mxu0 %v3564
        %3648 = vmatmul.bf16.gmra.mxu0 %v1786
        %v3649 = vpop.f32.mrf.mxu0
        %v3650 = vadd.f32 0.0, %v3649
        %v3651 = vpop.f32.mrf.mxu0
        %v3652 = vadd.f32 0.0, %v3651
        %3653 = vmatmul.bf16.gmra.mxu0 %v1789
        %v3654 = vpop.f32.mrf.mxu0
        %v3655 = vadd.f32 0.0, %v3654
        %v3656 = vpop.f32.mrf.mxu0
        %v3657 = vadd.f32 0.0, %v3656
        %3658 = vmatmul.bf16.gmra.mxu0 %v1792
        %v3659 = vpop.f32.mrf.mxu0
        %v3660 = vadd.f32 0.0, %v3659
        %v3661 = vpop.f32.mrf.mxu0
        %v3662 = vadd.f32 0.0, %v3661
        %3663 = vmatmul.bf16.gmra.mxu0 %v1795
        %v3664 = vpop.f32.mrf.mxu0
        %v3665 = vadd.f32 0.0, %v3664
        %v3666 = vpop.f32.mrf.mxu0
        %v3667 = vadd.f32 0.0, %v3666
        %3668 = vdwg.mxu0
        %3669 = vmatpush.bf16.msra.mxu0 0
        %3670 = vmatpush.bf16.msra.mxu0 0
        %3671 = vmatpush.bf16.msra.mxu0 0
        %3672 = vmatpush.bf16.msra.mxu0 0
        %3673 = vmatpush.bf16.msra.mxu0 0
        %3674 = vmatpush.bf16.msra.mxu0 0
        %3675 = vmatpush.bf16.msra.mxu0 %v3580
        %3676 = vmatpush.bf16.msra.mxu0 %v3565
        %3677 = vmatmul.bf16.gmra.mxu0 %v1786
        %v3678 = vpop.f32.mrf.mxu0
        %v3679 = vadd.f32 0.0, %v3678
        %v3680 = vpop.f32.mrf.mxu0
        %v3681 = vadd.f32 0.0, %v3680
        %3682 = vmatmul.bf16.gmra.mxu0 %v1789
        %v3683 = vpop.f32.mrf.mxu0
        %v3684 = vadd.f32 0.0, %v3683
        %v3685 = vpop.f32.mrf.mxu0
        %v3686 = vadd.f32 0.0, %v3685
        %3687 = vmatmul.bf16.gmra.mxu0 %v1792
        %v3688 = vpop.f32.mrf.mxu0
        %v3689 = vadd.f32 0.0, %v3688
        %v3690 = vpop.f32.mrf.mxu0
        %v3691 = vadd.f32 0.0, %v3690
        %3692 = vmatmul.bf16.gmra.mxu0 %v1795
        %v3693 = vpop.f32.mrf.mxu0
        %v3694 = vadd.f32 0.0, %v3693
        %v3695 = vpop.f32.mrf.mxu0
        %v3696 = vadd.f32 0.0, %v3695
        %3697 = vdwg.mxu0
        %v3698 = vmax.f32 %v3592, 0.0
        %v3699 = vmax.f32 %v3621, 0.0
        %v3700 = vmax.f32 %v3650, 0.0
        %v3701 = vmax.f32 %v3679, 0.0
        %v3702 = vmax.f32 %v3594, 0.0
        %v3703 = vmax.f32 %v3623, 0.0
        %v3704 = vmax.f32 %v3652, 0.0
        %v3705 = vmax.f32 %v3681, 0.0
        %v3706 = vmax.f32 %v3597, 0.0
        %v3707 = vmax.f32 %v3626, 0.0
        %v3708 = vmax.f32 %v3655, 0.0
        %v3709 = vmax.f32 %v3684, 0.0
        %v3710 = vmax.f32 %v3599, 0.0
        %v3711 = vmax.f32 %v3628, 0.0
        %v3712 = vmax.f32 %v3657, 0.0
        %v3713 = vmax.f32 %v3686, 0.0
        %v3714 = vmax.f32 %v3602, 0.0
        %v3715 = vmax.f32 %v3631, 0.0
        %v3716 = vmax.f32 %v3660, 0.0
        %v3717 = vmax.f32 %v3689, 0.0
        %v3718 = vmax.f32 %v3604, 0.0
        %v3719 = vmax.f32 %v3633, 0.0
        %v3720 = vmax.f32 %v3662, 0.0
        %v3721 = vmax.f32 %v3691, 0.0
        %v3722 = vmax.f32 %v3607, 0.0
        %v3723 = vmax.f32 %v3636, 0.0
        %v3724 = vmax.f32 %v3665, 0.0
        %v3725 = vmax.f32 %v3694, 0.0
        %v3726 = vmax.f32 %v3609, 0.0
        %v3727 = vmax.f32 %v3638, 0.0
        %v3728 = vmax.f32 %v3667, 0.0
        %v3729 = vmax.f32 %v3696, 0.0
        %v3730 = vpack.c.bf16 %v3702, %v3698
        %v3731 = vpack.c.bf16 %v3703, %v3699
        %v3732 = vpack.c.bf16 %v3704, %v3700
        %v3733 = vpack.c.bf16 %v3705, %v3701
        %v3734 = vpack.c.bf16 %v3710, %v3706
        %v3735 = vpack.c.bf16 %v3711, %v3707
        %v3736 = vpack.c.bf16 %v3712, %v3708
        %v3737 = vpack.c.bf16 %v3713, %v3709
        %v3738 = vpack.c.bf16 %v3718, %v3714
        %v3739 = vpack.c.bf16 %v3719, %v3715
        %v3740 = vpack.c.bf16 %v3720, %v3716
        %v3741 = vpack.c.bf16 %v3721, %v3717
        %v3742 = vpack.c.bf16 %v3726, %v3722
        %v3743 = vpack.c.bf16 %v3727, %v3723
        %v3744 = vpack.c.bf16 %v3728, %v3724
        %v3745 = vpack.c.bf16 %v3729, %v3725
        %3746 = vmatpush.bf16.msra.mxu0 0
        %3747 = vmatpush.bf16.msra.mxu0 0
        %3748 = vmatpush.bf16.msra.mxu0 0
        %3749 = vmatpush.bf16.msra.mxu0 0
        %3750 = vmatpush.bf16.msra.mxu0 %v3742
        %3751 = vmatpush.bf16.msra.mxu0 %v3738
        %3752 = vmatpush.bf16.msra.mxu0 %v3734
        %3753 = vmatpush.bf16.msra.mxu0 %v3730
        %3754 = vmatmul.bf16.gmra.mxu0 %v1980
        %v3755 = vpop.f32.mrf.mxu0
        %v3756 = vadd.f32 0.0, %v3755
        %v3757 = vpop.f32.mrf.mxu0
        %v3758 = vadd.f32 0.0, %v3757
        %3759 = vdwg.mxu0
        %3760 = vmatpush.bf16.msra.mxu0 0
        %3761 = vmatpush.bf16.msra.mxu0 0
        %3762 = vmatpush.bf16.msra.mxu0 0
        %3763 = vmatpush.bf16.msra.mxu0 0
        %3764 = vmatpush.bf16.msra.mxu0 %v3743
        %3765 = vmatpush.bf16.msra.mxu0 %v3739
        %3766 = vmatpush.bf16.msra.mxu0 %v3735
        %3767 = vmatpush.bf16.msra.mxu0 %v3731
        %3768 = vmatmul.bf16.gmra.mxu0 %v1980
        %v3769 = vpop.f32.mrf.mxu0
        %v3770 = vadd.f32 0.0, %v3769
        %v3771 = vpop.f32.mrf.mxu0
        %v3772 = vadd.f32 0.0, %v3771
        %3773 = vdwg.mxu0
        %3774 = vmatpush.bf16.msra.mxu0 0
        %3775 = vmatpush.bf16.msra.mxu0 0
        %3776 = vmatpush.bf16.msra.mxu0 0
        %3777 = vmatpush.bf16.msra.mxu0 0
        %3778 = vmatpush.bf16.msra.mxu0 %v3744
        %3779 = vmatpush.bf16.msra.mxu0 %v3740
        %3780 = vmatpush.bf16.msra.mxu0 %v3736
        %3781 = vmatpush.bf16.msra.mxu0 %v3732
        %3782 = vmatmul.bf16.gmra.mxu0 %v1980
        %v3783 = vpop.f32.mrf.mxu0
        %v3784 = vadd.f32 0.0, %v3783
        %v3785 = vpop.f32.mrf.mxu0
        %v3786 = vadd.f32 0.0, %v3785
        %3787 = vdwg.mxu0
        %3788 = vmatpush.bf16.msra.mxu0 0
        %3789 = vmatpush.bf16.msra.mxu0 0
        %3790 = vmatpush.bf16.msra.mxu0 0
        %3791 = vmatpush.bf16.msra.mxu0 0
        %3792 = vmatpush.bf16.msra.mxu0 %v3745
        %3793 = vmatpush.bf16.msra.mxu0 %v3741
        %3794 = vmatpush.bf16.msra.mxu0 %v3737
        %3795 = vmatpush.bf16.msra.mxu0 %v3733
        %3796 = vmatmul.bf16.gmra.mxu0 %v1980
        %v3797 = vpop.f32.mrf.mxu0
        %v3798 = vadd.f32 0.0, %v3797
        %v3799 = vpop.f32.mrf.mxu0
        %v3800 = vadd.f32 0.0, %v3799
        %3801 = vdwg.mxu0
        %v3802 = vmin.f32 %v3756, 15.0
        %v3803 = vmin.f32 %v3770, 15.0
        %v3804 = vmin.f32 %v3784, 15.0
        %v3805 = vmin.f32 %v3798, 15.0
        %v3806 = vmul.f32 %v3802, 1.442695
        %v3807 = vpow.pop %v3806
        %v3808 = vmul.f32 %v3803, 1.442695
        %v3809 = vpow.pop %v3808
        %v3810 = vmul.f32 %v3804, 1.442695
        %v3811 = vpow.pop %v3810
        %v3812 = vmul.f32 %v3805, 1.442695
        %v3813 = vpow.pop %v3812
        %v3814 = vpack.c.bf16 %v3770, %v3756
        %v3815 = vpack.c.bf16 %v3798, %v3784
        %v3816 = vpack.c.bf16 %v3772, %v3758
        %v3817 = vpack.c.bf16 %v3800, %v3786
        %v3822 = vunpack.c.l.b16 %v3814
        %v3823 = vunpack.c.h.b16 %v3814
        %v3824 = vunpack.c.l.b16 %v3815
        %v3825 = vunpack.c.h.b16 %v3815
        %v3826 = vunpack.c.l.b16 %v3816
        %v3827 = vunpack.c.h.b16 %v3816
        %v3828 = vunpack.c.l.b16 %v3817
        %v3829 = vunpack.c.h.b16 %v3817
        %v3830 = vpack.c.b16 %v3826, %v3822
        %v3831 = vpack.c.b16 %v3827, %v3823
        %v3832 = vpack.c.b16 %v3828, %v3824
        %v3833 = vpack.c.b16 %v3829, %v3825
        %3838 = vmatpush.bf16.msra.mxu0 0
        %3839 = vmatpush.bf16.msra.mxu0 0
        %3840 = vmatpush.bf16.msra.mxu0 0
        %3841 = vmatpush.bf16.msra.mxu0 0
        %3842 = vmatpush.bf16.msra.mxu0 0
        %3843 = vmatpush.bf16.msra.mxu0 0
        %3844 = vmatpush.bf16.msra.mxu0 %v2086
        %3845 = vmatpush.bf16.msra.mxu0 %v3830
        %3846 = vmatmul.bf16.gmra.mxu0 %v2116
        %v3847 = vpop.f32.mrf.mxu0
        %v3848 = vadd.f32 0.0, %v3847
        %v3849 = vpop.f32.mrf.mxu0
        %v3850 = vadd.f32 0.0, %v3849
        %3851 = vmatmul.bf16.gmra.mxu0 %v2119
        %v3852 = vpop.f32.mrf.mxu0
        %v3853 = vadd.f32 0.0, %v3852
        %v3854 = vpop.f32.mrf.mxu0
        %v3855 = vadd.f32 0.0, %v3854
        %3856 = vmatmul.bf16.gmra.mxu0 %v2122
        %v3857 = vpop.f32.mrf.mxu0
        %v3858 = vadd.f32 0.0, %v3857
        %v3859 = vpop.f32.mrf.mxu0
        %v3860 = vadd.f32 0.0, %v3859
        %3861 = vmatmul.bf16.gmra.mxu0 %v2125
        %v3862 = vpop.f32.mrf.mxu0
        %v3863 = vadd.f32 0.0, %v3862
        %v3864 = vpop.f32.mrf.mxu0
        %v3865 = vadd.f32 0.0, %v3864
        %3866 = vdwg.mxu0
        %3867 = vmatpush.bf16.msra.mxu0 0
        %3868 = vmatpush.bf16.msra.mxu0 0
        %3869 = vmatpush.bf16.msra.mxu0 0
        %3870 = vmatpush.bf16.msra.mxu0 0
        %3871 = vmatpush.bf16.msra.mxu0 0
        %3872 = vmatpush.bf16.msra.mxu0 0
        %3873 = vmatpush.bf16.msra.mxu0 %v2087
        %3874 = vmatpush.bf16.msra.mxu0 %v3831
        %3875 = vmatmul.bf16.gmra.mxu0 %v2116
        %v3876 = vpop.f32.mrf.mxu0
        %v3877 = vadd.f32 0.0, %v3876
        %v3878 = vpop.f32.mrf.mxu0
        %v3879 = vadd.f32 0.0, %v3878
        %3880 = vmatmul.bf16.gmra.mxu0 %v2119
        %v3881 = vpop.f32.mrf.mxu0
        %v3882 = vadd.f32 0.0, %v3881
        %v3883 = vpop.f32.mrf.mxu0
        %v3884 = vadd.f32 0.0, %v3883
        %3885 = vmatmul.bf16.gmra.mxu0 %v2122
        %v3886 = vpop.f32.mrf.mxu0
        %v3887 = vadd.f32 0.0, %v3886
        %v3888 = vpop.f32.mrf.mxu0
        %v3889 = vadd.f32 0.0, %v3888
        %3890 = vmatmul.bf16.gmra.mxu0 %v2125
        %v3891 = vpop.f32.mrf.mxu0
        %v3892 = vadd.f32 0.0, %v3891
        %v3893 = vpop.f32.mrf.mxu0
        %v3894 = vadd.f32 0.0, %v3893
        %3895 = vdwg.mxu0
        %3896 = vmatpush.bf16.msra.mxu0 0
        %3897 = vmatpush.bf16.msra.mxu0 0
        %3898 = vmatpush.bf16.msra.mxu0 0
        %3899 = vmatpush.bf16.msra.mxu0 0
        %3900 = vmatpush.bf16.msra.mxu0 0
        %3901 = vmatpush.bf16.msra.mxu0 0
        %3902 = vmatpush.bf16.msra.mxu0 %v2088
        %3903 = vmatpush.bf16.msra.mxu0 %v3832
        %3904 = vmatmul.bf16.gmra.mxu0 %v2116
        %v3905 = vpop.f32.mrf.mxu0
        %v3906 = vadd.f32 0.0, %v3905
        %v3907 = vpop.f32.mrf.mxu0
        %v3908 = vadd.f32 0.0, %v3907
        %3909 = vmatmul.bf16.gmra.mxu0 %v2119
        %v3910 = vpop.f32.mrf.mxu0
        %v3911 = vadd.f32 0.0, %v3910
        %v3912 = vpop.f32.mrf.mxu0
        %v3913 = vadd.f32 0.0, %v3912
        %3914 = vmatmul.bf16.gmra.mxu0 %v2122
        %v3915 = vpop.f32.mrf.mxu0
        %v3916 = vadd.f32 0.0, %v3915
        %v3917 = vpop.f32.mrf.mxu0
        %v3918 = vadd.f32 0.0, %v3917
        %3919 = vmatmul.bf16.gmra.mxu0 %v2125
        %v3920 = vpop.f32.mrf.mxu0
        %v3921 = vadd.f32 0.0, %v3920
        %v3922 = vpop.f32.mrf.mxu0
        %v3923 = vadd.f32 0.0, %v3922
        %3924 = vdwg.mxu0
        %3925 = vmatpush.bf16.msra.mxu0 0
        %3926 = vmatpush.bf16.msra.mxu0 0
        %3927 = vmatpush.bf16.msra.mxu0 0
        %3928 = vmatpush.bf16.msra.mxu0 0
        %3929 = vmatpush.bf16.msra.mxu0 0
        %3930 = vmatpush.bf16.msra.mxu0 0
        %3931 = vmatpush.bf16.msra.mxu0 %v2089
        %3932 = vmatpush.bf16.msra.mxu0 %v3833
        %3933 = vmatmul.bf16.gmra.mxu0 %v2116
        %v3934 = vpop.f32.mrf.mxu0
        %v3935 = vadd.f32 0.0, %v3934
        %v3936 = vpop.f32.mrf.mxu0
        %v3937 = vadd.f32 0.0, %v3936
        %3938 = vmatmul.bf16.gmra.mxu0 %v2119
        %v3939 = vpop.f32.mrf.mxu0
        %v3940 = vadd.f32 0.0, %v3939
        %v3941 = vpop.f32.mrf.mxu0
        %v3942 = vadd.f32 0.0, %v3941
        %3943 = vmatmul.bf16.gmra.mxu0 %v2122
        %v3944 = vpop.f32.mrf.mxu0
        %v3945 = vadd.f32 0.0, %v3944
        %v3946 = vpop.f32.mrf.mxu0
        %v3947 = vadd.f32 0.0, %v3946
        %3948 = vmatmul.bf16.gmra.mxu0 %v2125
        %v3949 = vpop.f32.mrf.mxu0
        %v3950 = vadd.f32 0.0, %v3949
        %v3951 = vpop.f32.mrf.mxu0
        %v3952 = vadd.f32 0.0, %v3951
        %3953 = vdwg.mxu0
        %v3954 = vmax.f32 %v3848, 0.0
        %v3955 = vmax.f32 %v3877, 0.0
        %v3956 = vmax.f32 %v3906, 0.0
        %v3957 = vmax.f32 %v3935, 0.0
        %v3958 = vmax.f32 %v3850, 0.0
        %v3959 = vmax.f32 %v3879, 0.0
        %v3960 = vmax.f32 %v3908, 0.0
        %v3961 = vmax.f32 %v3937, 0.0
        %v3962 = vmax.f32 %v3853, 0.0
        %v3963 = vmax.f32 %v3882, 0.0
        %v3964 = vmax.f32 %v3911, 0.0
        %v3965 = vmax.f32 %v3940, 0.0
        %v3966 = vmax.f32 %v3855, 0.0
        %v3967 = vmax.f32 %v3884, 0.0
        %v3968 = vmax.f32 %v3913, 0.0
        %v3969 = vmax.f32 %v3942, 0.0
        %v3970 = vmax.f32 %v3858, 0.0
        %v3971 = vmax.f32 %v3887, 0.0
        %v3972 = vmax.f32 %v3916, 0.0
        %v3973 = vmax.f32 %v3945, 0.0
        %v3974 = vmax.f32 %v3860, 0.0
        %v3975 = vmax.f32 %v3889, 0.0
        %v3976 = vmax.f32 %v3918, 0.0
        %v3977 = vmax.f32 %v3947, 0.0
        %v3978 = vmax.f32 %v3863, 0.0
        %v3979 = vmax.f32 %v3892, 0.0
        %v3980 = vmax.f32 %v3921, 0.0
        %v3981 = vmax.f32 %v3950, 0.0
        %v3982 = vmax.f32 %v3865, 0.0
        %v3983 = vmax.f32 %v3894, 0.0
        %v3984 = vmax.f32 %v3923, 0.0
        %v3985 = vmax.f32 %v3952, 0.0
        %v3986 = vpack.c.bf16 %v3958, %v3954
        %v3987 = vpack.c.bf16 %v3959, %v3955
        %v3988 = vpack.c.bf16 %v3960, %v3956
        %v3989 = vpack.c.bf16 %v3961, %v3957
        %v3990 = vpack.c.bf16 %v3966, %v3962
        %v3991 = vpack.c.bf16 %v3967, %v3963
        %v3992 = vpack.c.bf16 %v3968, %v3964
        %v3993 = vpack.c.bf16 %v3969, %v3965
        %v3994 = vpack.c.bf16 %v3974, %v3970
        %v3995 = vpack.c.bf16 %v3975, %v3971
        %v3996 = vpack.c.bf16 %v3976, %v3972
        %v3997 = vpack.c.bf16 %v3977, %v3973
        %v3998 = vpack.c.bf16 %v3982, %v3978
        %v3999 = vpack.c.bf16 %v3983, %v3979
        %v4000 = vpack.c.bf16 %v3984, %v3980
        %v4001 = vpack.c.bf16 %v3985, %v3981
        %4002 = vmatpush.bf16.msra.mxu0 0
        %4003 = vmatpush.bf16.msra.mxu0 0
        %4004 = vmatpush.bf16.msra.mxu0 0
        %4005 = vmatpush.bf16.msra.mxu0 0
        %4006 = vmatpush.bf16.msra.mxu0 %v3998
        %4007 = vmatpush.bf16.msra.mxu0 %v3994
        %4008 = vmatpush.bf16.msra.mxu0 %v3990
        %4009 = vmatpush.bf16.msra.mxu0 %v3986
        %4010 = vmatmul.bf16.gmra.mxu0 %v2312
        %v4011 = vpop.f32.mrf.mxu0
        %v4012 = vadd.f32 0.0, %v4011
        %v4013 = vpop.f32.mrf.mxu0
        %v4014 = vadd.f32 0.0, %v4013
        %4015 = vmatmul.bf16.gmra.mxu0 %v2315
        %v4016 = vpop.f32.mrf.mxu0
        %v4017 = vadd.f32 0.0, %v4016
        %v4018 = vpop.f32.mrf.mxu0
        %v4019 = vadd.f32 0.0, %v4018
        %4020 = vmatmul.bf16.gmra.mxu0 %v2318
        %v4021 = vpop.f32.mrf.mxu0
        %v4022 = vadd.f32 0.0, %v4021
        %v4023 = vpop.f32.mrf.mxu0
        %v4024 = vadd.f32 0.0, %v4023
        %4025 = vmatmul.bf16.gmra.mxu0 %v2321
        %v4026 = vpop.f32.mrf.mxu0
        %v4027 = vadd.f32 0.0, %v4026
        %v4028 = vpop.f32.mrf.mxu0
        %v4029 = vadd.f32 0.0, %v4028
        %4030 = vdwg.mxu0
        %4031 = vmatpush.bf16.msra.mxu0 0
        %4032 = vmatpush.bf16.msra.mxu0 0
        %4033 = vmatpush.bf16.msra.mxu0 0
        %4034 = vmatpush.bf16.msra.mxu0 0
        %4035 = vmatpush.bf16.msra.mxu0 %v3999
        %4036 = vmatpush.bf16.msra.mxu0 %v3995
        %4037 = vmatpush.bf16.msra.mxu0 %v3991
        %4038 = vmatpush.bf16.msra.mxu0 %v3987
        %4039 = vmatmul.bf16.gmra.mxu0 %v2312
        %v4040 = vpop.f32.mrf.mxu0
        %v4041 = vadd.f32 0.0, %v4040
        %v4042 = vpop.f32.mrf.mxu0
        %v4043 = vadd.f32 0.0, %v4042
        %4044 = vmatmul.bf16.gmra.mxu0 %v2315
        %v4045 = vpop.f32.mrf.mxu0
        %v4046 = vadd.f32 0.0, %v4045
        %v4047 = vpop.f32.mrf.mxu0
        %v4048 = vadd.f32 0.0, %v4047
        %4049 = vmatmul.bf16.gmra.mxu0 %v2318
        %v4050 = vpop.f32.mrf.mxu0
        %v4051 = vadd.f32 0.0, %v4050
        %v4052 = vpop.f32.mrf.mxu0
        %v4053 = vadd.f32 0.0, %v4052
        %4054 = vmatmul.bf16.gmra.mxu0 %v2321
        %v4055 = vpop.f32.mrf.mxu0
        %v4056 = vadd.f32 0.0, %v4055
        %v4057 = vpop.f32.mrf.mxu0
        %v4058 = vadd.f32 0.0, %v4057
        %4059 = vdwg.mxu0
        %4060 = vmatpush.bf16.msra.mxu0 0
        %4061 = vmatpush.bf16.msra.mxu0 0
        %4062 = vmatpush.bf16.msra.mxu0 0
        %4063 = vmatpush.bf16.msra.mxu0 0
        %4064 = vmatpush.bf16.msra.mxu0 %v4000
        %4065 = vmatpush.bf16.msra.mxu0 %v3996
        %4066 = vmatpush.bf16.msra.mxu0 %v3992
        %4067 = vmatpush.bf16.msra.mxu0 %v3988
        %4068 = vmatmul.bf16.gmra.mxu0 %v2312
        %v4069 = vpop.f32.mrf.mxu0
        %v4070 = vadd.f32 0.0, %v4069
        %v4071 = vpop.f32.mrf.mxu0
        %v4072 = vadd.f32 0.0, %v4071
        %4073 = vmatmul.bf16.gmra.mxu0 %v2315
        %v4074 = vpop.f32.mrf.mxu0
        %v4075 = vadd.f32 0.0, %v4074
        %v4076 = vpop.f32.mrf.mxu0
        %v4077 = vadd.f32 0.0, %v4076
        %4078 = vmatmul.bf16.gmra.mxu0 %v2318
        %v4079 = vpop.f32.mrf.mxu0
        %v4080 = vadd.f32 0.0, %v4079
        %v4081 = vpop.f32.mrf.mxu0
        %v4082 = vadd.f32 0.0, %v4081
        %4083 = vmatmul.bf16.gmra.mxu0 %v2321
        %v4084 = vpop.f32.mrf.mxu0
        %v4085 = vadd.f32 0.0, %v4084
        %v4086 = vpop.f32.mrf.mxu0
        %v4087 = vadd.f32 0.0, %v4086
        %4088 = vdwg.mxu0
        %4089 = vmatpush.bf16.msra.mxu0 0
        %4090 = vmatpush.bf16.msra.mxu0 0
        %4091 = vmatpush.bf16.msra.mxu0 0
        %4092 = vmatpush.bf16.msra.mxu0 0
        %4093 = vmatpush.bf16.msra.mxu0 %v4001
        %4094 = vmatpush.bf16.msra.mxu0 %v3997
        %4095 = vmatpush.bf16.msra.mxu0 %v3993
        %4096 = vmatpush.bf16.msra.mxu0 %v3989
        %4097 = vmatmul.bf16.gmra.mxu0 %v2312
        %v4098 = vpop.f32.mrf.mxu0
        %v4099 = vadd.f32 0.0, %v4098
        %v4100 = vpop.f32.mrf.mxu0
        %v4101 = vadd.f32 0.0, %v4100
        %4102 = vmatmul.bf16.gmra.mxu0 %v2315
        %v4103 = vpop.f32.mrf.mxu0
        %v4104 = vadd.f32 0.0, %v4103
        %v4105 = vpop.f32.mrf.mxu0
        %v4106 = vadd.f32 0.0, %v4105
        %4107 = vmatmul.bf16.gmra.mxu0 %v2318
        %v4108 = vpop.f32.mrf.mxu0
        %v4109 = vadd.f32 0.0, %v4108
        %v4110 = vpop.f32.mrf.mxu0
        %v4111 = vadd.f32 0.0, %v4110
        %4112 = vmatmul.bf16.gmra.mxu0 %v2321
        %v4113 = vpop.f32.mrf.mxu0
        %v4114 = vadd.f32 0.0, %v4113
        %v4115 = vpop.f32.mrf.mxu0
        %v4116 = vadd.f32 0.0, %v4115
        %4117 = vdwg.mxu0
        %v4118 = vmax.f32 %v4012, 0.0
        %v4119 = vmax.f32 %v4041, 0.0
        %v4120 = vmax.f32 %v4070, 0.0
        %v4121 = vmax.f32 %v4099, 0.0
        %v4122 = vmax.f32 %v4014, 0.0
        %v4123 = vmax.f32 %v4043, 0.0
        %v4124 = vmax.f32 %v4072, 0.0
        %v4125 = vmax.f32 %v4101, 0.0
        %v4126 = vmax.f32 %v4017, 0.0
        %v4127 = vmax.f32 %v4046, 0.0
        %v4128 = vmax.f32 %v4075, 0.0
        %v4129 = vmax.f32 %v4104, 0.0
        %v4130 = vmax.f32 %v4019, 0.0
        %v4131 = vmax.f32 %v4048, 0.0
        %v4132 = vmax.f32 %v4077, 0.0
        %v4133 = vmax.f32 %v4106, 0.0
        %v4134 = vmax.f32 %v4022, 0.0
        %v4135 = vmax.f32 %v4051, 0.0
        %v4136 = vmax.f32 %v4080, 0.0
        %v4137 = vmax.f32 %v4109, 0.0
        %v4138 = vmax.f32 %v4024, 0.0
        %v4139 = vmax.f32 %v4053, 0.0
        %v4140 = vmax.f32 %v4082, 0.0
        %v4141 = vmax.f32 %v4111, 0.0
        %v4142 = vmax.f32 %v4027, 0.0
        %v4143 = vmax.f32 %v4056, 0.0
        %v4144 = vmax.f32 %v4085, 0.0
        %v4145 = vmax.f32 %v4114, 0.0
        %v4146 = vmax.f32 %v4029, 0.0
        %v4147 = vmax.f32 %v4058, 0.0
        %v4148 = vmax.f32 %v4087, 0.0
        %v4149 = vmax.f32 %v4116, 0.0
        %v4150 = vpack.c.bf16 %v4122, %v4118
        %v4151 = vpack.c.bf16 %v4123, %v4119
        %v4152 = vpack.c.bf16 %v4124, %v4120
        %v4153 = vpack.c.bf16 %v4125, %v4121
        %v4154 = vpack.c.bf16 %v4130, %v4126
        %v4155 = vpack.c.bf16 %v4131, %v4127
        %v4156 = vpack.c.bf16 %v4132, %v4128
        %v4157 = vpack.c.bf16 %v4133, %v4129
        %v4158 = vpack.c.bf16 %v4138, %v4134
        %v4159 = vpack.c.bf16 %v4139, %v4135
        %v4160 = vpack.c.bf16 %v4140, %v4136
        %v4161 = vpack.c.bf16 %v4141, %v4137
        %v4162 = vpack.c.bf16 %v4146, %v4142
        %v4163 = vpack.c.bf16 %v4147, %v4143
        %v4164 = vpack.c.bf16 %v4148, %v4144
        %v4165 = vpack.c.bf16 %v4149, %v4145
        %4166 = vmatpush.bf16.msra.mxu0 0
        %4167 = vmatpush.bf16.msra.mxu0 0
        %4168 = vmatpush.bf16.msra.mxu0 0
        %4169 = vmatpush.bf16.msra.mxu0 0
        %4170 = vmatpush.bf16.msra.mxu0 %v4162
        %4171 = vmatpush.bf16.msra.mxu0 %v4158
        %4172 = vmatpush.bf16.msra.mxu0 %v4154
        %4173 = vmatpush.bf16.msra.mxu0 %v4150
        %4174 = vmatmul.bf16.gmra.mxu0 %v2488
        %v4175 = vpop.f32.mrf.mxu0
        %v4176 = vadd.f32 0.0, %v4175
        %v4177 = vpop.f32.mrf.mxu0
        %4178 = vdwg.mxu0
        %4179 = vmatpush.bf16.msra.mxu0 0
        %4180 = vmatpush.bf16.msra.mxu0 0
        %4181 = vmatpush.bf16.msra.mxu0 0
        %4182 = vmatpush.bf16.msra.mxu0 0
        %4183 = vmatpush.bf16.msra.mxu0 %v4163
        %4184 = vmatpush.bf16.msra.mxu0 %v4159
        %4185 = vmatpush.bf16.msra.mxu0 %v4155
        %4186 = vmatpush.bf16.msra.mxu0 %v4151
        %4187 = vmatmul.bf16.gmra.mxu0 %v2488
        %v4188 = vpop.f32.mrf.mxu0
        %v4189 = vadd.f32 0.0, %v4188
        %v4190 = vpop.f32.mrf.mxu0
        %4191 = vdwg.mxu0
        %4192 = vmatpush.bf16.msra.mxu0 0
        %4193 = vmatpush.bf16.msra.mxu0 0
        %4194 = vmatpush.bf16.msra.mxu0 0
        %4195 = vmatpush.bf16.msra.mxu0 0
        %4196 = vmatpush.bf16.msra.mxu0 %v4164
        %4197 = vmatpush.bf16.msra.mxu0 %v4160
        %4198 = vmatpush.bf16.msra.mxu0 %v4156
        %4199 = vmatpush.bf16.msra.mxu0 %v4152
        %4200 = vmatmul.bf16.gmra.mxu0 %v2488
        %v4201 = vpop.f32.mrf.mxu0
        %v4202 = vadd.f32 0.0, %v4201
        %v4203 = vpop.f32.mrf.mxu0
        %4204 = vdwg.mxu0
        %4205 = vmatpush.bf16.msra.mxu0 0
        %4206 = vmatpush.bf16.msra.mxu0 0
        %4207 = vmatpush.bf16.msra.mxu0 0
        %4208 = vmatpush.bf16.msra.mxu0 0
        %4209 = vmatpush.bf16.msra.mxu0 %v4165
        %4210 = vmatpush.bf16.msra.mxu0 %v4161
        %4211 = vmatpush.bf16.msra.mxu0 %v4157
        %4212 = vmatpush.bf16.msra.mxu0 %v4153
        %4213 = vmatmul.bf16.gmra.mxu0 %v2488
        %v4214 = vpop.f32.mrf.mxu0
        %v4215 = vadd.f32 0.0, %v4214
        %v4216 = vpop.f32.mrf.mxu0
        %4217 = vdwg.mxu0
        %v4218 = vsub.f32 0.0, %v4176
        %v4219 = vsub.f32 0.0, %v4189
        %v4220 = vsub.f32 0.0, %v4202
        %v4221 = vsub.f32 0.0, %v4215
        %v4222 = vmul.f32 %v4218, 1.442695
        %v4223 = vpow.pop %v4222
        %v4224 = vmul.f32 %v4219, 1.442695
        %v4225 = vpow.pop %v4224
        %v4226 = vmul.f32 %v4220, 1.442695
        %v4227 = vpow.pop %v4226
        %v4228 = vmul.f32 %v4221, 1.442695
        %v4229 = vpow.pop %v4228
        %v4230 = vadd.f32 %v4223, 1.0
        %v4231 = vadd.f32 %v4225, 1.0
        %v4232 = vadd.f32 %v4227, 1.0
        %v4233 = vadd.f32 %v4229, 1.0
        %v4234 = vrcp.pop %v4230
        %v4235 = vrcp.pop %v4231
        %v4236 = vrcp.pop %v4232
        %v4237 = vrcp.pop %v4233
        %v4238 = vsub.f32 0.0, %v3807
        %v4239 = vsub.f32 0.0, %v3809
        %v4240 = vsub.f32 0.0, %v3811
        %v4241 = vsub.f32 0.0, %v3813
        %v4242 = vmul.f32 %v4238, %v2570
        %v4243 = vmul.f32 %v4239, %v2571
        %v4244 = vmul.f32 %v4240, %v2572
        %v4245 = vmul.f32 %v4241, %v2573
        %v4246 = vmul.f32 %v4242, 1.442695
        %v4247 = vpow.pop %v4246
        %v4248 = vmul.f32 %v4243, 1.442695
        %v4249 = vpow.pop %v4248
        %v4250 = vmul.f32 %v4244, 1.442695
        %v4251 = vpow.pop %v4250
        %v4252 = vmul.f32 %v4245, 1.442695
        %v4253 = vpow.pop %v4252
        %v4254 = vsub.f32 1.0, %v4247
        %v4255 = vsub.f32 1.0, %v4249
        %v4256 = vsub.f32 1.0, %v4251
        %v4257 = vsub.f32 1.0, %v4253
        %v4258 = vmul.f32 %v3466, %v4254
        %v4259 = vmul.f32 %v3467, %v4255
        %v4260 = vmul.f32 %v3468, %v4256
        %v4261 = vmul.f32 %v3469, %v4257
        %v4262 = vperm.slane %v4258, 0
        %v4263 = vperm.slane %v4259, 0
        %v4264 = vperm.slane %v4260, 0
        %v4265 = vperm.slane %v4261, 0
        %v4266 = vmul.f32 %v4262, %v4234
        %v4267 = vmul.f32 %v4263, %v4235
        %v4268 = vmul.f32 %v4264, %v4236
        %v4269 = vmul.f32 %v4265, %v4237
        %v4270 = vadd.f32 %v3434, %v4266
        %v4271 = vadd.f32 %v3435, %v4267
        %v4272 = vadd.f32 %v3436, %v4268
        %v4273 = vadd.f32 %v3437, %v4269
        %v4278 = vrot.slane %v3470, 3
        %v4279 = vrot.slane %v3471, 3
        %v4280 = vrot.slane %v3472, 3
        %v4281 = vrot.slane %v3473, 3
        %v4286 = vmul.f32 %v4258, %v4278
        %v4287 = vmul.f32 %v4259, %v4279
        %v4288 = vmul.f32 %v4260, %v4280
        %v4289 = vmul.f32 %v4261, %v4281
        %v4290 = vadd.f32 %v3454, %v4286
        %v4291 = vadd.f32 %v3455, %v4287
        %v4292 = vadd.f32 %v3456, %v4288
        %v4293 = vadd.f32 %v3457, %v4289
        %v4294 = vadd.f32 %v3458, %v4258
        %v4295 = vadd.f32 %v3459, %v4259
        %v4296 = vadd.f32 %v3460, %v4260
        %v4297 = vadd.f32 %v3461, %v4261
        %v4298 = vsub.f32 1.0, %v4254
        %v4299 = vsub.f32 1.0, %v4255
        %v4300 = vsub.f32 1.0, %v4256
        %v4301 = vsub.f32 1.0, %v4257
        %v4302 = vmul.f32 %v3466, %v4298
        %v4303 = vmul.f32 %v3467, %v4299
        %v4304 = vmul.f32 %v3468, %v4300
        %v4305 = vmul.f32 %v3469, %v4301
        %v4306 = vadd.f32 %v3470, %v842
        %v4307 = vadd.f32 %v3471, %v843
        %v4308 = vadd.f32 %v3472, %v844
        %v4309 = vadd.f32 %v3473, %v845
        %v4310 = vperm.slane %v4306, 3
        %v4311 = vperm.slane %v4307, 3
        %v4312 = vperm.slane %v4308, 3
        %v4313 = vperm.slane %v4309, 3
        %v4314 = vmul.f32 %v4310, %v1054
        %v4315 = vmul.f32 %v4311, %v1055
        %v4316 = vmul.f32 %v4312, %v1056
        %v4317 = vmul.f32 %v4313, %v1057
        %v4318 = vmul.f32 %v4310, %v1068
        %v4319 = vmul.f32 %v4311, %v1069
        %v4320 = vmul.f32 %v4312, %v1070
        %v4321 = vmul.f32 %v4313, %v1071
        %v4322 = vmul.f32 %v4310, %v1077
        %v4323 = vmul.f32 %v4311, %v1078
        %v4324 = vmul.f32 %v4312, %v1079
        %v4325 = vmul.f32 %v4313, %v1080
        %v4326 = vadd.f32 %v1169, %v4314
        %v4327 = vadd.f32 %v1170, %v4315
        %v4328 = vadd.f32 %v1171, %v4316
        %v4329 = vadd.f32 %v1172, %v4317
        %v4330 = vadd.f32 %v1181, %v4318
        %v4331 = vadd.f32 %v1182, %v4319
        %v4332 = vadd.f32 %v1183, %v4320
        %v4333 = vadd.f32 %v1184, %v4321
        %v4334 = vadd.f32 %v1189, %v4322
        %v4335 = vadd.f32 %v1190, %v4323
        %v4336 = vadd.f32 %v1191, %v4324
        %v4337 = vadd.f32 %v1192, %v4325
        %v4338 = vfloor.f32 %v4326
        %v4339 = vfloor.f32 %v4327
        %v4340 = vfloor.f32 %v4328
        %v4341 = vfloor.f32 %v4329
        %v4342 = vfloor.f32 %v4330
        %v4343 = vfloor.f32 %v4331
        %v4344 = vfloor.f32 %v4332
        %v4345 = vfloor.f32 %v4333
        %v4346 = vfloor.f32 %v4334
        %v4347 = vfloor.f32 %v4335
        %v4348 = vfloor.f32 %v4336
        %v4349 = vfloor.f32 %v4337
        %v4350 = vsub.f32 %v4326, %v4338
        %v4351 = vsub.f32 %v4327, %v4339
        %v4352 = vsub.f32 %v4328, %v4340
        %v4353 = vsub.f32 %v4329, %v4341
        %v4354 = vsub.f32 %v4330, %v4342
        %v4355 = vsub.f32 %v4331, %v4343
        %v4356 = vsub.f32 %v4332, %v4344
        %v4357 = vsub.f32 %v4333, %v4345
        %v4358 = vsub.f32 %v4334, %v4346
        %v4359 = vsub.f32 %v4335, %v4347
        %v4360 = vsub.f32 %v4336, %v4348
        %v4361 = vsub.f32 %v4337, %v4349
        %v4362 = vmul.f32 %v4350, 2.0
        %v4363 = vmul.f32 %v4351, 2.0
        %v4364 = vmul.f32 %v4352, 2.0
        %v4365 = vmul.f32 %v4353, 2.0
        %v4366 = vmul.f32 %v4354, 2.0
        %v4367 = vmul.f32 %v4355, 2.0
        %v4368 = vmul.f32 %v4356, 2.0
        %v4369 = vmul.f32 %v4357, 2.0
        %v4370 = vmul.f32 %v4358, 2.0
        %v4371 = vmul.f32 %v4359, 2.0
        %v4372 = vmul.f32 %v4360, 2.0
        %v4373 = vmul.f32 %v4361, 2.0
        %v4374 = vsub.f32 %v4362, 1.0
        %v4375 = vsub.f32 %v4363, 1.0
        %v4376 = vsub.f32 %v4364, 1.0
        %v4377 = vsub.f32 %v4365, 1.0
        %v4378 = vsub.f32 %v4366, 1.0
        %v4379 = vsub.f32 %v4367, 1.0
        %v4380 = vsub.f32 %v4368, 1.0
        %v4381 = vsub.f32 %v4369, 1.0
        %v4382 = vsub.f32 %v4370, 1.0
        %v4383 = vsub.f32 %v4371, 1.0
        %v4384 = vsub.f32 %v4372, 1.0
        %v4385 = vsub.f32 %v4373, 1.0
        %v4386 = vand.u32 2147483647, %v4374
        %v4387 = vand.u32 2147483647, %v4375
        %v4388 = vand.u32 2147483647, %v4376
        %v4389 = vand.u32 2147483647, %v4377
        %v4390 = vand.u32 2147483647, %v4378
        %v4391 = vand.u32 2147483647, %v4379
        %v4392 = vand.u32 2147483647, %v4380
        %v4393 = vand.u32 2147483647, %v4381
        %v4394 = vand.u32 2147483647, %v4382
        %v4395 = vand.u32 2147483647, %v4383
        %v4396 = vand.u32 2147483647, %v4384
        %v4397 = vand.u32 2147483647, %v4385
        %v4398 = vpack.c.bf16 %v4390, %v4386
        %v4399 = vpack.c.bf16 %v4391, %v4387
        %v4400 = vpack.c.bf16 %v4392, %v4388
        %v4401 = vpack.c.bf16 %v4393, %v4389
        %v4402 = vpack.c.bf16 %v4394, %v4394
        %v4403 = vpack.c.bf16 %v4395, %v4395
        %v4404 = vpack.c.bf16 %v4396, %v4396
        %v4405 = vpack.c.bf16 %v4397, %v4397
        %v4407 = vsel %vm1062, %v4402, 0
        %v4410 = vsel %vm1062, %v4403, 0
        %v4413 = vsel %vm1062, %v4404, 0
        %v4416 = vsel %vm1062, %v4405, 0
        %4418 = vmatpush.bf16.msra.mxu0 0
        %4419 = vmatpush.bf16.msra.mxu0 0
        %4420 = vmatpush.bf16.msra.mxu0 0
        %4421 = vmatpush.bf16.msra.mxu0 0
        %4422 = vmatpush.bf16.msra.mxu0 0
        %4423 = vmatpush.bf16.msra.mxu0 0
        %4424 = vmatpush.bf16.msra.mxu0 %v4407
        %4425 = vmatpush.bf16.msra.mxu0 %v4398
        %4426 = vmatmul.bf16.gmra.mxu0 %v1786
        %v4427 = vpop.f32.mrf.mxu0
        %v4428 = vadd.f32 0.0, %v4427
        %v4429 = vpop.f32.mrf.mxu0
        %v4430 = vadd.f32 0.0, %v4429
        %4431 = vmatmul.bf16.gmra.mxu0 %v1789
        %v4432 = vpop.f32.mrf.mxu0
        %v4433 = vadd.f32 0.0, %v4432
        %v4434 = vpop.f32.mrf.mxu0
        %v4435 = vadd.f32 0.0, %v4434
        %4436 = vmatmul.bf16.gmra.mxu0 %v1792
        %v4437 = vpop.f32.mrf.mxu0
        %v4438 = vadd.f32 0.0, %v4437
        %v4439 = vpop.f32.mrf.mxu0
        %v4440 = vadd.f32 0.0, %v4439
        %4441 = vmatmul.bf16.gmra.mxu0 %v1795
        %v4442 = vpop.f32.mrf.mxu0
        %v4443 = vadd.f32 0.0, %v4442
        %v4444 = vpop.f32.mrf.mxu0
        %v4445 = vadd.f32 0.0, %v4444
        %4446 = vdwg.mxu0
        %4447 = vmatpush.bf16.msra.mxu0 0
        %4448 = vmatpush.bf16.msra.mxu0 0
        %4449 = vmatpush.bf16.msra.mxu0 0
        %4450 = vmatpush.bf16.msra.mxu0 0
        %4451 = vmatpush.bf16.msra.mxu0 0
        %4452 = vmatpush.bf16.msra.mxu0 0
        %4453 = vmatpush.bf16.msra.mxu0 %v4410
        %4454 = vmatpush.bf16.msra.mxu0 %v4399
        %4455 = vmatmul.bf16.gmra.mxu0 %v1786
        %v4456 = vpop.f32.mrf.mxu0
        %v4457 = vadd.f32 0.0, %v4456
        %v4458 = vpop.f32.mrf.mxu0
        %v4459 = vadd.f32 0.0, %v4458
        %4460 = vmatmul.bf16.gmra.mxu0 %v1789
        %v4461 = vpop.f32.mrf.mxu0
        %v4462 = vadd.f32 0.0, %v4461
        %v4463 = vpop.f32.mrf.mxu0
        %v4464 = vadd.f32 0.0, %v4463
        %4465 = vmatmul.bf16.gmra.mxu0 %v1792
        %v4466 = vpop.f32.mrf.mxu0
        %v4467 = vadd.f32 0.0, %v4466
        %v4468 = vpop.f32.mrf.mxu0
        %v4469 = vadd.f32 0.0, %v4468
        %4470 = vmatmul.bf16.gmra.mxu0 %v1795
        %v4471 = vpop.f32.mrf.mxu0
        %v4472 = vadd.f32 0.0, %v4471
        %v4473 = vpop.f32.mrf.mxu0
        %v4474 = vadd.f32 0.0, %v4473
        %4475 = vdwg.mxu0
        %4476 = vmatpush.bf16.msra.mxu0 0
        %4477 = vmatpush.bf16.msra.mxu0 0
        %4478 = vmatpush.bf16.msra.mxu0 0
        %4479 = vmatpush.bf16.msra.mxu0 0
        %4480 = vmatpush.bf16.msra.mxu0 0
        %4481 = vmatpush.bf16.msra.mxu0 0
        %4482 = vmatpush.bf16.msra.mxu0 %v4413
        %4483 = vmatpush.bf16.msra.mxu0 %v4400
        %4484 = vmatmul.bf16.gmra.mxu0 %v1786
        %v4485 = vpop.f32.mrf.mxu0
        %v4486 = vadd.f32 0.0, %v4485
        %v4487 = vpop.f32.mrf.mxu0
        %v4488 = vadd.f32 0.0, %v4487
        %4489 = vmatmul.bf16.gmra.mxu0 %v1789
        %v4490 = vpop.f32.mrf.mxu0
        %v4491 = vadd.f32 0.0, %v4490
        %v4492 = vpop.f32.mrf.mxu0
        %v4493 = vadd.f32 0.0, %v4492
        %4494 = vmatmul.bf16.gmra.mxu0 %v1792
        %v4495 = vpop.f32.mrf.mxu0
        %v4496 = vadd.f32 0.0, %v4495
        %v4497 = vpop.f32.mrf.mxu0
        %v4498 = vadd.f32 0.0, %v4497
        %4499 = vmatmul.bf16.gmra.mxu0 %v1795
        %v4500 = vpop.f32.mrf.mxu0
        %v4501 = vadd.f32 0.0, %v4500
        %v4502 = vpop.f32.mrf.mxu0
        %v4503 = vadd.f32 0.0, %v4502
        %4504 = vdwg.mxu0
        %4505 = vmatpush.bf16.msra.mxu0 0
        %4506 = vmatpush.bf16.msra.mxu0 0
        %4507 = vmatpush.bf16.msra.mxu0 0
        %4508 = vmatpush.bf16.msra.mxu0 0
        %4509 = vmatpush.bf16.msra.mxu0 0
        %4510 = vmatpush.bf16.msra.mxu0 0
        %4511 = vmatpush.bf16.msra.mxu0 %v4416
        %4512 = vmatpush.bf16.msra.mxu0 %v4401
        %4513 = vmatmul.bf16.gmra.mxu0 %v1786
        %v4514 = vpop.f32.mrf.mxu0
        %v4515 = vadd.f32 0.0, %v4514
        %v4516 = vpop.f32.mrf.mxu0
        %v4517 = vadd.f32 0.0, %v4516
        %4518 = vmatmul.bf16.gmra.mxu0 %v1789
        %v4519 = vpop.f32.mrf.mxu0
        %v4520 = vadd.f32 0.0, %v4519
        %v4521 = vpop.f32.mrf.mxu0
        %v4522 = vadd.f32 0.0, %v4521
        %4523 = vmatmul.bf16.gmra.mxu0 %v1792
        %v4524 = vpop.f32.mrf.mxu0
        %v4525 = vadd.f32 0.0, %v4524
        %v4526 = vpop.f32.mrf.mxu0
        %v4527 = vadd.f32 0.0, %v4526
        %4528 = vmatmul.bf16.gmra.mxu0 %v1795
        %v4529 = vpop.f32.mrf.mxu0
        %v4530 = vadd.f32 0.0, %v4529
        %v4531 = vpop.f32.mrf.mxu0
        %v4532 = vadd.f32 0.0, %v4531
        %4533 = vdwg.mxu0
        %v4534 = vmax.f32 %v4428, 0.0
        %v4535 = vmax.f32 %v4457, 0.0
        %v4536 = vmax.f32 %v4486, 0.0
        %v4537 = vmax.f32 %v4515, 0.0
        %v4538 = vmax.f32 %v4430, 0.0
        %v4539 = vmax.f32 %v4459, 0.0
        %v4540 = vmax.f32 %v4488, 0.0
        %v4541 = vmax.f32 %v4517, 0.0
        %v4542 = vmax.f32 %v4433, 0.0
        %v4543 = vmax.f32 %v4462, 0.0
        %v4544 = vmax.f32 %v4491, 0.0
        %v4545 = vmax.f32 %v4520, 0.0
        %v4546 = vmax.f32 %v4435, 0.0
        %v4547 = vmax.f32 %v4464, 0.0
        %v4548 = vmax.f32 %v4493, 0.0
        %v4549 = vmax.f32 %v4522, 0.0
        %v4550 = vmax.f32 %v4438, 0.0
        %v4551 = vmax.f32 %v4467, 0.0
        %v4552 = vmax.f32 %v4496, 0.0
        %v4553 = vmax.f32 %v4525, 0.0
        %v4554 = vmax.f32 %v4440, 0.0
        %v4555 = vmax.f32 %v4469, 0.0
        %v4556 = vmax.f32 %v4498, 0.0
        %v4557 = vmax.f32 %v4527, 0.0
        %v4558 = vmax.f32 %v4443, 0.0
        %v4559 = vmax.f32 %v4472, 0.0
        %v4560 = vmax.f32 %v4501, 0.0
        %v4561 = vmax.f32 %v4530, 0.0
        %v4562 = vmax.f32 %v4445, 0.0
        %v4563 = vmax.f32 %v4474, 0.0
        %v4564 = vmax.f32 %v4503, 0.0
        %v4565 = vmax.f32 %v4532, 0.0
        %v4566 = vpack.c.bf16 %v4538, %v4534
        %v4567 = vpack.c.bf16 %v4539, %v4535
        %v4568 = vpack.c.bf16 %v4540, %v4536
        %v4569 = vpack.c.bf16 %v4541, %v4537
        %v4570 = vpack.c.bf16 %v4546, %v4542
        %v4571 = vpack.c.bf16 %v4547, %v4543
        %v4572 = vpack.c.bf16 %v4548, %v4544
        %v4573 = vpack.c.bf16 %v4549, %v4545
        %v4574 = vpack.c.bf16 %v4554, %v4550
        %v4575 = vpack.c.bf16 %v4555, %v4551
        %v4576 = vpack.c.bf16 %v4556, %v4552
        %v4577 = vpack.c.bf16 %v4557, %v4553
        %v4578 = vpack.c.bf16 %v4562, %v4558
        %v4579 = vpack.c.bf16 %v4563, %v4559
        %v4580 = vpack.c.bf16 %v4564, %v4560
        %v4581 = vpack.c.bf16 %v4565, %v4561
        %4582 = vmatpush.bf16.msra.mxu0 0
        %4583 = vmatpush.bf16.msra.mxu0 0
        %4584 = vmatpush.bf16.msra.mxu0 0
        %4585 = vmatpush.bf16.msra.mxu0 0
        %4586 = vmatpush.bf16.msra.mxu0 %v4578
        %4587 = vmatpush.bf16.msra.mxu0 %v4574
        %4588 = vmatpush.bf16.msra.mxu0 %v4570
        %4589 = vmatpush.bf16.msra.mxu0 %v4566
        %4590 = vmatmul.bf16.gmra.mxu0 %v1980
        %v4591 = vpop.f32.mrf.mxu0
        %v4592 = vadd.f32 0.0, %v4591
        %v4593 = vpop.f32.mrf.mxu0
        %v4594 = vadd.f32 0.0, %v4593
        %4595 = vdwg.mxu0
        %4596 = vmatpush.bf16.msra.mxu0 0
        %4597 = vmatpush.bf16.msra.mxu0 0
        %4598 = vmatpush.bf16.msra.mxu0 0
        %4599 = vmatpush.bf16.msra.mxu0 0
        %4600 = vmatpush.bf16.msra.mxu0 %v4579
        %4601 = vmatpush.bf16.msra.mxu0 %v4575
        %4602 = vmatpush.bf16.msra.mxu0 %v4571
        %4603 = vmatpush.bf16.msra.mxu0 %v4567
        %4604 = vmatmul.bf16.gmra.mxu0 %v1980
        %v4605 = vpop.f32.mrf.mxu0
        %v4606 = vadd.f32 0.0, %v4605
        %v4607 = vpop.f32.mrf.mxu0
        %v4608 = vadd.f32 0.0, %v4607
        %4609 = vdwg.mxu0
        %4610 = vmatpush.bf16.msra.mxu0 0
        %4611 = vmatpush.bf16.msra.mxu0 0
        %4612 = vmatpush.bf16.msra.mxu0 0
        %4613 = vmatpush.bf16.msra.mxu0 0
        %4614 = vmatpush.bf16.msra.mxu0 %v4580
        %4615 = vmatpush.bf16.msra.mxu0 %v4576
        %4616 = vmatpush.bf16.msra.mxu0 %v4572
        %4617 = vmatpush.bf16.msra.mxu0 %v4568
        %4618 = vmatmul.bf16.gmra.mxu0 %v1980
        %v4619 = vpop.f32.mrf.mxu0
        %v4620 = vadd.f32 0.0, %v4619
        %v4621 = vpop.f32.mrf.mxu0
        %v4622 = vadd.f32 0.0, %v4621
        %4623 = vdwg.mxu0
        %4624 = vmatpush.bf16.msra.mxu0 0
        %4625 = vmatpush.bf16.msra.mxu0 0
        %4626 = vmatpush.bf16.msra.mxu0 0
        %4627 = vmatpush.bf16.msra.mxu0 0
        %4628 = vmatpush.bf16.msra.mxu0 %v4581
        %4629 = vmatpush.bf16.msra.mxu0 %v4577
        %4630 = vmatpush.bf16.msra.mxu0 %v4573
        %4631 = vmatpush.bf16.msra.mxu0 %v4569
        %4632 = vmatmul.bf16.gmra.mxu0 %v1980
        %v4633 = vpop.f32.mrf.mxu0
        %v4634 = vadd.f32 0.0, %v4633
        %v4635 = vpop.f32.mrf.mxu0
        %v4636 = vadd.f32 0.0, %v4635
        %4637 = vdwg.mxu0
        %v4638 = vmin.f32 %v4592, 15.0
        %v4639 = vmin.f32 %v4606, 15.0
        %v4640 = vmin.f32 %v4620, 15.0
        %v4641 = vmin.f32 %v4634, 15.0
        %v4642 = vmul.f32 %v4638, 1.442695
        %v4643 = vpow.pop %v4642
        %v4644 = vmul.f32 %v4639, 1.442695
        %v4645 = vpow.pop %v4644
        %v4646 = vmul.f32 %v4640, 1.442695
        %v4647 = vpow.pop %v4646
        %v4648 = vmul.f32 %v4641, 1.442695
        %v4649 = vpow.pop %v4648
        %v4650 = vpack.c.bf16 %v4606, %v4592
        %v4651 = vpack.c.bf16 %v4634, %v4620
        %v4652 = vpack.c.bf16 %v4608, %v4594
        %v4653 = vpack.c.bf16 %v4636, %v4622
        %v4658 = vunpack.c.l.b16 %v4650
        %v4659 = vunpack.c.h.b16 %v4650
        %v4660 = vunpack.c.l.b16 %v4651
        %v4661 = vunpack.c.h.b16 %v4651
        %v4662 = vunpack.c.l.b16 %v4652
        %v4663 = vunpack.c.h.b16 %v4652
        %v4664 = vunpack.c.l.b16 %v4653
        %v4665 = vunpack.c.h.b16 %v4653
        %v4666 = vpack.c.b16 %v4662, %v4658
        %v4667 = vpack.c.b16 %v4663, %v4659
        %v4668 = vpack.c.b16 %v4664, %v4660
        %v4669 = vpack.c.b16 %v4665, %v4661
        %4674 = vmatpush.bf16.msra.mxu0 0
        %4675 = vmatpush.bf16.msra.mxu0 0
        %4676 = vmatpush.bf16.msra.mxu0 0
        %4677 = vmatpush.bf16.msra.mxu0 0
        %4678 = vmatpush.bf16.msra.mxu0 0
        %4679 = vmatpush.bf16.msra.mxu0 0
        %4680 = vmatpush.bf16.msra.mxu0 %v2086
        %4681 = vmatpush.bf16.msra.mxu0 %v4666
        %4682 = vmatmul.bf16.gmra.mxu0 %v2116
        %v4683 = vpop.f32.mrf.mxu0
        %v4684 = vadd.f32 0.0, %v4683
        %v4685 = vpop.f32.mrf.mxu0
        %v4686 = vadd.f32 0.0, %v4685
        %4687 = vmatmul.bf16.gmra.mxu0 %v2119
        %v4688 = vpop.f32.mrf.mxu0
        %v4689 = vadd.f32 0.0, %v4688
        %v4690 = vpop.f32.mrf.mxu0
        %v4691 = vadd.f32 0.0, %v4690
        %4692 = vmatmul.bf16.gmra.mxu0 %v2122
        %v4693 = vpop.f32.mrf.mxu0
        %v4694 = vadd.f32 0.0, %v4693
        %v4695 = vpop.f32.mrf.mxu0
        %v4696 = vadd.f32 0.0, %v4695
        %4697 = vmatmul.bf16.gmra.mxu0 %v2125
        %v4698 = vpop.f32.mrf.mxu0
        %v4699 = vadd.f32 0.0, %v4698
        %v4700 = vpop.f32.mrf.mxu0
        %v4701 = vadd.f32 0.0, %v4700
        %4702 = vdwg.mxu0
        %4703 = vmatpush.bf16.msra.mxu0 0
        %4704 = vmatpush.bf16.msra.mxu0 0
        %4705 = vmatpush.bf16.msra.mxu0 0
        %4706 = vmatpush.bf16.msra.mxu0 0
        %4707 = vmatpush.bf16.msra.mxu0 0
        %4708 = vmatpush.bf16.msra.mxu0 0
        %4709 = vmatpush.bf16.msra.mxu0 %v2087
        %4710 = vmatpush.bf16.msra.mxu0 %v4667
        %4711 = vmatmul.bf16.gmra.mxu0 %v2116
        %v4712 = vpop.f32.mrf.mxu0
        %v4713 = vadd.f32 0.0, %v4712
        %v4714 = vpop.f32.mrf.mxu0
        %v4715 = vadd.f32 0.0, %v4714
        %4716 = vmatmul.bf16.gmra.mxu0 %v2119
        %v4717 = vpop.f32.mrf.mxu0
        %v4718 = vadd.f32 0.0, %v4717
        %v4719 = vpop.f32.mrf.mxu0
        %v4720 = vadd.f32 0.0, %v4719
        %4721 = vmatmul.bf16.gmra.mxu0 %v2122
        %v4722 = vpop.f32.mrf.mxu0
        %v4723 = vadd.f32 0.0, %v4722
        %v4724 = vpop.f32.mrf.mxu0
        %v4725 = vadd.f32 0.0, %v4724
        %4726 = vmatmul.bf16.gmra.mxu0 %v2125
        %v4727 = vpop.f32.mrf.mxu0
        %v4728 = vadd.f32 0.0, %v4727
        %v4729 = vpop.f32.mrf.mxu0
        %v4730 = vadd.f32 0.0, %v4729
        %4731 = vdwg.mxu0
        %4732 = vmatpush.bf16.msra.mxu0 0
        %4733 = vmatpush.bf16.msra.mxu0 0
        %4734 = vmatpush.bf16.msra.mxu0 0
        %4735 = vmatpush.bf16.msra.mxu0 0
        %4736 = vmatpush.bf16.msra.mxu0 0
        %4737 = vmatpush.bf16.msra.mxu0 0
        %4738 = vmatpush.bf16.msra.mxu0 %v2088
        %4739 = vmatpush.bf16.msra.mxu0 %v4668
        %4740 = vmatmul.bf16.gmra.mxu0 %v2116
        %v4741 = vpop.f32.mrf.mxu0
        %v4742 = vadd.f32 0.0, %v4741
        %v4743 = vpop.f32.mrf.mxu0
        %v4744 = vadd.f32 0.0, %v4743
        %4745 = vmatmul.bf16.gmra.mxu0 %v2119
        %v4746 = vpop.f32.mrf.mxu0
        %v4747 = vadd.f32 0.0, %v4746
        %v4748 = vpop.f32.mrf.mxu0
        %v4749 = vadd.f32 0.0, %v4748
        %4750 = vmatmul.bf16.gmra.mxu0 %v2122
        %v4751 = vpop.f32.mrf.mxu0
        %v4752 = vadd.f32 0.0, %v4751
        %v4753 = vpop.f32.mrf.mxu0
        %v4754 = vadd.f32 0.0, %v4753
        %4755 = vmatmul.bf16.gmra.mxu0 %v2125
        %v4756 = vpop.f32.mrf.mxu0
        %v4757 = vadd.f32 0.0, %v4756
        %v4758 = vpop.f32.mrf.mxu0
        %v4759 = vadd.f32 0.0, %v4758
        %4760 = vdwg.mxu0
        %4761 = vmatpush.bf16.msra.mxu0 0
        %4762 = vmatpush.bf16.msra.mxu0 0
        %4763 = vmatpush.bf16.msra.mxu0 0
        %4764 = vmatpush.bf16.msra.mxu0 0
        %4765 = vmatpush.bf16.msra.mxu0 0
        %4766 = vmatpush.bf16.msra.mxu0 0
        %4767 = vmatpush.bf16.msra.mxu0 %v2089
        %4768 = vmatpush.bf16.msra.mxu0 %v4669
        %4769 = vmatmul.bf16.gmra.mxu0 %v2116
        %v4770 = vpop.f32.mrf.mxu0
        %v4771 = vadd.f32 0.0, %v4770
        %v4772 = vpop.f32.mrf.mxu0
        %v4773 = vadd.f32 0.0, %v4772
        %4774 = vmatmul.bf16.gmra.mxu0 %v2119
        %v4775 = vpop.f32.mrf.mxu0
        %v4776 = vadd.f32 0.0, %v4775
        %v4777 = vpop.f32.mrf.mxu0
        %v4778 = vadd.f32 0.0, %v4777
        %4779 = vmatmul.bf16.gmra.mxu0 %v2122
        %v4780 = vpop.f32.mrf.mxu0
        %v4781 = vadd.f32 0.0, %v4780
        %v4782 = vpop.f32.mrf.mxu0
        %v4783 = vadd.f32 0.0, %v4782
        %4784 = vmatmul.bf16.gmra.mxu0 %v2125
        %v4785 = vpop.f32.mrf.mxu0
        %v4786 = vadd.f32 0.0, %v4785
        %v4787 = vpop.f32.mrf.mxu0
        %v4788 = vadd.f32 0.0, %v4787
        %4789 = vdwg.mxu0
        %v4790 = vmax.f32 %v4684, 0.0
        %v4791 = vmax.f32 %v4713, 0.0
        %v4792 = vmax.f32 %v4742, 0.0
        %v4793 = vmax.f32 %v4771, 0.0
        %v4794 = vmax.f32 %v4686, 0.0
        %v4795 = vmax.f32 %v4715, 0.0
        %v4796 = vmax.f32 %v4744, 0.0
        %v4797 = vmax.f32 %v4773, 0.0
        %v4798 = vmax.f32 %v4689, 0.0
        %v4799 = vmax.f32 %v4718, 0.0
        %v4800 = vmax.f32 %v4747, 0.0
        %v4801 = vmax.f32 %v4776, 0.0
        %v4802 = vmax.f32 %v4691, 0.0
        %v4803 = vmax.f32 %v4720, 0.0
        %v4804 = vmax.f32 %v4749, 0.0
        %v4805 = vmax.f32 %v4778, 0.0
        %v4806 = vmax.f32 %v4694, 0.0
        %v4807 = vmax.f32 %v4723, 0.0
        %v4808 = vmax.f32 %v4752, 0.0
        %v4809 = vmax.f32 %v4781, 0.0
        %v4810 = vmax.f32 %v4696, 0.0
        %v4811 = vmax.f32 %v4725, 0.0
        %v4812 = vmax.f32 %v4754, 0.0
        %v4813 = vmax.f32 %v4783, 0.0
        %v4814 = vmax.f32 %v4699, 0.0
        %v4815 = vmax.f32 %v4728, 0.0
        %v4816 = vmax.f32 %v4757, 0.0
        %v4817 = vmax.f32 %v4786, 0.0
        %v4818 = vmax.f32 %v4701, 0.0
        %v4819 = vmax.f32 %v4730, 0.0
        %v4820 = vmax.f32 %v4759, 0.0
        %v4821 = vmax.f32 %v4788, 0.0
        %v4822 = vpack.c.bf16 %v4794, %v4790
        %v4823 = vpack.c.bf16 %v4795, %v4791
        %v4824 = vpack.c.bf16 %v4796, %v4792
        %v4825 = vpack.c.bf16 %v4797, %v4793
        %v4826 = vpack.c.bf16 %v4802, %v4798
        %v4827 = vpack.c.bf16 %v4803, %v4799
        %v4828 = vpack.c.bf16 %v4804, %v4800
        %v4829 = vpack.c.bf16 %v4805, %v4801
        %v4830 = vpack.c.bf16 %v4810, %v4806
        %v4831 = vpack.c.bf16 %v4811, %v4807
        %v4832 = vpack.c.bf16 %v4812, %v4808
        %v4833 = vpack.c.bf16 %v4813, %v4809
        %v4834 = vpack.c.bf16 %v4818, %v4814
        %v4835 = vpack.c.bf16 %v4819, %v4815
        %v4836 = vpack.c.bf16 %v4820, %v4816
        %v4837 = vpack.c.bf16 %v4821, %v4817
        %4838 = vmatpush.bf16.msra.mxu0 0
        %4839 = vmatpush.bf16.msra.mxu0 0
        %4840 = vmatpush.bf16.msra.mxu0 0
        %4841 = vmatpush.bf16.msra.mxu0 0
        %4842 = vmatpush.bf16.msra.mxu0 %v4834
        %4843 = vmatpush.bf16.msra.mxu0 %v4830
        %4844 = vmatpush.bf16.msra.mxu0 %v4826
        %4845 = vmatpush.bf16.msra.mxu0 %v4822
        %4846 = vmatmul.bf16.gmra.mxu0 %v2312
        %v4847 = vpop.f32.mrf.mxu0
        %v4848 = vadd.f32 0.0, %v4847
        %v4849 = vpop.f32.mrf.mxu0
        %v4850 = vadd.f32 0.0, %v4849
        %4851 = vmatmul.bf16.gmra.mxu0 %v2315
        %v4852 = vpop.f32.mrf.mxu0
        %v4853 = vadd.f32 0.0, %v4852
        %v4854 = vpop.f32.mrf.mxu0
        %v4855 = vadd.f32 0.0, %v4854
        %4856 = vmatmul.bf16.gmra.mxu0 %v2318
        %v4857 = vpop.f32.mrf.mxu0
        %v4858 = vadd.f32 0.0, %v4857
        %v4859 = vpop.f32.mrf.mxu0
        %v4860 = vadd.f32 0.0, %v4859
        %4861 = vmatmul.bf16.gmra.mxu0 %v2321
        %v4862 = vpop.f32.mrf.mxu0
        %v4863 = vadd.f32 0.0, %v4862
        %v4864 = vpop.f32.mrf.mxu0
        %v4865 = vadd.f32 0.0, %v4864
        %4866 = vdwg.mxu0
        %4867 = vmatpush.bf16.msra.mxu0 0
        %4868 = vmatpush.bf16.msra.mxu0 0
        %4869 = vmatpush.bf16.msra.mxu0 0
        %4870 = vmatpush.bf16.msra.mxu0 0
        %4871 = vmatpush.bf16.msra.mxu0 %v4835
        %4872 = vmatpush.bf16.msra.mxu0 %v4831
        %4873 = vmatpush.bf16.msra.mxu0 %v4827
        %4874 = vmatpush.bf16.msra.mxu0 %v4823
        %4875 = vmatmul.bf16.gmra.mxu0 %v2312
        %v4876 = vpop.f32.mrf.mxu0
        %v4877 = vadd.f32 0.0, %v4876
        %v4878 = vpop.f32.mrf.mxu0
        %v4879 = vadd.f32 0.0, %v4878
        %4880 = vmatmul.bf16.gmra.mxu0 %v2315
        %v4881 = vpop.f32.mrf.mxu0
        %v4882 = vadd.f32 0.0, %v4881
        %v4883 = vpop.f32.mrf.mxu0
        %v4884 = vadd.f32 0.0, %v4883
        %4885 = vmatmul.bf16.gmra.mxu0 %v2318
        %v4886 = vpop.f32.mrf.mxu0
        %v4887 = vadd.f32 0.0, %v4886
        %v4888 = vpop.f32.mrf.mxu0
        %v4889 = vadd.f32 0.0, %v4888
        %4890 = vmatmul.bf16.gmra.mxu0 %v2321
        %v4891 = vpop.f32.mrf.mxu0
        %v4892 = vadd.f32 0.0, %v4891
        %v4893 = vpop.f32.mrf.mxu0
        %v4894 = vadd.f32 0.0, %v4893
        %4895 = vdwg.mxu0
        %4896 = vmatpush.bf16.msra.mxu0 0
        %4897 = vmatpush.bf16.msra.mxu0 0
        %4898 = vmatpush.bf16.msra.mxu0 0
        %4899 = vmatpush.bf16.msra.mxu0 0
        %4900 = vmatpush.bf16.msra.mxu0 %v4836
        %4901 = vmatpush.bf16.msra.mxu0 %v4832
        %4902 = vmatpush.bf16.msra.mxu0 %v4828
        %4903 = vmatpush.bf16.msra.mxu0 %v4824
        %4904 = vmatmul.bf16.gmra.mxu0 %v2312
        %v4905 = vpop.f32.mrf.mxu0
        %v4906 = vadd.f32 0.0, %v4905
        %v4907 = vpop.f32.mrf.mxu0
        %v4908 = vadd.f32 0.0, %v4907
        %4909 = vmatmul.bf16.gmra.mxu0 %v2315
        %v4910 = vpop.f32.mrf.mxu0
        %v4911 = vadd.f32 0.0, %v4910
        %v4912 = vpop.f32.mrf.mxu0
        %v4913 = vadd.f32 0.0, %v4912
        %4914 = vmatmul.bf16.gmra.mxu0 %v2318
        %v4915 = vpop.f32.mrf.mxu0
        %v4916 = vadd.f32 0.0, %v4915
        %v4917 = vpop.f32.mrf.mxu0
        %v4918 = vadd.f32 0.0, %v4917
        %4919 = vmatmul.bf16.gmra.mxu0 %v2321
        %v4920 = vpop.f32.mrf.mxu0
        %v4921 = vadd.f32 0.0, %v4920
        %v4922 = vpop.f32.mrf.mxu0
        %v4923 = vadd.f32 0.0, %v4922
        %4924 = vdwg.mxu0
        %4925 = vmatpush.bf16.msra.mxu0 0
        %4926 = vmatpush.bf16.msra.mxu0 0
        %4927 = vmatpush.bf16.msra.mxu0 0
        %4928 = vmatpush.bf16.msra.mxu0 0
        %4929 = vmatpush.bf16.msra.mxu0 %v4837
        %4930 = vmatpush.bf16.msra.mxu0 %v4833
        %4931 = vmatpush.bf16.msra.mxu0 %v4829
        %4932 = vmatpush.bf16.msra.mxu0 %v4825
        %4933 = vmatmul.bf16.gmra.mxu0 %v2312
        %v4934 = vpop.f32.mrf.mxu0
        %v4935 = vadd.f32 0.0, %v4934
        %v4936 = vpop.f32.mrf.mxu0
        %v4937 = vadd.f32 0.0, %v4936
        %4938 = vmatmul.bf16.gmra.mxu0 %v2315
        %v4939 = vpop.f32.mrf.mxu0
        %v4940 = vadd.f32 0.0, %v4939
        %v4941 = vpop.f32.mrf.mxu0
        %v4942 = vadd.f32 0.0, %v4941
        %4943 = vmatmul.bf16.gmra.mxu0 %v2318
        %v4944 = vpop.f32.mrf.mxu0
        %v4945 = vadd.f32 0.0, %v4944
        %v4946 = vpop.f32.mrf.mxu0
        %v4947 = vadd.f32 0.0, %v4946
        %4948 = vmatmul.bf16.gmra.mxu0 %v2321
        %v4949 = vpop.f32.mrf.mxu0
        %v4950 = vadd.f32 0.0, %v4949
        %v4951 = vpop.f32.mrf.mxu0
        %v4952 = vadd.f32 0.0, %v4951
        %4953 = vdwg.mxu0
        %v4954 = vmax.f32 %v4848, 0.0
        %v4955 = vmax.f32 %v4877, 0.0
        %v4956 = vmax.f32 %v4906, 0.0
        %v4957 = vmax.f32 %v4935, 0.0
        %v4958 = vmax.f32 %v4850, 0.0
        %v4959 = vmax.f32 %v4879, 0.0
        %v4960 = vmax.f32 %v4908, 0.0
        %v4961 = vmax.f32 %v4937, 0.0
        %v4962 = vmax.f32 %v4853, 0.0
        %v4963 = vmax.f32 %v4882, 0.0
        %v4964 = vmax.f32 %v4911, 0.0
        %v4965 = vmax.f32 %v4940, 0.0
        %v4966 = vmax.f32 %v4855, 0.0
        %v4967 = vmax.f32 %v4884, 0.0
        %v4968 = vmax.f32 %v4913, 0.0
        %v4969 = vmax.f32 %v4942, 0.0
        %v4970 = vmax.f32 %v4858, 0.0
        %v4971 = vmax.f32 %v4887, 0.0
        %v4972 = vmax.f32 %v4916, 0.0
        %v4973 = vmax.f32 %v4945, 0.0
        %v4974 = vmax.f32 %v4860, 0.0
        %v4975 = vmax.f32 %v4889, 0.0
        %v4976 = vmax.f32 %v4918, 0.0
        %v4977 = vmax.f32 %v4947, 0.0
        %v4978 = vmax.f32 %v4863, 0.0
        %v4979 = vmax.f32 %v4892, 0.0
        %v4980 = vmax.f32 %v4921, 0.0
        %v4981 = vmax.f32 %v4950, 0.0
        %v4982 = vmax.f32 %v4865, 0.0
        %v4983 = vmax.f32 %v4894, 0.0
        %v4984 = vmax.f32 %v4923, 0.0
        %v4985 = vmax.f32 %v4952, 0.0
        %v4986 = vpack.c.bf16 %v4958, %v4954
        %v4987 = vpack.c.bf16 %v4959, %v4955
        %v4988 = vpack.c.bf16 %v4960, %v4956
        %v4989 = vpack.c.bf16 %v4961, %v4957
        %v4990 = vpack.c.bf16 %v4966, %v4962
        %v4991 = vpack.c.bf16 %v4967, %v4963
        %v4992 = vpack.c.bf16 %v4968, %v4964
        %v4993 = vpack.c.bf16 %v4969, %v4965
        %v4994 = vpack.c.bf16 %v4974, %v4970
        %v4995 = vpack.c.bf16 %v4975, %v4971
        %v4996 = vpack.c.bf16 %v4976, %v4972
        %v4997 = vpack.c.bf16 %v4977, %v4973
        %v4998 = vpack.c.bf16 %v4982, %v4978
        %v4999 = vpack.c.bf16 %v4983, %v4979
        %v5000 = vpack.c.bf16 %v4984, %v4980
        %v5001 = vpack.c.bf16 %v4985, %v4981
        %5002 = vmatpush.bf16.msra.mxu0 0
        %5003 = vmatpush.bf16.msra.mxu0 0
        %5004 = vmatpush.bf16.msra.mxu0 0
        %5005 = vmatpush.bf16.msra.mxu0 0
        %5006 = vmatpush.bf16.msra.mxu0 %v4998
        %5007 = vmatpush.bf16.msra.mxu0 %v4994
        %5008 = vmatpush.bf16.msra.mxu0 %v4990
        %5009 = vmatpush.bf16.msra.mxu0 %v4986
        %5010 = vmatmul.bf16.gmra.mxu0 %v2488
        %v5011 = vpop.f32.mrf.mxu0
        %v5012 = vadd.f32 0.0, %v5011
        %v5013 = vpop.f32.mrf.mxu0
        %5014 = vdwg.mxu0
        %5015 = vmatpush.bf16.msra.mxu0 0
        %5016 = vmatpush.bf16.msra.mxu0 0
        %5017 = vmatpush.bf16.msra.mxu0 0
        %5018 = vmatpush.bf16.msra.mxu0 0
        %5019 = vmatpush.bf16.msra.mxu0 %v4999
        %5020 = vmatpush.bf16.msra.mxu0 %v4995
        %5021 = vmatpush.bf16.msra.mxu0 %v4991
        %5022 = vmatpush.bf16.msra.mxu0 %v4987
        %5023 = vmatmul.bf16.gmra.mxu0 %v2488
        %v5024 = vpop.f32.mrf.mxu0
        %v5025 = vadd.f32 0.0, %v5024
        %v5026 = vpop.f32.mrf.mxu0
        %5027 = vdwg.mxu0
        %5028 = vmatpush.bf16.msra.mxu0 0
        %5029 = vmatpush.bf16.msra.mxu0 0
        %5030 = vmatpush.bf16.msra.mxu0 0
        %5031 = vmatpush.bf16.msra.mxu0 0
        %5032 = vmatpush.bf16.msra.mxu0 %v5000
        %5033 = vmatpush.bf16.msra.mxu0 %v4996
        %5034 = vmatpush.bf16.msra.mxu0 %v4992
        %5035 = vmatpush.bf16.msra.mxu0 %v4988
        %5036 = vmatmul.bf16.gmra.mxu0 %v2488
        %v5037 = vpop.f32.mrf.mxu0
        %v5038 = vadd.f32 0.0, %v5037
        %v5039 = vpop.f32.mrf.mxu0
        %5040 = vdwg.mxu0
        %5041 = vmatpush.bf16.msra.mxu0 0
        %5042 = vmatpush.bf16.msra.mxu0 0
        %5043 = vmatpush.bf16.msra.mxu0 0
        %5044 = vmatpush.bf16.msra.mxu0 0
        %5045 = vmatpush.bf16.msra.mxu0 %v5001
        %5046 = vmatpush.bf16.msra.mxu0 %v4997
        %5047 = vmatpush.bf16.msra.mxu0 %v4993
        %5048 = vmatpush.bf16.msra.mxu0 %v4989
        %5049 = vmatmul.bf16.gmra.mxu0 %v2488
        %v5050 = vpop.f32.mrf.mxu0
        %v5051 = vadd.f32 0.0, %v5050
        %v5052 = vpop.f32.mrf.mxu0
        %5053 = vdwg.mxu0
        %v5054 = vsub.f32 0.0, %v5012
        %v5055 = vsub.f32 0.0, %v5025
        %v5056 = vsub.f32 0.0, %v5038
        %v5057 = vsub.f32 0.0, %v5051
        %v5058 = vmul.f32 %v5054, 1.442695
        %v5059 = vpow.pop %v5058
        %v5060 = vmul.f32 %v5055, 1.442695
        %v5061 = vpow.pop %v5060
        %v5062 = vmul.f32 %v5056, 1.442695
        %v5063 = vpow.pop %v5062
        %v5064 = vmul.f32 %v5057, 1.442695
        %v5065 = vpow.pop %v5064
        %v5066 = vadd.f32 %v5059, 1.0
        %v5067 = vadd.f32 %v5061, 1.0
        %v5068 = vadd.f32 %v5063, 1.0
        %v5069 = vadd.f32 %v5065, 1.0
        %v5070 = vrcp.pop %v5066
        %v5071 = vrcp.pop %v5067
        %v5072 = vrcp.pop %v5068
        %v5073 = vrcp.pop %v5069
        %v5074 = vsub.f32 0.0, %v4643
        %v5075 = vsub.f32 0.0, %v4645
        %v5076 = vsub.f32 0.0, %v4647
        %v5077 = vsub.f32 0.0, %v4649
        %v5078 = vmul.f32 %v5074, %v2570
        %v5079 = vmul.f32 %v5075, %v2571
        %v5080 = vmul.f32 %v5076, %v2572
        %v5081 = vmul.f32 %v5077, %v2573
        %v5082 = vmul.f32 %v5078, 1.442695
        %v5083 = vpow.pop %v5082
        %v5084 = vmul.f32 %v5079, 1.442695
        %v5085 = vpow.pop %v5084
        %v5086 = vmul.f32 %v5080, 1.442695
        %v5087 = vpow.pop %v5086
        %v5088 = vmul.f32 %v5081, 1.442695
        %v5089 = vpow.pop %v5088
        %v5090 = vsub.f32 1.0, %v5083
        %v5091 = vsub.f32 1.0, %v5085
        %v5092 = vsub.f32 1.0, %v5087
        %v5093 = vsub.f32 1.0, %v5089
        %v5094 = vmul.f32 %v4302, %v5090
        %v5095 = vmul.f32 %v4303, %v5091
        %v5096 = vmul.f32 %v4304, %v5092
        %v5097 = vmul.f32 %v4305, %v5093
        %v5098 = vperm.slane %v5094, 0
        %v5099 = vperm.slane %v5095, 0
        %v5100 = vperm.slane %v5096, 0
        %v5101 = vperm.slane %v5097, 0
        %v5102 = vmul.f32 %v5098, %v5070
        %v5103 = vmul.f32 %v5099, %v5071
        %v5104 = vmul.f32 %v5100, %v5072
        %v5105 = vmul.f32 %v5101, %v5073
        %v5106 = vadd.f32 %v4270, %v5102
        %v5107 = vadd.f32 %v4271, %v5103
        %v5108 = vadd.f32 %v4272, %v5104
        %v5109 = vadd.f32 %v4273, %v5105
        %v5114 = vrot.slane %v4306, 3
        %v5115 = vrot.slane %v4307, 3
        %v5116 = vrot.slane %v4308, 3
        %v5117 = vrot.slane %v4309, 3
        %v5122 = vmul.f32 %v5094, %v5114
        %v5123 = vmul.f32 %v5095, %v5115
        %v5124 = vmul.f32 %v5096, %v5116
        %v5125 = vmul.f32 %v5097, %v5117
        %v5126 = vadd.f32 %v4290, %v5122
        %v5127 = vadd.f32 %v4291, %v5123
        %v5128 = vadd.f32 %v4292, %v5124
        %v5129 = vadd.f32 %v4293, %v5125
        %v5130 = vadd.f32 %v4294, %v5094
        %v5131 = vadd.f32 %v4295, %v5095
        %v5132 = vadd.f32 %v4296, %v5096
        %v5133 = vadd.f32 %v4297, %v5097
        %v5134 = vsub.f32 1.0, %v5090
        %v5135 = vsub.f32 1.0, %v5091
        %v5136 = vsub.f32 1.0, %v5092
        %v5137 = vsub.f32 1.0, %v5093
        %v5138 = vmul.f32 %v4302, %v5134
        %v5139 = vmul.f32 %v4303, %v5135
        %v5140 = vmul.f32 %v4304, %v5136
        %v5141 = vmul.f32 %v4305, %v5137
        %v5142 = vadd.f32 %v4306, %v842
        %v5143 = vadd.f32 %v4307, %v843
        %v5144 = vadd.f32 %v4308, %v844
        %v5145 = vadd.f32 %v4309, %v845
        %v5146 = vperm.slane %v5142, 3
        %v5147 = vperm.slane %v5143, 3
        %v5148 = vperm.slane %v5144, 3
        %v5149 = vperm.slane %v5145, 3
        %v5150 = vmul.f32 %v5146, %v1054
        %v5151 = vmul.f32 %v5147, %v1055
        %v5152 = vmul.f32 %v5148, %v1056
        %v5153 = vmul.f32 %v5149, %v1057
        %v5154 = vmul.f32 %v5146, %v1068
        %v5155 = vmul.f32 %v5147, %v1069
        %v5156 = vmul.f32 %v5148, %v1070
        %v5157 = vmul.f32 %v5149, %v1071
        %v5158 = vmul.f32 %v5146, %v1077
        %v5159 = vmul.f32 %v5147, %v1078
        %v5160 = vmul.f32 %v5148, %v1079
        %v5161 = vmul.f32 %v5149, %v1080
        %v5162 = vadd.f32 %v1169, %v5150
        %v5163 = vadd.f32 %v1170, %v5151
        %v5164 = vadd.f32 %v1171, %v5152
        %v5165 = vadd.f32 %v1172, %v5153
        %v5166 = vadd.f32 %v1181, %v5154
        %v5167 = vadd.f32 %v1182, %v5155
        %v5168 = vadd.f32 %v1183, %v5156
        %v5169 = vadd.f32 %v1184, %v5157
        %v5170 = vadd.f32 %v1189, %v5158
        %v5171 = vadd.f32 %v1190, %v5159
        %v5172 = vadd.f32 %v1191, %v5160
        %v5173 = vadd.f32 %v1192, %v5161
        %v5174 = vfloor.f32 %v5162
        %v5175 = vfloor.f32 %v5163
        %v5176 = vfloor.f32 %v5164
        %v5177 = vfloor.f32 %v5165
        %v5178 = vfloor.f32 %v5166
        %v5179 = vfloor.f32 %v5167
        %v5180 = vfloor.f32 %v5168
        %v5181 = vfloor.f32 %v5169
        %v5182 = vfloor.f32 %v5170
        %v5183 = vfloor.f32 %v5171
        %v5184 = vfloor.f32 %v5172
        %v5185 = vfloor.f32 %v5173
        %v5186 = vsub.f32 %v5162, %v5174
        %v5187 = vsub.f32 %v5163, %v5175
        %v5188 = vsub.f32 %v5164, %v5176
        %v5189 = vsub.f32 %v5165, %v5177
        %v5190 = vsub.f32 %v5166, %v5178
        %v5191 = vsub.f32 %v5167, %v5179
        %v5192 = vsub.f32 %v5168, %v5180
        %v5193 = vsub.f32 %v5169, %v5181
        %v5194 = vsub.f32 %v5170, %v5182
        %v5195 = vsub.f32 %v5171, %v5183
        %v5196 = vsub.f32 %v5172, %v5184
        %v5197 = vsub.f32 %v5173, %v5185
        %v5198 = vmul.f32 %v5186, 2.0
        %v5199 = vmul.f32 %v5187, 2.0
        %v5200 = vmul.f32 %v5188, 2.0
        %v5201 = vmul.f32 %v5189, 2.0
        %v5202 = vmul.f32 %v5190, 2.0
        %v5203 = vmul.f32 %v5191, 2.0
        %v5204 = vmul.f32 %v5192, 2.0
        %v5205 = vmul.f32 %v5193, 2.0
        %v5206 = vmul.f32 %v5194, 2.0
        %v5207 = vmul.f32 %v5195, 2.0
        %v5208 = vmul.f32 %v5196, 2.0
        %v5209 = vmul.f32 %v5197, 2.0
        %v5210 = vsub.f32 %v5198, 1.0
        %v5211 = vsub.f32 %v5199, 1.0
        %v5212 = vsub.f32 %v5200, 1.0
        %v5213 = vsub.f32 %v5201, 1.0
        %v5214 = vsub.f32 %v5202, 1.0
        %v5215 = vsub.f32 %v5203, 1.0
        %v5216 = vsub.f32 %v5204, 1.0
        %v5217 = vsub.f32 %v5205, 1.0
        %v5218 = vsub.f32 %v5206, 1.0
        %v5219 = vsub.f32 %v5207, 1.0
        %v5220 = vsub.f32 %v5208, 1.0
        %v5221 = vsub.f32 %v5209, 1.0
        %v5222 = vand.u32 2147483647, %v5210
        %v5223 = vand.u32 2147483647, %v5211
        %v5224 = vand.u32 2147483647, %v5212
        %v5225 = vand.u32 2147483647, %v5213
        %v5226 = vand.u32 2147483647, %v5214
        %v5227 = vand.u32 2147483647, %v5215
        %v5228 = vand.u32 2147483647, %v5216
        %v5229 = vand.u32 2147483647, %v5217
        %v5230 = vand.u32 2147483647, %v5218
        %v5231 = vand.u32 2147483647, %v5219
        %v5232 = vand.u32 2147483647, %v5220
        %v5233 = vand.u32 2147483647, %v5221
        %v5234 = vpack.c.bf16 %v5226, %v5222
        %v5235 = vpack.c.bf16 %v5227, %v5223
        %v5236 = vpack.c.bf16 %v5228, %v5224
        %v5237 = vpack.c.bf16 %v5229, %v5225
        %v5238 = vpack.c.bf16 %v5230, %v5230
        %v5239 = vpack.c.bf16 %v5231, %v5231
        %v5240 = vpack.c.bf16 %v5232, %v5232
        %v5241 = vpack.c.bf16 %v5233, %v5233
        %v5243 = vsel %vm1062, %v5238, 0
        %v5246 = vsel %vm1062, %v5239, 0
        %v5249 = vsel %vm1062, %v5240, 0
        %v5252 = vsel %vm1062, %v5241, 0
        %5254 = vmatpush.bf16.msra.mxu0 0
        %5255 = vmatpush.bf16.msra.mxu0 0
        %5256 = vmatpush.bf16.msra.mxu0 0
        %5257 = vmatpush.bf16.msra.mxu0 0
        %5258 = vmatpush.bf16.msra.mxu0 0
        %5259 = vmatpush.bf16.msra.mxu0 0
        %5260 = vmatpush.bf16.msra.mxu0 %v5243
        %5261 = vmatpush.bf16.msra.mxu0 %v5234
        %5262 = vmatmul.bf16.gmra.mxu0 %v1786
        %v5263 = vpop.f32.mrf.mxu0
        %v5264 = vadd.f32 0.0, %v5263
        %v5265 = vpop.f32.mrf.mxu0
        %v5266 = vadd.f32 0.0, %v5265
        %5267 = vmatmul.bf16.gmra.mxu0 %v1789
        %v5268 = vpop.f32.mrf.mxu0
        %v5269 = vadd.f32 0.0, %v5268
        %v5270 = vpop.f32.mrf.mxu0
        %v5271 = vadd.f32 0.0, %v5270
        %5272 = vmatmul.bf16.gmra.mxu0 %v1792
        %v5273 = vpop.f32.mrf.mxu0
        %v5274 = vadd.f32 0.0, %v5273
        %v5275 = vpop.f32.mrf.mxu0
        %v5276 = vadd.f32 0.0, %v5275
        %5277 = vmatmul.bf16.gmra.mxu0 %v1795
        %v5278 = vpop.f32.mrf.mxu0
        %v5279 = vadd.f32 0.0, %v5278
        %v5280 = vpop.f32.mrf.mxu0
        %v5281 = vadd.f32 0.0, %v5280
        %5282 = vdwg.mxu0
        %5283 = vmatpush.bf16.msra.mxu0 0
        %5284 = vmatpush.bf16.msra.mxu0 0
        %5285 = vmatpush.bf16.msra.mxu0 0
        %5286 = vmatpush.bf16.msra.mxu0 0
        %5287 = vmatpush.bf16.msra.mxu0 0
        %5288 = vmatpush.bf16.msra.mxu0 0
        %5289 = vmatpush.bf16.msra.mxu0 %v5246
        %5290 = vmatpush.bf16.msra.mxu0 %v5235
        %5291 = vmatmul.bf16.gmra.mxu0 %v1786
        %v5292 = vpop.f32.mrf.mxu0
        %v5293 = vadd.f32 0.0, %v5292
        %v5294 = vpop.f32.mrf.mxu0
        %v5295 = vadd.f32 0.0, %v5294
        %5296 = vmatmul.bf16.gmra.mxu0 %v1789
        %v5297 = vpop.f32.mrf.mxu0
        %v5298 = vadd.f32 0.0, %v5297
        %v5299 = vpop.f32.mrf.mxu0
        %v5300 = vadd.f32 0.0, %v5299
        %5301 = vmatmul.bf16.gmra.mxu0 %v1792
        %v5302 = vpop.f32.mrf.mxu0
        %v5303 = vadd.f32 0.0, %v5302
        %v5304 = vpop.f32.mrf.mxu0
        %v5305 = vadd.f32 0.0, %v5304
        %5306 = vmatmul.bf16.gmra.mxu0 %v1795
        %v5307 = vpop.f32.mrf.mxu0
        %v5308 = vadd.f32 0.0, %v5307
        %v5309 = vpop.f32.mrf.mxu0
        %v5310 = vadd.f32 0.0, %v5309
        %5311 = vdwg.mxu0
        %5312 = vmatpush.bf16.msra.mxu0 0
        %5313 = vmatpush.bf16.msra.mxu0 0
        %5314 = vmatpush.bf16.msra.mxu0 0
        %5315 = vmatpush.bf16.msra.mxu0 0
        %5316 = vmatpush.bf16.msra.mxu0 0
        %5317 = vmatpush.bf16.msra.mxu0 0
        %5318 = vmatpush.bf16.msra.mxu0 %v5249
        %5319 = vmatpush.bf16.msra.mxu0 %v5236
        %5320 = vmatmul.bf16.gmra.mxu0 %v1786
        %v5321 = vpop.f32.mrf.mxu0
        %v5322 = vadd.f32 0.0, %v5321
        %v5323 = vpop.f32.mrf.mxu0
        %v5324 = vadd.f32 0.0, %v5323
        %5325 = vmatmul.bf16.gmra.mxu0 %v1789
        %v5326 = vpop.f32.mrf.mxu0
        %v5327 = vadd.f32 0.0, %v5326
        %v5328 = vpop.f32.mrf.mxu0
        %v5329 = vadd.f32 0.0, %v5328
        %5330 = vmatmul.bf16.gmra.mxu0 %v1792
        %v5331 = vpop.f32.mrf.mxu0
        %v5332 = vadd.f32 0.0, %v5331
        %v5333 = vpop.f32.mrf.mxu0
        %v5334 = vadd.f32 0.0, %v5333
        %5335 = vmatmul.bf16.gmra.mxu0 %v1795
        %v5336 = vpop.f32.mrf.mxu0
        %v5337 = vadd.f32 0.0, %v5336
        %v5338 = vpop.f32.mrf.mxu0
        %v5339 = vadd.f32 0.0, %v5338
        %5340 = vdwg.mxu0
        %5341 = vmatpush.bf16.msra.mxu0 0
        %5342 = vmatpush.bf16.msra.mxu0 0
        %5343 = vmatpush.bf16.msra.mxu0 0
        %5344 = vmatpush.bf16.msra.mxu0 0
        %5345 = vmatpush.bf16.msra.mxu0 0
        %5346 = vmatpush.bf16.msra.mxu0 0
        %5347 = vmatpush.bf16.msra.mxu0 %v5252
        %5348 = vmatpush.bf16.msra.mxu0 %v5237
        %5349 = vmatmul.bf16.gmra.mxu0 %v1786
        %v5350 = vpop.f32.mrf.mxu0
        %v5351 = vadd.f32 0.0, %v5350
        %v5352 = vpop.f32.mrf.mxu0
        %v5353 = vadd.f32 0.0, %v5352
        %5354 = vmatmul.bf16.gmra.mxu0 %v1789
        %v5355 = vpop.f32.mrf.mxu0
        %v5356 = vadd.f32 0.0, %v5355
        %v5357 = vpop.f32.mrf.mxu0
        %v5358 = vadd.f32 0.0, %v5357
        %5359 = vmatmul.bf16.gmra.mxu0 %v1792
        %v5360 = vpop.f32.mrf.mxu0
        %v5361 = vadd.f32 0.0, %v5360
        %v5362 = vpop.f32.mrf.mxu0
        %v5363 = vadd.f32 0.0, %v5362
        %5364 = vmatmul.bf16.gmra.mxu0 %v1795
        %v5365 = vpop.f32.mrf.mxu0
        %v5366 = vadd.f32 0.0, %v5365
        %v5367 = vpop.f32.mrf.mxu0
        %v5368 = vadd.f32 0.0, %v5367
        %5369 = vdwg.mxu0
        %v5370 = vmax.f32 %v5264, 0.0
        %v5371 = vmax.f32 %v5293, 0.0
        %v5372 = vmax.f32 %v5322, 0.0
        %v5373 = vmax.f32 %v5351, 0.0
        %v5374 = vmax.f32 %v5266, 0.0
        %v5375 = vmax.f32 %v5295, 0.0
        %v5376 = vmax.f32 %v5324, 0.0
        %v5377 = vmax.f32 %v5353, 0.0
        %v5378 = vmax.f32 %v5269, 0.0
        %v5379 = vmax.f32 %v5298, 0.0
        %v5380 = vmax.f32 %v5327, 0.0
        %v5381 = vmax.f32 %v5356, 0.0
        %v5382 = vmax.f32 %v5271, 0.0
        %v5383 = vmax.f32 %v5300, 0.0
        %v5384 = vmax.f32 %v5329, 0.0
        %v5385 = vmax.f32 %v5358, 0.0
        %v5386 = vmax.f32 %v5274, 0.0
        %v5387 = vmax.f32 %v5303, 0.0
        %v5388 = vmax.f32 %v5332, 0.0
        %v5389 = vmax.f32 %v5361, 0.0
        %v5390 = vmax.f32 %v5276, 0.0
        %v5391 = vmax.f32 %v5305, 0.0
        %v5392 = vmax.f32 %v5334, 0.0
        %v5393 = vmax.f32 %v5363, 0.0
        %v5394 = vmax.f32 %v5279, 0.0
        %v5395 = vmax.f32 %v5308, 0.0
        %v5396 = vmax.f32 %v5337, 0.0
        %v5397 = vmax.f32 %v5366, 0.0
        %v5398 = vmax.f32 %v5281, 0.0
        %v5399 = vmax.f32 %v5310, 0.0
        %v5400 = vmax.f32 %v5339, 0.0
        %v5401 = vmax.f32 %v5368, 0.0
        %v5402 = vpack.c.bf16 %v5374, %v5370
        %v5403 = vpack.c.bf16 %v5375, %v5371
        %v5404 = vpack.c.bf16 %v5376, %v5372
        %v5405 = vpack.c.bf16 %v5377, %v5373
        %v5406 = vpack.c.bf16 %v5382, %v5378
        %v5407 = vpack.c.bf16 %v5383, %v5379
        %v5408 = vpack.c.bf16 %v5384, %v5380
        %v5409 = vpack.c.bf16 %v5385, %v5381
        %v5410 = vpack.c.bf16 %v5390, %v5386
        %v5411 = vpack.c.bf16 %v5391, %v5387
        %v5412 = vpack.c.bf16 %v5392, %v5388
        %v5413 = vpack.c.bf16 %v5393, %v5389
        %v5414 = vpack.c.bf16 %v5398, %v5394
        %v5415 = vpack.c.bf16 %v5399, %v5395
        %v5416 = vpack.c.bf16 %v5400, %v5396
        %v5417 = vpack.c.bf16 %v5401, %v5397
        %5418 = vmatpush.bf16.msra.mxu0 0
        %5419 = vmatpush.bf16.msra.mxu0 0
        %5420 = vmatpush.bf16.msra.mxu0 0
        %5421 = vmatpush.bf16.msra.mxu0 0
        %5422 = vmatpush.bf16.msra.mxu0 %v5414
        %5423 = vmatpush.bf16.msra.mxu0 %v5410
        %5424 = vmatpush.bf16.msra.mxu0 %v5406
        %5425 = vmatpush.bf16.msra.mxu0 %v5402
        %5426 = vmatmul.bf16.gmra.mxu0 %v1980
        %v5427 = vpop.f32.mrf.mxu0
        %v5428 = vadd.f32 0.0, %v5427
        %v5429 = vpop.f32.mrf.mxu0
        %v5430 = vadd.f32 0.0, %v5429
        %5431 = vdwg.mxu0
        %5432 = vmatpush.bf16.msra.mxu0 0
        %5433 = vmatpush.bf16.msra.mxu0 0
        %5434 = vmatpush.bf16.msra.mxu0 0
        %5435 = vmatpush.bf16.msra.mxu0 0
        %5436 = vmatpush.bf16.msra.mxu0 %v5415
        %5437 = vmatpush.bf16.msra.mxu0 %v5411
        %5438 = vmatpush.bf16.msra.mxu0 %v5407
        %5439 = vmatpush.bf16.msra.mxu0 %v5403
        %5440 = vmatmul.bf16.gmra.mxu0 %v1980
        %v5441 = vpop.f32.mrf.mxu0
        %v5442 = vadd.f32 0.0, %v5441
        %v5443 = vpop.f32.mrf.mxu0
        %v5444 = vadd.f32 0.0, %v5443
        %5445 = vdwg.mxu0
        %5446 = vmatpush.bf16.msra.mxu0 0
        %5447 = vmatpush.bf16.msra.mxu0 0
        %5448 = vmatpush.bf16.msra.mxu0 0
        %5449 = vmatpush.bf16.msra.mxu0 0
        %5450 = vmatpush.bf16.msra.mxu0 %v5416
        %5451 = vmatpush.bf16.msra.mxu0 %v5412
        %5452 = vmatpush.bf16.msra.mxu0 %v5408
        %5453 = vmatpush.bf16.msra.mxu0 %v5404
        %5454 = vmatmul.bf16.gmra.mxu0 %v1980
        %v5455 = vpop.f32.mrf.mxu0
        %v5456 = vadd.f32 0.0, %v5455
        %v5457 = vpop.f32.mrf.mxu0
        %v5458 = vadd.f32 0.0, %v5457
        %5459 = vdwg.mxu0
        %5460 = vmatpush.bf16.msra.mxu0 0
        %5461 = vmatpush.bf16.msra.mxu0 0
        %5462 = vmatpush.bf16.msra.mxu0 0
        %5463 = vmatpush.bf16.msra.mxu0 0
        %5464 = vmatpush.bf16.msra.mxu0 %v5417
        %5465 = vmatpush.bf16.msra.mxu0 %v5413
        %5466 = vmatpush.bf16.msra.mxu0 %v5409
        %5467 = vmatpush.bf16.msra.mxu0 %v5405
        %5468 = vmatmul.bf16.gmra.mxu0 %v1980
        %v5469 = vpop.f32.mrf.mxu0
        %v5470 = vadd.f32 0.0, %v5469
        %v5471 = vpop.f32.mrf.mxu0
        %v5472 = vadd.f32 0.0, %v5471
        %5473 = vdwg.mxu0
        %v5474 = vmin.f32 %v5428, 15.0
        %v5475 = vmin.f32 %v5442, 15.0
        %v5476 = vmin.f32 %v5456, 15.0
        %v5477 = vmin.f32 %v5470, 15.0
        %v5478 = vmul.f32 %v5474, 1.442695
        %v5479 = vpow.pop %v5478
        %v5480 = vmul.f32 %v5475, 1.442695
        %v5481 = vpow.pop %v5480
        %v5482 = vmul.f32 %v5476, 1.442695
        %v5483 = vpow.pop %v5482
        %v5484 = vmul.f32 %v5477, 1.442695
        %v5485 = vpow.pop %v5484
        %v5486 = vpack.c.bf16 %v5442, %v5428
        %v5487 = vpack.c.bf16 %v5470, %v5456
        %v5488 = vpack.c.bf16 %v5444, %v5430
        %v5489 = vpack.c.bf16 %v5472, %v5458
        %v5494 = vunpack.c.l.b16 %v5486
        %v5495 = vunpack.c.h.b16 %v5486
        %v5496 = vunpack.c.l.b16 %v5487
        %v5497 = vunpack.c.h.b16 %v5487
        %v5498 = vunpack.c.l.b16 %v5488
        %v5499 = vunpack.c.h.b16 %v5488
        %v5500 = vunpack.c.l.b16 %v5489
        %v5501 = vunpack.c.h.b16 %v5489
        %v5502 = vpack.c.b16 %v5498, %v5494
        %v5503 = vpack.c.b16 %v5499, %v5495
        %v5504 = vpack.c.b16 %v5500, %v5496
        %v5505 = vpack.c.b16 %v5501, %v5497
        %5510 = vmatpush.bf16.msra.mxu0 0
        %5511 = vmatpush.bf16.msra.mxu0 0
        %5512 = vmatpush.bf16.msra.mxu0 0
        %5513 = vmatpush.bf16.msra.mxu0 0
        %5514 = vmatpush.bf16.msra.mxu0 0
        %5515 = vmatpush.bf16.msra.mxu0 0
        %5516 = vmatpush.bf16.msra.mxu0 %v2086
        %5517 = vmatpush.bf16.msra.mxu0 %v5502
        %5518 = vmatmul.bf16.gmra.mxu0 %v2116
        %v5519 = vpop.f32.mrf.mxu0
        %v5520 = vadd.f32 0.0, %v5519
        %v5521 = vpop.f32.mrf.mxu0
        %v5522 = vadd.f32 0.0, %v5521
        %5523 = vmatmul.bf16.gmra.mxu0 %v2119
        %v5524 = vpop.f32.mrf.mxu0
        %v5525 = vadd.f32 0.0, %v5524
        %v5526 = vpop.f32.mrf.mxu0
        %v5527 = vadd.f32 0.0, %v5526
        %5528 = vmatmul.bf16.gmra.mxu0 %v2122
        %v5529 = vpop.f32.mrf.mxu0
        %v5530 = vadd.f32 0.0, %v5529
        %v5531 = vpop.f32.mrf.mxu0
        %v5532 = vadd.f32 0.0, %v5531
        %5533 = vmatmul.bf16.gmra.mxu0 %v2125
        %v5534 = vpop.f32.mrf.mxu0
        %v5535 = vadd.f32 0.0, %v5534
        %v5536 = vpop.f32.mrf.mxu0
        %v5537 = vadd.f32 0.0, %v5536
        %5538 = vdwg.mxu0
        %5539 = vmatpush.bf16.msra.mxu0 0
        %5540 = vmatpush.bf16.msra.mxu0 0
        %5541 = vmatpush.bf16.msra.mxu0 0
        %5542 = vmatpush.bf16.msra.mxu0 0
        %5543 = vmatpush.bf16.msra.mxu0 0
        %5544 = vmatpush.bf16.msra.mxu0 0
        %5545 = vmatpush.bf16.msra.mxu0 %v2087
        %5546 = vmatpush.bf16.msra.mxu0 %v5503
        %5547 = vmatmul.bf16.gmra.mxu0 %v2116
        %v5548 = vpop.f32.mrf.mxu0
        %v5549 = vadd.f32 0.0, %v5548
        %v5550 = vpop.f32.mrf.mxu0
        %v5551 = vadd.f32 0.0, %v5550
        %5552 = vmatmul.bf16.gmra.mxu0 %v2119
        %v5553 = vpop.f32.mrf.mxu0
        %v5554 = vadd.f32 0.0, %v5553
        %v5555 = vpop.f32.mrf.mxu0
        %v5556 = vadd.f32 0.0, %v5555
        %5557 = vmatmul.bf16.gmra.mxu0 %v2122
        %v5558 = vpop.f32.mrf.mxu0
        %v5559 = vadd.f32 0.0, %v5558
        %v5560 = vpop.f32.mrf.mxu0
        %v5561 = vadd.f32 0.0, %v5560
        %5562 = vmatmul.bf16.gmra.mxu0 %v2125
        %v5563 = vpop.f32.mrf.mxu0
        %v5564 = vadd.f32 0.0, %v5563
        %v5565 = vpop.f32.mrf.mxu0
        %v5566 = vadd.f32 0.0, %v5565
        %5567 = vdwg.mxu0
        %5568 = vmatpush.bf16.msra.mxu0 0
        %5569 = vmatpush.bf16.msra.mxu0 0
        %5570 = vmatpush.bf16.msra.mxu0 0
        %5571 = vmatpush.bf16.msra.mxu0 0
        %5572 = vmatpush.bf16.msra.mxu0 0
        %5573 = vmatpush.bf16.msra.mxu0 0
        %5574 = vmatpush.bf16.msra.mxu0 %v2088
        %5575 = vmatpush.bf16.msra.mxu0 %v5504
        %5576 = vmatmul.bf16.gmra.mxu0 %v2116
        %v5577 = vpop.f32.mrf.mxu0
        %v5578 = vadd.f32 0.0, %v5577
        %v5579 = vpop.f32.mrf.mxu0
        %v5580 = vadd.f32 0.0, %v5579
        %5581 = vmatmul.bf16.gmra.mxu0 %v2119
        %v5582 = vpop.f32.mrf.mxu0
        %v5583 = vadd.f32 0.0, %v5582
        %v5584 = vpop.f32.mrf.mxu0
        %v5585 = vadd.f32 0.0, %v5584
        %5586 = vmatmul.bf16.gmra.mxu0 %v2122
        %v5587 = vpop.f32.mrf.mxu0
        %v5588 = vadd.f32 0.0, %v5587
        %v5589 = vpop.f32.mrf.mxu0
        %v5590 = vadd.f32 0.0, %v5589
        %5591 = vmatmul.bf16.gmra.mxu0 %v2125
        %v5592 = vpop.f32.mrf.mxu0
        %v5593 = vadd.f32 0.0, %v5592
        %v5594 = vpop.f32.mrf.mxu0
        %v5595 = vadd.f32 0.0, %v5594
        %5596 = vdwg.mxu0
        %5597 = vmatpush.bf16.msra.mxu0 0
        %5598 = vmatpush.bf16.msra.mxu0 0
        %5599 = vmatpush.bf16.msra.mxu0 0
        %5600 = vmatpush.bf16.msra.mxu0 0
        %5601 = vmatpush.bf16.msra.mxu0 0
        %5602 = vmatpush.bf16.msra.mxu0 0
        %5603 = vmatpush.bf16.msra.mxu0 %v2089
        %5604 = vmatpush.bf16.msra.mxu0 %v5505
        %5605 = vmatmul.bf16.gmra.mxu0 %v2116
        %v5606 = vpop.f32.mrf.mxu0
        %v5607 = vadd.f32 0.0, %v5606
        %v5608 = vpop.f32.mrf.mxu0
        %v5609 = vadd.f32 0.0, %v5608
        %5610 = vmatmul.bf16.gmra.mxu0 %v2119
        %v5611 = vpop.f32.mrf.mxu0
        %v5612 = vadd.f32 0.0, %v5611
        %v5613 = vpop.f32.mrf.mxu0
        %v5614 = vadd.f32 0.0, %v5613
        %5615 = vmatmul.bf16.gmra.mxu0 %v2122
        %v5616 = vpop.f32.mrf.mxu0
        %v5617 = vadd.f32 0.0, %v5616
        %v5618 = vpop.f32.mrf.mxu0
        %v5619 = vadd.f32 0.0, %v5618
        %5620 = vmatmul.bf16.gmra.mxu0 %v2125
        %v5621 = vpop.f32.mrf.mxu0
        %v5622 = vadd.f32 0.0, %v5621
        %v5623 = vpop.f32.mrf.mxu0
        %v5624 = vadd.f32 0.0, %v5623
        %5625 = vdwg.mxu0
        %v5626 = vmax.f32 %v5520, 0.0
        %v5627 = vmax.f32 %v5549, 0.0
        %v5628 = vmax.f32 %v5578, 0.0
        %v5629 = vmax.f32 %v5607, 0.0
        %v5630 = vmax.f32 %v5522, 0.0
        %v5631 = vmax.f32 %v5551, 0.0
        %v5632 = vmax.f32 %v5580, 0.0
        %v5633 = vmax.f32 %v5609, 0.0
        %v5634 = vmax.f32 %v5525, 0.0
        %v5635 = vmax.f32 %v5554, 0.0
        %v5636 = vmax.f32 %v5583, 0.0
        %v5637 = vmax.f32 %v5612, 0.0
        %v5638 = vmax.f32 %v5527, 0.0
        %v5639 = vmax.f32 %v5556, 0.0
        %v5640 = vmax.f32 %v5585, 0.0
        %v5641 = vmax.f32 %v5614, 0.0
        %v5642 = vmax.f32 %v5530, 0.0
        %v5643 = vmax.f32 %v5559, 0.0
        %v5644 = vmax.f32 %v5588, 0.0
        %v5645 = vmax.f32 %v5617, 0.0
        %v5646 = vmax.f32 %v5532, 0.0
        %v5647 = vmax.f32 %v5561, 0.0
        %v5648 = vmax.f32 %v5590, 0.0
        %v5649 = vmax.f32 %v5619, 0.0
        %v5650 = vmax.f32 %v5535, 0.0
        %v5651 = vmax.f32 %v5564, 0.0
        %v5652 = vmax.f32 %v5593, 0.0
        %v5653 = vmax.f32 %v5622, 0.0
        %v5654 = vmax.f32 %v5537, 0.0
        %v5655 = vmax.f32 %v5566, 0.0
        %v5656 = vmax.f32 %v5595, 0.0
        %v5657 = vmax.f32 %v5624, 0.0
        %v5658 = vpack.c.bf16 %v5630, %v5626
        %v5659 = vpack.c.bf16 %v5631, %v5627
        %v5660 = vpack.c.bf16 %v5632, %v5628
        %v5661 = vpack.c.bf16 %v5633, %v5629
        %v5662 = vpack.c.bf16 %v5638, %v5634
        %v5663 = vpack.c.bf16 %v5639, %v5635
        %v5664 = vpack.c.bf16 %v5640, %v5636
        %v5665 = vpack.c.bf16 %v5641, %v5637
        %v5666 = vpack.c.bf16 %v5646, %v5642
        %v5667 = vpack.c.bf16 %v5647, %v5643
        %v5668 = vpack.c.bf16 %v5648, %v5644
        %v5669 = vpack.c.bf16 %v5649, %v5645
        %v5670 = vpack.c.bf16 %v5654, %v5650
        %v5671 = vpack.c.bf16 %v5655, %v5651
        %v5672 = vpack.c.bf16 %v5656, %v5652
        %v5673 = vpack.c.bf16 %v5657, %v5653
        %5674 = vmatpush.bf16.msra.mxu0 0
        %5675 = vmatpush.bf16.msra.mxu0 0
        %5676 = vmatpush.bf16.msra.mxu0 0
        %5677 = vmatpush.bf16.msra.mxu0 0
        %5678 = vmatpush.bf16.msra.mxu0 %v5670
        %5679 = vmatpush.bf16.msra.mxu0 %v5666
        %5680 = vmatpush.bf16.msra.mxu0 %v5662
        %5681 = vmatpush.bf16.msra.mxu0 %v5658
        %5682 = vmatmul.bf16.gmra.mxu0 %v2312
        %v5683 = vpop.f32.mrf.mxu0
        %v5684 = vadd.f32 0.0, %v5683
        %v5685 = vpop.f32.mrf.mxu0
        %v5686 = vadd.f32 0.0, %v5685
        %5687 = vmatmul.bf16.gmra.mxu0 %v2315
        %v5688 = vpop.f32.mrf.mxu0
        %v5689 = vadd.f32 0.0, %v5688
        %v5690 = vpop.f32.mrf.mxu0
        %v5691 = vadd.f32 0.0, %v5690
        %5692 = vmatmul.bf16.gmra.mxu0 %v2318
        %v5693 = vpop.f32.mrf.mxu0
        %v5694 = vadd.f32 0.0, %v5693
        %v5695 = vpop.f32.mrf.mxu0
        %v5696 = vadd.f32 0.0, %v5695
        %5697 = vmatmul.bf16.gmra.mxu0 %v2321
        %v5698 = vpop.f32.mrf.mxu0
        %v5699 = vadd.f32 0.0, %v5698
        %v5700 = vpop.f32.mrf.mxu0
        %v5701 = vadd.f32 0.0, %v5700
        %5702 = vdwg.mxu0
        %5703 = vmatpush.bf16.msra.mxu0 0
        %5704 = vmatpush.bf16.msra.mxu0 0
        %5705 = vmatpush.bf16.msra.mxu0 0
        %5706 = vmatpush.bf16.msra.mxu0 0
        %5707 = vmatpush.bf16.msra.mxu0 %v5671
        %5708 = vmatpush.bf16.msra.mxu0 %v5667
        %5709 = vmatpush.bf16.msra.mxu0 %v5663
        %5710 = vmatpush.bf16.msra.mxu0 %v5659
        %5711 = vmatmul.bf16.gmra.mxu0 %v2312
        %v5712 = vpop.f32.mrf.mxu0
        %v5713 = vadd.f32 0.0, %v5712
        %v5714 = vpop.f32.mrf.mxu0
        %v5715 = vadd.f32 0.0, %v5714
        %5716 = vmatmul.bf16.gmra.mxu0 %v2315
        %v5717 = vpop.f32.mrf.mxu0
        %v5718 = vadd.f32 0.0, %v5717
        %v5719 = vpop.f32.mrf.mxu0
        %v5720 = vadd.f32 0.0, %v5719
        %5721 = vmatmul.bf16.gmra.mxu0 %v2318
        %v5722 = vpop.f32.mrf.mxu0
        %v5723 = vadd.f32 0.0, %v5722
        %v5724 = vpop.f32.mrf.mxu0
        %v5725 = vadd.f32 0.0, %v5724
        %5726 = vmatmul.bf16.gmra.mxu0 %v2321
        %v5727 = vpop.f32.mrf.mxu0
        %v5728 = vadd.f32 0.0, %v5727
        %v5729 = vpop.f32.mrf.mxu0
        %v5730 = vadd.f32 0.0, %v5729
        %5731 = vdwg.mxu0
        %5732 = vmatpush.bf16.msra.mxu0 0
        %5733 = vmatpush.bf16.msra.mxu0 0
        %5734 = vmatpush.bf16.msra.mxu0 0
        %5735 = vmatpush.bf16.msra.mxu0 0
        %5736 = vmatpush.bf16.msra.mxu0 %v5672
        %5737 = vmatpush.bf16.msra.mxu0 %v5668
        %5738 = vmatpush.bf16.msra.mxu0 %v5664
        %5739 = vmatpush.bf16.msra.mxu0 %v5660
        %5740 = vmatmul.bf16.gmra.mxu0 %v2312
        %v5741 = vpop.f32.mrf.mxu0
        %v5742 = vadd.f32 0.0, %v5741
        %v5743 = vpop.f32.mrf.mxu0
        %v5744 = vadd.f32 0.0, %v5743
        %5745 = vmatmul.bf16.gmra.mxu0 %v2315
        %v5746 = vpop.f32.mrf.mxu0
        %v5747 = vadd.f32 0.0, %v5746
        %v5748 = vpop.f32.mrf.mxu0
        %v5749 = vadd.f32 0.0, %v5748
        %5750 = vmatmul.bf16.gmra.mxu0 %v2318
        %v5751 = vpop.f32.mrf.mxu0
        %v5752 = vadd.f32 0.0, %v5751
        %v5753 = vpop.f32.mrf.mxu0
        %v5754 = vadd.f32 0.0, %v5753
        %5755 = vmatmul.bf16.gmra.mxu0 %v2321
        %v5756 = vpop.f32.mrf.mxu0
        %v5757 = vadd.f32 0.0, %v5756
        %v5758 = vpop.f32.mrf.mxu0
        %v5759 = vadd.f32 0.0, %v5758
        %5760 = vdwg.mxu0
        %5761 = vmatpush.bf16.msra.mxu0 0
        %5762 = vmatpush.bf16.msra.mxu0 0
        %5763 = vmatpush.bf16.msra.mxu0 0
        %5764 = vmatpush.bf16.msra.mxu0 0
        %5765 = vmatpush.bf16.msra.mxu0 %v5673
        %5766 = vmatpush.bf16.msra.mxu0 %v5669
        %5767 = vmatpush.bf16.msra.mxu0 %v5665
        %5768 = vmatpush.bf16.msra.mxu0 %v5661
        %5769 = vmatmul.bf16.gmra.mxu0 %v2312
        %v5770 = vpop.f32.mrf.mxu0
        %v5771 = vadd.f32 0.0, %v5770
        %v5772 = vpop.f32.mrf.mxu0
        %v5773 = vadd.f32 0.0, %v5772
        %5774 = vmatmul.bf16.gmra.mxu0 %v2315
        %v5775 = vpop.f32.mrf.mxu0
        %v5776 = vadd.f32 0.0, %v5775
        %v5777 = vpop.f32.mrf.mxu0
        %v5778 = vadd.f32 0.0, %v5777
        %5779 = vmatmul.bf16.gmra.mxu0 %v2318
        %v5780 = vpop.f32.mrf.mxu0
        %v5781 = vadd.f32 0.0, %v5780
        %v5782 = vpop.f32.mrf.mxu0
        %v5783 = vadd.f32 0.0, %v5782
        %5784 = vmatmul.bf16.gmra.mxu0 %v2321
        %v5785 = vpop.f32.mrf.mxu0
        %v5786 = vadd.f32 0.0, %v5785
        %v5787 = vpop.f32.mrf.mxu0
        %v5788 = vadd.f32 0.0, %v5787
        %5789 = vdwg.mxu0
        %v5790 = vmax.f32 %v5684, 0.0
        %v5791 = vmax.f32 %v5713, 0.0
        %v5792 = vmax.f32 %v5742, 0.0
        %v5793 = vmax.f32 %v5771, 0.0
        %v5794 = vmax.f32 %v5686, 0.0
        %v5795 = vmax.f32 %v5715, 0.0
        %v5796 = vmax.f32 %v5744, 0.0
        %v5797 = vmax.f32 %v5773, 0.0
        %v5798 = vmax.f32 %v5689, 0.0
        %v5799 = vmax.f32 %v5718, 0.0
        %v5800 = vmax.f32 %v5747, 0.0
        %v5801 = vmax.f32 %v5776, 0.0
        %v5802 = vmax.f32 %v5691, 0.0
        %v5803 = vmax.f32 %v5720, 0.0
        %v5804 = vmax.f32 %v5749, 0.0
        %v5805 = vmax.f32 %v5778, 0.0
        %v5806 = vmax.f32 %v5694, 0.0
        %v5807 = vmax.f32 %v5723, 0.0
        %v5808 = vmax.f32 %v5752, 0.0
        %v5809 = vmax.f32 %v5781, 0.0
        %v5810 = vmax.f32 %v5696, 0.0
        %v5811 = vmax.f32 %v5725, 0.0
        %v5812 = vmax.f32 %v5754, 0.0
        %v5813 = vmax.f32 %v5783, 0.0
        %v5814 = vmax.f32 %v5699, 0.0
        %v5815 = vmax.f32 %v5728, 0.0
        %v5816 = vmax.f32 %v5757, 0.0
        %v5817 = vmax.f32 %v5786, 0.0
        %v5818 = vmax.f32 %v5701, 0.0
        %v5819 = vmax.f32 %v5730, 0.0
        %v5820 = vmax.f32 %v5759, 0.0
        %v5821 = vmax.f32 %v5788, 0.0
        %v5822 = vpack.c.bf16 %v5794, %v5790
        %v5823 = vpack.c.bf16 %v5795, %v5791
        %v5824 = vpack.c.bf16 %v5796, %v5792
        %v5825 = vpack.c.bf16 %v5797, %v5793
        %v5826 = vpack.c.bf16 %v5802, %v5798
        %v5827 = vpack.c.bf16 %v5803, %v5799
        %v5828 = vpack.c.bf16 %v5804, %v5800
        %v5829 = vpack.c.bf16 %v5805, %v5801
        %v5830 = vpack.c.bf16 %v5810, %v5806
        %v5831 = vpack.c.bf16 %v5811, %v5807
        %v5832 = vpack.c.bf16 %v5812, %v5808
        %v5833 = vpack.c.bf16 %v5813, %v5809
        %v5834 = vpack.c.bf16 %v5818, %v5814
        %v5835 = vpack.c.bf16 %v5819, %v5815
        %v5836 = vpack.c.bf16 %v5820, %v5816
        %v5837 = vpack.c.bf16 %v5821, %v5817
        %5838 = vmatpush.bf16.msra.mxu0 0
        %5839 = vmatpush.bf16.msra.mxu0 0
        %5840 = vmatpush.bf16.msra.mxu0 0
        %5841 = vmatpush.bf16.msra.mxu0 0
        %5842 = vmatpush.bf16.msra.mxu0 %v5834
        %5843 = vmatpush.bf16.msra.mxu0 %v5830
        %5844 = vmatpush.bf16.msra.mxu0 %v5826
        %5845 = vmatpush.bf16.msra.mxu0 %v5822
        %5846 = vmatmul.bf16.gmra.mxu0 %v2488
        %v5847 = vpop.f32.mrf.mxu0
        %v5848 = vadd.f32 0.0, %v5847
        %v5849 = vpop.f32.mrf.mxu0
        %5850 = vdwg.mxu0
        %5851 = vmatpush.bf16.msra.mxu0 0
        %5852 = vmatpush.bf16.msra.mxu0 0
        %5853 = vmatpush.bf16.msra.mxu0 0
        %5854 = vmatpush.bf16.msra.mxu0 0
        %5855 = vmatpush.bf16.msra.mxu0 %v5835
        %5856 = vmatpush.bf16.msra.mxu0 %v5831
        %5857 = vmatpush.bf16.msra.mxu0 %v5827
        %5858 = vmatpush.bf16.msra.mxu0 %v5823
        %5859 = vmatmul.bf16.gmra.mxu0 %v2488
        %v5860 = vpop.f32.mrf.mxu0
        %v5861 = vadd.f32 0.0, %v5860
        %v5862 = vpop.f32.mrf.mxu0
        %5863 = vdwg.mxu0
        %5864 = vmatpush.bf16.msra.mxu0 0
        %5865 = vmatpush.bf16.msra.mxu0 0
        %5866 = vmatpush.bf16.msra.mxu0 0
        %5867 = vmatpush.bf16.msra.mxu0 0
        %5868 = vmatpush.bf16.msra.mxu0 %v5836
        %5869 = vmatpush.bf16.msra.mxu0 %v5832
        %5870 = vmatpush.bf16.msra.mxu0 %v5828
        %5871 = vmatpush.bf16.msra.mxu0 %v5824
        %5872 = vmatmul.bf16.gmra.mxu0 %v2488
        %v5873 = vpop.f32.mrf.mxu0
        %v5874 = vadd.f32 0.0, %v5873
        %v5875 = vpop.f32.mrf.mxu0
        %5876 = vdwg.mxu0
        %5877 = vmatpush.bf16.msra.mxu0 0
        %5878 = vmatpush.bf16.msra.mxu0 0
        %5879 = vmatpush.bf16.msra.mxu0 0
        %5880 = vmatpush.bf16.msra.mxu0 0
        %5881 = vmatpush.bf16.msra.mxu0 %v5837
        %5882 = vmatpush.bf16.msra.mxu0 %v5833
        %5883 = vmatpush.bf16.msra.mxu0 %v5829
        %5884 = vmatpush.bf16.msra.mxu0 %v5825
        %5885 = vmatmul.bf16.gmra.mxu0 %v2488
        %v5886 = vpop.f32.mrf.mxu0
        %v5887 = vadd.f32 0.0, %v5886
        %v5888 = vpop.f32.mrf.mxu0
        %5889 = vdwg.mxu0
        %v5890 = vsub.f32 0.0, %v5848
        %v5891 = vsub.f32 0.0, %v5861
        %v5892 = vsub.f32 0.0, %v5874
        %v5893 = vsub.f32 0.0, %v5887
        %v5894 = vmul.f32 %v5890, 1.442695
        %v5895 = vpow.pop %v5894
        %v5896 = vmul.f32 %v5891, 1.442695
        %v5897 = vpow.pop %v5896
        %v5898 = vmul.f32 %v5892, 1.442695
        %v5899 = vpow.pop %v5898
        %v5900 = vmul.f32 %v5893, 1.442695
        %v5901 = vpow.pop %v5900
        %v5902 = vadd.f32 %v5895, 1.0
        %v5903 = vadd.f32 %v5897, 1.0
        %v5904 = vadd.f32 %v5899, 1.0
        %v5905 = vadd.f32 %v5901, 1.0
        %v5906 = vrcp.pop %v5902
        %v5907 = vrcp.pop %v5903
        %v5908 = vrcp.pop %v5904
        %v5909 = vrcp.pop %v5905
        %v5910 = vsub.f32 0.0, %v5479
        %v5911 = vsub.f32 0.0, %v5481
        %v5912 = vsub.f32 0.0, %v5483
        %v5913 = vsub.f32 0.0, %v5485
        %v5914 = vmul.f32 %v5910, %v2570
        %v5915 = vmul.f32 %v5911, %v2571
        %v5916 = vmul.f32 %v5912, %v2572
        %v5917 = vmul.f32 %v5913, %v2573
        %v5918 = vmul.f32 %v5914, 1.442695
        %v5919 = vpow.pop %v5918
        %v5920 = vmul.f32 %v5915, 1.442695
        %v5921 = vpow.pop %v5920
        %v5922 = vmul.f32 %v5916, 1.442695
        %v5923 = vpow.pop %v5922
        %v5924 = vmul.f32 %v5917, 1.442695
        %v5925 = vpow.pop %v5924
        %v5926 = vsub.f32 1.0, %v5919
        %v5927 = vsub.f32 1.0, %v5921
        %v5928 = vsub.f32 1.0, %v5923
        %v5929 = vsub.f32 1.0, %v5925
        %v5930 = vmul.f32 %v5138, %v5926
        %v5931 = vmul.f32 %v5139, %v5927
        %v5932 = vmul.f32 %v5140, %v5928
        %v5933 = vmul.f32 %v5141, %v5929
        %v5934 = vperm.slane %v5930, 0
        %v5935 = vperm.slane %v5931, 0
        %v5936 = vperm.slane %v5932, 0
        %v5937 = vperm.slane %v5933, 0
        %v5938 = vmul.f32 %v5934, %v5906
        %v5939 = vmul.f32 %v5935, %v5907
        %v5940 = vmul.f32 %v5936, %v5908
        %v5941 = vmul.f32 %v5937, %v5909
        %v5942 = vadd.f32 %v5106, %v5938
        %v5943 = vadd.f32 %v5107, %v5939
        %v5944 = vadd.f32 %v5108, %v5940
        %v5945 = vadd.f32 %v5109, %v5941
        %v5950 = vrot.slane %v5142, 3
        %v5951 = vrot.slane %v5143, 3
        %v5952 = vrot.slane %v5144, 3
        %v5953 = vrot.slane %v5145, 3
        %v5958 = vmul.f32 %v5930, %v5950
        %v5959 = vmul.f32 %v5931, %v5951
        %v5960 = vmul.f32 %v5932, %v5952
        %v5961 = vmul.f32 %v5933, %v5953
        %v5962 = vadd.f32 %v5126, %v5958
        %v5963 = vadd.f32 %v5127, %v5959
        %v5964 = vadd.f32 %v5128, %v5960
        %v5965 = vadd.f32 %v5129, %v5961
        %v5966 = vadd.f32 %v5130, %v5930
        %v5967 = vadd.f32 %v5131, %v5931
        %v5968 = vadd.f32 %v5132, %v5932
        %v5969 = vadd.f32 %v5133, %v5933
        %v5970 = vsub.f32 1.0, %v5926
        %v5971 = vsub.f32 1.0, %v5927
        %v5972 = vsub.f32 1.0, %v5928
        %v5973 = vsub.f32 1.0, %v5929
        %v5974 = vmul.f32 %v5138, %v5970
        %v5975 = vmul.f32 %v5139, %v5971
        %v5976 = vmul.f32 %v5140, %v5972
        %v5977 = vmul.f32 %v5141, %v5973
        %v5978 = vadd.f32 %v5142, %v842
        %v5979 = vadd.f32 %v5143, %v843
        %v5980 = vadd.f32 %v5144, %v844
        %v5981 = vadd.f32 %v5145, %v845
        %v5982 = vperm.slane %v5978, 3
        %v5983 = vperm.slane %v5979, 3
        %v5984 = vperm.slane %v5980, 3
        %v5985 = vperm.slane %v5981, 3
        %v5986 = vmul.f32 %v5982, %v1054
        %v5987 = vmul.f32 %v5983, %v1055
        %v5988 = vmul.f32 %v5984, %v1056
        %v5989 = vmul.f32 %v5985, %v1057
        %v5990 = vmul.f32 %v5982, %v1068
        %v5991 = vmul.f32 %v5983, %v1069
        %v5992 = vmul.f32 %v5984, %v1070
        %v5993 = vmul.f32 %v5985, %v1071
        %v5994 = vmul.f32 %v5982, %v1077
        %v5995 = vmul.f32 %v5983, %v1078
        %v5996 = vmul.f32 %v5984, %v1079
        %v5997 = vmul.f32 %v5985, %v1080
        %v5998 = vadd.f32 %v1169, %v5986
        %v5999 = vadd.f32 %v1170, %v5987
        %v6000 = vadd.f32 %v1171, %v5988
        %v6001 = vadd.f32 %v1172, %v5989
        %v6002 = vadd.f32 %v1181, %v5990
        %v6003 = vadd.f32 %v1182, %v5991
        %v6004 = vadd.f32 %v1183, %v5992
        %v6005 = vadd.f32 %v1184, %v5993
        %v6006 = vadd.f32 %v1189, %v5994
        %v6007 = vadd.f32 %v1190, %v5995
        %v6008 = vadd.f32 %v1191, %v5996
        %v6009 = vadd.f32 %v1192, %v5997
        %v6010 = vfloor.f32 %v5998
        %v6011 = vfloor.f32 %v5999
        %v6012 = vfloor.f32 %v6000
        %v6013 = vfloor.f32 %v6001
        %v6014 = vfloor.f32 %v6002
        %v6015 = vfloor.f32 %v6003
        %v6016 = vfloor.f32 %v6004
        %v6017 = vfloor.f32 %v6005
        %v6018 = vfloor.f32 %v6006
        %v6019 = vfloor.f32 %v6007
        %v6020 = vfloor.f32 %v6008
        %v6021 = vfloor.f32 %v6009
        %v6022 = vsub.f32 %v5998, %v6010
        %v6023 = vsub.f32 %v5999, %v6011
        %v6024 = vsub.f32 %v6000, %v6012
        %v6025 = vsub.f32 %v6001, %v6013
        %v6026 = vsub.f32 %v6002, %v6014
        %v6027 = vsub.f32 %v6003, %v6015
        %v6028 = vsub.f32 %v6004, %v6016
        %v6029 = vsub.f32 %v6005, %v6017
        %v6030 = vsub.f32 %v6006, %v6018
        %v6031 = vsub.f32 %v6007, %v6019
        %v6032 = vsub.f32 %v6008, %v6020
        %v6033 = vsub.f32 %v6009, %v6021
        %v6034 = vmul.f32 %v6022, 2.0
        %v6035 = vmul.f32 %v6023, 2.0
        %v6036 = vmul.f32 %v6024, 2.0
        %v6037 = vmul.f32 %v6025, 2.0
        %v6038 = vmul.f32 %v6026, 2.0
        %v6039 = vmul.f32 %v6027, 2.0
        %v6040 = vmul.f32 %v6028, 2.0
        %v6041 = vmul.f32 %v6029, 2.0
        %v6042 = vmul.f32 %v6030, 2.0
        %v6043 = vmul.f32 %v6031, 2.0
        %v6044 = vmul.f32 %v6032, 2.0
        %v6045 = vmul.f32 %v6033, 2.0
        %v6046 = vsub.f32 %v6034, 1.0
        %v6047 = vsub.f32 %v6035, 1.0
        %v6048 = vsub.f32 %v6036, 1.0
        %v6049 = vsub.f32 %v6037, 1.0
        %v6050 = vsub.f32 %v6038, 1.0
        %v6051 = vsub.f32 %v6039, 1.0
        %v6052 = vsub.f32 %v6040, 1.0
        %v6053 = vsub.f32 %v6041, 1.0
        %v6054 = vsub.f32 %v6042, 1.0
        %v6055 = vsub.f32 %v6043, 1.0
        %v6056 = vsub.f32 %v6044, 1.0
        %v6057 = vsub.f32 %v6045, 1.0
        %v6058 = vand.u32 2147483647, %v6046
        %v6059 = vand.u32 2147483647, %v6047
        %v6060 = vand.u32 2147483647, %v6048
        %v6061 = vand.u32 2147483647, %v6049
        %v6062 = vand.u32 2147483647, %v6050
        %v6063 = vand.u32 2147483647, %v6051
        %v6064 = vand.u32 2147483647, %v6052
        %v6065 = vand.u32 2147483647, %v6053
        %v6066 = vand.u32 2147483647, %v6054
        %v6067 = vand.u32 2147483647, %v6055
        %v6068 = vand.u32 2147483647, %v6056
        %v6069 = vand.u32 2147483647, %v6057
        %v6070 = vpack.c.bf16 %v6062, %v6058
        %v6071 = vpack.c.bf16 %v6063, %v6059
        %v6072 = vpack.c.bf16 %v6064, %v6060
        %v6073 = vpack.c.bf16 %v6065, %v6061
        %v6074 = vpack.c.bf16 %v6066, %v6066
        %v6075 = vpack.c.bf16 %v6067, %v6067
        %v6076 = vpack.c.bf16 %v6068, %v6068
        %v6077 = vpack.c.bf16 %v6069, %v6069
        %v6079 = vsel %vm1062, %v6074, 0
        %v6082 = vsel %vm1062, %v6075, 0
        %v6085 = vsel %vm1062, %v6076, 0
        %v6088 = vsel %vm1062, %v6077, 0
        %6090 = vmatpush.bf16.msra.mxu0 0
        %6091 = vmatpush.bf16.msra.mxu0 0
        %6092 = vmatpush.bf16.msra.mxu0 0
        %6093 = vmatpush.bf16.msra.mxu0 0
        %6094 = vmatpush.bf16.msra.mxu0 0
        %6095 = vmatpush.bf16.msra.mxu0 0
        %6096 = vmatpush.bf16.msra.mxu0 %v6079
        %6097 = vmatpush.bf16.msra.mxu0 %v6070
        %6098 = vmatmul.bf16.gmra.mxu0 %v1786
        %v6099 = vpop.f32.mrf.mxu0
        %v6100 = vadd.f32 0.0, %v6099
        %v6101 = vpop.f32.mrf.mxu0
        %v6102 = vadd.f32 0.0, %v6101
        %6103 = vmatmul.bf16.gmra.mxu0 %v1789
        %v6104 = vpop.f32.mrf.mxu0
        %v6105 = vadd.f32 0.0, %v6104
        %v6106 = vpop.f32.mrf.mxu0
        %v6107 = vadd.f32 0.0, %v6106
        %6108 = vmatmul.bf16.gmra.mxu0 %v1792
        %v6109 = vpop.f32.mrf.mxu0
        %v6110 = vadd.f32 0.0, %v6109
        %v6111 = vpop.f32.mrf.mxu0
        %v6112 = vadd.f32 0.0, %v6111
        %6113 = vmatmul.bf16.gmra.mxu0 %v1795
        %v6114 = vpop.f32.mrf.mxu0
        %v6115 = vadd.f32 0.0, %v6114
        %v6116 = vpop.f32.mrf.mxu0
        %v6117 = vadd.f32 0.0, %v6116
        %6118 = vdwg.mxu0
        %6119 = vmatpush.bf16.msra.mxu0 0
        %6120 = vmatpush.bf16.msra.mxu0 0
        %6121 = vmatpush.bf16.msra.mxu0 0
        %6122 = vmatpush.bf16.msra.mxu0 0
        %6123 = vmatpush.bf16.msra.mxu0 0
        %6124 = vmatpush.bf16.msra.mxu0 0
        %6125 = vmatpush.bf16.msra.mxu0 %v6082
        %6126 = vmatpush.bf16.msra.mxu0 %v6071
        %6127 = vmatmul.bf16.gmra.mxu0 %v1786
        %v6128 = vpop.f32.mrf.mxu0
        %v6129 = vadd.f32 0.0, %v6128
        %v6130 = vpop.f32.mrf.mxu0
        %v6131 = vadd.f32 0.0, %v6130
        %6132 = vmatmul.bf16.gmra.mxu0 %v1789
        %v6133 = vpop.f32.mrf.mxu0
        %v6134 = vadd.f32 0.0, %v6133
        %v6135 = vpop.f32.mrf.mxu0
        %v6136 = vadd.f32 0.0, %v6135
        %6137 = vmatmul.bf16.gmra.mxu0 %v1792
        %v6138 = vpop.f32.mrf.mxu0
        %v6139 = vadd.f32 0.0, %v6138
        %v6140 = vpop.f32.mrf.mxu0
        %v6141 = vadd.f32 0.0, %v6140
        %6142 = vmatmul.bf16.gmra.mxu0 %v1795
        %v6143 = vpop.f32.mrf.mxu0
        %v6144 = vadd.f32 0.0, %v6143
        %v6145 = vpop.f32.mrf.mxu0
        %v6146 = vadd.f32 0.0, %v6145
        %6147 = vdwg.mxu0
        %6148 = vmatpush.bf16.msra.mxu0 0
        %6149 = vmatpush.bf16.msra.mxu0 0
        %6150 = vmatpush.bf16.msra.mxu0 0
        %6151 = vmatpush.bf16.msra.mxu0 0
        %6152 = vmatpush.bf16.msra.mxu0 0
        %6153 = vmatpush.bf16.msra.mxu0 0
        %6154 = vmatpush.bf16.msra.mxu0 %v6085
        %6155 = vmatpush.bf16.msra.mxu0 %v6072
        %6156 = vmatmul.bf16.gmra.mxu0 %v1786
        %v6157 = vpop.f32.mrf.mxu0
        %v6158 = vadd.f32 0.0, %v6157
        %v6159 = vpop.f32.mrf.mxu0
        %v6160 = vadd.f32 0.0, %v6159
        %6161 = vmatmul.bf16.gmra.mxu0 %v1789
        %v6162 = vpop.f32.mrf.mxu0
        %v6163 = vadd.f32 0.0, %v6162
        %v6164 = vpop.f32.mrf.mxu0
        %v6165 = vadd.f32 0.0, %v6164
        %6166 = vmatmul.bf16.gmra.mxu0 %v1792
        %v6167 = vpop.f32.mrf.mxu0
        %v6168 = vadd.f32 0.0, %v6167
        %v6169 = vpop.f32.mrf.mxu0
        %v6170 = vadd.f32 0.0, %v6169
        %6171 = vmatmul.bf16.gmra.mxu0 %v1795
        %v6172 = vpop.f32.mrf.mxu0
        %v6173 = vadd.f32 0.0, %v6172
        %v6174 = vpop.f32.mrf.mxu0
        %v6175 = vadd.f32 0.0, %v6174
        %6176 = vdwg.mxu0
        %6177 = vmatpush.bf16.msra.mxu0 0
        %6178 = vmatpush.bf16.msra.mxu0 0
        %6179 = vmatpush.bf16.msra.mxu0 0
        %6180 = vmatpush.bf16.msra.mxu0 0
        %6181 = vmatpush.bf16.msra.mxu0 0
        %6182 = vmatpush.bf16.msra.mxu0 0
        %6183 = vmatpush.bf16.msra.mxu0 %v6088
        %6184 = vmatpush.bf16.msra.mxu0 %v6073
        %6185 = vmatmul.bf16.gmra.mxu0 %v1786
        %v6186 = vpop.f32.mrf.mxu0
        %v6187 = vadd.f32 0.0, %v6186
        %v6188 = vpop.f32.mrf.mxu0
        %v6189 = vadd.f32 0.0, %v6188
        %6190 = vmatmul.bf16.gmra.mxu0 %v1789
        %v6191 = vpop.f32.mrf.mxu0
        %v6192 = vadd.f32 0.0, %v6191
        %v6193 = vpop.f32.mrf.mxu0
        %v6194 = vadd.f32 0.0, %v6193
        %6195 = vmatmul.bf16.gmra.mxu0 %v1792
        %v6196 = vpop.f32.mrf.mxu0
        %v6197 = vadd.f32 0.0, %v6196
        %v6198 = vpop.f32.mrf.mxu0
        %v6199 = vadd.f32 0.0, %v6198
        %6200 = vmatmul.bf16.gmra.mxu0 %v1795
        %v6201 = vpop.f32.mrf.mxu0
        %v6202 = vadd.f32 0.0, %v6201
        %v6203 = vpop.f32.mrf.mxu0
        %v6204 = vadd.f32 0.0, %v6203
        %6205 = vdwg.mxu0
        %v6206 = vmax.f32 %v6100, 0.0
        %v6207 = vmax.f32 %v6129, 0.0
        %v6208 = vmax.f32 %v6158, 0.0
        %v6209 = vmax.f32 %v6187, 0.0
        %v6210 = vmax.f32 %v6102, 0.0
        %v6211 = vmax.f32 %v6131, 0.0
        %v6212 = vmax.f32 %v6160, 0.0
        %v6213 = vmax.f32 %v6189, 0.0
        %v6214 = vmax.f32 %v6105, 0.0
        %v6215 = vmax.f32 %v6134, 0.0
        %v6216 = vmax.f32 %v6163, 0.0
        %v6217 = vmax.f32 %v6192, 0.0
        %v6218 = vmax.f32 %v6107, 0.0
        %v6219 = vmax.f32 %v6136, 0.0
        %v6220 = vmax.f32 %v6165, 0.0
        %v6221 = vmax.f32 %v6194, 0.0
        %v6222 = vmax.f32 %v6110, 0.0
        %v6223 = vmax.f32 %v6139, 0.0
        %v6224 = vmax.f32 %v6168, 0.0
        %v6225 = vmax.f32 %v6197, 0.0
        %v6226 = vmax.f32 %v6112, 0.0
        %v6227 = vmax.f32 %v6141, 0.0
        %v6228 = vmax.f32 %v6170, 0.0
        %v6229 = vmax.f32 %v6199, 0.0
        %v6230 = vmax.f32 %v6115, 0.0
        %v6231 = vmax.f32 %v6144, 0.0
        %v6232 = vmax.f32 %v6173, 0.0
        %v6233 = vmax.f32 %v6202, 0.0
        %v6234 = vmax.f32 %v6117, 0.0
        %v6235 = vmax.f32 %v6146, 0.0
        %v6236 = vmax.f32 %v6175, 0.0
        %v6237 = vmax.f32 %v6204, 0.0
        %v6238 = vpack.c.bf16 %v6210, %v6206
        %v6239 = vpack.c.bf16 %v6211, %v6207
        %v6240 = vpack.c.bf16 %v6212, %v6208
        %v6241 = vpack.c.bf16 %v6213, %v6209
        %v6242 = vpack.c.bf16 %v6218, %v6214
        %v6243 = vpack.c.bf16 %v6219, %v6215
        %v6244 = vpack.c.bf16 %v6220, %v6216
        %v6245 = vpack.c.bf16 %v6221, %v6217
        %v6246 = vpack.c.bf16 %v6226, %v6222
        %v6247 = vpack.c.bf16 %v6227, %v6223
        %v6248 = vpack.c.bf16 %v6228, %v6224
        %v6249 = vpack.c.bf16 %v6229, %v6225
        %v6250 = vpack.c.bf16 %v6234, %v6230
        %v6251 = vpack.c.bf16 %v6235, %v6231
        %v6252 = vpack.c.bf16 %v6236, %v6232
        %v6253 = vpack.c.bf16 %v6237, %v6233
        %6254 = vmatpush.bf16.msra.mxu0 0
        %6255 = vmatpush.bf16.msra.mxu0 0
        %6256 = vmatpush.bf16.msra.mxu0 0
        %6257 = vmatpush.bf16.msra.mxu0 0
        %6258 = vmatpush.bf16.msra.mxu0 %v6250
        %6259 = vmatpush.bf16.msra.mxu0 %v6246
        %6260 = vmatpush.bf16.msra.mxu0 %v6242
        %6261 = vmatpush.bf16.msra.mxu0 %v6238
        %6262 = vmatmul.bf16.gmra.mxu0 %v1980
        %v6263 = vpop.f32.mrf.mxu0
        %v6264 = vadd.f32 0.0, %v6263
        %v6265 = vpop.f32.mrf.mxu0
        %v6266 = vadd.f32 0.0, %v6265
        %6267 = vdwg.mxu0
        %6268 = vmatpush.bf16.msra.mxu0 0
        %6269 = vmatpush.bf16.msra.mxu0 0
        %6270 = vmatpush.bf16.msra.mxu0 0
        %6271 = vmatpush.bf16.msra.mxu0 0
        %6272 = vmatpush.bf16.msra.mxu0 %v6251
        %6273 = vmatpush.bf16.msra.mxu0 %v6247
        %6274 = vmatpush.bf16.msra.mxu0 %v6243
        %6275 = vmatpush.bf16.msra.mxu0 %v6239
        %6276 = vmatmul.bf16.gmra.mxu0 %v1980
        %v6277 = vpop.f32.mrf.mxu0
        %v6278 = vadd.f32 0.0, %v6277
        %v6279 = vpop.f32.mrf.mxu0
        %v6280 = vadd.f32 0.0, %v6279
        %6281 = vdwg.mxu0
        %6282 = vmatpush.bf16.msra.mxu0 0
        %6283 = vmatpush.bf16.msra.mxu0 0
        %6284 = vmatpush.bf16.msra.mxu0 0
        %6285 = vmatpush.bf16.msra.mxu0 0
        %6286 = vmatpush.bf16.msra.mxu0 %v6252
        %6287 = vmatpush.bf16.msra.mxu0 %v6248
        %6288 = vmatpush.bf16.msra.mxu0 %v6244
        %6289 = vmatpush.bf16.msra.mxu0 %v6240
        %6290 = vmatmul.bf16.gmra.mxu0 %v1980
        %v6291 = vpop.f32.mrf.mxu0
        %v6292 = vadd.f32 0.0, %v6291
        %v6293 = vpop.f32.mrf.mxu0
        %v6294 = vadd.f32 0.0, %v6293
        %6295 = vdwg.mxu0
        %6296 = vmatpush.bf16.msra.mxu0 0
        %6297 = vmatpush.bf16.msra.mxu0 0
        %6298 = vmatpush.bf16.msra.mxu0 0
        %6299 = vmatpush.bf16.msra.mxu0 0
        %6300 = vmatpush.bf16.msra.mxu0 %v6253
        %6301 = vmatpush.bf16.msra.mxu0 %v6249
        %6302 = vmatpush.bf16.msra.mxu0 %v6245
        %6303 = vmatpush.bf16.msra.mxu0 %v6241
        %6304 = vmatmul.bf16.gmra.mxu0 %v1980
        %v6305 = vpop.f32.mrf.mxu0
        %v6306 = vadd.f32 0.0, %v6305
        %v6307 = vpop.f32.mrf.mxu0
        %v6308 = vadd.f32 0.0, %v6307
        %6309 = vdwg.mxu0
        %v6310 = vmin.f32 %v6264, 15.0
        %v6311 = vmin.f32 %v6278, 15.0
        %v6312 = vmin.f32 %v6292, 15.0
        %v6313 = vmin.f32 %v6306, 15.0
        %v6314 = vmul.f32 %v6310, 1.442695
        %v6315 = vpow.pop %v6314
        %v6316 = vmul.f32 %v6311, 1.442695
        %v6317 = vpow.pop %v6316
        %v6318 = vmul.f32 %v6312, 1.442695
        %v6319 = vpow.pop %v6318
        %v6320 = vmul.f32 %v6313, 1.442695
        %v6321 = vpow.pop %v6320
        %v6322 = vpack.c.bf16 %v6278, %v6264
        %v6323 = vpack.c.bf16 %v6306, %v6292
        %v6324 = vpack.c.bf16 %v6280, %v6266
        %v6325 = vpack.c.bf16 %v6308, %v6294
        %v6330 = vunpack.c.l.b16 %v6322
        %v6331 = vunpack.c.h.b16 %v6322
        %v6332 = vunpack.c.l.b16 %v6323
        %v6333 = vunpack.c.h.b16 %v6323
        %v6334 = vunpack.c.l.b16 %v6324
        %v6335 = vunpack.c.h.b16 %v6324
        %v6336 = vunpack.c.l.b16 %v6325
        %v6337 = vunpack.c.h.b16 %v6325
        %v6338 = vpack.c.b16 %v6334, %v6330
        %v6339 = vpack.c.b16 %v6335, %v6331
        %v6340 = vpack.c.b16 %v6336, %v6332
        %v6341 = vpack.c.b16 %v6337, %v6333
        %6346 = vmatpush.bf16.msra.mxu0 0
        %6347 = vmatpush.bf16.msra.mxu0 0
        %6348 = vmatpush.bf16.msra.mxu0 0
        %6349 = vmatpush.bf16.msra.mxu0 0
        %6350 = vmatpush.bf16.msra.mxu0 0
        %6351 = vmatpush.bf16.msra.mxu0 0
        %6352 = vmatpush.bf16.msra.mxu0 %v2086
        %6353 = vmatpush.bf16.msra.mxu0 %v6338
        %6354 = vmatmul.bf16.gmra.mxu0 %v2116
        %v6355 = vpop.f32.mrf.mxu0
        %v6356 = vadd.f32 0.0, %v6355
        %v6357 = vpop.f32.mrf.mxu0
        %v6358 = vadd.f32 0.0, %v6357
        %6359 = vmatmul.bf16.gmra.mxu0 %v2119
        %v6360 = vpop.f32.mrf.mxu0
        %v6361 = vadd.f32 0.0, %v6360
        %v6362 = vpop.f32.mrf.mxu0
        %v6363 = vadd.f32 0.0, %v6362
        %6364 = vmatmul.bf16.gmra.mxu0 %v2122
        %v6365 = vpop.f32.mrf.mxu0
        %v6366 = vadd.f32 0.0, %v6365
        %v6367 = vpop.f32.mrf.mxu0
        %v6368 = vadd.f32 0.0, %v6367
        %6369 = vmatmul.bf16.gmra.mxu0 %v2125
        %v6370 = vpop.f32.mrf.mxu0
        %v6371 = vadd.f32 0.0, %v6370
        %v6372 = vpop.f32.mrf.mxu0
        %v6373 = vadd.f32 0.0, %v6372
        %6374 = vdwg.mxu0
        %6375 = vmatpush.bf16.msra.mxu0 0
        %6376 = vmatpush.bf16.msra.mxu0 0
        %6377 = vmatpush.bf16.msra.mxu0 0
        %6378 = vmatpush.bf16.msra.mxu0 0
        %6379 = vmatpush.bf16.msra.mxu0 0
        %6380 = vmatpush.bf16.msra.mxu0 0
        %6381 = vmatpush.bf16.msra.mxu0 %v2087
        %6382 = vmatpush.bf16.msra.mxu0 %v6339
        %6383 = vmatmul.bf16.gmra.mxu0 %v2116
        %v6384 = vpop.f32.mrf.mxu0
        %v6385 = vadd.f32 0.0, %v6384
        %v6386 = vpop.f32.mrf.mxu0
        %v6387 = vadd.f32 0.0, %v6386
        %6388 = vmatmul.bf16.gmra.mxu0 %v2119
        %v6389 = vpop.f32.mrf.mxu0
        %v6390 = vadd.f32 0.0, %v6389
        %v6391 = vpop.f32.mrf.mxu0
        %v6392 = vadd.f32 0.0, %v6391
        %6393 = vmatmul.bf16.gmra.mxu0 %v2122
        %v6394 = vpop.f32.mrf.mxu0
        %v6395 = vadd.f32 0.0, %v6394
        %v6396 = vpop.f32.mrf.mxu0
        %v6397 = vadd.f32 0.0, %v6396
        %6398 = vmatmul.bf16.gmra.mxu0 %v2125
        %v6399 = vpop.f32.mrf.mxu0
        %v6400 = vadd.f32 0.0, %v6399
        %v6401 = vpop.f32.mrf.mxu0
        %v6402 = vadd.f32 0.0, %v6401
        %6403 = vdwg.mxu0
        %6404 = vmatpush.bf16.msra.mxu0 0
        %6405 = vmatpush.bf16.msra.mxu0 0
        %6406 = vmatpush.bf16.msra.mxu0 0
        %6407 = vmatpush.bf16.msra.mxu0 0
        %6408 = vmatpush.bf16.msra.mxu0 0
        %6409 = vmatpush.bf16.msra.mxu0 0
        %6410 = vmatpush.bf16.msra.mxu0 %v2088
        %6411 = vmatpush.bf16.msra.mxu0 %v6340
        %6412 = vmatmul.bf16.gmra.mxu0 %v2116
        %v6413 = vpop.f32.mrf.mxu0
        %v6414 = vadd.f32 0.0, %v6413
        %v6415 = vpop.f32.mrf.mxu0
        %v6416 = vadd.f32 0.0, %v6415
        %6417 = vmatmul.bf16.gmra.mxu0 %v2119
        %v6418 = vpop.f32.mrf.mxu0
        %v6419 = vadd.f32 0.0, %v6418
        %v6420 = vpop.f32.mrf.mxu0
        %v6421 = vadd.f32 0.0, %v6420
        %6422 = vmatmul.bf16.gmra.mxu0 %v2122
        %v6423 = vpop.f32.mrf.mxu0
        %v6424 = vadd.f32 0.0, %v6423
        %v6425 = vpop.f32.mrf.mxu0
        %v6426 = vadd.f32 0.0, %v6425
        %6427 = vmatmul.bf16.gmra.mxu0 %v2125
        %v6428 = vpop.f32.mrf.mxu0
        %v6429 = vadd.f32 0.0, %v6428
        %v6430 = vpop.f32.mrf.mxu0
        %v6431 = vadd.f32 0.0, %v6430
        %6432 = vdwg.mxu0
        %6433 = vmatpush.bf16.msra.mxu0 0
        %6434 = vmatpush.bf16.msra.mxu0 0
        %6435 = vmatpush.bf16.msra.mxu0 0
        %6436 = vmatpush.bf16.msra.mxu0 0
        %6437 = vmatpush.bf16.msra.mxu0 0
        %6438 = vmatpush.bf16.msra.mxu0 0
        %6439 = vmatpush.bf16.msra.mxu0 %v2089
        %6440 = vmatpush.bf16.msra.mxu0 %v6341
        %6441 = vmatmul.bf16.gmra.mxu0 %v2116
        %v6442 = vpop.f32.mrf.mxu0
        %v6443 = vadd.f32 0.0, %v6442
        %v6444 = vpop.f32.mrf.mxu0
        %v6445 = vadd.f32 0.0, %v6444
        %6446 = vmatmul.bf16.gmra.mxu0 %v2119
        %v6447 = vpop.f32.mrf.mxu0
        %v6448 = vadd.f32 0.0, %v6447
        %v6449 = vpop.f32.mrf.mxu0
        %v6450 = vadd.f32 0.0, %v6449
        %6451 = vmatmul.bf16.gmra.mxu0 %v2122
        %v6452 = vpop.f32.mrf.mxu0
        %v6453 = vadd.f32 0.0, %v6452
        %v6454 = vpop.f32.mrf.mxu0
        %v6455 = vadd.f32 0.0, %v6454
        %6456 = vmatmul.bf16.gmra.mxu0 %v2125
        %v6457 = vpop.f32.mrf.mxu0
        %v6458 = vadd.f32 0.0, %v6457
        %v6459 = vpop.f32.mrf.mxu0
        %v6460 = vadd.f32 0.0, %v6459
        %6461 = vdwg.mxu0
        %v6462 = vmax.f32 %v6356, 0.0
        %v6463 = vmax.f32 %v6385, 0.0
        %v6464 = vmax.f32 %v6414, 0.0
        %v6465 = vmax.f32 %v6443, 0.0
        %v6466 = vmax.f32 %v6358, 0.0
        %v6467 = vmax.f32 %v6387, 0.0
        %v6468 = vmax.f32 %v6416, 0.0
        %v6469 = vmax.f32 %v6445, 0.0
        %v6470 = vmax.f32 %v6361, 0.0
        %v6471 = vmax.f32 %v6390, 0.0
        %v6472 = vmax.f32 %v6419, 0.0
        %v6473 = vmax.f32 %v6448, 0.0
        %v6474 = vmax.f32 %v6363, 0.0
        %v6475 = vmax.f32 %v6392, 0.0
        %v6476 = vmax.f32 %v6421, 0.0
        %v6477 = vmax.f32 %v6450, 0.0
        %v6478 = vmax.f32 %v6366, 0.0
        %v6479 = vmax.f32 %v6395, 0.0
        %v6480 = vmax.f32 %v6424, 0.0
        %v6481 = vmax.f32 %v6453, 0.0
        %v6482 = vmax.f32 %v6368, 0.0
        %v6483 = vmax.f32 %v6397, 0.0
        %v6484 = vmax.f32 %v6426, 0.0
        %v6485 = vmax.f32 %v6455, 0.0
        %v6486 = vmax.f32 %v6371, 0.0
        %v6487 = vmax.f32 %v6400, 0.0
        %v6488 = vmax.f32 %v6429, 0.0
        %v6489 = vmax.f32 %v6458, 0.0
        %v6490 = vmax.f32 %v6373, 0.0
        %v6491 = vmax.f32 %v6402, 0.0
        %v6492 = vmax.f32 %v6431, 0.0
        %v6493 = vmax.f32 %v6460, 0.0
        %v6494 = vpack.c.bf16 %v6466, %v6462
        %v6495 = vpack.c.bf16 %v6467, %v6463
        %v6496 = vpack.c.bf16 %v6468, %v6464
        %v6497 = vpack.c.bf16 %v6469, %v6465
        %v6498 = vpack.c.bf16 %v6474, %v6470
        %v6499 = vpack.c.bf16 %v6475, %v6471
        %v6500 = vpack.c.bf16 %v6476, %v6472
        %v6501 = vpack.c.bf16 %v6477, %v6473
        %v6502 = vpack.c.bf16 %v6482, %v6478
        %v6503 = vpack.c.bf16 %v6483, %v6479
        %v6504 = vpack.c.bf16 %v6484, %v6480
        %v6505 = vpack.c.bf16 %v6485, %v6481
        %v6506 = vpack.c.bf16 %v6490, %v6486
        %v6507 = vpack.c.bf16 %v6491, %v6487
        %v6508 = vpack.c.bf16 %v6492, %v6488
        %v6509 = vpack.c.bf16 %v6493, %v6489
        %6510 = vmatpush.bf16.msra.mxu0 0
        %6511 = vmatpush.bf16.msra.mxu0 0
        %6512 = vmatpush.bf16.msra.mxu0 0
        %6513 = vmatpush.bf16.msra.mxu0 0
        %6514 = vmatpush.bf16.msra.mxu0 %v6506
        %6515 = vmatpush.bf16.msra.mxu0 %v6502
        %6516 = vmatpush.bf16.msra.mxu0 %v6498
        %6517 = vmatpush.bf16.msra.mxu0 %v6494
        %6518 = vmatmul.bf16.gmra.mxu0 %v2312
        %v6519 = vpop.f32.mrf.mxu0
        %v6520 = vadd.f32 0.0, %v6519
        %v6521 = vpop.f32.mrf.mxu0
        %v6522 = vadd.f32 0.0, %v6521
        %6523 = vmatmul.bf16.gmra.mxu0 %v2315
        %v6524 = vpop.f32.mrf.mxu0
        %v6525 = vadd.f32 0.0, %v6524
        %v6526 = vpop.f32.mrf.mxu0
        %v6527 = vadd.f32 0.0, %v6526
        %6528 = vmatmul.bf16.gmra.mxu0 %v2318
        %v6529 = vpop.f32.mrf.mxu0
        %v6530 = vadd.f32 0.0, %v6529
        %v6531 = vpop.f32.mrf.mxu0
        %v6532 = vadd.f32 0.0, %v6531
        %6533 = vmatmul.bf16.gmra.mxu0 %v2321
        %v6534 = vpop.f32.mrf.mxu0
        %v6535 = vadd.f32 0.0, %v6534
        %v6536 = vpop.f32.mrf.mxu0
        %v6537 = vadd.f32 0.0, %v6536
        %6538 = vdwg.mxu0
        %6539 = vmatpush.bf16.msra.mxu0 0
        %6540 = vmatpush.bf16.msra.mxu0 0
        %6541 = vmatpush.bf16.msra.mxu0 0
        %6542 = vmatpush.bf16.msra.mxu0 0
        %6543 = vmatpush.bf16.msra.mxu0 %v6507
        %6544 = vmatpush.bf16.msra.mxu0 %v6503
        %6545 = vmatpush.bf16.msra.mxu0 %v6499
        %6546 = vmatpush.bf16.msra.mxu0 %v6495
        %6547 = vmatmul.bf16.gmra.mxu0 %v2312
        %v6548 = vpop.f32.mrf.mxu0
        %v6549 = vadd.f32 0.0, %v6548
        %v6550 = vpop.f32.mrf.mxu0
        %v6551 = vadd.f32 0.0, %v6550
        %6552 = vmatmul.bf16.gmra.mxu0 %v2315
        %v6553 = vpop.f32.mrf.mxu0
        %v6554 = vadd.f32 0.0, %v6553
        %v6555 = vpop.f32.mrf.mxu0
        %v6556 = vadd.f32 0.0, %v6555
        %6557 = vmatmul.bf16.gmra.mxu0 %v2318
        %v6558 = vpop.f32.mrf.mxu0
        %v6559 = vadd.f32 0.0, %v6558
        %v6560 = vpop.f32.mrf.mxu0
        %v6561 = vadd.f32 0.0, %v6560
        %6562 = vmatmul.bf16.gmra.mxu0 %v2321
        %v6563 = vpop.f32.mrf.mxu0
        %v6564 = vadd.f32 0.0, %v6563
        %v6565 = vpop.f32.mrf.mxu0
        %v6566 = vadd.f32 0.0, %v6565
        %6567 = vdwg.mxu0
        %6568 = vmatpush.bf16.msra.mxu0 0
        %6569 = vmatpush.bf16.msra.mxu0 0
        %6570 = vmatpush.bf16.msra.mxu0 0
        %6571 = vmatpush.bf16.msra.mxu0 0
        %6572 = vmatpush.bf16.msra.mxu0 %v6508
        %6573 = vmatpush.bf16.msra.mxu0 %v6504
        %6574 = vmatpush.bf16.msra.mxu0 %v6500
        %6575 = vmatpush.bf16.msra.mxu0 %v6496
        %6576 = vmatmul.bf16.gmra.mxu0 %v2312
        %v6577 = vpop.f32.mrf.mxu0
        %v6578 = vadd.f32 0.0, %v6577
        %v6579 = vpop.f32.mrf.mxu0
        %v6580 = vadd.f32 0.0, %v6579
        %6581 = vmatmul.bf16.gmra.mxu0 %v2315
        %v6582 = vpop.f32.mrf.mxu0
        %v6583 = vadd.f32 0.0, %v6582
        %v6584 = vpop.f32.mrf.mxu0
        %v6585 = vadd.f32 0.0, %v6584
        %6586 = vmatmul.bf16.gmra.mxu0 %v2318
        %v6587 = vpop.f32.mrf.mxu0
        %v6588 = vadd.f32 0.0, %v6587
        %v6589 = vpop.f32.mrf.mxu0
        %v6590 = vadd.f32 0.0, %v6589
        %6591 = vmatmul.bf16.gmra.mxu0 %v2321
        %v6592 = vpop.f32.mrf.mxu0
        %v6593 = vadd.f32 0.0, %v6592
        %v6594 = vpop.f32.mrf.mxu0
        %v6595 = vadd.f32 0.0, %v6594
        %6596 = vdwg.mxu0
        %6597 = vmatpush.bf16.msra.mxu0 0
        %6598 = vmatpush.bf16.msra.mxu0 0
        %6599 = vmatpush.bf16.msra.mxu0 0
        %6600 = vmatpush.bf16.msra.mxu0 0
        %6601 = vmatpush.bf16.msra.mxu0 %v6509
        %6602 = vmatpush.bf16.msra.mxu0 %v6505
        %6603 = vmatpush.bf16.msra.mxu0 %v6501
        %6604 = vmatpush.bf16.msra.mxu0 %v6497
        %6605 = vmatmul.bf16.gmra.mxu0 %v2312
        %v6606 = vpop.f32.mrf.mxu0
        %v6607 = vadd.f32 0.0, %v6606
        %v6608 = vpop.f32.mrf.mxu0
        %v6609 = vadd.f32 0.0, %v6608
        %6610 = vmatmul.bf16.gmra.mxu0 %v2315
        %v6611 = vpop.f32.mrf.mxu0
        %v6612 = vadd.f32 0.0, %v6611
        %v6613 = vpop.f32.mrf.mxu0
        %v6614 = vadd.f32 0.0, %v6613
        %6615 = vmatmul.bf16.gmra.mxu0 %v2318
        %v6616 = vpop.f32.mrf.mxu0
        %v6617 = vadd.f32 0.0, %v6616
        %v6618 = vpop.f32.mrf.mxu0
        %v6619 = vadd.f32 0.0, %v6618
        %6620 = vmatmul.bf16.gmra.mxu0 %v2321
        %v6621 = vpop.f32.mrf.mxu0
        %v6622 = vadd.f32 0.0, %v6621
        %v6623 = vpop.f32.mrf.mxu0
        %v6624 = vadd.f32 0.0, %v6623
        %6625 = vdwg.mxu0
        %v6626 = vmax.f32 %v6520, 0.0
        %v6627 = vmax.f32 %v6549, 0.0
        %v6628 = vmax.f32 %v6578, 0.0
        %v6629 = vmax.f32 %v6607, 0.0
        %v6630 = vmax.f32 %v6522, 0.0
        %v6631 = vmax.f32 %v6551, 0.0
        %v6632 = vmax.f32 %v6580, 0.0
        %v6633 = vmax.f32 %v6609, 0.0
        %v6634 = vmax.f32 %v6525, 0.0
        %v6635 = vmax.f32 %v6554, 0.0
        %v6636 = vmax.f32 %v6583, 0.0
        %v6637 = vmax.f32 %v6612, 0.0
        %v6638 = vmax.f32 %v6527, 0.0
        %v6639 = vmax.f32 %v6556, 0.0
        %v6640 = vmax.f32 %v6585, 0.0
        %v6641 = vmax.f32 %v6614, 0.0
        %v6642 = vmax.f32 %v6530, 0.0
        %v6643 = vmax.f32 %v6559, 0.0
        %v6644 = vmax.f32 %v6588, 0.0
        %v6645 = vmax.f32 %v6617, 0.0
        %v6646 = vmax.f32 %v6532, 0.0
        %v6647 = vmax.f32 %v6561, 0.0
        %v6648 = vmax.f32 %v6590, 0.0
        %v6649 = vmax.f32 %v6619, 0.0
        %v6650 = vmax.f32 %v6535, 0.0
        %v6651 = vmax.f32 %v6564, 0.0
        %v6652 = vmax.f32 %v6593, 0.0
        %v6653 = vmax.f32 %v6622, 0.0
        %v6654 = vmax.f32 %v6537, 0.0
        %v6655 = vmax.f32 %v6566, 0.0
        %v6656 = vmax.f32 %v6595, 0.0
        %v6657 = vmax.f32 %v6624, 0.0
        %v6658 = vpack.c.bf16 %v6630, %v6626
        %v6659 = vpack.c.bf16 %v6631, %v6627
        %v6660 = vpack.c.bf16 %v6632, %v6628
        %v6661 = vpack.c.bf16 %v6633, %v6629
        %v6662 = vpack.c.bf16 %v6638, %v6634
        %v6663 = vpack.c.bf16 %v6639, %v6635
        %v6664 = vpack.c.bf16 %v6640, %v6636
        %v6665 = vpack.c.bf16 %v6641, %v6637
        %v6666 = vpack.c.bf16 %v6646, %v6642
        %v6667 = vpack.c.bf16 %v6647, %v6643
        %v6668 = vpack.c.bf16 %v6648, %v6644
        %v6669 = vpack.c.bf16 %v6649, %v6645
        %v6670 = vpack.c.bf16 %v6654, %v6650
        %v6671 = vpack.c.bf16 %v6655, %v6651
        %v6672 = vpack.c.bf16 %v6656, %v6652
        %v6673 = vpack.c.bf16 %v6657, %v6653
        %6674 = vmatpush.bf16.msra.mxu0 0
        %6675 = vmatpush.bf16.msra.mxu0 0
        %6676 = vmatpush.bf16.msra.mxu0 0
        %6677 = vmatpush.bf16.msra.mxu0 0
        %6678 = vmatpush.bf16.msra.mxu0 %v6670
        %6679 = vmatpush.bf16.msra.mxu0 %v6666
        %6680 = vmatpush.bf16.msra.mxu0 %v6662
        %6681 = vmatpush.bf16.msra.mxu0 %v6658
        %6682 = vmatmul.bf16.gmra.mxu0 %v2488
        %v6683 = vpop.f32.mrf.mxu0
        %v6684 = vadd.f32 0.0, %v6683
        %v6685 = vpop.f32.mrf.mxu0
        %6686 = vdwg.mxu0
        %6687 = vmatpush.bf16.msra.mxu0 0
        %6688 = vmatpush.bf16.msra.mxu0 0
        %6689 = vmatpush.bf16.msra.mxu0 0
        %6690 = vmatpush.bf16.msra.mxu0 0
        %6691 = vmatpush.bf16.msra.mxu0 %v6671
        %6692 = vmatpush.bf16.msra.mxu0 %v6667
        %6693 = vmatpush.bf16.msra.mxu0 %v6663
        %6694 = vmatpush.bf16.msra.mxu0 %v6659
        %6695 = vmatmul.bf16.gmra.mxu0 %v2488
        %v6696 = vpop.f32.mrf.mxu0
        %v6697 = vadd.f32 0.0, %v6696
        %v6698 = vpop.f32.mrf.mxu0
        %6699 = vdwg.mxu0
        %6700 = vmatpush.bf16.msra.mxu0 0
        %6701 = vmatpush.bf16.msra.mxu0 0
        %6702 = vmatpush.bf16.msra.mxu0 0
        %6703 = vmatpush.bf16.msra.mxu0 0
        %6704 = vmatpush.bf16.msra.mxu0 %v6672
        %6705 = vmatpush.bf16.msra.mxu0 %v6668
        %6706 = vmatpush.bf16.msra.mxu0 %v6664
        %6707 = vmatpush.bf16.msra.mxu0 %v6660
        %6708 = vmatmul.bf16.gmra.mxu0 %v2488
        %v6709 = vpop.f32.mrf.mxu0
        %v6710 = vadd.f32 0.0, %v6709
        %v6711 = vpop.f32.mrf.mxu0
        %6712 = vdwg.mxu0
        %6713 = vmatpush.bf16.msra.mxu0 0
        %6714 = vmatpush.bf16.msra.mxu0 0
        %6715 = vmatpush.bf16.msra.mxu0 0
        %6716 = vmatpush.bf16.msra.mxu0 0
        %6717 = vmatpush.bf16.msra.mxu0 %v6673
        %6718 = vmatpush.bf16.msra.mxu0 %v6669
        %6719 = vmatpush.bf16.msra.mxu0 %v6665
        %6720 = vmatpush.bf16.msra.mxu0 %v6661
        %6721 = vmatmul.bf16.gmra.mxu0 %v2488
        %v6722 = vpop.f32.mrf.mxu0
        %v6723 = vadd.f32 0.0, %v6722
        %v6724 = vpop.f32.mrf.mxu0
        %6725 = vdwg.mxu0
        %v6726 = vsub.f32 0.0, %v6684
        %v6727 = vsub.f32 0.0, %v6697
        %v6728 = vsub.f32 0.0, %v6710
        %v6729 = vsub.f32 0.0, %v6723
        %v6730 = vmul.f32 %v6726, 1.442695
        %v6731 = vpow.pop %v6730
        %v6732 = vmul.f32 %v6727, 1.442695
        %v6733 = vpow.pop %v6732
        %v6734 = vmul.f32 %v6728, 1.442695
        %v6735 = vpow.pop %v6734
        %v6736 = vmul.f32 %v6729, 1.442695
        %v6737 = vpow.pop %v6736
        %v6738 = vadd.f32 %v6731, 1.0
        %v6739 = vadd.f32 %v6733, 1.0
        %v6740 = vadd.f32 %v6735, 1.0
        %v6741 = vadd.f32 %v6737, 1.0
        %v6742 = vrcp.pop %v6738
        %v6743 = vrcp.pop %v6739
        %v6744 = vrcp.pop %v6740
        %v6745 = vrcp.pop %v6741
        %v6746 = vsub.f32 0.0, %v6315
        %v6747 = vsub.f32 0.0, %v6317
        %v6748 = vsub.f32 0.0, %v6319
        %v6749 = vsub.f32 0.0, %v6321
        %v6750 = vmul.f32 %v6746, %v2570
        %v6751 = vmul.f32 %v6747, %v2571
        %v6752 = vmul.f32 %v6748, %v2572
        %v6753 = vmul.f32 %v6749, %v2573
        %v6754 = vmul.f32 %v6750, 1.442695
        %v6755 = vpow.pop %v6754
        %v6756 = vmul.f32 %v6751, 1.442695
        %v6757 = vpow.pop %v6756
        %v6758 = vmul.f32 %v6752, 1.442695
        %v6759 = vpow.pop %v6758
        %v6760 = vmul.f32 %v6753, 1.442695
        %v6761 = vpow.pop %v6760
        %v6762 = vsub.f32 1.0, %v6755
        %v6763 = vsub.f32 1.0, %v6757
        %v6764 = vsub.f32 1.0, %v6759
        %v6765 = vsub.f32 1.0, %v6761
        %v6766 = vmul.f32 %v5974, %v6762
        %v6767 = vmul.f32 %v5975, %v6763
        %v6768 = vmul.f32 %v5976, %v6764
        %v6769 = vmul.f32 %v5977, %v6765
        %v6770 = vperm.slane %v6766, 0
        %v6771 = vperm.slane %v6767, 0
        %v6772 = vperm.slane %v6768, 0
        %v6773 = vperm.slane %v6769, 0
        %v6774 = vmul.f32 %v6770, %v6742
        %v6775 = vmul.f32 %v6771, %v6743
        %v6776 = vmul.f32 %v6772, %v6744
        %v6777 = vmul.f32 %v6773, %v6745
        %v6778 = vadd.f32 %v5942, %v6774
        %v6779 = vadd.f32 %v5943, %v6775
        %v6780 = vadd.f32 %v5944, %v6776
        %v6781 = vadd.f32 %v5945, %v6777
        %v6786 = vrot.slane %v5978, 3
        %v6787 = vrot.slane %v5979, 3
        %v6788 = vrot.slane %v5980, 3
        %v6789 = vrot.slane %v5981, 3
        %v6794 = vmul.f32 %v6766, %v6786
        %v6795 = vmul.f32 %v6767, %v6787
        %v6796 = vmul.f32 %v6768, %v6788
        %v6797 = vmul.f32 %v6769, %v6789
        %v6798 = vadd.f32 %v5962, %v6794
        %v6799 = vadd.f32 %v5963, %v6795
        %v6800 = vadd.f32 %v5964, %v6796
        %v6801 = vadd.f32 %v5965, %v6797
        %v6802 = vadd.f32 %v5966, %v6766
        %v6803 = vadd.f32 %v5967, %v6767
        %v6804 = vadd.f32 %v5968, %v6768
        %v6805 = vadd.f32 %v5969, %v6769
        %v6806 = vsub.f32 1.0, %v6762
        %v6807 = vsub.f32 1.0, %v6763
        %v6808 = vsub.f32 1.0, %v6764
        %v6809 = vsub.f32 1.0, %v6765
        %v6810 = vmul.f32 %v5974, %v6806
        %v6811 = vmul.f32 %v5975, %v6807
        %v6812 = vmul.f32 %v5976, %v6808
        %v6813 = vmul.f32 %v5977, %v6809
        %v6814 = vadd.f32 %v5978, %v842
        %v6815 = vadd.f32 %v5979, %v843
        %v6816 = vadd.f32 %v5980, %v844
        %v6817 = vadd.f32 %v5981, %v845
        %v6818 = vperm.slane %v6814, 3
        %v6819 = vperm.slane %v6815, 3
        %v6820 = vperm.slane %v6816, 3
        %v6821 = vperm.slane %v6817, 3
        %v6822 = vmul.f32 %v6818, %v1054
        %v6823 = vmul.f32 %v6819, %v1055
        %v6824 = vmul.f32 %v6820, %v1056
        %v6825 = vmul.f32 %v6821, %v1057
        %v6826 = vmul.f32 %v6818, %v1068
        %v6827 = vmul.f32 %v6819, %v1069
        %v6828 = vmul.f32 %v6820, %v1070
        %v6829 = vmul.f32 %v6821, %v1071
        %v6830 = vmul.f32 %v6818, %v1077
        %v6831 = vmul.f32 %v6819, %v1078
        %v6832 = vmul.f32 %v6820, %v1079
        %v6833 = vmul.f32 %v6821, %v1080
        %v6834 = vadd.f32 %v1169, %v6822
        %v6835 = vadd.f32 %v1170, %v6823
        %v6836 = vadd.f32 %v1171, %v6824
        %v6837 = vadd.f32 %v1172, %v6825
        %v6838 = vadd.f32 %v1181, %v6826
        %v6839 = vadd.f32 %v1182, %v6827
        %v6840 = vadd.f32 %v1183, %v6828
        %v6841 = vadd.f32 %v1184, %v6829
        %v6842 = vadd.f32 %v1189, %v6830
        %v6843 = vadd.f32 %v1190, %v6831
        %v6844 = vadd.f32 %v1191, %v6832
        %v6845 = vadd.f32 %v1192, %v6833
        %v6846 = vfloor.f32 %v6834
        %v6847 = vfloor.f32 %v6835
        %v6848 = vfloor.f32 %v6836
        %v6849 = vfloor.f32 %v6837
        %v6850 = vfloor.f32 %v6838
        %v6851 = vfloor.f32 %v6839
        %v6852 = vfloor.f32 %v6840
        %v6853 = vfloor.f32 %v6841
        %v6854 = vfloor.f32 %v6842
        %v6855 = vfloor.f32 %v6843
        %v6856 = vfloor.f32 %v6844
        %v6857 = vfloor.f32 %v6845
        %v6858 = vsub.f32 %v6834, %v6846
        %v6859 = vsub.f32 %v6835, %v6847
        %v6860 = vsub.f32 %v6836, %v6848
        %v6861 = vsub.f32 %v6837, %v6849
        %v6862 = vsub.f32 %v6838, %v6850
        %v6863 = vsub.f32 %v6839, %v6851
        %v6864 = vsub.f32 %v6840, %v6852
        %v6865 = vsub.f32 %v6841, %v6853
        %v6866 = vsub.f32 %v6842, %v6854
        %v6867 = vsub.f32 %v6843, %v6855
        %v6868 = vsub.f32 %v6844, %v6856
        %v6869 = vsub.f32 %v6845, %v6857
        %v6870 = vmul.f32 %v6858, 2.0
        %v6871 = vmul.f32 %v6859, 2.0
        %v6872 = vmul.f32 %v6860, 2.0
        %v6873 = vmul.f32 %v6861, 2.0
        %v6874 = vmul.f32 %v6862, 2.0
        %v6875 = vmul.f32 %v6863, 2.0
        %v6876 = vmul.f32 %v6864, 2.0
        %v6877 = vmul.f32 %v6865, 2.0
        %v6878 = vmul.f32 %v6866, 2.0
        %v6879 = vmul.f32 %v6867, 2.0
        %v6880 = vmul.f32 %v6868, 2.0
        %v6881 = vmul.f32 %v6869, 2.0
        %v6882 = vsub.f32 %v6870, 1.0
        %v6883 = vsub.f32 %v6871, 1.0
        %v6884 = vsub.f32 %v6872, 1.0
        %v6885 = vsub.f32 %v6873, 1.0
        %v6886 = vsub.f32 %v6874, 1.0
        %v6887 = vsub.f32 %v6875, 1.0
        %v6888 = vsub.f32 %v6876, 1.0
        %v6889 = vsub.f32 %v6877, 1.0
        %v6890 = vsub.f32 %v6878, 1.0
        %v6891 = vsub.f32 %v6879, 1.0
        %v6892 = vsub.f32 %v6880, 1.0
        %v6893 = vsub.f32 %v6881, 1.0
        %v6894 = vand.u32 2147483647, %v6882
        %v6895 = vand.u32 2147483647, %v6883
        %v6896 = vand.u32 2147483647, %v6884
        %v6897 = vand.u32 2147483647, %v6885
        %v6898 = vand.u32 2147483647, %v6886
        %v6899 = vand.u32 2147483647, %v6887
        %v6900 = vand.u32 2147483647, %v6888
        %v6901 = vand.u32 2147483647, %v6889
        %v6902 = vand.u32 2147483647, %v6890
        %v6903 = vand.u32 2147483647, %v6891
        %v6904 = vand.u32 2147483647, %v6892
        %v6905 = vand.u32 2147483647, %v6893
        %v6906 = vpack.c.bf16 %v6898, %v6894
        %v6907 = vpack.c.bf16 %v6899, %v6895
        %v6908 = vpack.c.bf16 %v6900, %v6896
        %v6909 = vpack.c.bf16 %v6901, %v6897
        %v6910 = vpack.c.bf16 %v6902, %v6902
        %v6911 = vpack.c.bf16 %v6903, %v6903
        %v6912 = vpack.c.bf16 %v6904, %v6904
        %v6913 = vpack.c.bf16 %v6905, %v6905
        %v6915 = vsel %vm1062, %v6910, 0
        %v6918 = vsel %vm1062, %v6911, 0
        %v6921 = vsel %vm1062, %v6912, 0
        %v6924 = vsel %vm1062, %v6913, 0
        %6926 = vmatpush.bf16.msra.mxu0 0
        %6927 = vmatpush.bf16.msra.mxu0 0
        %6928 = vmatpush.bf16.msra.mxu0 0
        %6929 = vmatpush.bf16.msra.mxu0 0
        %6930 = vmatpush.bf16.msra.mxu0 0
        %6931 = vmatpush.bf16.msra.mxu0 0
        %6932 = vmatpush.bf16.msra.mxu0 %v6915
        %6933 = vmatpush.bf16.msra.mxu0 %v6906
        %6934 = vmatmul.bf16.gmra.mxu0 %v1786
        %v6935 = vpop.f32.mrf.mxu0
        %v6936 = vadd.f32 0.0, %v6935
        %v6937 = vpop.f32.mrf.mxu0
        %v6938 = vadd.f32 0.0, %v6937
        %6939 = vmatmul.bf16.gmra.mxu0 %v1789
        %v6940 = vpop.f32.mrf.mxu0
        %v6941 = vadd.f32 0.0, %v6940
        %v6942 = vpop.f32.mrf.mxu0
        %v6943 = vadd.f32 0.0, %v6942
        %6944 = vmatmul.bf16.gmra.mxu0 %v1792
        %v6945 = vpop.f32.mrf.mxu0
        %v6946 = vadd.f32 0.0, %v6945
        %v6947 = vpop.f32.mrf.mxu0
        %v6948 = vadd.f32 0.0, %v6947
        %6949 = vmatmul.bf16.gmra.mxu0 %v1795
        %v6950 = vpop.f32.mrf.mxu0
        %v6951 = vadd.f32 0.0, %v6950
        %v6952 = vpop.f32.mrf.mxu0
        %v6953 = vadd.f32 0.0, %v6952
        %6954 = vdwg.mxu0
        %6955 = vmatpush.bf16.msra.mxu0 0
        %6956 = vmatpush.bf16.msra.mxu0 0
        %6957 = vmatpush.bf16.msra.mxu0 0
        %6958 = vmatpush.bf16.msra.mxu0 0
        %6959 = vmatpush.bf16.msra.mxu0 0
        %6960 = vmatpush.bf16.msra.mxu0 0
        %6961 = vmatpush.bf16.msra.mxu0 %v6918
        %6962 = vmatpush.bf16.msra.mxu0 %v6907
        %6963 = vmatmul.bf16.gmra.mxu0 %v1786
        %v6964 = vpop.f32.mrf.mxu0
        %v6965 = vadd.f32 0.0, %v6964
        %v6966 = vpop.f32.mrf.mxu0
        %v6967 = vadd.f32 0.0, %v6966
        %6968 = vmatmul.bf16.gmra.mxu0 %v1789
        %v6969 = vpop.f32.mrf.mxu0
        %v6970 = vadd.f32 0.0, %v6969
        %v6971 = vpop.f32.mrf.mxu0
        %v6972 = vadd.f32 0.0, %v6971
        %6973 = vmatmul.bf16.gmra.mxu0 %v1792
        %v6974 = vpop.f32.mrf.mxu0
        %v6975 = vadd.f32 0.0, %v6974
        %v6976 = vpop.f32.mrf.mxu0
        %v6977 = vadd.f32 0.0, %v6976
        %6978 = vmatmul.bf16.gmra.mxu0 %v1795
        %v6979 = vpop.f32.mrf.mxu0
        %v6980 = vadd.f32 0.0, %v6979
        %v6981 = vpop.f32.mrf.mxu0
        %v6982 = vadd.f32 0.0, %v6981
        %6983 = vdwg.mxu0
        %6984 = vmatpush.bf16.msra.mxu0 0
        %6985 = vmatpush.bf16.msra.mxu0 0
        %6986 = vmatpush.bf16.msra.mxu0 0
        %6987 = vmatpush.bf16.msra.mxu0 0
        %6988 = vmatpush.bf16.msra.mxu0 0
        %6989 = vmatpush.bf16.msra.mxu0 0
        %6990 = vmatpush.bf16.msra.mxu0 %v6921
        %6991 = vmatpush.bf16.msra.mxu0 %v6908
        %6992 = vmatmul.bf16.gmra.mxu0 %v1786
        %v6993 = vpop.f32.mrf.mxu0
        %v6994 = vadd.f32 0.0, %v6993
        %v6995 = vpop.f32.mrf.mxu0
        %v6996 = vadd.f32 0.0, %v6995
        %6997 = vmatmul.bf16.gmra.mxu0 %v1789
        %v6998 = vpop.f32.mrf.mxu0
        %v6999 = vadd.f32 0.0, %v6998
        %v7000 = vpop.f32.mrf.mxu0
        %v7001 = vadd.f32 0.0, %v7000
        %7002 = vmatmul.bf16.gmra.mxu0 %v1792
        %v7003 = vpop.f32.mrf.mxu0
        %v7004 = vadd.f32 0.0, %v7003
        %v7005 = vpop.f32.mrf.mxu0
        %v7006 = vadd.f32 0.0, %v7005
        %7007 = vmatmul.bf16.gmra.mxu0 %v1795
        %v7008 = vpop.f32.mrf.mxu0
        %v7009 = vadd.f32 0.0, %v7008
        %v7010 = vpop.f32.mrf.mxu0
        %v7011 = vadd.f32 0.0, %v7010
        %7012 = vdwg.mxu0
        %7013 = vmatpush.bf16.msra.mxu0 0
        %7014 = vmatpush.bf16.msra.mxu0 0
        %7015 = vmatpush.bf16.msra.mxu0 0
        %7016 = vmatpush.bf16.msra.mxu0 0
        %7017 = vmatpush.bf16.msra.mxu0 0
        %7018 = vmatpush.bf16.msra.mxu0 0
        %7019 = vmatpush.bf16.msra.mxu0 %v6924
        %7020 = vmatpush.bf16.msra.mxu0 %v6909
        %7021 = vmatmul.bf16.gmra.mxu0 %v1786
        %v7022 = vpop.f32.mrf.mxu0
        %v7023 = vadd.f32 0.0, %v7022
        %v7024 = vpop.f32.mrf.mxu0
        %v7025 = vadd.f32 0.0, %v7024
        %7026 = vmatmul.bf16.gmra.mxu0 %v1789
        %v7027 = vpop.f32.mrf.mxu0
        %v7028 = vadd.f32 0.0, %v7027
        %v7029 = vpop.f32.mrf.mxu0
        %v7030 = vadd.f32 0.0, %v7029
        %7031 = vmatmul.bf16.gmra.mxu0 %v1792
        %v7032 = vpop.f32.mrf.mxu0
        %v7033 = vadd.f32 0.0, %v7032
        %v7034 = vpop.f32.mrf.mxu0
        %v7035 = vadd.f32 0.0, %v7034
        %7036 = vmatmul.bf16.gmra.mxu0 %v1795
        %v7037 = vpop.f32.mrf.mxu0
        %v7038 = vadd.f32 0.0, %v7037
        %v7039 = vpop.f32.mrf.mxu0
        %v7040 = vadd.f32 0.0, %v7039
        %7041 = vdwg.mxu0
        %v7042 = vmax.f32 %v6936, 0.0
        %v7043 = vmax.f32 %v6965, 0.0
        %v7044 = vmax.f32 %v6994, 0.0
        %v7045 = vmax.f32 %v7023, 0.0
        %v7046 = vmax.f32 %v6938, 0.0
        %v7047 = vmax.f32 %v6967, 0.0
        %v7048 = vmax.f32 %v6996, 0.0
        %v7049 = vmax.f32 %v7025, 0.0
        %v7050 = vmax.f32 %v6941, 0.0
        %v7051 = vmax.f32 %v6970, 0.0
        %v7052 = vmax.f32 %v6999, 0.0
        %v7053 = vmax.f32 %v7028, 0.0
        %v7054 = vmax.f32 %v6943, 0.0
        %v7055 = vmax.f32 %v6972, 0.0
        %v7056 = vmax.f32 %v7001, 0.0
        %v7057 = vmax.f32 %v7030, 0.0
        %v7058 = vmax.f32 %v6946, 0.0
        %v7059 = vmax.f32 %v6975, 0.0
        %v7060 = vmax.f32 %v7004, 0.0
        %v7061 = vmax.f32 %v7033, 0.0
        %v7062 = vmax.f32 %v6948, 0.0
        %v7063 = vmax.f32 %v6977, 0.0
        %v7064 = vmax.f32 %v7006, 0.0
        %v7065 = vmax.f32 %v7035, 0.0
        %v7066 = vmax.f32 %v6951, 0.0
        %v7067 = vmax.f32 %v6980, 0.0
        %v7068 = vmax.f32 %v7009, 0.0
        %v7069 = vmax.f32 %v7038, 0.0
        %v7070 = vmax.f32 %v6953, 0.0
        %v7071 = vmax.f32 %v6982, 0.0
        %v7072 = vmax.f32 %v7011, 0.0
        %v7073 = vmax.f32 %v7040, 0.0
        %v7074 = vpack.c.bf16 %v7046, %v7042
        %v7075 = vpack.c.bf16 %v7047, %v7043
        %v7076 = vpack.c.bf16 %v7048, %v7044
        %v7077 = vpack.c.bf16 %v7049, %v7045
        %v7078 = vpack.c.bf16 %v7054, %v7050
        %v7079 = vpack.c.bf16 %v7055, %v7051
        %v7080 = vpack.c.bf16 %v7056, %v7052
        %v7081 = vpack.c.bf16 %v7057, %v7053
        %v7082 = vpack.c.bf16 %v7062, %v7058
        %v7083 = vpack.c.bf16 %v7063, %v7059
        %v7084 = vpack.c.bf16 %v7064, %v7060
        %v7085 = vpack.c.bf16 %v7065, %v7061
        %v7086 = vpack.c.bf16 %v7070, %v7066
        %v7087 = vpack.c.bf16 %v7071, %v7067
        %v7088 = vpack.c.bf16 %v7072, %v7068
        %v7089 = vpack.c.bf16 %v7073, %v7069
        %7090 = vmatpush.bf16.msra.mxu0 0
        %7091 = vmatpush.bf16.msra.mxu0 0
        %7092 = vmatpush.bf16.msra.mxu0 0
        %7093 = vmatpush.bf16.msra.mxu0 0
        %7094 = vmatpush.bf16.msra.mxu0 %v7086
        %7095 = vmatpush.bf16.msra.mxu0 %v7082
        %7096 = vmatpush.bf16.msra.mxu0 %v7078
        %7097 = vmatpush.bf16.msra.mxu0 %v7074
        %7098 = vmatmul.bf16.gmra.mxu0 %v1980
        %v7099 = vpop.f32.mrf.mxu0
        %v7100 = vadd.f32 0.0, %v7099
        %v7101 = vpop.f32.mrf.mxu0
        %v7102 = vadd.f32 0.0, %v7101
        %7103 = vdwg.mxu0
        %7104 = vmatpush.bf16.msra.mxu0 0
        %7105 = vmatpush.bf16.msra.mxu0 0
        %7106 = vmatpush.bf16.msra.mxu0 0
        %7107 = vmatpush.bf16.msra.mxu0 0
        %7108 = vmatpush.bf16.msra.mxu0 %v7087
        %7109 = vmatpush.bf16.msra.mxu0 %v7083
        %7110 = vmatpush.bf16.msra.mxu0 %v7079
        %7111 = vmatpush.bf16.msra.mxu0 %v7075
        %7112 = vmatmul.bf16.gmra.mxu0 %v1980
        %v7113 = vpop.f32.mrf.mxu0
        %v7114 = vadd.f32 0.0, %v7113
        %v7115 = vpop.f32.mrf.mxu0
        %v7116 = vadd.f32 0.0, %v7115
        %7117 = vdwg.mxu0
        %7118 = vmatpush.bf16.msra.mxu0 0
        %7119 = vmatpush.bf16.msra.mxu0 0
        %7120 = vmatpush.bf16.msra.mxu0 0
        %7121 = vmatpush.bf16.msra.mxu0 0
        %7122 = vmatpush.bf16.msra.mxu0 %v7088
        %7123 = vmatpush.bf16.msra.mxu0 %v7084
        %7124 = vmatpush.bf16.msra.mxu0 %v7080
        %7125 = vmatpush.bf16.msra.mxu0 %v7076
        %7126 = vmatmul.bf16.gmra.mxu0 %v1980
        %v7127 = vpop.f32.mrf.mxu0
        %v7128 = vadd.f32 0.0, %v7127
        %v7129 = vpop.f32.mrf.mxu0
        %v7130 = vadd.f32 0.0, %v7129
        %7131 = vdwg.mxu0
        %7132 = vmatpush.bf16.msra.mxu0 0
        %7133 = vmatpush.bf16.msra.mxu0 0
        %7134 = vmatpush.bf16.msra.mxu0 0
        %7135 = vmatpush.bf16.msra.mxu0 0
        %7136 = vmatpush.bf16.msra.mxu0 %v7089
        %7137 = vmatpush.bf16.msra.mxu0 %v7085
        %7138 = vmatpush.bf16.msra.mxu0 %v7081
        %7139 = vmatpush.bf16.msra.mxu0 %v7077
        %7140 = vmatmul.bf16.gmra.mxu0 %v1980
        %v7141 = vpop.f32.mrf.mxu0
        %v7142 = vadd.f32 0.0, %v7141
        %v7143 = vpop.f32.mrf.mxu0
        %v7144 = vadd.f32 0.0, %v7143
        %7145 = vdwg.mxu0
        %v7146 = vmin.f32 %v7100, 15.0
        %v7147 = vmin.f32 %v7114, 15.0
        %v7148 = vmin.f32 %v7128, 15.0
        %v7149 = vmin.f32 %v7142, 15.0
        %v7150 = vmul.f32 %v7146, 1.442695
        %v7151 = vpow.pop %v7150
        %v7152 = vmul.f32 %v7147, 1.442695
        %v7153 = vpow.pop %v7152
        %v7154 = vmul.f32 %v7148, 1.442695
        %v7155 = vpow.pop %v7154
        %v7156 = vmul.f32 %v7149, 1.442695
        %v7157 = vpow.pop %v7156
        %v7158 = vpack.c.bf16 %v7114, %v7100
        %v7159 = vpack.c.bf16 %v7142, %v7128
        %v7160 = vpack.c.bf16 %v7116, %v7102
        %v7161 = vpack.c.bf16 %v7144, %v7130
        %v7166 = vunpack.c.l.b16 %v7158
        %v7167 = vunpack.c.h.b16 %v7158
        %v7168 = vunpack.c.l.b16 %v7159
        %v7169 = vunpack.c.h.b16 %v7159
        %v7170 = vunpack.c.l.b16 %v7160
        %v7171 = vunpack.c.h.b16 %v7160
        %v7172 = vunpack.c.l.b16 %v7161
        %v7173 = vunpack.c.h.b16 %v7161
        %v7174 = vpack.c.b16 %v7170, %v7166
        %v7175 = vpack.c.b16 %v7171, %v7167
        %v7176 = vpack.c.b16 %v7172, %v7168
        %v7177 = vpack.c.b16 %v7173, %v7169
        %7182 = vmatpush.bf16.msra.mxu0 0
        %7183 = vmatpush.bf16.msra.mxu0 0
        %7184 = vmatpush.bf16.msra.mxu0 0
        %7185 = vmatpush.bf16.msra.mxu0 0
        %7186 = vmatpush.bf16.msra.mxu0 0
        %7187 = vmatpush.bf16.msra.mxu0 0
        %7188 = vmatpush.bf16.msra.mxu0 %v2086
        %7189 = vmatpush.bf16.msra.mxu0 %v7174
        %7190 = vmatmul.bf16.gmra.mxu0 %v2116
        %v7191 = vpop.f32.mrf.mxu0
        %v7192 = vadd.f32 0.0, %v7191
        %v7193 = vpop.f32.mrf.mxu0
        %v7194 = vadd.f32 0.0, %v7193
        %7195 = vmatmul.bf16.gmra.mxu0 %v2119
        %v7196 = vpop.f32.mrf.mxu0
        %v7197 = vadd.f32 0.0, %v7196
        %v7198 = vpop.f32.mrf.mxu0
        %v7199 = vadd.f32 0.0, %v7198
        %7200 = vmatmul.bf16.gmra.mxu0 %v2122
        %v7201 = vpop.f32.mrf.mxu0
        %v7202 = vadd.f32 0.0, %v7201
        %v7203 = vpop.f32.mrf.mxu0
        %v7204 = vadd.f32 0.0, %v7203
        %7205 = vmatmul.bf16.gmra.mxu0 %v2125
        %v7206 = vpop.f32.mrf.mxu0
        %v7207 = vadd.f32 0.0, %v7206
        %v7208 = vpop.f32.mrf.mxu0
        %v7209 = vadd.f32 0.0, %v7208
        %7210 = vdwg.mxu0
        %7211 = vmatpush.bf16.msra.mxu0 0
        %7212 = vmatpush.bf16.msra.mxu0 0
        %7213 = vmatpush.bf16.msra.mxu0 0
        %7214 = vmatpush.bf16.msra.mxu0 0
        %7215 = vmatpush.bf16.msra.mxu0 0
        %7216 = vmatpush.bf16.msra.mxu0 0
        %7217 = vmatpush.bf16.msra.mxu0 %v2087
        %7218 = vmatpush.bf16.msra.mxu0 %v7175
        %7219 = vmatmul.bf16.gmra.mxu0 %v2116
        %v7220 = vpop.f32.mrf.mxu0
        %v7221 = vadd.f32 0.0, %v7220
        %v7222 = vpop.f32.mrf.mxu0
        %v7223 = vadd.f32 0.0, %v7222
        %7224 = vmatmul.bf16.gmra.mxu0 %v2119
        %v7225 = vpop.f32.mrf.mxu0
        %v7226 = vadd.f32 0.0, %v7225
        %v7227 = vpop.f32.mrf.mxu0
        %v7228 = vadd.f32 0.0, %v7227
        %7229 = vmatmul.bf16.gmra.mxu0 %v2122
        %v7230 = vpop.f32.mrf.mxu0
        %v7231 = vadd.f32 0.0, %v7230
        %v7232 = vpop.f32.mrf.mxu0
        %v7233 = vadd.f32 0.0, %v7232
        %7234 = vmatmul.bf16.gmra.mxu0 %v2125
        %v7235 = vpop.f32.mrf.mxu0
        %v7236 = vadd.f32 0.0, %v7235
        %v7237 = vpop.f32.mrf.mxu0
        %v7238 = vadd.f32 0.0, %v7237
        %7239 = vdwg.mxu0
        %7240 = vmatpush.bf16.msra.mxu0 0
        %7241 = vmatpush.bf16.msra.mxu0 0
        %7242 = vmatpush.bf16.msra.mxu0 0
        %7243 = vmatpush.bf16.msra.mxu0 0
        %7244 = vmatpush.bf16.msra.mxu0 0
        %7245 = vmatpush.bf16.msra.mxu0 0
        %7246 = vmatpush.bf16.msra.mxu0 %v2088
        %7247 = vmatpush.bf16.msra.mxu0 %v7176
        %7248 = vmatmul.bf16.gmra.mxu0 %v2116
        %v7249 = vpop.f32.mrf.mxu0
        %v7250 = vadd.f32 0.0, %v7249
        %v7251 = vpop.f32.mrf.mxu0
        %v7252 = vadd.f32 0.0, %v7251
        %7253 = vmatmul.bf16.gmra.mxu0 %v2119
        %v7254 = vpop.f32.mrf.mxu0
        %v7255 = vadd.f32 0.0, %v7254
        %v7256 = vpop.f32.mrf.mxu0
        %v7257 = vadd.f32 0.0, %v7256
        %7258 = vmatmul.bf16.gmra.mxu0 %v2122
        %v7259 = vpop.f32.mrf.mxu0
        %v7260 = vadd.f32 0.0, %v7259
        %v7261 = vpop.f32.mrf.mxu0
        %v7262 = vadd.f32 0.0, %v7261
        %7263 = vmatmul.bf16.gmra.mxu0 %v2125
        %v7264 = vpop.f32.mrf.mxu0
        %v7265 = vadd.f32 0.0, %v7264
        %v7266 = vpop.f32.mrf.mxu0
        %v7267 = vadd.f32 0.0, %v7266
        %7268 = vdwg.mxu0
        %7269 = vmatpush.bf16.msra.mxu0 0
        %7270 = vmatpush.bf16.msra.mxu0 0
        %7271 = vmatpush.bf16.msra.mxu0 0
        %7272 = vmatpush.bf16.msra.mxu0 0
        %7273 = vmatpush.bf16.msra.mxu0 0
        %7274 = vmatpush.bf16.msra.mxu0 0
        %7275 = vmatpush.bf16.msra.mxu0 %v2089
        %7276 = vmatpush.bf16.msra.mxu0 %v7177
        %7277 = vmatmul.bf16.gmra.mxu0 %v2116
        %v7278 = vpop.f32.mrf.mxu0
        %v7279 = vadd.f32 0.0, %v7278
        %v7280 = vpop.f32.mrf.mxu0
        %v7281 = vadd.f32 0.0, %v7280
        %7282 = vmatmul.bf16.gmra.mxu0 %v2119
        %v7283 = vpop.f32.mrf.mxu0
        %v7284 = vadd.f32 0.0, %v7283
        %v7285 = vpop.f32.mrf.mxu0
        %v7286 = vadd.f32 0.0, %v7285
        %7287 = vmatmul.bf16.gmra.mxu0 %v2122
        %v7288 = vpop.f32.mrf.mxu0
        %v7289 = vadd.f32 0.0, %v7288
        %v7290 = vpop.f32.mrf.mxu0
        %v7291 = vadd.f32 0.0, %v7290
        %7292 = vmatmul.bf16.gmra.mxu0 %v2125
        %v7293 = vpop.f32.mrf.mxu0
        %v7294 = vadd.f32 0.0, %v7293
        %v7295 = vpop.f32.mrf.mxu0
        %v7296 = vadd.f32 0.0, %v7295
        %7297 = vdwg.mxu0
        %v7298 = vmax.f32 %v7192, 0.0
        %v7299 = vmax.f32 %v7221, 0.0
        %v7300 = vmax.f32 %v7250, 0.0
        %v7301 = vmax.f32 %v7279, 0.0
        %v7302 = vmax.f32 %v7194, 0.0
        %v7303 = vmax.f32 %v7223, 0.0
        %v7304 = vmax.f32 %v7252, 0.0
        %v7305 = vmax.f32 %v7281, 0.0
        %v7306 = vmax.f32 %v7197, 0.0
        %v7307 = vmax.f32 %v7226, 0.0
        %v7308 = vmax.f32 %v7255, 0.0
        %v7309 = vmax.f32 %v7284, 0.0
        %v7310 = vmax.f32 %v7199, 0.0
        %v7311 = vmax.f32 %v7228, 0.0
        %v7312 = vmax.f32 %v7257, 0.0
        %v7313 = vmax.f32 %v7286, 0.0
        %v7314 = vmax.f32 %v7202, 0.0
        %v7315 = vmax.f32 %v7231, 0.0
        %v7316 = vmax.f32 %v7260, 0.0
        %v7317 = vmax.f32 %v7289, 0.0
        %v7318 = vmax.f32 %v7204, 0.0
        %v7319 = vmax.f32 %v7233, 0.0
        %v7320 = vmax.f32 %v7262, 0.0
        %v7321 = vmax.f32 %v7291, 0.0
        %v7322 = vmax.f32 %v7207, 0.0
        %v7323 = vmax.f32 %v7236, 0.0
        %v7324 = vmax.f32 %v7265, 0.0
        %v7325 = vmax.f32 %v7294, 0.0
        %v7326 = vmax.f32 %v7209, 0.0
        %v7327 = vmax.f32 %v7238, 0.0
        %v7328 = vmax.f32 %v7267, 0.0
        %v7329 = vmax.f32 %v7296, 0.0
        %v7330 = vpack.c.bf16 %v7302, %v7298
        %v7331 = vpack.c.bf16 %v7303, %v7299
        %v7332 = vpack.c.bf16 %v7304, %v7300
        %v7333 = vpack.c.bf16 %v7305, %v7301
        %v7334 = vpack.c.bf16 %v7310, %v7306
        %v7335 = vpack.c.bf16 %v7311, %v7307
        %v7336 = vpack.c.bf16 %v7312, %v7308
        %v7337 = vpack.c.bf16 %v7313, %v7309
        %v7338 = vpack.c.bf16 %v7318, %v7314
        %v7339 = vpack.c.bf16 %v7319, %v7315
        %v7340 = vpack.c.bf16 %v7320, %v7316
        %v7341 = vpack.c.bf16 %v7321, %v7317
        %v7342 = vpack.c.bf16 %v7326, %v7322
        %v7343 = vpack.c.bf16 %v7327, %v7323
        %v7344 = vpack.c.bf16 %v7328, %v7324
        %v7345 = vpack.c.bf16 %v7329, %v7325
        %7346 = vmatpush.bf16.msra.mxu0 0
        %7347 = vmatpush.bf16.msra.mxu0 0
        %7348 = vmatpush.bf16.msra.mxu0 0
        %7349 = vmatpush.bf16.msra.mxu0 0
        %7350 = vmatpush.bf16.msra.mxu0 %v7342
        %7351 = vmatpush.bf16.msra.mxu0 %v7338
        %7352 = vmatpush.bf16.msra.mxu0 %v7334
        %7353 = vmatpush.bf16.msra.mxu0 %v7330
        %7354 = vmatmul.bf16.gmra.mxu0 %v2312
        %v7355 = vpop.f32.mrf.mxu0
        %v7356 = vadd.f32 0.0, %v7355
        %v7357 = vpop.f32.mrf.mxu0
        %v7358 = vadd.f32 0.0, %v7357
        %7359 = vmatmul.bf16.gmra.mxu0 %v2315
        %v7360 = vpop.f32.mrf.mxu0
        %v7361 = vadd.f32 0.0, %v7360
        %v7362 = vpop.f32.mrf.mxu0
        %v7363 = vadd.f32 0.0, %v7362
        %7364 = vmatmul.bf16.gmra.mxu0 %v2318
        %v7365 = vpop.f32.mrf.mxu0
        %v7366 = vadd.f32 0.0, %v7365
        %v7367 = vpop.f32.mrf.mxu0
        %v7368 = vadd.f32 0.0, %v7367
        %7369 = vmatmul.bf16.gmra.mxu0 %v2321
        %v7370 = vpop.f32.mrf.mxu0
        %v7371 = vadd.f32 0.0, %v7370
        %v7372 = vpop.f32.mrf.mxu0
        %v7373 = vadd.f32 0.0, %v7372
        %7374 = vdwg.mxu0
        %7375 = vmatpush.bf16.msra.mxu0 0
        %7376 = vmatpush.bf16.msra.mxu0 0
        %7377 = vmatpush.bf16.msra.mxu0 0
        %7378 = vmatpush.bf16.msra.mxu0 0
        %7379 = vmatpush.bf16.msra.mxu0 %v7343
        %7380 = vmatpush.bf16.msra.mxu0 %v7339
        %7381 = vmatpush.bf16.msra.mxu0 %v7335
        %7382 = vmatpush.bf16.msra.mxu0 %v7331
        %7383 = vmatmul.bf16.gmra.mxu0 %v2312
        %v7384 = vpop.f32.mrf.mxu0
        %v7385 = vadd.f32 0.0, %v7384
        %v7386 = vpop.f32.mrf.mxu0
        %v7387 = vadd.f32 0.0, %v7386
        %7388 = vmatmul.bf16.gmra.mxu0 %v2315
        %v7389 = vpop.f32.mrf.mxu0
        %v7390 = vadd.f32 0.0, %v7389
        %v7391 = vpop.f32.mrf.mxu0
        %v7392 = vadd.f32 0.0, %v7391
        %7393 = vmatmul.bf16.gmra.mxu0 %v2318
        %v7394 = vpop.f32.mrf.mxu0
        %v7395 = vadd.f32 0.0, %v7394
        %v7396 = vpop.f32.mrf.mxu0
        %v7397 = vadd.f32 0.0, %v7396
        %7398 = vmatmul.bf16.gmra.mxu0 %v2321
        %v7399 = vpop.f32.mrf.mxu0
        %v7400 = vadd.f32 0.0, %v7399
        %v7401 = vpop.f32.mrf.mxu0
        %v7402 = vadd.f32 0.0, %v7401
        %7403 = vdwg.mxu0
        %7404 = vmatpush.bf16.msra.mxu0 0
        %7405 = vmatpush.bf16.msra.mxu0 0
        %7406 = vmatpush.bf16.msra.mxu0 0
        %7407 = vmatpush.bf16.msra.mxu0 0
        %7408 = vmatpush.bf16.msra.mxu0 %v7344
        %7409 = vmatpush.bf16.msra.mxu0 %v7340
        %7410 = vmatpush.bf16.msra.mxu0 %v7336
        %7411 = vmatpush.bf16.msra.mxu0 %v7332
        %7412 = vmatmul.bf16.gmra.mxu0 %v2312
        %v7413 = vpop.f32.mrf.mxu0
        %v7414 = vadd.f32 0.0, %v7413
        %v7415 = vpop.f32.mrf.mxu0
        %v7416 = vadd.f32 0.0, %v7415
        %7417 = vmatmul.bf16.gmra.mxu0 %v2315
        %v7418 = vpop.f32.mrf.mxu0
        %v7419 = vadd.f32 0.0, %v7418
        %v7420 = vpop.f32.mrf.mxu0
        %v7421 = vadd.f32 0.0, %v7420
        %7422 = vmatmul.bf16.gmra.mxu0 %v2318
        %v7423 = vpop.f32.mrf.mxu0
        %v7424 = vadd.f32 0.0, %v7423
        %v7425 = vpop.f32.mrf.mxu0
        %v7426 = vadd.f32 0.0, %v7425
        %7427 = vmatmul.bf16.gmra.mxu0 %v2321
        %v7428 = vpop.f32.mrf.mxu0
        %v7429 = vadd.f32 0.0, %v7428
        %v7430 = vpop.f32.mrf.mxu0
        %v7431 = vadd.f32 0.0, %v7430
        %7432 = vdwg.mxu0
        %7433 = vmatpush.bf16.msra.mxu0 0
        %7434 = vmatpush.bf16.msra.mxu0 0
        %7435 = vmatpush.bf16.msra.mxu0 0
        %7436 = vmatpush.bf16.msra.mxu0 0
        %7437 = vmatpush.bf16.msra.mxu0 %v7345
        %7438 = vmatpush.bf16.msra.mxu0 %v7341
        %7439 = vmatpush.bf16.msra.mxu0 %v7337
        %7440 = vmatpush.bf16.msra.mxu0 %v7333
        %7441 = vmatmul.bf16.gmra.mxu0 %v2312
        %v7442 = vpop.f32.mrf.mxu0
        %v7443 = vadd.f32 0.0, %v7442
        %v7444 = vpop.f32.mrf.mxu0
        %v7445 = vadd.f32 0.0, %v7444
        %7446 = vmatmul.bf16.gmra.mxu0 %v2315
        %v7447 = vpop.f32.mrf.mxu0
        %v7448 = vadd.f32 0.0, %v7447
        %v7449 = vpop.f32.mrf.mxu0
        %v7450 = vadd.f32 0.0, %v7449
        %7451 = vmatmul.bf16.gmra.mxu0 %v2318
        %v7452 = vpop.f32.mrf.mxu0
        %v7453 = vadd.f32 0.0, %v7452
        %v7454 = vpop.f32.mrf.mxu0
        %v7455 = vadd.f32 0.0, %v7454
        %7456 = vmatmul.bf16.gmra.mxu0 %v2321
        %v7457 = vpop.f32.mrf.mxu0
        %v7458 = vadd.f32 0.0, %v7457
        %v7459 = vpop.f32.mrf.mxu0
        %v7460 = vadd.f32 0.0, %v7459
        %7461 = vdwg.mxu0
        %v7462 = vmax.f32 %v7356, 0.0
        %v7463 = vmax.f32 %v7385, 0.0
        %v7464 = vmax.f32 %v7414, 0.0
        %v7465 = vmax.f32 %v7443, 0.0
        %v7466 = vmax.f32 %v7358, 0.0
        %v7467 = vmax.f32 %v7387, 0.0
        %v7468 = vmax.f32 %v7416, 0.0
        %v7469 = vmax.f32 %v7445, 0.0
        %v7470 = vmax.f32 %v7361, 0.0
        %v7471 = vmax.f32 %v7390, 0.0
        %v7472 = vmax.f32 %v7419, 0.0
        %v7473 = vmax.f32 %v7448, 0.0
        %v7474 = vmax.f32 %v7363, 0.0
        %v7475 = vmax.f32 %v7392, 0.0
        %v7476 = vmax.f32 %v7421, 0.0
        %v7477 = vmax.f32 %v7450, 0.0
        %v7478 = vmax.f32 %v7366, 0.0
        %v7479 = vmax.f32 %v7395, 0.0
        %v7480 = vmax.f32 %v7424, 0.0
        %v7481 = vmax.f32 %v7453, 0.0
        %v7482 = vmax.f32 %v7368, 0.0
        %v7483 = vmax.f32 %v7397, 0.0
        %v7484 = vmax.f32 %v7426, 0.0
        %v7485 = vmax.f32 %v7455, 0.0
        %v7486 = vmax.f32 %v7371, 0.0
        %v7487 = vmax.f32 %v7400, 0.0
        %v7488 = vmax.f32 %v7429, 0.0
        %v7489 = vmax.f32 %v7458, 0.0
        %v7490 = vmax.f32 %v7373, 0.0
        %v7491 = vmax.f32 %v7402, 0.0
        %v7492 = vmax.f32 %v7431, 0.0
        %v7493 = vmax.f32 %v7460, 0.0
        %v7494 = vpack.c.bf16 %v7466, %v7462
        %v7495 = vpack.c.bf16 %v7467, %v7463
        %v7496 = vpack.c.bf16 %v7468, %v7464
        %v7497 = vpack.c.bf16 %v7469, %v7465
        %v7498 = vpack.c.bf16 %v7474, %v7470
        %v7499 = vpack.c.bf16 %v7475, %v7471
        %v7500 = vpack.c.bf16 %v7476, %v7472
        %v7501 = vpack.c.bf16 %v7477, %v7473
        %v7502 = vpack.c.bf16 %v7482, %v7478
        %v7503 = vpack.c.bf16 %v7483, %v7479
        %v7504 = vpack.c.bf16 %v7484, %v7480
        %v7505 = vpack.c.bf16 %v7485, %v7481
        %v7506 = vpack.c.bf16 %v7490, %v7486
        %v7507 = vpack.c.bf16 %v7491, %v7487
        %v7508 = vpack.c.bf16 %v7492, %v7488
        %v7509 = vpack.c.bf16 %v7493, %v7489
        %7510 = vmatpush.bf16.msra.mxu0 0
        %7511 = vmatpush.bf16.msra.mxu0 0
        %7512 = vmatpush.bf16.msra.mxu0 0
        %7513 = vmatpush.bf16.msra.mxu0 0
        %7514 = vmatpush.bf16.msra.mxu0 %v7506
        %7515 = vmatpush.bf16.msra.mxu0 %v7502
        %7516 = vmatpush.bf16.msra.mxu0 %v7498
        %7517 = vmatpush.bf16.msra.mxu0 %v7494
        %7518 = vmatmul.bf16.gmra.mxu0 %v2488
        %v7519 = vpop.f32.mrf.mxu0
        %v7520 = vadd.f32 0.0, %v7519
        %v7521 = vpop.f32.mrf.mxu0
        %7522 = vdwg.mxu0
        %7523 = vmatpush.bf16.msra.mxu0 0
        %7524 = vmatpush.bf16.msra.mxu0 0
        %7525 = vmatpush.bf16.msra.mxu0 0
        %7526 = vmatpush.bf16.msra.mxu0 0
        %7527 = vmatpush.bf16.msra.mxu0 %v7507
        %7528 = vmatpush.bf16.msra.mxu0 %v7503
        %7529 = vmatpush.bf16.msra.mxu0 %v7499
        %7530 = vmatpush.bf16.msra.mxu0 %v7495
        %7531 = vmatmul.bf16.gmra.mxu0 %v2488
        %v7532 = vpop.f32.mrf.mxu0
        %v7533 = vadd.f32 0.0, %v7532
        %v7534 = vpop.f32.mrf.mxu0
        %7535 = vdwg.mxu0
        %7536 = vmatpush.bf16.msra.mxu0 0
        %7537 = vmatpush.bf16.msra.mxu0 0
        %7538 = vmatpush.bf16.msra.mxu0 0
        %7539 = vmatpush.bf16.msra.mxu0 0
        %7540 = vmatpush.bf16.msra.mxu0 %v7508
        %7541 = vmatpush.bf16.msra.mxu0 %v7504
        %7542 = vmatpush.bf16.msra.mxu0 %v7500
        %7543 = vmatpush.bf16.msra.mxu0 %v7496
        %7544 = vmatmul.bf16.gmra.mxu0 %v2488
        %v7545 = vpop.f32.mrf.mxu0
        %v7546 = vadd.f32 0.0, %v7545
        %v7547 = vpop.f32.mrf.mxu0
        %7548 = vdwg.mxu0
        %7549 = vmatpush.bf16.msra.mxu0 0
        %7550 = vmatpush.bf16.msra.mxu0 0
        %7551 = vmatpush.bf16.msra.mxu0 0
        %7552 = vmatpush.bf16.msra.mxu0 0
        %7553 = vmatpush.bf16.msra.mxu0 %v7509
        %7554 = vmatpush.bf16.msra.mxu0 %v7505
        %7555 = vmatpush.bf16.msra.mxu0 %v7501
        %7556 = vmatpush.bf16.msra.mxu0 %v7497
        %7557 = vmatmul.bf16.gmra.mxu0 %v2488
        %v7558 = vpop.f32.mrf.mxu0
        %v7559 = vadd.f32 0.0, %v7558
        %v7560 = vpop.f32.mrf.mxu0
        %7561 = vdwg.mxu0
        %v7562 = vsub.f32 0.0, %v7520
        %v7563 = vsub.f32 0.0, %v7533
        %v7564 = vsub.f32 0.0, %v7546
        %v7565 = vsub.f32 0.0, %v7559
        %v7566 = vmul.f32 %v7562, 1.442695
        %v7567 = vpow.pop %v7566
        %v7568 = vmul.f32 %v7563, 1.442695
        %v7569 = vpow.pop %v7568
        %v7570 = vmul.f32 %v7564, 1.442695
        %v7571 = vpow.pop %v7570
        %v7572 = vmul.f32 %v7565, 1.442695
        %v7573 = vpow.pop %v7572
        %v7574 = vadd.f32 %v7567, 1.0
        %v7575 = vadd.f32 %v7569, 1.0
        %v7576 = vadd.f32 %v7571, 1.0
        %v7577 = vadd.f32 %v7573, 1.0
        %v7578 = vrcp.pop %v7574
        %v7579 = vrcp.pop %v7575
        %v7580 = vrcp.pop %v7576
        %v7581 = vrcp.pop %v7577
        %v7582 = vsub.f32 0.0, %v7151
        %v7583 = vsub.f32 0.0, %v7153
        %v7584 = vsub.f32 0.0, %v7155
        %v7585 = vsub.f32 0.0, %v7157
        %v7586 = vmul.f32 %v7582, %v2570
        %v7587 = vmul.f32 %v7583, %v2571
        %v7588 = vmul.f32 %v7584, %v2572
        %v7589 = vmul.f32 %v7585, %v2573
        %v7590 = vmul.f32 %v7586, 1.442695
        %v7591 = vpow.pop %v7590
        %v7592 = vmul.f32 %v7587, 1.442695
        %v7593 = vpow.pop %v7592
        %v7594 = vmul.f32 %v7588, 1.442695
        %v7595 = vpow.pop %v7594
        %v7596 = vmul.f32 %v7589, 1.442695
        %v7597 = vpow.pop %v7596
        %v7598 = vsub.f32 1.0, %v7591
        %v7599 = vsub.f32 1.0, %v7593
        %v7600 = vsub.f32 1.0, %v7595
        %v7601 = vsub.f32 1.0, %v7597
        %v7602 = vmul.f32 %v6810, %v7598
        %v7603 = vmul.f32 %v6811, %v7599
        %v7604 = vmul.f32 %v6812, %v7600
        %v7605 = vmul.f32 %v6813, %v7601
        %v7606 = vperm.slane %v7602, 0
        %v7607 = vperm.slane %v7603, 0
        %v7608 = vperm.slane %v7604, 0
        %v7609 = vperm.slane %v7605, 0
        %v7610 = vmul.f32 %v7606, %v7578
        %v7611 = vmul.f32 %v7607, %v7579
        %v7612 = vmul.f32 %v7608, %v7580
        %v7613 = vmul.f32 %v7609, %v7581
        %v7614 = vadd.f32 %v6778, %v7610
        %v7615 = vadd.f32 %v6779, %v7611
        %v7616 = vadd.f32 %v6780, %v7612
        %v7617 = vadd.f32 %v6781, %v7613
        %v7622 = vrot.slane %v6814, 3
        %v7623 = vrot.slane %v6815, 3
        %v7624 = vrot.slane %v6816, 3
        %v7625 = vrot.slane %v6817, 3
        %v7630 = vmul.f32 %v7602, %v7622
        %v7631 = vmul.f32 %v7603, %v7623
        %v7632 = vmul.f32 %v7604, %v7624
        %v7633 = vmul.f32 %v7605, %v7625
        %v7634 = vadd.f32 %v6798, %v7630
        %v7635 = vadd.f32 %v6799, %v7631
        %v7636 = vadd.f32 %v6800, %v7632
        %v7637 = vadd.f32 %v6801, %v7633
        %v7638 = vadd.f32 %v6802, %v7602
        %v7639 = vadd.f32 %v6803, %v7603
        %v7640 = vadd.f32 %v6804, %v7604
        %v7641 = vadd.f32 %v6805, %v7605
        %v7642 = vsub.f32 1.0, %v7598
        %v7643 = vsub.f32 1.0, %v7599
        %v7644 = vsub.f32 1.0, %v7600
        %v7645 = vsub.f32 1.0, %v7601
        %v7646 = vmul.f32 %v6810, %v7642
        %v7647 = vmul.f32 %v6811, %v7643
        %v7648 = vmul.f32 %v6812, %v7644
        %v7649 = vmul.f32 %v6813, %v7645
        %v7650 = vadd.f32 %v6814, %v842
        %v7651 = vadd.f32 %v6815, %v843
        %v7652 = vadd.f32 %v6816, %v844
        %v7653 = vadd.f32 %v6817, %v845
        %v7654 = vperm.slane %v7650, 3
        %v7655 = vperm.slane %v7651, 3
        %v7656 = vperm.slane %v7652, 3
        %v7657 = vperm.slane %v7653, 3
        %v7658 = vmul.f32 %v7654, %v1054
        %v7659 = vmul.f32 %v7655, %v1055
        %v7660 = vmul.f32 %v7656, %v1056
        %v7661 = vmul.f32 %v7657, %v1057
        %v7662 = vmul.f32 %v7654, %v1068
        %v7663 = vmul.f32 %v7655, %v1069
        %v7664 = vmul.f32 %v7656, %v1070
        %v7665 = vmul.f32 %v7657, %v1071
        %v7666 = vmul.f32 %v7654, %v1077
        %v7667 = vmul.f32 %v7655, %v1078
        %v7668 = vmul.f32 %v7656, %v1079
        %v7669 = vmul.f32 %v7657, %v1080
        %v7670 = vadd.f32 %v1169, %v7658
        %v7671 = vadd.f32 %v1170, %v7659
        %v7672 = vadd.f32 %v1171, %v7660
        %v7673 = vadd.f32 %v1172, %v7661
        %v7674 = vadd.f32 %v1181, %v7662
        %v7675 = vadd.f32 %v1182, %v7663
        %v7676 = vadd.f32 %v1183, %v7664
        %v7677 = vadd.f32 %v1184, %v7665
        %v7678 = vadd.f32 %v1189, %v7666
        %v7679 = vadd.f32 %v1190, %v7667
        %v7680 = vadd.f32 %v1191, %v7668
        %v7681 = vadd.f32 %v1192, %v7669
        %v7682 = vfloor.f32 %v7670
        %v7683 = vfloor.f32 %v7671
        %v7684 = vfloor.f32 %v7672
        %v7685 = vfloor.f32 %v7673
        %v7686 = vfloor.f32 %v7674
        %v7687 = vfloor.f32 %v7675
        %v7688 = vfloor.f32 %v7676
        %v7689 = vfloor.f32 %v7677
        %v7690 = vfloor.f32 %v7678
        %v7691 = vfloor.f32 %v7679
        %v7692 = vfloor.f32 %v7680
        %v7693 = vfloor.f32 %v7681
        %v7694 = vsub.f32 %v7670, %v7682
        %v7695 = vsub.f32 %v7671, %v7683
        %v7696 = vsub.f32 %v7672, %v7684
        %v7697 = vsub.f32 %v7673, %v7685
        %v7698 = vsub.f32 %v7674, %v7686
        %v7699 = vsub.f32 %v7675, %v7687
        %v7700 = vsub.f32 %v7676, %v7688
        %v7701 = vsub.f32 %v7677, %v7689
        %v7702 = vsub.f32 %v7678, %v7690
        %v7703 = vsub.f32 %v7679, %v7691
        %v7704 = vsub.f32 %v7680, %v7692
        %v7705 = vsub.f32 %v7681, %v7693
        %v7706 = vmul.f32 %v7694, 2.0
        %v7707 = vmul.f32 %v7695, 2.0
        %v7708 = vmul.f32 %v7696, 2.0
        %v7709 = vmul.f32 %v7697, 2.0
        %v7710 = vmul.f32 %v7698, 2.0
        %v7711 = vmul.f32 %v7699, 2.0
        %v7712 = vmul.f32 %v7700, 2.0
        %v7713 = vmul.f32 %v7701, 2.0
        %v7714 = vmul.f32 %v7702, 2.0
        %v7715 = vmul.f32 %v7703, 2.0
        %v7716 = vmul.f32 %v7704, 2.0
        %v7717 = vmul.f32 %v7705, 2.0
        %v7718 = vsub.f32 %v7706, 1.0
        %v7719 = vsub.f32 %v7707, 1.0
        %v7720 = vsub.f32 %v7708, 1.0
        %v7721 = vsub.f32 %v7709, 1.0
        %v7722 = vsub.f32 %v7710, 1.0
        %v7723 = vsub.f32 %v7711, 1.0
        %v7724 = vsub.f32 %v7712, 1.0
        %v7725 = vsub.f32 %v7713, 1.0
        %v7726 = vsub.f32 %v7714, 1.0
        %v7727 = vsub.f32 %v7715, 1.0
        %v7728 = vsub.f32 %v7716, 1.0
        %v7729 = vsub.f32 %v7717, 1.0
        %v7730 = vand.u32 2147483647, %v7718
        %v7731 = vand.u32 2147483647, %v7719
        %v7732 = vand.u32 2147483647, %v7720
        %v7733 = vand.u32 2147483647, %v7721
        %v7734 = vand.u32 2147483647, %v7722
        %v7735 = vand.u32 2147483647, %v7723
        %v7736 = vand.u32 2147483647, %v7724
        %v7737 = vand.u32 2147483647, %v7725
        %v7738 = vand.u32 2147483647, %v7726
        %v7739 = vand.u32 2147483647, %v7727
        %v7740 = vand.u32 2147483647, %v7728
        %v7741 = vand.u32 2147483647, %v7729
        %v7742 = vpack.c.bf16 %v7734, %v7730
        %v7743 = vpack.c.bf16 %v7735, %v7731
        %v7744 = vpack.c.bf16 %v7736, %v7732
        %v7745 = vpack.c.bf16 %v7737, %v7733
        %v7746 = vpack.c.bf16 %v7738, %v7738
        %v7747 = vpack.c.bf16 %v7739, %v7739
        %v7748 = vpack.c.bf16 %v7740, %v7740
        %v7749 = vpack.c.bf16 %v7741, %v7741
        %v7751 = vsel %vm1062, %v7746, 0
        %v7754 = vsel %vm1062, %v7747, 0
        %v7757 = vsel %vm1062, %v7748, 0
        %v7760 = vsel %vm1062, %v7749, 0
        %7762 = vmatpush.bf16.msra.mxu0 0
        %7763 = vmatpush.bf16.msra.mxu0 0
        %7764 = vmatpush.bf16.msra.mxu0 0
        %7765 = vmatpush.bf16.msra.mxu0 0
        %7766 = vmatpush.bf16.msra.mxu0 0
        %7767 = vmatpush.bf16.msra.mxu0 0
        %7768 = vmatpush.bf16.msra.mxu0 %v7751
        %7769 = vmatpush.bf16.msra.mxu0 %v7742
        %7770 = vmatmul.bf16.gmra.mxu0 %v1786
        %v7771 = vpop.f32.mrf.mxu0
        %v7772 = vadd.f32 0.0, %v7771
        %v7773 = vpop.f32.mrf.mxu0
        %v7774 = vadd.f32 0.0, %v7773
        %7775 = vmatmul.bf16.gmra.mxu0 %v1789
        %v7776 = vpop.f32.mrf.mxu0
        %v7777 = vadd.f32 0.0, %v7776
        %v7778 = vpop.f32.mrf.mxu0
        %v7779 = vadd.f32 0.0, %v7778
        %7780 = vmatmul.bf16.gmra.mxu0 %v1792
        %v7781 = vpop.f32.mrf.mxu0
        %v7782 = vadd.f32 0.0, %v7781
        %v7783 = vpop.f32.mrf.mxu0
        %v7784 = vadd.f32 0.0, %v7783
        %7785 = vmatmul.bf16.gmra.mxu0 %v1795
        %v7786 = vpop.f32.mrf.mxu0
        %v7787 = vadd.f32 0.0, %v7786
        %v7788 = vpop.f32.mrf.mxu0
        %v7789 = vadd.f32 0.0, %v7788
        %7790 = vdwg.mxu0
        %7791 = vmatpush.bf16.msra.mxu0 0
        %7792 = vmatpush.bf16.msra.mxu0 0
        %7793 = vmatpush.bf16.msra.mxu0 0
        %7794 = vmatpush.bf16.msra.mxu0 0
        %7795 = vmatpush.bf16.msra.mxu0 0
        %7796 = vmatpush.bf16.msra.mxu0 0
        %7797 = vmatpush.bf16.msra.mxu0 %v7754
        %7798 = vmatpush.bf16.msra.mxu0 %v7743
        %7799 = vmatmul.bf16.gmra.mxu0 %v1786
        %v7800 = vpop.f32.mrf.mxu0
        %v7801 = vadd.f32 0.0, %v7800
        %v7802 = vpop.f32.mrf.mxu0
        %v7803 = vadd.f32 0.0, %v7802
        %7804 = vmatmul.bf16.gmra.mxu0 %v1789
        %v7805 = vpop.f32.mrf.mxu0
        %v7806 = vadd.f32 0.0, %v7805
        %v7807 = vpop.f32.mrf.mxu0
        %v7808 = vadd.f32 0.0, %v7807
        %7809 = vmatmul.bf16.gmra.mxu0 %v1792
        %v7810 = vpop.f32.mrf.mxu0
        %v7811 = vadd.f32 0.0, %v7810
        %v7812 = vpop.f32.mrf.mxu0
        %v7813 = vadd.f32 0.0, %v7812
        %7814 = vmatmul.bf16.gmra.mxu0 %v1795
        %v7815 = vpop.f32.mrf.mxu0
        %v7816 = vadd.f32 0.0, %v7815
        %v7817 = vpop.f32.mrf.mxu0
        %v7818 = vadd.f32 0.0, %v7817
        %7819 = vdwg.mxu0
        %7820 = vmatpush.bf16.msra.mxu0 0
        %7821 = vmatpush.bf16.msra.mxu0 0
        %7822 = vmatpush.bf16.msra.mxu0 0
        %7823 = vmatpush.bf16.msra.mxu0 0
        %7824 = vmatpush.bf16.msra.mxu0 0
        %7825 = vmatpush.bf16.msra.mxu0 0
        %7826 = vmatpush.bf16.msra.mxu0 %v7757
        %7827 = vmatpush.bf16.msra.mxu0 %v7744
        %7828 = vmatmul.bf16.gmra.mxu0 %v1786
        %v7829 = vpop.f32.mrf.mxu0
        %v7830 = vadd.f32 0.0, %v7829
        %v7831 = vpop.f32.mrf.mxu0
        %v7832 = vadd.f32 0.0, %v7831
        %7833 = vmatmul.bf16.gmra.mxu0 %v1789
        %v7834 = vpop.f32.mrf.mxu0
        %v7835 = vadd.f32 0.0, %v7834
        %v7836 = vpop.f32.mrf.mxu0
        %v7837 = vadd.f32 0.0, %v7836
        %7838 = vmatmul.bf16.gmra.mxu0 %v1792
        %v7839 = vpop.f32.mrf.mxu0
        %v7840 = vadd.f32 0.0, %v7839
        %v7841 = vpop.f32.mrf.mxu0
        %v7842 = vadd.f32 0.0, %v7841
        %7843 = vmatmul.bf16.gmra.mxu0 %v1795
        %v7844 = vpop.f32.mrf.mxu0
        %v7845 = vadd.f32 0.0, %v7844
        %v7846 = vpop.f32.mrf.mxu0
        %v7847 = vadd.f32 0.0, %v7846
        %7848 = vdwg.mxu0
        %7849 = vmatpush.bf16.msra.mxu0 0
        %7850 = vmatpush.bf16.msra.mxu0 0
        %7851 = vmatpush.bf16.msra.mxu0 0
        %7852 = vmatpush.bf16.msra.mxu0 0
        %7853 = vmatpush.bf16.msra.mxu0 0
        %7854 = vmatpush.bf16.msra.mxu0 0
        %7855 = vmatpush.bf16.msra.mxu0 %v7760
        %7856 = vmatpush.bf16.msra.mxu0 %v7745
        %7857 = vmatmul.bf16.gmra.mxu0 %v1786
        %v7858 = vpop.f32.mrf.mxu0
        %v7859 = vadd.f32 0.0, %v7858
        %v7860 = vpop.f32.mrf.mxu0
        %v7861 = vadd.f32 0.0, %v7860
        %7862 = vmatmul.bf16.gmra.mxu0 %v1789
        %v7863 = vpop.f32.mrf.mxu0
        %v7864 = vadd.f32 0.0, %v7863
        %v7865 = vpop.f32.mrf.mxu0
        %v7866 = vadd.f32 0.0, %v7865
        %7867 = vmatmul.bf16.gmra.mxu0 %v1792
        %v7868 = vpop.f32.mrf.mxu0
        %v7869 = vadd.f32 0.0, %v7868
        %v7870 = vpop.f32.mrf.mxu0
        %v7871 = vadd.f32 0.0, %v7870
        %7872 = vmatmul.bf16.gmra.mxu0 %v1795
        %v7873 = vpop.f32.mrf.mxu0
        %v7874 = vadd.f32 0.0, %v7873
        %v7875 = vpop.f32.mrf.mxu0
        %v7876 = vadd.f32 0.0, %v7875
        %7877 = vdwg.mxu0
        %v7878 = vmax.f32 %v7772, 0.0
        %v7879 = vmax.f32 %v7801, 0.0
        %v7880 = vmax.f32 %v7830, 0.0
        %v7881 = vmax.f32 %v7859, 0.0
        %v7882 = vmax.f32 %v7774, 0.0
        %v7883 = vmax.f32 %v7803, 0.0
        %v7884 = vmax.f32 %v7832, 0.0
        %v7885 = vmax.f32 %v7861, 0.0
        %v7886 = vmax.f32 %v7777, 0.0
        %v7887 = vmax.f32 %v7806, 0.0
        %v7888 = vmax.f32 %v7835, 0.0
        %v7889 = vmax.f32 %v7864, 0.0
        %v7890 = vmax.f32 %v7779, 0.0
        %v7891 = vmax.f32 %v7808, 0.0
        %v7892 = vmax.f32 %v7837, 0.0
        %v7893 = vmax.f32 %v7866, 0.0
        %v7894 = vmax.f32 %v7782, 0.0
        %v7895 = vmax.f32 %v7811, 0.0
        %v7896 = vmax.f32 %v7840, 0.0
        %v7897 = vmax.f32 %v7869, 0.0
        %v7898 = vmax.f32 %v7784, 0.0
        %v7899 = vmax.f32 %v7813, 0.0
        %v7900 = vmax.f32 %v7842, 0.0
        %v7901 = vmax.f32 %v7871, 0.0
        %v7902 = vmax.f32 %v7787, 0.0
        %v7903 = vmax.f32 %v7816, 0.0
        %v7904 = vmax.f32 %v7845, 0.0
        %v7905 = vmax.f32 %v7874, 0.0
        %v7906 = vmax.f32 %v7789, 0.0
        %v7907 = vmax.f32 %v7818, 0.0
        %v7908 = vmax.f32 %v7847, 0.0
        %v7909 = vmax.f32 %v7876, 0.0
        %v7910 = vpack.c.bf16 %v7882, %v7878
        %v7911 = vpack.c.bf16 %v7883, %v7879
        %v7912 = vpack.c.bf16 %v7884, %v7880
        %v7913 = vpack.c.bf16 %v7885, %v7881
        %v7914 = vpack.c.bf16 %v7890, %v7886
        %v7915 = vpack.c.bf16 %v7891, %v7887
        %v7916 = vpack.c.bf16 %v7892, %v7888
        %v7917 = vpack.c.bf16 %v7893, %v7889
        %v7918 = vpack.c.bf16 %v7898, %v7894
        %v7919 = vpack.c.bf16 %v7899, %v7895
        %v7920 = vpack.c.bf16 %v7900, %v7896
        %v7921 = vpack.c.bf16 %v7901, %v7897
        %v7922 = vpack.c.bf16 %v7906, %v7902
        %v7923 = vpack.c.bf16 %v7907, %v7903
        %v7924 = vpack.c.bf16 %v7908, %v7904
        %v7925 = vpack.c.bf16 %v7909, %v7905
        %7926 = vmatpush.bf16.msra.mxu0 0
        %7927 = vmatpush.bf16.msra.mxu0 0
        %7928 = vmatpush.bf16.msra.mxu0 0
        %7929 = vmatpush.bf16.msra.mxu0 0
        %7930 = vmatpush.bf16.msra.mxu0 %v7922
        %7931 = vmatpush.bf16.msra.mxu0 %v7918
        %7932 = vmatpush.bf16.msra.mxu0 %v7914
        %7933 = vmatpush.bf16.msra.mxu0 %v7910
        %7934 = vmatmul.bf16.gmra.mxu0 %v1980
        %v7935 = vpop.f32.mrf.mxu0
        %v7936 = vadd.f32 0.0, %v7935
        %v7937 = vpop.f32.mrf.mxu0
        %v7938 = vadd.f32 0.0, %v7937
        %7939 = vdwg.mxu0
        %7940 = vmatpush.bf16.msra.mxu0 0
        %7941 = vmatpush.bf16.msra.mxu0 0
        %7942 = vmatpush.bf16.msra.mxu0 0
        %7943 = vmatpush.bf16.msra.mxu0 0
        %7944 = vmatpush.bf16.msra.mxu0 %v7923
        %7945 = vmatpush.bf16.msra.mxu0 %v7919
        %7946 = vmatpush.bf16.msra.mxu0 %v7915
        %7947 = vmatpush.bf16.msra.mxu0 %v7911
        %7948 = vmatmul.bf16.gmra.mxu0 %v1980
        %v7949 = vpop.f32.mrf.mxu0
        %v7950 = vadd.f32 0.0, %v7949
        %v7951 = vpop.f32.mrf.mxu0
        %v7952 = vadd.f32 0.0, %v7951
        %7953 = vdwg.mxu0
        %7954 = vmatpush.bf16.msra.mxu0 0
        %7955 = vmatpush.bf16.msra.mxu0 0
        %7956 = vmatpush.bf16.msra.mxu0 0
        %7957 = vmatpush.bf16.msra.mxu0 0
        %7958 = vmatpush.bf16.msra.mxu0 %v7924
        %7959 = vmatpush.bf16.msra.mxu0 %v7920
        %7960 = vmatpush.bf16.msra.mxu0 %v7916
        %7961 = vmatpush.bf16.msra.mxu0 %v7912
        %7962 = vmatmul.bf16.gmra.mxu0 %v1980
        %v7963 = vpop.f32.mrf.mxu0
        %v7964 = vadd.f32 0.0, %v7963
        %v7965 = vpop.f32.mrf.mxu0
        %v7966 = vadd.f32 0.0, %v7965
        %7967 = vdwg.mxu0
        %7968 = vmatpush.bf16.msra.mxu0 0
        %7969 = vmatpush.bf16.msra.mxu0 0
        %7970 = vmatpush.bf16.msra.mxu0 0
        %7971 = vmatpush.bf16.msra.mxu0 0
        %7972 = vmatpush.bf16.msra.mxu0 %v7925
        %7973 = vmatpush.bf16.msra.mxu0 %v7921
        %7974 = vmatpush.bf16.msra.mxu0 %v7917
        %7975 = vmatpush.bf16.msra.mxu0 %v7913
        %7976 = vmatmul.bf16.gmra.mxu0 %v1980
        %v7977 = vpop.f32.mrf.mxu0
        %v7978 = vadd.f32 0.0, %v7977
        %v7979 = vpop.f32.mrf.mxu0
        %v7980 = vadd.f32 0.0, %v7979
        %7981 = vdwg.mxu0
        %v7982 = vmin.f32 %v7936, 15.0
        %v7983 = vmin.f32 %v7950, 15.0
        %v7984 = vmin.f32 %v7964, 15.0
        %v7985 = vmin.f32 %v7978, 15.0
        %v7986 = vmul.f32 %v7982, 1.442695
        %v7987 = vpow.pop %v7986
        %v7988 = vmul.f32 %v7983, 1.442695
        %v7989 = vpow.pop %v7988
        %v7990 = vmul.f32 %v7984, 1.442695
        %v7991 = vpow.pop %v7990
        %v7992 = vmul.f32 %v7985, 1.442695
        %v7993 = vpow.pop %v7992
        %v7994 = vpack.c.bf16 %v7950, %v7936
        %v7995 = vpack.c.bf16 %v7978, %v7964
        %v7996 = vpack.c.bf16 %v7952, %v7938
        %v7997 = vpack.c.bf16 %v7980, %v7966
        %v8002 = vunpack.c.l.b16 %v7994
        %v8003 = vunpack.c.h.b16 %v7994
        %v8004 = vunpack.c.l.b16 %v7995
        %v8005 = vunpack.c.h.b16 %v7995
        %v8006 = vunpack.c.l.b16 %v7996
        %v8007 = vunpack.c.h.b16 %v7996
        %v8008 = vunpack.c.l.b16 %v7997
        %v8009 = vunpack.c.h.b16 %v7997
        %v8010 = vpack.c.b16 %v8006, %v8002
        %v8011 = vpack.c.b16 %v8007, %v8003
        %v8012 = vpack.c.b16 %v8008, %v8004
        %v8013 = vpack.c.b16 %v8009, %v8005
        %8018 = vmatpush.bf16.msra.mxu0 0
        %8019 = vmatpush.bf16.msra.mxu0 0
        %8020 = vmatpush.bf16.msra.mxu0 0
        %8021 = vmatpush.bf16.msra.mxu0 0
        %8022 = vmatpush.bf16.msra.mxu0 0
        %8023 = vmatpush.bf16.msra.mxu0 0
        %8024 = vmatpush.bf16.msra.mxu0 %v2086
        %8025 = vmatpush.bf16.msra.mxu0 %v8010
        %8026 = vmatmul.bf16.gmra.mxu0 %v2116
        %v8027 = vpop.f32.mrf.mxu0
        %v8028 = vadd.f32 0.0, %v8027
        %v8029 = vpop.f32.mrf.mxu0
        %v8030 = vadd.f32 0.0, %v8029
        %8031 = vmatmul.bf16.gmra.mxu0 %v2119
        %v8032 = vpop.f32.mrf.mxu0
        %v8033 = vadd.f32 0.0, %v8032
        %v8034 = vpop.f32.mrf.mxu0
        %v8035 = vadd.f32 0.0, %v8034
        %8036 = vmatmul.bf16.gmra.mxu0 %v2122
        %v8037 = vpop.f32.mrf.mxu0
        %v8038 = vadd.f32 0.0, %v8037
        %v8039 = vpop.f32.mrf.mxu0
        %v8040 = vadd.f32 0.0, %v8039
        %8041 = vmatmul.bf16.gmra.mxu0 %v2125
        %v8042 = vpop.f32.mrf.mxu0
        %v8043 = vadd.f32 0.0, %v8042
        %v8044 = vpop.f32.mrf.mxu0
        %v8045 = vadd.f32 0.0, %v8044
        %8046 = vdwg.mxu0
        %8047 = vmatpush.bf16.msra.mxu0 0
        %8048 = vmatpush.bf16.msra.mxu0 0
        %8049 = vmatpush.bf16.msra.mxu0 0
        %8050 = vmatpush.bf16.msra.mxu0 0
        %8051 = vmatpush.bf16.msra.mxu0 0
        %8052 = vmatpush.bf16.msra.mxu0 0
        %8053 = vmatpush.bf16.msra.mxu0 %v2087
        %8054 = vmatpush.bf16.msra.mxu0 %v8011
        %8055 = vmatmul.bf16.gmra.mxu0 %v2116
        %v8056 = vpop.f32.mrf.mxu0
        %v8057 = vadd.f32 0.0, %v8056
        %v8058 = vpop.f32.mrf.mxu0
        %v8059 = vadd.f32 0.0, %v8058
        %8060 = vmatmul.bf16.gmra.mxu0 %v2119
        %v8061 = vpop.f32.mrf.mxu0
        %v8062 = vadd.f32 0.0, %v8061
        %v8063 = vpop.f32.mrf.mxu0
        %v8064 = vadd.f32 0.0, %v8063
        %8065 = vmatmul.bf16.gmra.mxu0 %v2122
        %v8066 = vpop.f32.mrf.mxu0
        %v8067 = vadd.f32 0.0, %v8066
        %v8068 = vpop.f32.mrf.mxu0
        %v8069 = vadd.f32 0.0, %v8068
        %8070 = vmatmul.bf16.gmra.mxu0 %v2125
        %v8071 = vpop.f32.mrf.mxu0
        %v8072 = vadd.f32 0.0, %v8071
        %v8073 = vpop.f32.mrf.mxu0
        %v8074 = vadd.f32 0.0, %v8073
        %8075 = vdwg.mxu0
        %8076 = vmatpush.bf16.msra.mxu0 0
        %8077 = vmatpush.bf16.msra.mxu0 0
        %8078 = vmatpush.bf16.msra.mxu0 0
        %8079 = vmatpush.bf16.msra.mxu0 0
        %8080 = vmatpush.bf16.msra.mxu0 0
        %8081 = vmatpush.bf16.msra.mxu0 0
        %8082 = vmatpush.bf16.msra.mxu0 %v2088
        %8083 = vmatpush.bf16.msra.mxu0 %v8012
        %8084 = vmatmul.bf16.gmra.mxu0 %v2116
        %v8085 = vpop.f32.mrf.mxu0
        %v8086 = vadd.f32 0.0, %v8085
        %v8087 = vpop.f32.mrf.mxu0
        %v8088 = vadd.f32 0.0, %v8087
        %8089 = vmatmul.bf16.gmra.mxu0 %v2119
        %v8090 = vpop.f32.mrf.mxu0
        %v8091 = vadd.f32 0.0, %v8090
        %v8092 = vpop.f32.mrf.mxu0
        %v8093 = vadd.f32 0.0, %v8092
        %8094 = vmatmul.bf16.gmra.mxu0 %v2122
        %v8095 = vpop.f32.mrf.mxu0
        %v8096 = vadd.f32 0.0, %v8095
        %v8097 = vpop.f32.mrf.mxu0
        %v8098 = vadd.f32 0.0, %v8097
        %8099 = vmatmul.bf16.gmra.mxu0 %v2125
        %v8100 = vpop.f32.mrf.mxu0
        %v8101 = vadd.f32 0.0, %v8100
        %v8102 = vpop.f32.mrf.mxu0
        %v8103 = vadd.f32 0.0, %v8102
        %8104 = vdwg.mxu0
        %8105 = vmatpush.bf16.msra.mxu0 0
        %8106 = vmatpush.bf16.msra.mxu0 0
        %8107 = vmatpush.bf16.msra.mxu0 0
        %8108 = vmatpush.bf16.msra.mxu0 0
        %8109 = vmatpush.bf16.msra.mxu0 0
        %8110 = vmatpush.bf16.msra.mxu0 0
        %8111 = vmatpush.bf16.msra.mxu0 %v2089
        %8112 = vmatpush.bf16.msra.mxu0 %v8013
        %8113 = vmatmul.bf16.gmra.mxu0 %v2116
        %v8114 = vpop.f32.mrf.mxu0
        %v8115 = vadd.f32 0.0, %v8114
        %v8116 = vpop.f32.mrf.mxu0
        %v8117 = vadd.f32 0.0, %v8116
        %8118 = vmatmul.bf16.gmra.mxu0 %v2119
        %v8119 = vpop.f32.mrf.mxu0
        %v8120 = vadd.f32 0.0, %v8119
        %v8121 = vpop.f32.mrf.mxu0
        %v8122 = vadd.f32 0.0, %v8121
        %8123 = vmatmul.bf16.gmra.mxu0 %v2122
        %v8124 = vpop.f32.mrf.mxu0
        %v8125 = vadd.f32 0.0, %v8124
        %v8126 = vpop.f32.mrf.mxu0
        %v8127 = vadd.f32 0.0, %v8126
        %8128 = vmatmul.bf16.gmra.mxu0 %v2125
        %v8129 = vpop.f32.mrf.mxu0
        %v8130 = vadd.f32 0.0, %v8129
        %v8131 = vpop.f32.mrf.mxu0
        %v8132 = vadd.f32 0.0, %v8131
        %8133 = vdwg.mxu0
        %v8134 = vmax.f32 %v8028, 0.0
        %v8135 = vmax.f32 %v8057, 0.0
        %v8136 = vmax.f32 %v8086, 0.0
        %v8137 = vmax.f32 %v8115, 0.0
        %v8138 = vmax.f32 %v8030, 0.0
        %v8139 = vmax.f32 %v8059, 0.0
        %v8140 = vmax.f32 %v8088, 0.0
        %v8141 = vmax.f32 %v8117, 0.0
        %v8142 = vmax.f32 %v8033, 0.0
        %v8143 = vmax.f32 %v8062, 0.0
        %v8144 = vmax.f32 %v8091, 0.0
        %v8145 = vmax.f32 %v8120, 0.0
        %v8146 = vmax.f32 %v8035, 0.0
        %v8147 = vmax.f32 %v8064, 0.0
        %v8148 = vmax.f32 %v8093, 0.0
        %v8149 = vmax.f32 %v8122, 0.0
        %v8150 = vmax.f32 %v8038, 0.0
        %v8151 = vmax.f32 %v8067, 0.0
        %v8152 = vmax.f32 %v8096, 0.0
        %v8153 = vmax.f32 %v8125, 0.0
        %v8154 = vmax.f32 %v8040, 0.0
        %v8155 = vmax.f32 %v8069, 0.0
        %v8156 = vmax.f32 %v8098, 0.0
        %v8157 = vmax.f32 %v8127, 0.0
        %v8158 = vmax.f32 %v8043, 0.0
        %v8159 = vmax.f32 %v8072, 0.0
        %v8160 = vmax.f32 %v8101, 0.0
        %v8161 = vmax.f32 %v8130, 0.0
        %v8162 = vmax.f32 %v8045, 0.0
        %v8163 = vmax.f32 %v8074, 0.0
        %v8164 = vmax.f32 %v8103, 0.0
        %v8165 = vmax.f32 %v8132, 0.0
        %v8166 = vpack.c.bf16 %v8138, %v8134
        %v8167 = vpack.c.bf16 %v8139, %v8135
        %v8168 = vpack.c.bf16 %v8140, %v8136
        %v8169 = vpack.c.bf16 %v8141, %v8137
        %v8170 = vpack.c.bf16 %v8146, %v8142
        %v8171 = vpack.c.bf16 %v8147, %v8143
        %v8172 = vpack.c.bf16 %v8148, %v8144
        %v8173 = vpack.c.bf16 %v8149, %v8145
        %v8174 = vpack.c.bf16 %v8154, %v8150
        %v8175 = vpack.c.bf16 %v8155, %v8151
        %v8176 = vpack.c.bf16 %v8156, %v8152
        %v8177 = vpack.c.bf16 %v8157, %v8153
        %v8178 = vpack.c.bf16 %v8162, %v8158
        %v8179 = vpack.c.bf16 %v8163, %v8159
        %v8180 = vpack.c.bf16 %v8164, %v8160
        %v8181 = vpack.c.bf16 %v8165, %v8161
        %8182 = vmatpush.bf16.msra.mxu0 0
        %8183 = vmatpush.bf16.msra.mxu0 0
        %8184 = vmatpush.bf16.msra.mxu0 0
        %8185 = vmatpush.bf16.msra.mxu0 0
        %8186 = vmatpush.bf16.msra.mxu0 %v8178
        %8187 = vmatpush.bf16.msra.mxu0 %v8174
        %8188 = vmatpush.bf16.msra.mxu0 %v8170
        %8189 = vmatpush.bf16.msra.mxu0 %v8166
        %8190 = vmatmul.bf16.gmra.mxu0 %v2312
        %v8191 = vpop.f32.mrf.mxu0
        %v8192 = vadd.f32 0.0, %v8191
        %v8193 = vpop.f32.mrf.mxu0
        %v8194 = vadd.f32 0.0, %v8193
        %8195 = vmatmul.bf16.gmra.mxu0 %v2315
        %v8196 = vpop.f32.mrf.mxu0
        %v8197 = vadd.f32 0.0, %v8196
        %v8198 = vpop.f32.mrf.mxu0
        %v8199 = vadd.f32 0.0, %v8198
        %8200 = vmatmul.bf16.gmra.mxu0 %v2318
        %v8201 = vpop.f32.mrf.mxu0
        %v8202 = vadd.f32 0.0, %v8201
        %v8203 = vpop.f32.mrf.mxu0
        %v8204 = vadd.f32 0.0, %v8203
        %8205 = vmatmul.bf16.gmra.mxu0 %v2321
        %v8206 = vpop.f32.mrf.mxu0
        %v8207 = vadd.f32 0.0, %v8206
        %v8208 = vpop.f32.mrf.mxu0
        %v8209 = vadd.f32 0.0, %v8208
        %8210 = vdwg.mxu0
        %8211 = vmatpush.bf16.msra.mxu0 0
        %8212 = vmatpush.bf16.msra.mxu0 0
        %8213 = vmatpush.bf16.msra.mxu0 0
        %8214 = vmatpush.bf16.msra.mxu0 0
        %8215 = vmatpush.bf16.msra.mxu0 %v8179
        %8216 = vmatpush.bf16.msra.mxu0 %v8175
        %8217 = vmatpush.bf16.msra.mxu0 %v8171
        %8218 = vmatpush.bf16.msra.mxu0 %v8167
        %8219 = vmatmul.bf16.gmra.mxu0 %v2312
        %v8220 = vpop.f32.mrf.mxu0
        %v8221 = vadd.f32 0.0, %v8220
        %v8222 = vpop.f32.mrf.mxu0
        %v8223 = vadd.f32 0.0, %v8222
        %8224 = vmatmul.bf16.gmra.mxu0 %v2315
        %v8225 = vpop.f32.mrf.mxu0
        %v8226 = vadd.f32 0.0, %v8225
        %v8227 = vpop.f32.mrf.mxu0
        %v8228 = vadd.f32 0.0, %v8227
        %8229 = vmatmul.bf16.gmra.mxu0 %v2318
        %v8230 = vpop.f32.mrf.mxu0
        %v8231 = vadd.f32 0.0, %v8230
        %v8232 = vpop.f32.mrf.mxu0
        %v8233 = vadd.f32 0.0, %v8232
        %8234 = vmatmul.bf16.gmra.mxu0 %v2321
        %v8235 = vpop.f32.mrf.mxu0
        %v8236 = vadd.f32 0.0, %v8235
        %v8237 = vpop.f32.mrf.mxu0
        %v8238 = vadd.f32 0.0, %v8237
        %8239 = vdwg.mxu0
        %8240 = vmatpush.bf16.msra.mxu0 0
        %8241 = vmatpush.bf16.msra.mxu0 0
        %8242 = vmatpush.bf16.msra.mxu0 0
        %8243 = vmatpush.bf16.msra.mxu0 0
        %8244 = vmatpush.bf16.msra.mxu0 %v8180
        %8245 = vmatpush.bf16.msra.mxu0 %v8176
        %8246 = vmatpush.bf16.msra.mxu0 %v8172
        %8247 = vmatpush.bf16.msra.mxu0 %v8168
        %8248 = vmatmul.bf16.gmra.mxu0 %v2312
        %v8249 = vpop.f32.mrf.mxu0
        %v8250 = vadd.f32 0.0, %v8249
        %v8251 = vpop.f32.mrf.mxu0
        %v8252 = vadd.f32 0.0, %v8251
        %8253 = vmatmul.bf16.gmra.mxu0 %v2315
        %v8254 = vpop.f32.mrf.mxu0
        %v8255 = vadd.f32 0.0, %v8254
        %v8256 = vpop.f32.mrf.mxu0
        %v8257 = vadd.f32 0.0, %v8256
        %8258 = vmatmul.bf16.gmra.mxu0 %v2318
        %v8259 = vpop.f32.mrf.mxu0
        %v8260 = vadd.f32 0.0, %v8259
        %v8261 = vpop.f32.mrf.mxu0
        %v8262 = vadd.f32 0.0, %v8261
        %8263 = vmatmul.bf16.gmra.mxu0 %v2321
        %v8264 = vpop.f32.mrf.mxu0
        %v8265 = vadd.f32 0.0, %v8264
        %v8266 = vpop.f32.mrf.mxu0
        %v8267 = vadd.f32 0.0, %v8266
        %8268 = vdwg.mxu0
        %8269 = vmatpush.bf16.msra.mxu0 0
        %8270 = vmatpush.bf16.msra.mxu0 0
        %8271 = vmatpush.bf16.msra.mxu0 0
        %8272 = vmatpush.bf16.msra.mxu0 0
        %8273 = vmatpush.bf16.msra.mxu0 %v8181
        %8274 = vmatpush.bf16.msra.mxu0 %v8177
        %8275 = vmatpush.bf16.msra.mxu0 %v8173
        %8276 = vmatpush.bf16.msra.mxu0 %v8169
        %8277 = vmatmul.bf16.gmra.mxu0 %v2312
        %v8278 = vpop.f32.mrf.mxu0
        %v8279 = vadd.f32 0.0, %v8278
        %v8280 = vpop.f32.mrf.mxu0
        %v8281 = vadd.f32 0.0, %v8280
        %8282 = vmatmul.bf16.gmra.mxu0 %v2315
        %v8283 = vpop.f32.mrf.mxu0
        %v8284 = vadd.f32 0.0, %v8283
        %v8285 = vpop.f32.mrf.mxu0
        %v8286 = vadd.f32 0.0, %v8285
        %8287 = vmatmul.bf16.gmra.mxu0 %v2318
        %v8288 = vpop.f32.mrf.mxu0
        %v8289 = vadd.f32 0.0, %v8288
        %v8290 = vpop.f32.mrf.mxu0
        %v8291 = vadd.f32 0.0, %v8290
        %8292 = vmatmul.bf16.gmra.mxu0 %v2321
        %v8293 = vpop.f32.mrf.mxu0
        %v8294 = vadd.f32 0.0, %v8293
        %v8295 = vpop.f32.mrf.mxu0
        %v8296 = vadd.f32 0.0, %v8295
        %8297 = vdwg.mxu0
        %v8298 = vmax.f32 %v8192, 0.0
        %v8299 = vmax.f32 %v8221, 0.0
        %v8300 = vmax.f32 %v8250, 0.0
        %v8301 = vmax.f32 %v8279, 0.0
        %v8302 = vmax.f32 %v8194, 0.0
        %v8303 = vmax.f32 %v8223, 0.0
        %v8304 = vmax.f32 %v8252, 0.0
        %v8305 = vmax.f32 %v8281, 0.0
        %v8306 = vmax.f32 %v8197, 0.0
        %v8307 = vmax.f32 %v8226, 0.0
        %v8308 = vmax.f32 %v8255, 0.0
        %v8309 = vmax.f32 %v8284, 0.0
        %v8310 = vmax.f32 %v8199, 0.0
        %v8311 = vmax.f32 %v8228, 0.0
        %v8312 = vmax.f32 %v8257, 0.0
        %v8313 = vmax.f32 %v8286, 0.0
        %v8314 = vmax.f32 %v8202, 0.0
        %v8315 = vmax.f32 %v8231, 0.0
        %v8316 = vmax.f32 %v8260, 0.0
        %v8317 = vmax.f32 %v8289, 0.0
        %v8318 = vmax.f32 %v8204, 0.0
        %v8319 = vmax.f32 %v8233, 0.0
        %v8320 = vmax.f32 %v8262, 0.0
        %v8321 = vmax.f32 %v8291, 0.0
        %v8322 = vmax.f32 %v8207, 0.0
        %v8323 = vmax.f32 %v8236, 0.0
        %v8324 = vmax.f32 %v8265, 0.0
        %v8325 = vmax.f32 %v8294, 0.0
        %v8326 = vmax.f32 %v8209, 0.0
        %v8327 = vmax.f32 %v8238, 0.0
        %v8328 = vmax.f32 %v8267, 0.0
        %v8329 = vmax.f32 %v8296, 0.0
        %v8330 = vpack.c.bf16 %v8302, %v8298
        %v8331 = vpack.c.bf16 %v8303, %v8299
        %v8332 = vpack.c.bf16 %v8304, %v8300
        %v8333 = vpack.c.bf16 %v8305, %v8301
        %v8334 = vpack.c.bf16 %v8310, %v8306
        %v8335 = vpack.c.bf16 %v8311, %v8307
        %v8336 = vpack.c.bf16 %v8312, %v8308
        %v8337 = vpack.c.bf16 %v8313, %v8309
        %v8338 = vpack.c.bf16 %v8318, %v8314
        %v8339 = vpack.c.bf16 %v8319, %v8315
        %v8340 = vpack.c.bf16 %v8320, %v8316
        %v8341 = vpack.c.bf16 %v8321, %v8317
        %v8342 = vpack.c.bf16 %v8326, %v8322
        %v8343 = vpack.c.bf16 %v8327, %v8323
        %v8344 = vpack.c.bf16 %v8328, %v8324
        %v8345 = vpack.c.bf16 %v8329, %v8325
        %8346 = vmatpush.bf16.msra.mxu0 0
        %8347 = vmatpush.bf16.msra.mxu0 0
        %8348 = vmatpush.bf16.msra.mxu0 0
        %8349 = vmatpush.bf16.msra.mxu0 0
        %8350 = vmatpush.bf16.msra.mxu0 %v8342
        %8351 = vmatpush.bf16.msra.mxu0 %v8338
        %8352 = vmatpush.bf16.msra.mxu0 %v8334
        %8353 = vmatpush.bf16.msra.mxu0 %v8330
        %8354 = vmatmul.bf16.gmra.mxu0 %v2488
        %v8355 = vpop.f32.mrf.mxu0
        %v8356 = vadd.f32 0.0, %v8355
        %v8357 = vpop.f32.mrf.mxu0
        %8358 = vdwg.mxu0
        %8359 = vmatpush.bf16.msra.mxu0 0
        %8360 = vmatpush.bf16.msra.mxu0 0
        %8361 = vmatpush.bf16.msra.mxu0 0
        %8362 = vmatpush.bf16.msra.mxu0 0
        %8363 = vmatpush.bf16.msra.mxu0 %v8343
        %8364 = vmatpush.bf16.msra.mxu0 %v8339
        %8365 = vmatpush.bf16.msra.mxu0 %v8335
        %8366 = vmatpush.bf16.msra.mxu0 %v8331
        %8367 = vmatmul.bf16.gmra.mxu0 %v2488
        %v8368 = vpop.f32.mrf.mxu0
        %v8369 = vadd.f32 0.0, %v8368
        %v8370 = vpop.f32.mrf.mxu0
        %8371 = vdwg.mxu0
        %8372 = vmatpush.bf16.msra.mxu0 0
        %8373 = vmatpush.bf16.msra.mxu0 0
        %8374 = vmatpush.bf16.msra.mxu0 0
        %8375 = vmatpush.bf16.msra.mxu0 0
        %8376 = vmatpush.bf16.msra.mxu0 %v8344
        %8377 = vmatpush.bf16.msra.mxu0 %v8340
        %8378 = vmatpush.bf16.msra.mxu0 %v8336
        %8379 = vmatpush.bf16.msra.mxu0 %v8332
        %8380 = vmatmul.bf16.gmra.mxu0 %v2488
        %v8381 = vpop.f32.mrf.mxu0
        %v8382 = vadd.f32 0.0, %v8381
        %v8383 = vpop.f32.mrf.mxu0
        %8384 = vdwg.mxu0
        %8385 = vmatpush.bf16.msra.mxu0 0
        %8386 = vmatpush.bf16.msra.mxu0 0
        %8387 = vmatpush.bf16.msra.mxu0 0
        %8388 = vmatpush.bf16.msra.mxu0 0
        %8389 = vmatpush.bf16.msra.mxu0 %v8345
        %8390 = vmatpush.bf16.msra.mxu0 %v8341
        %8391 = vmatpush.bf16.msra.mxu0 %v8337
        %8392 = vmatpush.bf16.msra.mxu0 %v8333
        %8393 = vmatmul.bf16.gmra.mxu0 %v2488
        %v8394 = vpop.f32.mrf.mxu0
        %v8395 = vadd.f32 0.0, %v8394
        %v8396 = vpop.f32.mrf.mxu0
        %8397 = vdwg.mxu0
        %v8398 = vsub.f32 0.0, %v8356
        %v8399 = vsub.f32 0.0, %v8369
        %v8400 = vsub.f32 0.0, %v8382
        %v8401 = vsub.f32 0.0, %v8395
        %v8402 = vmul.f32 %v8398, 1.442695
        %v8403 = vpow.pop %v8402
        %v8404 = vmul.f32 %v8399, 1.442695
        %v8405 = vpow.pop %v8404
        %v8406 = vmul.f32 %v8400, 1.442695
        %v8407 = vpow.pop %v8406
        %v8408 = vmul.f32 %v8401, 1.442695
        %v8409 = vpow.pop %v8408
        %v8410 = vadd.f32 %v8403, 1.0
        %v8411 = vadd.f32 %v8405, 1.0
        %v8412 = vadd.f32 %v8407, 1.0
        %v8413 = vadd.f32 %v8409, 1.0
        %v8414 = vrcp.pop %v8410
        %v8415 = vrcp.pop %v8411
        %v8416 = vrcp.pop %v8412
        %v8417 = vrcp.pop %v8413
        %v8418 = vsub.f32 0.0, %v7987
        %v8419 = vsub.f32 0.0, %v7989
        %v8420 = vsub.f32 0.0, %v7991
        %v8421 = vsub.f32 0.0, %v7993
        %v8422 = vmul.f32 %v8418, %v2570
        %v8423 = vmul.f32 %v8419, %v2571
        %v8424 = vmul.f32 %v8420, %v2572
        %v8425 = vmul.f32 %v8421, %v2573
        %v8426 = vmul.f32 %v8422, 1.442695
        %v8427 = vpow.pop %v8426
        %v8428 = vmul.f32 %v8423, 1.442695
        %v8429 = vpow.pop %v8428
        %v8430 = vmul.f32 %v8424, 1.442695
        %v8431 = vpow.pop %v8430
        %v8432 = vmul.f32 %v8425, 1.442695
        %v8433 = vpow.pop %v8432
        %v8434 = vsub.f32 1.0, %v8427
        %v8435 = vsub.f32 1.0, %v8429
        %v8436 = vsub.f32 1.0, %v8431
        %v8437 = vsub.f32 1.0, %v8433
        %v8438 = vmul.f32 %v7646, %v8434
        %v8439 = vmul.f32 %v7647, %v8435
        %v8440 = vmul.f32 %v7648, %v8436
        %v8441 = vmul.f32 %v7649, %v8437
        %v8442 = vperm.slane %v8438, 0
        %v8443 = vperm.slane %v8439, 0
        %v8444 = vperm.slane %v8440, 0
        %v8445 = vperm.slane %v8441, 0
        %v8446 = vmul.f32 %v8442, %v8414
        %v8447 = vmul.f32 %v8443, %v8415
        %v8448 = vmul.f32 %v8444, %v8416
        %v8449 = vmul.f32 %v8445, %v8417
        %v8450 = vadd.f32 %v7614, %v8446
        %v8451 = vadd.f32 %v7615, %v8447
        %v8452 = vadd.f32 %v7616, %v8448
        %v8453 = vadd.f32 %v7617, %v8449
        %v8458 = vrot.slane %v7650, 3
        %v8459 = vrot.slane %v7651, 3
        %v8460 = vrot.slane %v7652, 3
        %v8461 = vrot.slane %v7653, 3
        %v8466 = vmul.f32 %v8438, %v8458
        %v8467 = vmul.f32 %v8439, %v8459
        %v8468 = vmul.f32 %v8440, %v8460
        %v8469 = vmul.f32 %v8441, %v8461
        %v8470 = vadd.f32 %v7634, %v8466
        %v8471 = vadd.f32 %v7635, %v8467
        %v8472 = vadd.f32 %v7636, %v8468
        %v8473 = vadd.f32 %v7637, %v8469
        %v8474 = vadd.f32 %v7638, %v8438
        %v8475 = vadd.f32 %v7639, %v8439
        %v8476 = vadd.f32 %v7640, %v8440
        %v8477 = vadd.f32 %v7641, %v8441
        %v8482 = vrot.slane %v8451, 4
        %v8483 = vrot.slane %v8453, 4
        %v8484 = vsel %vm1062, %v8450, %v8482
        %v8485 = vsel %vm1062, %v8452, %v8483
        %8488 = vst [vmem:[%s372] sm:$0x77] %v8484
        %8489 = vst [vmem:[%s372 + $0x8] sm:$0x77] %v8485
        %v8494 = vrot.slane %v8471, 7
        %v8495 = vrot.slane %v8472, 6
        %v8496 = vrot.slane %v8473, 5
        %v8497 = vsel %vm870, %v8470, %v8494
        %vm8498 = vcmask 1042434
        %v8499 = vsel %vm8498, %v8495, %v8496
        %v8500 = vsel %vm875, %v8497, %v8499
        %v8502 = vlaneseq
        %vm8503 = vcmp.ge.s32.totalorder %v8502, 0
        %vm8504 = vcmp.lt.s32.totalorder %v8502, 512
        %vm8505 = vmand %vm8503, %vm8504
        %8506 = vst.msk [vmem:[%s379] sm:$0xf] %vm8505, %v8500
        %v8511 = vrot.slane %v8475, 7
        %v8512 = vrot.slane %v8476, 6
        %v8513 = vrot.slane %v8477, 5
        %v8514 = vsel %vm870, %v8474, %v8511
        %v8515 = vsel %vm8498, %v8512, %v8513
        %v8516 = vsel %vm875, %v8514, %v8515
        %8518 = vst.msk [vmem:[%s386] sm:$0xf] %vm8505, %v8516
        %s8519 = sand.u32 %s195, 1
        %s8520 = scalar_lea.sflag [#allocation4], %s8519
        %s8521 = sand.u32 %s195, 1
        %s8522 = smul.addr %s8521, 16
        %s8523 = scalar_lea.vmem [#allocation5], %s8522
        %s8524 = sand.u32 %s30, 1
        %s8525 = scalar_lea.sflag [#allocation7], %s8524
        %s8526 = sand.u32 %s221, 1
        %s8527 = smul.addr %s8526, 4
        %s8528 = scalar_lea.vmem [#allocation6], %s8527
        %s8529 = sand.u32 %s30, 1
        %s8530 = scalar_lea.sflag [#allocation7], %s8529
        %s8531 = sand.u32 %s247, 1
        %s8532 = smul.addr %s8531, 4
        %s8533 = scalar_lea.vmem [#allocation8], %s8532
        // Predicated region
        $region53: #{tpu_custom_call.1} parent=47 // pred_check
          %p8534 = pneg %p205
        $region54: #{tpu_custom_call.1} parent=47 // pred_check_branch
          %8536 = sbr.rel (%p8534) target = $region56
        $region55: #{tpu_custom_call.1} parent=47 // pred_region
          %s8537 = smul.u32 4, %s30
          %8539 = vsyncadd %s8520, 0
          %s8540 = smul.addr %s8537, 4
          %s8541 = scalar_lea.hbm %s7, %s8540
          %s8543 = sshll.u32 %s8523, 4
          %s8544 = int_to_ptr.vmem [resolvable:$true] %s8543
          %s8545 = sshll.u32 %s8541, 4
          %s8546 = int_to_ptr.hbm [resolvable:$true] %s8545
          %8548 = dma.vmem_to_hbm [thread:$0]  %s8544, 256, %s8546, %s8520
        $region56: #{tpu_custom_call.1} parent=47 // pred_fallthru
          _
        // Predicated region
        $region57: #{tpu_custom_call.1} parent=47 // pred_check
          %p8549 = pneg %p231
        $region58: #{tpu_custom_call.1} parent=47 // pred_check_branch
          %8551 = sbr.rel (%p8549) target = $region60
        $region59: #{tpu_custom_call.1} parent=47 // pred_region
          %s8552 = smul.u32 4, %s30
          %8554 = vsyncadd %s8525, 0
          %s8555 = scalar_lea.hbm %s8, %s8552
          %s8557 = sshll.u32 %s8528, 4
          %s8558 = int_to_ptr.vmem [resolvable:$true] %s8557
          %s8559 = sshll.u32 %s8555, 4
          %s8560 = int_to_ptr.hbm [resolvable:$true] %s8559
          %8562 = dma.vmem_to_hbm [thread:$0]  %s8558, 64, %s8560, %s8525
        $region60: #{tpu_custom_call.1} parent=47 // pred_fallthru
          _
        // Predicated region
        $region61: #{tpu_custom_call.1} parent=47 // pred_check
          %p8563 = pneg %p257
        $region62: #{tpu_custom_call.1} parent=47 // pred_check_branch
          %8565 = sbr.rel (%p8563) target = $region64
        $region63: #{tpu_custom_call.1} parent=47 // pred_region
          %s8566 = smul.u32 4, %s30
          %8568 = vsyncadd %s8530, 0
          %s8569 = scalar_lea.hbm %s9, %s8566
          %s8571 = sshll.u32 %s8533, 4
          %s8572 = int_to_ptr.vmem [resolvable:$true] %s8571
          %s8573 = sshll.u32 %s8569, 4
          %s8574 = int_to_ptr.hbm [resolvable:$true] %s8573
          %8576 = dma.vmem_to_hbm [thread:$0]  %s8572, 64, %s8574, %s8530
        $region64: #{tpu_custom_call.1} parent=47 // pred_fallthru
          _
      $region48: #{tpu_custom_call.1} parent=5 // pred_fallthru
        _
      %p8577 = scmp.le.s32.totalorder 2, %s25
      // Predicated region
      $region65: #{tpu_custom_call.1} parent=5 // pred_check
        %p8578 = pneg %p8577
      $region66: #{tpu_custom_call.1} parent=5 // pred_check_branch
        %8580 = sbr.rel (%p8578) target = $region68
      $region67: #{tpu_custom_call.1} parent=5 // pred_region
        %s8581 = ssub.s32 %s25, 2
        // Predicated region
        $region69: #{tpu_custom_call.1} parent=67 // pred_check
          %p8582 = pneg %p211
        $region70: #{tpu_custom_call.1} parent=67 // pred_check_branch
          %8584 = sbr.rel (%p8582) target = $region72
        $region71: #{tpu_custom_call.1} parent=67 // pred_region
          %s8585 = sand.u32 %s196, 1
          %s8586 = scalar_lea.sflag [#allocation4], %s8585
          %s8587 = sand.u32 %s196, 1
          %s8588 = smul.addr %s8587, 16
          %s8589 = scalar_lea.vmem [#allocation5], %s8588
          %8591 = dma.done %s8586, 256
        $region72: #{tpu_custom_call.1} parent=67 // pred_fallthru
          _
        // Predicated region
        $region73: #{tpu_custom_call.1} parent=67 // pred_check
          %p8592 = pneg %p237
        $region74: #{tpu_custom_call.1} parent=67 // pred_check_branch
          %8594 = sbr.rel (%p8592) target = $region76
        $region75: #{tpu_custom_call.1} parent=67 // pred_region
          %s8595 = sand.u32 %s31, 1
          %s8596 = scalar_lea.sflag [#allocation7], %s8595
          %s8597 = sand.u32 %s222, 1
          %s8598 = smul.addr %s8597, 4
          %s8599 = scalar_lea.vmem [#allocation6], %s8598
          %8601 = dma.done %s8596, 64
        $region76: #{tpu_custom_call.1} parent=67 // pred_fallthru
          _
        // Predicated region
        $region77: #{tpu_custom_call.1} parent=67 // pred_check
          %p8602 = pneg %p263
        $region78: #{tpu_custom_call.1} parent=67 // pred_check_branch
          %8604 = sbr.rel (%p8602) target = $region80
        $region79: #{tpu_custom_call.1} parent=67 // pred_region
          %s8605 = sand.u32 %s31, 1
          %s8606 = scalar_lea.sflag [#allocation7], %s8605
          %s8607 = sand.u32 %s248, 1
          %s8608 = smul.addr %s8607, 4
          %s8609 = scalar_lea.vmem [#allocation8], %s8608
          %8611 = dma.done %s8606, 64
        $region80: #{tpu_custom_call.1} parent=67 // pred_fallthru
          _
      $region68: #{tpu_custom_call.1} parent=5 // pred_fallthru
        _
    $region6: #{tpu_custom_call.1} parent=1 // loop_footer
      %s29 = sadd.s32 1, %s25
    $region7: #{tpu_custom_call.1} parent=1 // loop_footer_branch
      %24 = sbr.rel target = $region3
    $region8: #{tpu_custom_call.1} parent=1 // loop_exit
      _
    %8612 = vsyncpa [#allocation3], 1
    %s8613 = scalar_lea.sflag [#allocation3], 1
    %8614 = vsyncpa %s8613, 1
    %8615 = vsyncpa [#allocation4], 1
    %s8616 = scalar_lea.sflag [#allocation4], 1
    %8617 = vsyncpa %s8616, 1
    %8618 = vsyncpa [#allocation7], 1
    %s8619 = scalar_lea.sflag [#allocation7], 1
    %8620 = vsyncpa %s8619, 1

</llo_original>
